<compile_context>
chip_gen: v6e
topology: v6e:2x2x1
jax: 0.10.0
libtpu: 0.0.40
codegen_flags: <defaults>
</compile_context>

<pallas_src>
import functools

import numpy as np

import jax
import jax.numpy as jnp
from jax import lax
from jax.experimental import pallas as pl
from jax.experimental.pallas import tpu as pltpu


C_HID = 32          # hidden channel count of Teacher/Student nets
KK = 9              # 3x3 taps


# ----------------------------------------------------------------------------
# Per-tap boundary masks (express Conv2d padding=1 zero halo without padding)
# ----------------------------------------------------------------------------
def _tap_masks(H, W):
    """(9, 1, H*W) f32: mask[t, 0, y*W+x] == 1 iff the source pixel
    (y+dy, x+dx) of tap t lies inside the image (zero-padding otherwise)."""
    ys, xs = np.mgrid[0:H, 0:W]
    rows = []
    for dy in (-1, 0, 1):
        for dx in (-1, 0, 1):
            ok = (ys + dy >= 0) & (ys + dy < H) & (xs + dx >= 0) & (xs + dx < W)
            rows.append(ok.reshape(-1))
    return jnp.asarray(np.stack(rows)[:, None, :].astype(np.float32))


# ----------------------------------------------------------------------------
# Fused cascade kernel (whole TeacherNet / StudentNet for one batch element)
# ----------------------------------------------------------------------------
def _cascade_kernel(x_ref, m_ref, w1_ref, b1_ref, wm_ref, bm_ref, wl_ref,
                    bl_ref, o_ref, act_ref, *, H, W, n_mid):
    """x_ref  : (1, 1, HW)          input image, pixels on lanes
       m_ref  : (9, 1, HW)          per-tap boundary masks
       w1_ref : (9, 32, 1)          conv1 weights  w1[t, cout, 0]
       b1_ref : (32, 1)             conv1 bias
       wm_ref : (n_mid, 9, 32, 32)  hidden conv weights  wm[i, t, cout, cin]
       bm_ref : (n_mid, 32, 1)      hidden conv biases
       wl_ref : (9, 32, 1)          last conv weights  wl[t, cin, 0]
       bl_ref : (1, 1)              last conv bias
       o_ref  : (1, 1, HW)          output block (last conv, no ReLU)
       act_ref: (32, HW) VMEM       channels-first activation scratch
    """
    HW = H * W

    # Static tap table: (tap index, lane-roll amount, needs boundary mask).
    taps = []
    for dy in (-1, 0, 1):
        for dx in (-1, 0, 1):
            t = (dy + 1) * 3 + (dx + 1)
            taps.append((t, (-(dy * W + dx)) % HW, not (dy == 0 and dx == 0)))

    def tap_view(a, t, shift, needs_mask):
        # a[:, p] -> a[:, p + dy*W + dx], zeroed where that leaves the image.
        # Roll is on the XLU slot; the mask multiply is a cheap VPU op.
        if not needs_mask:
            return a
        return pltpu.roll(a, shift, 1) * m_ref[t]

    # --- conv1: Cin=1 -> 32.  VPU outer product per tap (exact op count;
    #     avoids a 288-wide MXU contraction that is 31/32 zeros). ------------
    x = x_ref[0]                                           # (1, HW)
    h = jnp.zeros((C_HID, HW), jnp.float32)
    for t, shift, needs_mask in taps:
        h = h + w1_ref[t] * tap_view(x, t, shift, needs_mask)   # (32,1)*(1,HW)
    h = jnp.maximum(h + b1_ref[...], 0.0)
    act_ref[...] = h

    # --- hidden convs: 32 -> 32.  Nine K=32 MXU dots per layer, activations
    #     stay flat (32, HW) so there are no reshapes / patch copies. --------
    for i in range(n_mid):
        a = act_ref[...]
        h = jnp.zeros((C_HID, HW), jnp.float32)
        for t, shift, needs_mask in taps:
            s = tap_view(a, t, shift, needs_mask)          # (32, HW)
            h = h + jnp.dot(wm_ref[i, t], s,
                            preferred_element_type=jnp.float32)
        h = jnp.maximum(h + bm_ref[i], 0.0)
        act_ref[...] = h

    # --- last conv: 32 -> 1, no ReLU.  VPU weighted channel sum so the
    #     result is lane-dense and no N=1 MXU push is issued. ---------------
    a = act_ref[...]
    y = jnp.zeros((1, HW), jnp.float32)
    for t, shift, needs_mask in taps:
        s = tap_view(a, t, shift, needs_mask)
        y = y + jnp.sum(wl_ref[t] * s, axis=0, keepdims=True)
    o_ref[0] = (y + bl_ref[...]).astype(o_ref.dtype)


def cascade_forward(packed, x_nchw):
    """Fused TeacherNet/StudentNet forward.  Returns only the last layer's
    output (the only tensor the SFTN training graph consumes), in NCHW."""
    w1, b1, wm, bm, wl, bl = packed
    B, C, H, W = x_nchw.shape
    assert C == 1
    HW = H * W
    n_mid = wm.shape[0]

    x = x_nchw.reshape(B, 1, HW)              # free reshape: pixels -> lanes
    masks = _tap_masks(H, W)

    flops = 2 * B * HW * KK * C_HID * (2 + C_HID * n_mid)
    bytes_accessed = 4 * (2 * B * HW + int(masks.size) + int(w1.size)
                          + int(b1.size) + int(wm.size) + int(bm.size)
                          + int(wl.size) + int(bl.size))

    kernel = functools.partial(_cascade_kernel, H=H, W=W, n_mid=n_mid)
    out = pl.pallas_call(
        kernel,
        out_shape=jax.ShapeDtypeStruct((B, 1, HW), jnp.float32),
        grid_spec=pltpu.PrefetchScalarGridSpec(
            num_scalar_prefetch=0,
            grid=(B,),
            in_specs=[
                pl.BlockSpec((1, 1, HW), lambda b: (b, 0, 0)),
                pl.BlockSpec((KK, 1, HW), lambda b: (0, 0, 0)),
                pl.BlockSpec((KK, C_HID, 1), lambda b: (0, 0, 0)),
                pl.BlockSpec((C_HID, 1), lambda b: (0, 0)),
                pl.BlockSpec((n_mid, KK, C_HID, C_HID), lambda b: (0, 0, 0, 0)),
                pl.BlockSpec((n_mid, C_HID, 1), lambda b: (0, 0, 0)),
                pl.BlockSpec((KK, C_HID, 1), lambda b: (0, 0, 0)),
                pl.BlockSpec((1, 1), lambda b: (0, 0)),
            ],
            out_specs=pl.BlockSpec((1, 1, HW), lambda b: (b, 0, 0)),
            scratch_shapes=[pltpu.VMEM((C_HID, HW), jnp.float32)],
        ),
        compiler_params=pltpu.CompilerParams(
            dimension_semantics=("parallel",)),
        cost_estimate=pl.CostEstimate(flops=int(flops), transcendentals=0,
                                      bytes_accessed=int(bytes_accessed)),
    )(x, masks, w1, b1, wm, bm, wl, bl)
    return out.reshape(B, 1, H, W)


# ----------------------------------------------------------------------------
# Data-consistency layer (pure XLA — fuses around the FFTs)
# ----------------------------------------------------------------------------
def data_consistency(pred_nchw, us_kspace, us_mask):
    """DataConsistencyLayer.forward; the mask blend is a few elementwise ops;
    keeping it in jnp lets XLA fuse it with the FFT real/imag handling."""
    # TODO(synk): FFT/IFFT have no Pallas TPU lowering; they stay in XLA.
    k_pred = jnp.fft.fft2(pred_nchw, norm="ortho")
    k_us = lax.complex(us_kspace[..., 0], us_kspace[..., 1])
    m = us_mask.astype(jnp.float32)
    k_upd = m * k_us + (1.0 - m) * k_pred
    img = jnp.fft.ifft2(k_upd, norm="ortho")
    return jnp.real(img).astype(jnp.float32)


# ----------------------------------------------------------------------------
# Parameter init (PyTorch Conv2d-like) + channels-first packing
# ----------------------------------------------------------------------------
def _init_conv(key, cin, cout):
    kw, kb = jax.random.split(key)
    fan_in = cin * 9
    bound = 1.0 / float(np.sqrt(fan_in))
    w = jax.random.uniform(kw, (3, 3, cin, cout), jnp.float32, -bound, bound)
    b = jax.random.uniform(kb, (cout,), jnp.float32, -bound, bound)
    return w, b


def init_teacher(key):
    chans = [(1, 32), (32, 32), (32, 32), (32, 32), (32, 1)]
    keys = jax.random.split(key, len(chans))
    return [_init_conv(k, ci, co) for k, (ci, co) in zip(keys, chans)]


def init_student(key):
    chans = [(1, 32), (32, 32), (32, 1)]
    keys = jax.random.split(key, len(chans))
    return [_init_conv(k, ci, co) for k, (ci, co) in zip(keys, chans)]


def pack_cascade(conv_params):
    """HWIO conv weights -> per-tap channels-first packing."""
    (w1, b1), *mid, (wl, bl) = conv_params
    w1p = jnp.transpose(w1.reshape(KK, 1, C_HID), (0, 2, 1))       # (9, 32, 1)
    b1p = b1.reshape(C_HID, 1)                                      # (32, 1)
    wmp = jnp.stack([jnp.transpose(w.reshape(KK, C_HID, C_HID), (0, 2, 1))
                     for (w, _) in mid])                            # (n_mid, 9, 32, 32)
    bmp = jnp.stack([b.reshape(C_HID, 1) for (_, b) in mid])        # (n_mid, 32, 1)
    wlp = wl.reshape(KK, C_HID, 1)                                  # (9, 32, 1)
    blp = bl.reshape(1, 1)                                          # (1, 1)
    return w1p, b1p, wmp, bmp, wlp, blp


def init_dcteachernet_sftn(key):
    ks = jax.random.split(key, 10)
    raw = {
        "t1": init_teacher(ks[0]), "t2": init_teacher(ks[1]),
        "t3": init_teacher(ks[2]), "t4": init_teacher(ks[3]),
        "t5": init_teacher(ks[4]),
        # scascade1 exists in the PyTorch module but is never used in forward().
        "s1": init_student(ks[5]), "s2": init_student(ks[6]),
        "s3": init_student(ks[7]), "s4": init_student(ks[8]),
        "s5": init_student(ks[9]),
    }
    packed = {k: pack_cascade(v) for k, v in raw.items()}
    return packed, raw


# ----------------------------------------------------------------------------
# DCTeacherNetSFTN forward (training branch, i.e. self.training == True)
# ----------------------------------------------------------------------------
def dcteachernet_sftn_forward(params, x, x_k, us_mask):
    B = x.shape[0]

    def dc(pred, rep=1):
        if rep == 1:
            return data_consistency(pred, x_k, us_mask)
        k = jnp.concatenate([x_k] * rep, axis=0)
        m = jnp.concatenate([us_mask] * rep, axis=0)
        return data_consistency(pred, k, m)

    # --- teacher chain (strictly sequential) --------------------------------
    h = x
    t_dc = []
    for name in ("t1", "t2", "t3", "t4", "t5"):
        h = dc(cascade_forward(params[name], h))
        t_dc.append(h)
    x1_dc, x2_dc, x3_dc, x4_dc, x5_dc = t_dc

    # --- student chains, batched per shared cascade --------------------------
    # Every chain that has reached depth k uses scascade_k; stack those inputs
    # on the batch axis so each student cascade / DC FFT pair runs once.
    s2_dc = dc(cascade_forward(params["s2"], x1_dc))                      # B
    s3_dc = dc(cascade_forward(params["s3"],
                               jnp.concatenate([s2_dc, x2_dc], 0)), 2)    # 2B
    s4_dc = dc(cascade_forward(params["s4"],
                               jnp.concatenate([s3_dc, x3_dc], 0)), 3)    # 3B
    s5_dc = dc(cascade_forward(params["s5"],
                               jnp.concatenate([s4_dc, x4_dc], 0)), 4)    # 4B

    x_s1dc = s5_dc[0 * B:1 * B]
    x_s2dc = s5_dc[1 * B:2 * B]
    x_s3dc = s5_dc[2 * B:3 * B]
    x_s4dc = s5_dc[3 * B:4 * B]
    return (x_s1dc, x_s2dc, x_s3dc, x_s4dc, x5_dc)


# ----------------------------------------------------------------------------
# Reference (XLA conv) for a correctness self-check of the fused cascade
# ----------------------------------------------------------------------------
def _cascade_reference(conv_params, x_nchw):
    h = x_nchw
    n = len(conv_params)
    for i, (w, b) in enumerate(conv_params):
        h = lax.conv_general_dilated(
            h, w, window_strides=(1, 1), padding="SAME",
            dimension_numbers=("NCHW", "HWIO", "NCHW"),
            precision=lax.Precision.HIGHEST)
        h = h + b.reshape(1, -1, 1, 1)
        if i < n - 1:
            h = jax.nn.relu(h)
    return h


# ----------------------------------------------------------------------------
# Example run
# ----------------------------------------------------------------------------
if __name__ == "__main__":
    key = jax.random.PRNGKey(0)
    k_p, k_x, k_k, k_m = jax.random.split(key, 4)

    B, C, H, W = 2, 1, 16, 16
    params, raw = init_dcteachernet_sftn(k_p)

    x = jax.random.normal(k_x, (B, C, H, W), jnp.float32)
    x_k = jax.random.normal(k_k, (B, C, H, W, 2), jnp.float32)
    us_mask = (jax.random.uniform(k_m, (B, C, H, W)) < 0.5).astype(jnp.float32)

    # Fused Pallas cascade vs. XLA conv reference (one teacher + one student
    # block).  Tightened from the previous 3e-2 so layout/halo regressions
    # are actually caught (f32 vs f32 should agree to ~1e-4; allow 1e-3).
    for name in ("t1", "s2"):
        got = jax.block_until_ready(cascade_forward(params[name], x))
        ref = _cascade_reference(raw[name], x)
        assert got.shape == ref.shape
        err = float(jnp.max(jnp.abs(got - ref)))
        assert err < 1e-3, f"{name} cascade mismatch, max abs err = {err}"

    fwd = jax.jit(dcteachernet_sftn_forward)
    outs = jax.block_until_ready(fwd(params, x, x_k, us_mask))

    assert len(outs) == 5
    for o in outs:
        assert o.shape == (B, C, H, W) and o.dtype == jnp.float32
        assert bool(jnp.all(jnp.isfinite(o)))

    print("KERNEL_OK")
</pallas_src>

<mosaic_0001>
module attributes {stable_mosaic.version = 11 : i64} {
  func.func @_cascade_kernel(%arg0: i32, %arg1: memref<1x1x256xf32, #tpu.memory_space<vmem>>, %arg2: memref<9x1x256xf32, #tpu.memory_space<vmem>>, %arg3: memref<9x32x1xf32, #tpu.memory_space<vmem>>, %arg4: memref<32x1xf32, #tpu.memory_space<vmem>>, %arg5: memref<3x9x32x32xf32, #tpu.memory_space<vmem>>, %arg6: memref<3x32x1xf32, #tpu.memory_space<vmem>>, %arg7: memref<9x32x1xf32, #tpu.memory_space<vmem>>, %arg8: memref<1x1xf32, #tpu.memory_space<vmem>>, %arg9: memref<1x1x256xf32, #tpu.memory_space<vmem>>, %arg10: memref<32x256xf32, #tpu.memory_space<vmem>>) attributes {dimension_semantics = [#tpu.dimension_semantics<parallel>], iteration_bounds = array<i64: 2>, scalar_prefetch = 0 : i64, scratch_operands = 1 : i64, tpu.core_type = #tpu.core_type<tc>, window_params = [{transform_indices = @transform_0, window_bounds = array<i64: 1, 1, 256>}, {pipeline_mode = #tpu.pipeline_mode<synchronous>, transform_indices = @transform_1, window_bounds = array<i64: 9, 1, 256>}, {pipeline_mode = #tpu.pipeline_mode<synchronous>, transform_indices = @transform_2, window_bounds = array<i64: 9, 32, 1>}, {pipeline_mode = #tpu.pipeline_mode<synchronous>, transform_indices = @transform_3, window_bounds = array<i64: 32, 1>}, {pipeline_mode = #tpu.pipeline_mode<synchronous>, transform_indices = @transform_4, window_bounds = array<i64: 3, 9, 32, 32>}, {pipeline_mode = #tpu.pipeline_mode<synchronous>, transform_indices = @transform_5, window_bounds = array<i64: 3, 32, 1>}, {pipeline_mode = #tpu.pipeline_mode<synchronous>, transform_indices = @transform_6, window_bounds = array<i64: 9, 32, 1>}, {pipeline_mode = #tpu.pipeline_mode<synchronous>, transform_indices = @transform_7, window_bounds = array<i64: 1, 1>}, {transform_indices = @transform_8, window_bounds = array<i64: 1, 1, 256>}]} {
    %c0 = arith.constant 0 : index
    %c0_0 = arith.constant 0 : index
    %c0_1 = arith.constant 0 : index
    %0 = vector.load %arg1[%c0, %c0_0, %c0_1] : memref<1x1x256xf32, #tpu.memory_space<vmem>>, vector<1x1x256xf32>
    %1 = vector.shape_cast %0 : vector<1x1x256xf32> to vector<1x256xf32>
    %cst = arith.constant 0.000000e+00 : f32
    %2 = vector.broadcast %cst : f32 to vector<32x256xf32>
    %c0_2 = arith.constant 0 : index
    %c0_3 = arith.constant 0 : index
    %c0_4 = arith.constant 0 : index
    %3 = vector.load %arg3[%c0_2, %c0_3, %c0_4] : memref<9x32x1xf32, #tpu.memory_space<vmem>>, vector<1x32x1xf32>
    %4 = vector.shape_cast %3 : vector<1x32x1xf32> to vector<32x1xf32>
    %c17_i32 = arith.constant 17 : i32
    %5 = tpu.dynamic_rotate %1 by %c17_i32 dim 1 : vector<1x256xf32>, i32 -> vector<1x256xf32>
    %c0_5 = arith.constant 0 : index
    %c0_6 = arith.constant 0 : index
    %c0_7 = arith.constant 0 : index
    %6 = vector.load %arg2[%c0_5, %c0_6, %c0_7] : memref<9x1x256xf32, #tpu.memory_space<vmem>>, vector<1x1x256xf32>
    %7 = vector.shape_cast %6 : vector<1x1x256xf32> to vector<1x256xf32>
    %8 = arith.mulf %5, %7 : vector<1x256xf32>
    %9 = vector.broadcast %4 : vector<32x1xf32> to vector<32x256xf32>
    %10 = vector.broadcast %8 : vector<1x256xf32> to vector<32x256xf32>
    %11 = arith.mulf %9, %10 : vector<32x256xf32>
    %12 = arith.addf %2, %11 : vector<32x256xf32>
    %c1 = arith.constant 1 : index
    %c0_8 = arith.constant 0 : index
    %c0_9 = arith.constant 0 : index
    %13 = vector.load %arg3[%c1, %c0_8, %c0_9] : memref<9x32x1xf32, #tpu.memory_space<vmem>>, vector<1x32x1xf32>
    %14 = vector.shape_cast %13 : vector<1x32x1xf32> to vector<32x1xf32>
    %c16_i32 = arith.constant 16 : i32
    %15 = tpu.dynamic_rotate %1 by %c16_i32 dim 1 : vector<1x256xf32>, i32 -> vector<1x256xf32>
    %c1_10 = arith.constant 1 : index
    %c0_11 = arith.constant 0 : index
    %c0_12 = arith.constant 0 : index
    %16 = vector.load %arg2[%c1_10, %c0_11, %c0_12] : memref<9x1x256xf32, #tpu.memory_space<vmem>>, vector<1x1x256xf32>
    %17 = vector.shape_cast %16 : vector<1x1x256xf32> to vector<1x256xf32>
    %18 = arith.mulf %15, %17 : vector<1x256xf32>
    %19 = vector.broadcast %14 : vector<32x1xf32> to vector<32x256xf32>
    %20 = vector.broadcast %18 : vector<1x256xf32> to vector<32x256xf32>
    %21 = arith.mulf %19, %20 : vector<32x256xf32>
    %22 = arith.addf %12, %21 : vector<32x256xf32>
    %c2 = arith.constant 2 : index
    %c0_13 = arith.constant 0 : index
    %c0_14 = arith.constant 0 : index
    %23 = vector.load %arg3[%c2, %c0_13, %c0_14] : memref<9x32x1xf32, #tpu.memory_space<vmem>>, vector<1x32x1xf32>
    %24 = vector.shape_cast %23 : vector<1x32x1xf32> to vector<32x1xf32>
    %c15_i32 = arith.constant 15 : i32
    %25 = tpu.dynamic_rotate %1 by %c15_i32 dim 1 : vector<1x256xf32>, i32 -> vector<1x256xf32>
    %c2_15 = arith.constant 2 : index
    %c0_16 = arith.constant 0 : index
    %c0_17 = arith.constant 0 : index
    %26 = vector.load %arg2[%c2_15, %c0_16, %c0_17] : memref<9x1x256xf32, #tpu.memory_space<vmem>>, vector<1x1x256xf32>
    %27 = vector.shape_cast %26 : vector<1x1x256xf32> to vector<1x256xf32>
    %28 = arith.mulf %25, %27 : vector<1x256xf32>
    %29 = vector.broadcast %24 : vector<32x1xf32> to vector<32x256xf32>
    %30 = vector.broadcast %28 : vector<1x256xf32> to vector<32x256xf32>
    %31 = arith.mulf %29, %30 : vector<32x256xf32>
    %32 = arith.addf %22, %31 : vector<32x256xf32>
    %c3 = arith.constant 3 : index
    %c0_18 = arith.constant 0 : index
    %c0_19 = arith.constant 0 : index
    %33 = vector.load %arg3[%c3, %c0_18, %c0_19] : memref<9x32x1xf32, #tpu.memory_space<vmem>>, vector<1x32x1xf32>
    %34 = vector.shape_cast %33 : vector<1x32x1xf32> to vector<32x1xf32>
    %c1_i32 = arith.constant 1 : i32
    %35 = tpu.dynamic_rotate %1 by %c1_i32 dim 1 : vector<1x256xf32>, i32 -> vector<1x256xf32>
    %c3_20 = arith.constant 3 : index
    %c0_21 = arith.constant 0 : index
    %c0_22 = arith.constant 0 : index
    %36 = vector.load %arg2[%c3_20, %c0_21, %c0_22] : memref<9x1x256xf32, #tpu.memory_space<vmem>>, vector<1x1x256xf32>
    %37 = vector.shape_cast %36 : vector<1x1x256xf32> to vector<1x256xf32>
    %38 = arith.mulf %35, %37 : vector<1x256xf32>
    %39 = vector.broadcast %34 : vector<32x1xf32> to vector<32x256xf32>
    %40 = vector.broadcast %38 : vector<1x256xf32> to vector<32x256xf32>
    %41 = arith.mulf %39, %40 : vector<32x256xf32>
    %42 = arith.addf %32, %41 : vector<32x256xf32>
    %c4 = arith.constant 4 : index
    %c0_23 = arith.constant 0 : index
    %c0_24 = arith.constant 0 : index
    %43 = vector.load %arg3[%c4, %c0_23, %c0_24] : memref<9x32x1xf32, #tpu.memory_space<vmem>>, vector<1x32x1xf32>
    %44 = vector.shape_cast %43 : vector<1x32x1xf32> to vector<32x1xf32>
    %45 = vector.broadcast %44 : vector<32x1xf32> to vector<32x256xf32>
    %46 = vector.broadcast %1 : vector<1x256xf32> to vector<32x256xf32>
    %47 = arith.mulf %45, %46 : vector<32x256xf32>
    %48 = arith.addf %42, %47 : vector<32x256xf32>
    %c5 = arith.constant 5 : index
    %c0_25 = arith.constant 0 : index
    %c0_26 = arith.constant 0 : index
    %49 = vector.load %arg3[%c5, %c0_25, %c0_26] : memref<9x32x1xf32, #tpu.memory_space<vmem>>, vector<1x32x1xf32>
    %50 = vector.shape_cast %49 : vector<1x32x1xf32> to vector<32x1xf32>
    %c255_i32 = arith.constant 255 : i32
    %51 = tpu.dynamic_rotate %1 by %c255_i32 dim 1 : vector<1x256xf32>, i32 -> vector<1x256xf32>
    %c5_27 = arith.constant 5 : index
    %c0_28 = arith.constant 0 : index
    %c0_29 = arith.constant 0 : index
    %52 = vector.load %arg2[%c5_27, %c0_28, %c0_29] : memref<9x1x256xf32, #tpu.memory_space<vmem>>, vector<1x1x256xf32>
    %53 = vector.shape_cast %52 : vector<1x1x256xf32> to vector<1x256xf32>
    %54 = arith.mulf %51, %53 : vector<1x256xf32>
    %55 = vector.broadcast %50 : vector<32x1xf32> to vector<32x256xf32>
    %56 = vector.broadcast %54 : vector<1x256xf32> to vector<32x256xf32>
    %57 = arith.mulf %55, %56 : vector<32x256xf32>
    %58 = arith.addf %48, %57 : vector<32x256xf32>
    %c6 = arith.constant 6 : index
    %c0_30 = arith.constant 0 : index
    %c0_31 = arith.constant 0 : index
    %59 = vector.load %arg3[%c6, %c0_30, %c0_31] : memref<9x32x1xf32, #tpu.memory_space<vmem>>, vector<1x32x1xf32>
    %60 = vector.shape_cast %59 : vector<1x32x1xf32> to vector<32x1xf32>
    %c241_i32 = arith.constant 241 : i32
    %61 = tpu.dynamic_rotate %1 by %c241_i32 dim 1 : vector<1x256xf32>, i32 -> vector<1x256xf32>
    %c6_32 = arith.constant 6 : index
    %c0_33 = arith.constant 0 : index
    %c0_34 = arith.constant 0 : index
    %62 = vector.load %arg2[%c6_32, %c0_33, %c0_34] : memref<9x1x256xf32, #tpu.memory_space<vmem>>, vector<1x1x256xf32>
    %63 = vector.shape_cast %62 : vector<1x1x256xf32> to vector<1x256xf32>
    %64 = arith.mulf %61, %63 : vector<1x256xf32>
    %65 = vector.broadcast %60 : vector<32x1xf32> to vector<32x256xf32>
    %66 = vector.broadcast %64 : vector<1x256xf32> to vector<32x256xf32>
    %67 = arith.mulf %65, %66 : vector<32x256xf32>
    %68 = arith.addf %58, %67 : vector<32x256xf32>
    %c7 = arith.constant 7 : index
    %c0_35 = arith.constant 0 : index
    %c0_36 = arith.constant 0 : index
    %69 = vector.load %arg3[%c7, %c0_35, %c0_36] : memref<9x32x1xf32, #tpu.memory_space<vmem>>, vector<1x32x1xf32>
    %70 = vector.shape_cast %69 : vector<1x32x1xf32> to vector<32x1xf32>
    %c240_i32 = arith.constant 240 : i32
    %71 = tpu.dynamic_rotate %1 by %c240_i32 dim 1 : vector<1x256xf32>, i32 -> vector<1x256xf32>
    %c7_37 = arith.constant 7 : index
    %c0_38 = arith.constant 0 : index
    %c0_39 = arith.constant 0 : index
    %72 = vector.load %arg2[%c7_37, %c0_38, %c0_39] : memref<9x1x256xf32, #tpu.memory_space<vmem>>, vector<1x1x256xf32>
    %73 = vector.shape_cast %72 : vector<1x1x256xf32> to vector<1x256xf32>
    %74 = arith.mulf %71, %73 : vector<1x256xf32>
    %75 = vector.broadcast %70 : vector<32x1xf32> to vector<32x256xf32>
    %76 = vector.broadcast %74 : vector<1x256xf32> to vector<32x256xf32>
    %77 = arith.mulf %75, %76 : vector<32x256xf32>
    %78 = arith.addf %68, %77 : vector<32x256xf32>
    %c8 = arith.constant 8 : index
    %c0_40 = arith.constant 0 : index
    %c0_41 = arith.constant 0 : index
    %79 = vector.load %arg3[%c8, %c0_40, %c0_41] : memref<9x32x1xf32, #tpu.memory_space<vmem>>, vector<1x32x1xf32>
    %80 = vector.shape_cast %79 : vector<1x32x1xf32> to vector<32x1xf32>
    %c239_i32 = arith.constant 239 : i32
    %81 = tpu.dynamic_rotate %1 by %c239_i32 dim 1 : vector<1x256xf32>, i32 -> vector<1x256xf32>
    %c8_42 = arith.constant 8 : index
    %c0_43 = arith.constant 0 : index
    %c0_44 = arith.constant 0 : index
    %82 = vector.load %arg2[%c8_42, %c0_43, %c0_44] : memref<9x1x256xf32, #tpu.memory_space<vmem>>, vector<1x1x256xf32>
    %83 = vector.shape_cast %82 : vector<1x1x256xf32> to vector<1x256xf32>
    %84 = arith.mulf %81, %83 : vector<1x256xf32>
    %85 = vector.broadcast %80 : vector<32x1xf32> to vector<32x256xf32>
    %86 = vector.broadcast %84 : vector<1x256xf32> to vector<32x256xf32>
    %87 = arith.mulf %85, %86 : vector<32x256xf32>
    %88 = arith.addf %78, %87 : vector<32x256xf32>
    %c0_45 = arith.constant 0 : index
    %c0_46 = arith.constant 0 : index
    %89 = vector.load %arg4[%c0_45, %c0_46] : memref<32x1xf32, #tpu.memory_space<vmem>>, vector<32x1xf32>
    %90 = vector.broadcast %89 : vector<32x1xf32> to vector<32x256xf32>
    %91 = arith.addf %88, %90 : vector<32x256xf32>
    %cst_47 = arith.constant 0.000000e+00 : f32
    %92 = vector.broadcast %cst_47 : f32 to vector<32x256xf32>
    %93 = arith.maximumf %91, %92 : vector<32x256xf32>
    %c0_48 = arith.constant 0 : index
    %c0_49 = arith.constant 0 : index
    %94 = vector.load %arg10[%c0_48, %c0_49] : memref<32x256xf32, #tpu.memory_space<vmem>>, vector<32x256xf32>
    tpu.vector_store %arg10[%c0_48, %c0_49], %93 {strides = array<i32>} : memref<32x256xf32, #tpu.memory_space<vmem>>, vector<32x256xf32>,
    %c0_50 = arith.constant 0 : index
    %c0_51 = arith.constant 0 : index
    %95 = vector.load %arg10[%c0_50, %c0_51] : memref<32x256xf32, #tpu.memory_space<vmem>>, vector<32x256xf32>
    %cst_52 = arith.constant 0.000000e+00 : f32
    %96 = vector.broadcast %cst_52 : f32 to vector<32x256xf32>
    %c17_i32_53 = arith.constant 17 : i32
    %97 = tpu.dynamic_rotate %95 by %c17_i32_53 dim 1 : vector<32x256xf32>, i32 -> vector<32x256xf32>
    %c0_54 = arith.constant 0 : index
    %c0_55 = arith.constant 0 : index
    %c0_56 = arith.constant 0 : index
    %98 = vector.load %arg2[%c0_54, %c0_55, %c0_56] : memref<9x1x256xf32, #tpu.memory_space<vmem>>, vector<1x1x256xf32>
    %99 = vector.shape_cast %98 : vector<1x1x256xf32> to vector<1x256xf32>
    %100 = vector.broadcast %99 : vector<1x256xf32> to vector<32x256xf32>
    %101 = arith.mulf %97, %100 : vector<32x256xf32>
    %c0_57 = arith.constant 0 : index
    %c0_58 = arith.constant 0 : index
    %c0_59 = arith.constant 0 : index
    %c0_60 = arith.constant 0 : index
    %102 = vector.load %arg5[%c0_57, %c0_58, %c0_59, %c0_60] : memref<3x9x32x32xf32, #tpu.memory_space<vmem>>, vector<1x1x32x32xf32>
    %103 = vector.shape_cast %102 : vector<1x1x32x32xf32> to vector<32x32xf32>
    %cst_61 = arith.constant dense<0.000000e+00> : vector<32x256xf32>
    %104 = tpu.matmul %103, %101, %cst_61 {dimension_numbers = #tpu.dot_dimension_numbers<[1], [0], [0], [1], [0, 0, 1, 1], [], []>} : vector<32x32xf32>, vector<32x256xf32>, vector<32x256xf32> -> vector<32x256xf32>
    %105 = arith.addf %96, %104 : vector<32x256xf32>
    %c16_i32_62 = arith.constant 16 : i32
    %106 = tpu.dynamic_rotate %95 by %c16_i32_62 dim 1 : vector<32x256xf32>, i32 -> vector<32x256xf32>
    %c1_63 = arith.constant 1 : index
    %c0_64 = arith.constant 0 : index
    %c0_65 = arith.constant 0 : index
    %107 = vector.load %arg2[%c1_63, %c0_64, %c0_65] : memref<9x1x256xf32, #tpu.memory_space<vmem>>, vector<1x1x256xf32>
    %108 = vector.shape_cast %107 : vector<1x1x256xf32> to vector<1x256xf32>
    %109 = vector.broadcast %108 : vector<1x256xf32> to vector<32x256xf32>
    %110 = arith.mulf %106, %109 : vector<32x256xf32>
    %c0_66 = arith.constant 0 : index
    %c1_67 = arith.constant 1 : index
    %c0_68 = arith.constant 0 : index
    %c0_69 = arith.constant 0 : index
    %111 = vector.load %arg5[%c0_66, %c1_67, %c0_68, %c0_69] : memref<3x9x32x32xf32, #tpu.memory_space<vmem>>, vector<1x1x32x32xf32>
    %112 = vector.shape_cast %111 : vector<1x1x32x32xf32> to vector<32x32xf32>
    %cst_70 = arith.constant dense<0.000000e+00> : vector<32x256xf32>
    %113 = tpu.matmul %112, %110, %cst_70 {dimension_numbers = #tpu.dot_dimension_numbers<[1], [0], [0], [1], [0, 0, 1, 1], [], []>} : vector<32x32xf32>, vector<32x256xf32>, vector<32x256xf32> -> vector<32x256xf32>
    %114 = arith.addf %105, %113 : vector<32x256xf32>
    %c15_i32_71 = arith.constant 15 : i32
    %115 = tpu.dynamic_rotate %95 by %c15_i32_71 dim 1 : vector<32x256xf32>, i32 -> vector<32x256xf32>
    %c2_72 = arith.constant 2 : index
    %c0_73 = arith.constant 0 : index
    %c0_74 = arith.constant 0 : index
    %116 = vector.load %arg2[%c2_72, %c0_73, %c0_74] : memref<9x1x256xf32, #tpu.memory_space<vmem>>, vector<1x1x256xf32>
    %117 = vector.shape_cast %116 : vector<1x1x256xf32> to vector<1x256xf32>
    %118 = vector.broadcast %117 : vector<1x256xf32> to vector<32x256xf32>
    %119 = arith.mulf %115, %118 : vector<32x256xf32>
    %c0_75 = arith.constant 0 : index
    %c2_76 = arith.constant 2 : index
    %c0_77 = arith.constant 0 : index
    %c0_78 = arith.constant 0 : index
    %120 = vector.load %arg5[%c0_75, %c2_76, %c0_77, %c0_78] : memref<3x9x32x32xf32, #tpu.memory_space<vmem>>, vector<1x1x32x32xf32>
    %121 = vector.shape_cast %120 : vector<1x1x32x32xf32> to vector<32x32xf32>
    %cst_79 = arith.constant dense<0.000000e+00> : vector<32x256xf32>
    %122 = tpu.matmul %121, %119, %cst_79 {dimension_numbers = #tpu.dot_dimension_numbers<[1], [0], [0], [1], [0, 0, 1, 1], [], []>} : vector<32x32xf32>, vector<32x256xf32>, vector<32x256xf32> -> vector<32x256xf32>
    %123 = arith.addf %114, %122 : vector<32x256xf32>
    %c1_i32_80 = arith.constant 1 : i32
    %124 = tpu.dynamic_rotate %95 by %c1_i32_80 dim 1 : vector<32x256xf32>, i32 -> vector<32x256xf32>
    %c3_81 = arith.constant 3 : index
    %c0_82 = arith.constant 0 : index
    %c0_83 = arith.constant 0 : index
    %125 = vector.load %arg2[%c3_81, %c0_82, %c0_83] : memref<9x1x256xf32, #tpu.memory_space<vmem>>, vector<1x1x256xf32>
    %126 = vector.shape_cast %125 : vector<1x1x256xf32> to vector<1x256xf32>
    %127 = vector.broadcast %126 : vector<1x256xf32> to vector<32x256xf32>
    %128 = arith.mulf %124, %127 : vector<32x256xf32>
    %c0_84 = arith.constant 0 : index
    %c3_85 = arith.constant 3 : index
    %c0_86 = arith.constant 0 : index
    %c0_87 = arith.constant 0 : index
    %129 = vector.load %arg5[%c0_84, %c3_85, %c0_86, %c0_87] : memref<3x9x32x32xf32, #tpu.memory_space<vmem>>, vector<1x1x32x32xf32>
    %130 = vector.shape_cast %129 : vector<1x1x32x32xf32> to vector<32x32xf32>
    %cst_88 = arith.constant dense<0.000000e+00> : vector<32x256xf32>
    %131 = tpu.matmul %130, %128, %cst_88 {dimension_numbers = #tpu.dot_dimension_numbers<[1], [0], [0], [1], [0, 0, 1, 1], [], []>} : vector<32x32xf32>, vector<32x256xf32>, vector<32x256xf32> -> vector<32x256xf32>
    %132 = arith.addf %123, %131 : vector<32x256xf32>
    %c0_89 = arith.constant 0 : index
    %c4_90 = arith.constant 4 : index
    %c0_91 = arith.constant 0 : index
    %c0_92 = arith.constant 0 : index
    %133 = vector.load %arg5[%c0_89, %c4_90, %c0_91, %c0_92] : memref<3x9x32x32xf32, #tpu.memory_space<vmem>>, vector<1x1x32x32xf32>
    %134 = vector.shape_cast %133 : vector<1x1x32x32xf32> to vector<32x32xf32>
    %cst_93 = arith.constant dense<0.000000e+00> : vector<32x256xf32>
    %135 = tpu.matmul %134, %95, %cst_93 {dimension_numbers = #tpu.dot_dimension_numbers<[1], [0], [0], [1], [0, 0, 1, 1], [], []>} : vector<32x32xf32>, vector<32x256xf32>, vector<32x256xf32> -> vector<32x256xf32>
    %136 = arith.addf %132, %135 : vector<32x256xf32>
    %c255_i32_94 = arith.constant 255 : i32
    %137 = tpu.dynamic_rotate %95 by %c255_i32_94 dim 1 : vector<32x256xf32>, i32 -> vector<32x256xf32>
    %c5_95 = arith.constant 5 : index
    %c0_96 = arith.constant 0 : index
    %c0_97 = arith.constant 0 : index
    %138 = vector.load %arg2[%c5_95, %c0_96, %c0_97] : memref<9x1x256xf32, #tpu.memory_space<vmem>>, vector<1x1x256xf32>
    %139 = vector.shape_cast %138 : vector<1x1x256xf32> to vector<1x256xf32>
    %140 = vector.broadcast %139 : vector<1x256xf32> to vector<32x256xf32>
    %141 = arith.mulf %137, %140 : vector<32x256xf32>
    %c0_98 = arith.constant 0 : index
    %c5_99 = arith.constant 5 : index
    %c0_100 = arith.constant 0 : index
    %c0_101 = arith.constant 0 : index
    %142 = vector.load %arg5[%c0_98, %c5_99, %c0_100, %c0_101] : memref<3x9x32x32xf32, #tpu.memory_space<vmem>>, vector<1x1x32x32xf32>
    %143 = vector.shape_cast %142 : vector<1x1x32x32xf32> to vector<32x32xf32>
    %cst_102 = arith.constant dense<0.000000e+00> : vector<32x256xf32>
    %144 = tpu.matmul %143, %141, %cst_102 {dimension_numbers = #tpu.dot_dimension_numbers<[1], [0], [0], [1], [0, 0, 1, 1], [], []>} : vector<32x32xf32>, vector<32x256xf32>, vector<32x256xf32> -> vector<32x256xf32>
    %145 = arith.addf %136, %144 : vector<32x256xf32>
    %c241_i32_103 = arith.constant 241 : i32
    %146 = tpu.dynamic_rotate %95 by %c241_i32_103 dim 1 : vector<32x256xf32>, i32 -> vector<32x256xf32>
    %c6_104 = arith.constant 6 : index
    %c0_105 = arith.constant 0 : index
    %c0_106 = arith.constant 0 : index
    %147 = vector.load %arg2[%c6_104, %c0_105, %c0_106] : memref<9x1x256xf32, #tpu.memory_space<vmem>>, vector<1x1x256xf32>
    %148 = vector.shape_cast %147 : vector<1x1x256xf32> to vector<1x256xf32>
    %149 = vector.broadcast %148 : vector<1x256xf32> to vector<32x256xf32>
    %150 = arith.mulf %146, %149 : vector<32x256xf32>
    %c0_107 = arith.constant 0 : index
    %c6_108 = arith.constant 6 : index
    %c0_109 = arith.constant 0 : index
    %c0_110 = arith.constant 0 : index
    %151 = vector.load %arg5[%c0_107, %c6_108, %c0_109, %c0_110] : memref<3x9x32x32xf32, #tpu.memory_space<vmem>>, vector<1x1x32x32xf32>
    %152 = vector.shape_cast %151 : vector<1x1x32x32xf32> to vector<32x32xf32>
    %cst_111 = arith.constant dense<0.000000e+00> : vector<32x256xf32>
    %153 = tpu.matmul %152, %150, %cst_111 {dimension_numbers = #tpu.dot_dimension_numbers<[1], [0], [0], [1], [0, 0, 1, 1], [], []>} : vector<32x32xf32>, vector<32x256xf32>, vector<32x256xf32> -> vector<32x256xf32>
    %154 = arith.addf %145, %153 : vector<32x256xf32>
    %c240_i32_112 = arith.constant 240 : i32
    %155 = tpu.dynamic_rotate %95 by %c240_i32_112 dim 1 : vector<32x256xf32>, i32 -> vector<32x256xf32>
    %c7_113 = arith.constant 7 : index
    %c0_114 = arith.constant 0 : index
    %c0_115 = arith.constant 0 : index
    %156 = vector.load %arg2[%c7_113, %c0_114, %c0_115] : memref<9x1x256xf32, #tpu.memory_space<vmem>>, vector<1x1x256xf32>
    %157 = vector.shape_cast %156 : vector<1x1x256xf32> to vector<1x256xf32>
    %158 = vector.broadcast %157 : vector<1x256xf32> to vector<32x256xf32>
    %159 = arith.mulf %155, %158 : vector<32x256xf32>
    %c0_116 = arith.constant 0 : index
    %c7_117 = arith.constant 7 : index
    %c0_118 = arith.constant 0 : index
    %c0_119 = arith.constant 0 : index
    %160 = vector.load %arg5[%c0_116, %c7_117, %c0_118, %c0_119] : memref<3x9x32x32xf32, #tpu.memory_space<vmem>>, vector<1x1x32x32xf32>
    %161 = vector.shape_cast %160 : vector<1x1x32x32xf32> to vector<32x32xf32>
    %cst_120 = arith.constant dense<0.000000e+00> : vector<32x256xf32>
    %162 = tpu.matmul %161, %159, %cst_120 {dimension_numbers = #tpu.dot_dimension_numbers<[1], [0], [0], [1], [0, 0, 1, 1], [], []>} : vector<32x32xf32>, vector<32x256xf32>, vector<32x256xf32> -> vector<32x256xf32>
    %163 = arith.addf %154, %162 : vector<32x256xf32>
    %c239_i32_121 = arith.constant 239 : i32
    %164 = tpu.dynamic_rotate %95 by %c239_i32_121 dim 1 : vector<32x256xf32>, i32 -> vector<32x256xf32>
    %c8_122 = arith.constant 8 : index
    %c0_123 = arith.constant 0 : index
    %c0_124 = arith.constant 0 : index
    %165 = vector.load %arg2[%c8_122, %c0_123, %c0_124] : memref<9x1x256xf32, #tpu.memory_space<vmem>>, vector<1x1x256xf32>
    %166 = vector.shape_cast %165 : vector<1x1x256xf32> to vector<1x256xf32>
    %167 = vector.broadcast %166 : vector<1x256xf32> to vector<32x256xf32>
    %168 = arith.mulf %164, %167 : vector<32x256xf32>
    %c0_125 = arith.constant 0 : index
    %c8_126 = arith.constant 8 : index
    %c0_127 = arith.constant 0 : index
    %c0_128 = arith.constant 0 : index
    %169 = vector.load %arg5[%c0_125, %c8_126, %c0_127, %c0_128] : memref<3x9x32x32xf32, #tpu.memory_space<vmem>>, vector<1x1x32x32xf32>
    %170 = vector.shape_cast %169 : vector<1x1x32x32xf32> to vector<32x32xf32>
    %cst_129 = arith.constant dense<0.000000e+00> : vector<32x256xf32>
    %171 = tpu.matmul %170, %168, %cst_129 {dimension_numbers = #tpu.dot_dimension_numbers<[1], [0], [0], [1], [0, 0, 1, 1], [], []>} : vector<32x32xf32>, vector<32x256xf32>, vector<32x256xf32> -> vector<32x256xf32>
    %172 = arith.addf %163, %171 : vector<32x256xf32>
    %c0_130 = arith.constant 0 : index
    %c0_131 = arith.constant 0 : index
    %c0_132 = arith.constant 0 : index
    %173 = vector.load %arg6[%c0_130, %c0_131, %c0_132] : memref<3x32x1xf32, #tpu.memory_space<vmem>>, vector<1x32x1xf32>
    %174 = vector.shape_cast %173 : vector<1x32x1xf32> to vector<32x1xf32>
    %175 = vector.broadcast %174 : vector<32x1xf32> to vector<32x256xf32>
    %176 = arith.addf %172, %175 : vector<32x256xf32>
    %cst_133 = arith.constant 0.000000e+00 : f32
    %177 = vector.broadcast %cst_133 : f32 to vector<32x256xf32>
    %178 = arith.maximumf %176, %177 : vector<32x256xf32>
    %c0_134 = arith.constant 0 : index
    %c0_135 = arith.constant 0 : index
    %179 = vector.load %arg10[%c0_134, %c0_135] : memref<32x256xf32, #tpu.memory_space<vmem>>, vector<32x256xf32>
    tpu.vector_store %arg10[%c0_134, %c0_135], %178 {strides = array<i32>} : memref<32x256xf32, #tpu.memory_space<vmem>>, vector<32x256xf32>,
    %c0_136 = arith.constant 0 : index
    %c0_137 = arith.constant 0 : index
    %180 = vector.load %arg10[%c0_136, %c0_137] : memref<32x256xf32, #tpu.memory_space<vmem>>, vector<32x256xf32>
    %cst_138 = arith.constant 0.000000e+00 : f32
    %181 = vector.broadcast %cst_138 : f32 to vector<32x256xf32>
    %c17_i32_139 = arith.constant 17 : i32
    %182 = tpu.dynamic_rotate %180 by %c17_i32_139 dim 1 : vector<32x256xf32>, i32 -> vector<32x256xf32>
    %c0_140 = arith.constant 0 : index
    %c0_141 = arith.constant 0 : index
    %c0_142 = arith.constant 0 : index
    %183 = vector.load %arg2[%c0_140, %c0_141, %c0_142] : memref<9x1x256xf32, #tpu.memory_space<vmem>>, vector<1x1x256xf32>
    %184 = vector.shape_cast %183 : vector<1x1x256xf32> to vector<1x256xf32>
    %185 = vector.broadcast %184 : vector<1x256xf32> to vector<32x256xf32>
    %186 = arith.mulf %182, %185 : vector<32x256xf32>
    %c1_143 = arith.constant 1 : index
    %c0_144 = arith.constant 0 : index
    %c0_145 = arith.constant 0 : index
    %c0_146 = arith.constant 0 : index
    %187 = vector.load %arg5[%c1_143, %c0_144, %c0_145, %c0_146] : memref<3x9x32x32xf32, #tpu.memory_space<vmem>>, vector<1x1x32x32xf32>
    %188 = vector.shape_cast %187 : vector<1x1x32x32xf32> to vector<32x32xf32>
    %cst_147 = arith.constant dense<0.000000e+00> : vector<32x256xf32>
    %189 = tpu.matmul %188, %186, %cst_147 {dimension_numbers = #tpu.dot_dimension_numbers<[1], [0], [0], [1], [0, 0, 1, 1], [], []>} : vector<32x32xf32>, vector<32x256xf32>, vector<32x256xf32> -> vector<32x256xf32>
    %190 = arith.addf %181, %189 : vector<32x256xf32>
    %c16_i32_148 = arith.constant 16 : i32
    %191 = tpu.dynamic_rotate %180 by %c16_i32_148 dim 1 : vector<32x256xf32>, i32 -> vector<32x256xf32>
    %c1_149 = arith.constant 1 : index
    %c0_150 = arith.constant 0 : index
    %c0_151 = arith.constant 0 : index
    %192 = vector.load %arg2[%c1_149, %c0_150, %c0_151] : memref<9x1x256xf32, #tpu.memory_space<vmem>>, vector<1x1x256xf32>
    %193 = vector.shape_cast %192 : vector<1x1x256xf32> to vector<1x256xf32>
    %194 = vector.broadcast %193 : vector<1x256xf32> to vector<32x256xf32>
    %195 = arith.mulf %191, %194 : vector<32x256xf32>
    %c1_152 = arith.constant 1 : index
    %c1_153 = arith.constant 1 : index
    %c0_154 = arith.constant 0 : index
    %c0_155 = arith.constant 0 : index
    %196 = vector.load %arg5[%c1_152, %c1_153, %c0_154, %c0_155] : memref<3x9x32x32xf32, #tpu.memory_space<vmem>>, vector<1x1x32x32xf32>
    %197 = vector.shape_cast %196 : vector<1x1x32x32xf32> to vector<32x32xf32>
    %cst_156 = arith.constant dense<0.000000e+00> : vector<32x256xf32>
    %198 = tpu.matmul %197, %195, %cst_156 {dimension_numbers = #tpu.dot_dimension_numbers<[1], [0], [0], [1], [0, 0, 1, 1], [], []>} : vector<32x32xf32>, vector<32x256xf32>, vector<32x256xf32> -> vector<32x256xf32>
    %199 = arith.addf %190, %198 : vector<32x256xf32>
    %c15_i32_157 = arith.constant 15 : i32
    %200 = tpu.dynamic_rotate %180 by %c15_i32_157 dim 1 : vector<32x256xf32>, i32 -> vector<32x256xf32>
    %c2_158 = arith.constant 2 : index
    %c0_159 = arith.constant 0 : index
    %c0_160 = arith.constant 0 : index
    %201 = vector.load %arg2[%c2_158, %c0_159, %c0_160] : memref<9x1x256xf32, #tpu.memory_space<vmem>>, vector<1x1x256xf32>
    %202 = vector.shape_cast %201 : vector<1x1x256xf32> to vector<1x256xf32>
    %203 = vector.broadcast %202 : vector<1x256xf32> to vector<32x256xf32>
    %204 = arith.mulf %200, %203 : vector<32x256xf32>
    %c1_161 = arith.constant 1 : index
    %c2_162 = arith.constant 2 : index
    %c0_163 = arith.constant 0 : index
    %c0_164 = arith.constant 0 : index
    %205 = vector.load %arg5[%c1_161, %c2_162, %c0_163, %c0_164] : memref<3x9x32x32xf32, #tpu.memory_space<vmem>>, vector<1x1x32x32xf32>
    %206 = vector.shape_cast %205 : vector<1x1x32x32xf32> to vector<32x32xf32>
    %cst_165 = arith.constant dense<0.000000e+00> : vector<32x256xf32>
    %207 = tpu.matmul %206, %204, %cst_165 {dimension_numbers = #tpu.dot_dimension_numbers<[1], [0], [0], [1], [0, 0, 1, 1], [], []>} : vector<32x32xf32>, vector<32x256xf32>, vector<32x256xf32> -> vector<32x256xf32>
    %208 = arith.addf %199, %207 : vector<32x256xf32>
    %c1_i32_166 = arith.constant 1 : i32
    %209 = tpu.dynamic_rotate %180 by %c1_i32_166 dim 1 : vector<32x256xf32>, i32 -> vector<32x256xf32>
    %c3_167 = arith.constant 3 : index
    %c0_168 = arith.constant 0 : index
    %c0_169 = arith.constant 0 : index
    %210 = vector.load %arg2[%c3_167, %c0_168, %c0_169] : memref<9x1x256xf32, #tpu.memory_space<vmem>>, vector<1x1x256xf32>
    %211 = vector.shape_cast %210 : vector<1x1x256xf32> to vector<1x256xf32>
    %212 = vector.broadcast %211 : vector<1x256xf32> to vector<32x256xf32>
    %213 = arith.mulf %209, %212 : vector<32x256xf32>
    %c1_170 = arith.constant 1 : index
    %c3_171 = arith.constant 3 : index
    %c0_172 = arith.constant 0 : index
    %c0_173 = arith.constant 0 : index
    %214 = vector.load %arg5[%c1_170, %c3_171, %c0_172, %c0_173] : memref<3x9x32x32xf32, #tpu.memory_space<vmem>>, vector<1x1x32x32xf32>
    %215 = vector.shape_cast %214 : vector<1x1x32x32xf32> to vector<32x32xf32>
    %cst_174 = arith.constant dense<0.000000e+00> : vector<32x256xf32>
    %216 = tpu.matmul %215, %213, %cst_174 {dimension_numbers = #tpu.dot_dimension_numbers<[1], [0], [0], [1], [0, 0, 1, 1], [], []>} : vector<32x32xf32>, vector<32x256xf32>, vector<32x256xf32> -> vector<32x256xf32>
    %217 = arith.addf %208, %216 : vector<32x256xf32>
    %c1_175 = arith.constant 1 : index
    %c4_176 = arith.constant 4 : index
    %c0_177 = arith.constant 0 : index
    %c0_178 = arith.constant 0 : index
    %218 = vector.load %arg5[%c1_175, %c4_176, %c0_177, %c0_178] : memref<3x9x32x32xf32, #tpu.memory_space<vmem>>, vector<1x1x32x32xf32>
    %219 = vector.shape_cast %218 : vector<1x1x32x32xf32> to vector<32x32xf32>
    %cst_179 = arith.constant dense<0.000000e+00> : vector<32x256xf32>
    %220 = tpu.matmul %219, %180, %cst_179 {dimension_numbers = #tpu.dot_dimension_numbers<[1], [0], [0], [1], [0, 0, 1, 1], [], []>} : vector<32x32xf32>, vector<32x256xf32>, vector<32x256xf32> -> vector<32x256xf32>
    %221 = arith.addf %217, %220 : vector<32x256xf32>
    %c255_i32_180 = arith.constant 255 : i32
    %222 = tpu.dynamic_rotate %180 by %c255_i32_180 dim 1 : vector<32x256xf32>, i32 -> vector<32x256xf32>
    %c5_181 = arith.constant 5 : index
    %c0_182 = arith.constant 0 : index
    %c0_183 = arith.constant 0 : index
    %223 = vector.load %arg2[%c5_181, %c0_182, %c0_183] : memref<9x1x256xf32, #tpu.memory_space<vmem>>, vector<1x1x256xf32>
    %224 = vector.shape_cast %223 : vector<1x1x256xf32> to vector<1x256xf32>
    %225 = vector.broadcast %224 : vector<1x256xf32> to vector<32x256xf32>
    %226 = arith.mulf %222, %225 : vector<32x256xf32>
    %c1_184 = arith.constant 1 : index
    %c5_185 = arith.constant 5 : index
    %c0_186 = arith.constant 0 : index
    %c0_187 = arith.constant 0 : index
    %227 = vector.load %arg5[%c1_184, %c5_185, %c0_186, %c0_187] : memref<3x9x32x32xf32, #tpu.memory_space<vmem>>, vector<1x1x32x32xf32>
    %228 = vector.shape_cast %227 : vector<1x1x32x32xf32> to vector<32x32xf32>
    %cst_188 = arith.constant dense<0.000000e+00> : vector<32x256xf32>
    %229 = tpu.matmul %228, %226, %cst_188 {dimension_numbers = #tpu.dot_dimension_numbers<[1], [0], [0], [1], [0, 0, 1, 1], [], []>} : vector<32x32xf32>, vector<32x256xf32>, vector<32x256xf32> -> vector<32x256xf32>
    %230 = arith.addf %221, %229 : vector<32x256xf32>
    %c241_i32_189 = arith.constant 241 : i32
    %231 = tpu.dynamic_rotate %180 by %c241_i32_189 dim 1 : vector<32x256xf32>, i32 -> vector<32x256xf32>
    %c6_190 = arith.constant 6 : index
    %c0_191 = arith.constant 0 : index
    %c0_192 = arith.constant 0 : index
    %232 = vector.load %arg2[%c6_190, %c0_191, %c0_192] : memref<9x1x256xf32, #tpu.memory_space<vmem>>, vector<1x1x256xf32>
    %233 = vector.shape_cast %232 : vector<1x1x256xf32> to vector<1x256xf32>
    %234 = vector.broadcast %233 : vector<1x256xf32> to vector<32x256xf32>
    %235 = arith.mulf %231, %234 : vector<32x256xf32>
    %c1_193 = arith.constant 1 : index
    %c6_194 = arith.constant 6 : index
    %c0_195 = arith.constant 0 : index
    %c0_196 = arith.constant 0 : index
    %236 = vector.load %arg5[%c1_193, %c6_194, %c0_195, %c0_196] : memref<3x9x32x32xf32, #tpu.memory_space<vmem>>, vector<1x1x32x32xf32>
    %237 = vector.shape_cast %236 : vector<1x1x32x32xf32> to vector<32x32xf32>
    %cst_197 = arith.constant dense<0.000000e+00> : vector<32x256xf32>
    %238 = tpu.matmul %237, %235, %cst_197 {dimension_numbers = #tpu.dot_dimension_numbers<[1], [0], [0], [1], [0, 0, 1, 1], [], []>} : vector<32x32xf32>, vector<32x256xf32>, vector<32x256xf32> -> vector<32x256xf32>
    %239 = arith.addf %230, %238 : vector<32x256xf32>
    %c240_i32_198 = arith.constant 240 : i32
    %240 = tpu.dynamic_rotate %180 by %c240_i32_198 dim 1 : vector<32x256xf32>, i32 -> vector<32x256xf32>
    %c7_199 = arith.constant 7 : index
    %c0_200 = arith.constant 0 : index
    %c0_201 = arith.constant 0 : index
    %241 = vector.load %arg2[%c7_199, %c0_200, %c0_201] : memref<9x1x256xf32, #tpu.memory_space<vmem>>, vector<1x1x256xf32>
    %242 = vector.shape_cast %241 : vector<1x1x256xf32> to vector<1x256xf32>
    %243 = vector.broadcast %242 : vector<1x256xf32> to vector<32x256xf32>
    %244 = arith.mulf %240, %243 : vector<32x256xf32>
    %c1_202 = arith.constant 1 : index
    %c7_203 = arith.constant 7 : index
    %c0_204 = arith.constant 0 : index
    %c0_205 = arith.constant 0 : index
    %245 = vector.load %arg5[%c1_202, %c7_203, %c0_204, %c0_205] : memref<3x9x32x32xf32, #tpu.memory_space<vmem>>, vector<1x1x32x32xf32>
    %246 = vector.shape_cast %245 : vector<1x1x32x32xf32> to vector<32x32xf32>
    %cst_206 = arith.constant dense<0.000000e+00> : vector<32x256xf32>
    %247 = tpu.matmul %246, %244, %cst_206 {dimension_numbers = #tpu.dot_dimension_numbers<[1], [0], [0], [1], [0, 0, 1, 1], [], []>} : vector<32x32xf32>, vector<32x256xf32>, vector<32x256xf32> -> vector<32x256xf32>
    %248 = arith.addf %239, %247 : vector<32x256xf32>
    %c239_i32_207 = arith.constant 239 : i32
    %249 = tpu.dynamic_rotate %180 by %c239_i32_207 dim 1 : vector<32x256xf32>, i32 -> vector<32x256xf32>
    %c8_208 = arith.constant 8 : index
    %c0_209 = arith.constant 0 : index
    %c0_210 = arith.constant 0 : index
    %250 = vector.load %arg2[%c8_208, %c0_209, %c0_210] : memref<9x1x256xf32, #tpu.memory_space<vmem>>, vector<1x1x256xf32>
    %251 = vector.shape_cast %250 : vector<1x1x256xf32> to vector<1x256xf32>
    %252 = vector.broadcast %251 : vector<1x256xf32> to vector<32x256xf32>
    %253 = arith.mulf %249, %252 : vector<32x256xf32>
    %c1_211 = arith.constant 1 : index
    %c8_212 = arith.constant 8 : index
    %c0_213 = arith.constant 0 : index
    %c0_214 = arith.constant 0 : index
    %254 = vector.load %arg5[%c1_211, %c8_212, %c0_213, %c0_214] : memref<3x9x32x32xf32, #tpu.memory_space<vmem>>, vector<1x1x32x32xf32>
    %255 = vector.shape_cast %254 : vector<1x1x32x32xf32> to vector<32x32xf32>
    %cst_215 = arith.constant dense<0.000000e+00> : vector<32x256xf32>
    %256 = tpu.matmul %255, %253, %cst_215 {dimension_numbers = #tpu.dot_dimension_numbers<[1], [0], [0], [1], [0, 0, 1, 1], [], []>} : vector<32x32xf32>, vector<32x256xf32>, vector<32x256xf32> -> vector<32x256xf32>
    %257 = arith.addf %248, %256 : vector<32x256xf32>
    %c1_216 = arith.constant 1 : index
    %c0_217 = arith.constant 0 : index
    %c0_218 = arith.constant 0 : index
    %258 = vector.load %arg6[%c1_216, %c0_217, %c0_218] : memref<3x32x1xf32, #tpu.memory_space<vmem>>, vector<1x32x1xf32>
    %259 = vector.shape_cast %258 : vector<1x32x1xf32> to vector<32x1xf32>
    %260 = vector.broadcast %259 : vector<32x1xf32> to vector<32x256xf32>
    %261 = arith.addf %257, %260 : vector<32x256xf32>
    %cst_219 = arith.constant 0.000000e+00 : f32
    %262 = vector.broadcast %cst_219 : f32 to vector<32x256xf32>
    %263 = arith.maximumf %261, %262 : vector<32x256xf32>
    %c0_220 = arith.constant 0 : index
    %c0_221 = arith.constant 0 : index
    %264 = vector.load %arg10[%c0_220, %c0_221] : memref<32x256xf32, #tpu.memory_space<vmem>>, vector<32x256xf32>
    tpu.vector_store %arg10[%c0_220, %c0_221], %263 {strides = array<i32>} : memref<32x256xf32, #tpu.memory_space<vmem>>, vector<32x256xf32>,
    %c0_222 = arith.constant 0 : index
    %c0_223 = arith.constant 0 : index
    %265 = vector.load %arg10[%c0_222, %c0_223] : memref<32x256xf32, #tpu.memory_space<vmem>>, vector<32x256xf32>
    %cst_224 = arith.constant 0.000000e+00 : f32
    %266 = vector.broadcast %cst_224 : f32 to vector<32x256xf32>
    %c17_i32_225 = arith.constant 17 : i32
    %267 = tpu.dynamic_rotate %265 by %c17_i32_225 dim 1 : vector<32x256xf32>, i32 -> vector<32x256xf32>
    %c0_226 = arith.constant 0 : index
    %c0_227 = arith.constant 0 : index
    %c0_228 = arith.constant 0 : index
    %268 = vector.load %arg2[%c0_226, %c0_227, %c0_228] : memref<9x1x256xf32, #tpu.memory_space<vmem>>, vector<1x1x256xf32>
    %269 = vector.shape_cast %268 : vector<1x1x256xf32> to vector<1x256xf32>
    %270 = vector.broadcast %269 : vector<1x256xf32> to vector<32x256xf32>
    %271 = arith.mulf %267, %270 : vector<32x256xf32>
    %c2_229 = arith.constant 2 : index
    %c0_230 = arith.constant 0 : index
    %c0_231 = arith.constant 0 : index
    %c0_232 = arith.constant 0 : index
    %272 = vector.load %arg5[%c2_229, %c0_230, %c0_231, %c0_232] : memref<3x9x32x32xf32, #tpu.memory_space<vmem>>, vector<1x1x32x32xf32>
    %273 = vector.shape_cast %272 : vector<1x1x32x32xf32> to vector<32x32xf32>
    %cst_233 = arith.constant dense<0.000000e+00> : vector<32x256xf32>
    %274 = tpu.matmul %273, %271, %cst_233 {dimension_numbers = #tpu.dot_dimension_numbers<[1], [0], [0], [1], [0, 0, 1, 1], [], []>} : vector<32x32xf32>, vector<32x256xf32>, vector<32x256xf32> -> vector<32x256xf32>
    %275 = arith.addf %266, %274 : vector<32x256xf32>
    %c16_i32_234 = arith.constant 16 : i32
    %276 = tpu.dynamic_rotate %265 by %c16_i32_234 dim 1 : vector<32x256xf32>, i32 -> vector<32x256xf32>
    %c1_235 = arith.constant 1 : index
    %c0_236 = arith.constant 0 : index
    %c0_237 = arith.constant 0 : index
    %277 = vector.load %arg2[%c1_235, %c0_236, %c0_237] : memref<9x1x256xf32, #tpu.memory_space<vmem>>, vector<1x1x256xf32>
    %278 = vector.shape_cast %277 : vector<1x1x256xf32> to vector<1x256xf32>
    %279 = vector.broadcast %278 : vector<1x256xf32> to vector<32x256xf32>
    %280 = arith.mulf %276, %279 : vector<32x256xf32>
    %c2_238 = arith.constant 2 : index
    %c1_239 = arith.constant 1 : index
    %c0_240 = arith.constant 0 : index
    %c0_241 = arith.constant 0 : index
    %281 = vector.load %arg5[%c2_238, %c1_239, %c0_240, %c0_241] : memref<3x9x32x32xf32, #tpu.memory_space<vmem>>, vector<1x1x32x32xf32>
    %282 = vector.shape_cast %281 : vector<1x1x32x32xf32> to vector<32x32xf32>
    %cst_242 = arith.constant dense<0.000000e+00> : vector<32x256xf32>
    %283 = tpu.matmul %282, %280, %cst_242 {dimension_numbers = #tpu.dot_dimension_numbers<[1], [0], [0], [1], [0, 0, 1, 1], [], []>} : vector<32x32xf32>, vector<32x256xf32>, vector<32x256xf32> -> vector<32x256xf32>
    %284 = arith.addf %275, %283 : vector<32x256xf32>
    %c15_i32_243 = arith.constant 15 : i32
    %285 = tpu.dynamic_rotate %265 by %c15_i32_243 dim 1 : vector<32x256xf32>, i32 -> vector<32x256xf32>
    %c2_244 = arith.constant 2 : index
    %c0_245 = arith.constant 0 : index
    %c0_246 = arith.constant 0 : index
    %286 = vector.load %arg2[%c2_244, %c0_245, %c0_246] : memref<9x1x256xf32, #tpu.memory_space<vmem>>, vector<1x1x256xf32>
    %287 = vector.shape_cast %286 : vector<1x1x256xf32> to vector<1x256xf32>
    %288 = vector.broadcast %287 : vector<1x256xf32> to vector<32x256xf32>
    %289 = arith.mulf %285, %288 : vector<32x256xf32>
    %c2_247 = arith.constant 2 : index
    %c2_248 = arith.constant 2 : index
    %c0_249 = arith.constant 0 : index
    %c0_250 = arith.constant 0 : index
    %290 = vector.load %arg5[%c2_247, %c2_248, %c0_249, %c0_250] : memref<3x9x32x32xf32, #tpu.memory_space<vmem>>, vector<1x1x32x32xf32>
    %291 = vector.shape_cast %290 : vector<1x1x32x32xf32> to vector<32x32xf32>
    %cst_251 = arith.constant dense<0.000000e+00> : vector<32x256xf32>
    %292 = tpu.matmul %291, %289, %cst_251 {dimension_numbers = #tpu.dot_dimension_numbers<[1], [0], [0], [1], [0, 0, 1, 1], [], []>} : vector<32x32xf32>, vector<32x256xf32>, vector<32x256xf32> -> vector<32x256xf32>
    %293 = arith.addf %284, %292 : vector<32x256xf32>
    %c1_i32_252 = arith.constant 1 : i32
    %294 = tpu.dynamic_rotate %265 by %c1_i32_252 dim 1 : vector<32x256xf32>, i32 -> vector<32x256xf32>
    %c3_253 = arith.constant 3 : index
    %c0_254 = arith.constant 0 : index
    %c0_255 = arith.constant 0 : index
    %295 = vector.load %arg2[%c3_253, %c0_254, %c0_255] : memref<9x1x256xf32, #tpu.memory_space<vmem>>, vector<1x1x256xf32>
    %296 = vector.shape_cast %295 : vector<1x1x256xf32> to vector<1x256xf32>
    %297 = vector.broadcast %296 : vector<1x256xf32> to vector<32x256xf32>
    %298 = arith.mulf %294, %297 : vector<32x256xf32>
    %c2_256 = arith.constant 2 : index
    %c3_257 = arith.constant 3 : index
    %c0_258 = arith.constant 0 : index
    %c0_259 = arith.constant 0 : index
    %299 = vector.load %arg5[%c2_256, %c3_257, %c0_258, %c0_259] : memref<3x9x32x32xf32, #tpu.memory_space<vmem>>, vector<1x1x32x32xf32>
    %300 = vector.shape_cast %299 : vector<1x1x32x32xf32> to vector<32x32xf32>
    %cst_260 = arith.constant dense<0.000000e+00> : vector<32x256xf32>
    %301 = tpu.matmul %300, %298, %cst_260 {dimension_numbers = #tpu.dot_dimension_numbers<[1], [0], [0], [1], [0, 0, 1, 1], [], []>} : vector<32x32xf32>, vector<32x256xf32>, vector<32x256xf32> -> vector<32x256xf32>
    %302 = arith.addf %293, %301 : vector<32x256xf32>
    %c2_261 = arith.constant 2 : index
    %c4_262 = arith.constant 4 : index
    %c0_263 = arith.constant 0 : index
    %c0_264 = arith.constant 0 : index
    %303 = vector.load %arg5[%c2_261, %c4_262, %c0_263, %c0_264] : memref<3x9x32x32xf32, #tpu.memory_space<vmem>>, vector<1x1x32x32xf32>
    %304 = vector.shape_cast %303 : vector<1x1x32x32xf32> to vector<32x32xf32>
    %cst_265 = arith.constant dense<0.000000e+00> : vector<32x256xf32>
    %305 = tpu.matmul %304, %265, %cst_265 {dimension_numbers = #tpu.dot_dimension_numbers<[1], [0], [0], [1], [0, 0, 1, 1], [], []>} : vector<32x32xf32>, vector<32x256xf32>, vector<32x256xf32> -> vector<32x256xf32>
    %306 = arith.addf %302, %305 : vector<32x256xf32>
    %c255_i32_266 = arith.constant 255 : i32
    %307 = tpu.dynamic_rotate %265 by %c255_i32_266 dim 1 : vector<32x256xf32>, i32 -> vector<32x256xf32>
    %c5_267 = arith.constant 5 : index
    %c0_268 = arith.constant 0 : index
    %c0_269 = arith.constant 0 : index
    %308 = vector.load %arg2[%c5_267, %c0_268, %c0_269] : memref<9x1x256xf32, #tpu.memory_space<vmem>>, vector<1x1x256xf32>
    %309 = vector.shape_cast %308 : vector<1x1x256xf32> to vector<1x256xf32>
    %310 = vector.broadcast %309 : vector<1x256xf32> to vector<32x256xf32>
    %311 = arith.mulf %307, %310 : vector<32x256xf32>
    %c2_270 = arith.constant 2 : index
    %c5_271 = arith.constant 5 : index
    %c0_272 = arith.constant 0 : index
    %c0_273 = arith.constant 0 : index
    %312 = vector.load %arg5[%c2_270, %c5_271, %c0_272, %c0_273] : memref<3x9x32x32xf32, #tpu.memory_space<vmem>>, vector<1x1x32x32xf32>
    %313 = vector.shape_cast %312 : vector<1x1x32x32xf32> to vector<32x32xf32>
    %cst_274 = arith.constant dense<0.000000e+00> : vector<32x256xf32>
    %314 = tpu.matmul %313, %311, %cst_274 {dimension_numbers = #tpu.dot_dimension_numbers<[1], [0], [0], [1], [0, 0, 1, 1], [], []>} : vector<32x32xf32>, vector<32x256xf32>, vector<32x256xf32> -> vector<32x256xf32>
    %315 = arith.addf %306, %314 : vector<32x256xf32>
    %c241_i32_275 = arith.constant 241 : i32
    %316 = tpu.dynamic_rotate %265 by %c241_i32_275 dim 1 : vector<32x256xf32>, i32 -> vector<32x256xf32>
    %c6_276 = arith.constant 6 : index
    %c0_277 = arith.constant 0 : index
    %c0_278 = arith.constant 0 : index
    %317 = vector.load %arg2[%c6_276, %c0_277, %c0_278] : memref<9x1x256xf32, #tpu.memory_space<vmem>>, vector<1x1x256xf32>
    %318 = vector.shape_cast %317 : vector<1x1x256xf32> to vector<1x256xf32>
    %319 = vector.broadcast %318 : vector<1x256xf32> to vector<32x256xf32>
    %320 = arith.mulf %316, %319 : vector<32x256xf32>
    %c2_279 = arith.constant 2 : index
    %c6_280 = arith.constant 6 : index
    %c0_281 = arith.constant 0 : index
    %c0_282 = arith.constant 0 : index
    %321 = vector.load %arg5[%c2_279, %c6_280, %c0_281, %c0_282] : memref<3x9x32x32xf32, #tpu.memory_space<vmem>>, vector<1x1x32x32xf32>
    %322 = vector.shape_cast %321 : vector<1x1x32x32xf32> to vector<32x32xf32>
    %cst_283 = arith.constant dense<0.000000e+00> : vector<32x256xf32>
    %323 = tpu.matmul %322, %320, %cst_283 {dimension_numbers = #tpu.dot_dimension_numbers<[1], [0], [0], [1], [0, 0, 1, 1], [], []>} : vector<32x32xf32>, vector<32x256xf32>, vector<32x256xf32> -> vector<32x256xf32>
    %324 = arith.addf %315, %323 : vector<32x256xf32>
    %c240_i32_284 = arith.constant 240 : i32
    %325 = tpu.dynamic_rotate %265 by %c240_i32_284 dim 1 : vector<32x256xf32>, i32 -> vector<32x256xf32>
    %c7_285 = arith.constant 7 : index
    %c0_286 = arith.constant 0 : index
    %c0_287 = arith.constant 0 : index
    %326 = vector.load %arg2[%c7_285, %c0_286, %c0_287] : memref<9x1x256xf32, #tpu.memory_space<vmem>>, vector<1x1x256xf32>
    %327 = vector.shape_cast %326 : vector<1x1x256xf32> to vector<1x256xf32>
    %328 = vector.broadcast %327 : vector<1x256xf32> to vector<32x256xf32>
    %329 = arith.mulf %325, %328 : vector<32x256xf32>
    %c2_288 = arith.constant 2 : index
    %c7_289 = arith.constant 7 : index
    %c0_290 = arith.constant 0 : index
    %c0_291 = arith.constant 0 : index
    %330 = vector.load %arg5[%c2_288, %c7_289, %c0_290, %c0_291] : memref<3x9x32x32xf32, #tpu.memory_space<vmem>>, vector<1x1x32x32xf32>
    %331 = vector.shape_cast %330 : vector<1x1x32x32xf32> to vector<32x32xf32>
    %cst_292 = arith.constant dense<0.000000e+00> : vector<32x256xf32>
    %332 = tpu.matmul %331, %329, %cst_292 {dimension_numbers = #tpu.dot_dimension_numbers<[1], [0], [0], [1], [0, 0, 1, 1], [], []>} : vector<32x32xf32>, vector<32x256xf32>, vector<32x256xf32> -> vector<32x256xf32>
    %333 = arith.addf %324, %332 : vector<32x256xf32>
    %c239_i32_293 = arith.constant 239 : i32
    %334 = tpu.dynamic_rotate %265 by %c239_i32_293 dim 1 : vector<32x256xf32>, i32 -> vector<32x256xf32>
    %c8_294 = arith.constant 8 : index
    %c0_295 = arith.constant 0 : index
    %c0_296 = arith.constant 0 : index
    %335 = vector.load %arg2[%c8_294, %c0_295, %c0_296] : memref<9x1x256xf32, #tpu.memory_space<vmem>>, vector<1x1x256xf32>
    %336 = vector.shape_cast %335 : vector<1x1x256xf32> to vector<1x256xf32>
    %337 = vector.broadcast %336 : vector<1x256xf32> to vector<32x256xf32>
    %338 = arith.mulf %334, %337 : vector<32x256xf32>
    %c2_297 = arith.constant 2 : index
    %c8_298 = arith.constant 8 : index
    %c0_299 = arith.constant 0 : index
    %c0_300 = arith.constant 0 : index
    %339 = vector.load %arg5[%c2_297, %c8_298, %c0_299, %c0_300] : memref<3x9x32x32xf32, #tpu.memory_space<vmem>>, vector<1x1x32x32xf32>
    %340 = vector.shape_cast %339 : vector<1x1x32x32xf32> to vector<32x32xf32>
    %cst_301 = arith.constant dense<0.000000e+00> : vector<32x256xf32>
    %341 = tpu.matmul %340, %338, %cst_301 {dimension_numbers = #tpu.dot_dimension_numbers<[1], [0], [0], [1], [0, 0, 1, 1], [], []>} : vector<32x32xf32>, vector<32x256xf32>, vector<32x256xf32> -> vector<32x256xf32>
    %342 = arith.addf %333, %341 : vector<32x256xf32>
    %c2_302 = arith.constant 2 : index
    %c0_303 = arith.constant 0 : index
    %c0_304 = arith.constant 0 : index
    %343 = vector.load %arg6[%c2_302, %c0_303, %c0_304] : memref<3x32x1xf32, #tpu.memory_space<vmem>>, vector<1x32x1xf32>
    %344 = vector.shape_cast %343 : vector<1x32x1xf32> to vector<32x1xf32>
    %345 = vector.broadcast %344 : vector<32x1xf32> to vector<32x256xf32>
    %346 = arith.addf %342, %345 : vector<32x256xf32>
    %cst_305 = arith.constant 0.000000e+00 : f32
    %347 = vector.broadcast %cst_305 : f32 to vector<32x256xf32>
    %348 = arith.maximumf %346, %347 : vector<32x256xf32>
    %c0_306 = arith.constant 0 : index
    %c0_307 = arith.constant 0 : index
    %349 = vector.load %arg10[%c0_306, %c0_307] : memref<32x256xf32, #tpu.memory_space<vmem>>, vector<32x256xf32>
    tpu.vector_store %arg10[%c0_306, %c0_307], %348 {strides = array<i32>} : memref<32x256xf32, #tpu.memory_space<vmem>>, vector<32x256xf32>,
    %c0_308 = arith.constant 0 : index
    %c0_309 = arith.constant 0 : index
    %350 = vector.load %arg10[%c0_308, %c0_309] : memref<32x256xf32, #tpu.memory_space<vmem>>, vector<32x256xf32>
    %cst_310 = arith.constant 0.000000e+00 : f32
    %351 = vector.broadcast %cst_310 : f32 to vector<1x256xf32>
    %c17_i32_311 = arith.constant 17 : i32
    %352 = tpu.dynamic_rotate %350 by %c17_i32_311 dim 1 : vector<32x256xf32>, i32 -> vector<32x256xf32>
    %c0_312 = arith.constant 0 : index
    %c0_313 = arith.constant 0 : index
    %c0_314 = arith.constant 0 : index
    %353 = vector.load %arg2[%c0_312, %c0_313, %c0_314] : memref<9x1x256xf32, #tpu.memory_space<vmem>>, vector<1x1x256xf32>
    %354 = vector.shape_cast %353 : vector<1x1x256xf32> to vector<1x256xf32>
    %355 = vector.broadcast %354 : vector<1x256xf32> to vector<32x256xf32>
    %356 = arith.mulf %352, %355 : vector<32x256xf32>
    %c0_315 = arith.constant 0 : index
    %c0_316 = arith.constant 0 : index
    %c0_317 = arith.constant 0 : index
    %357 = vector.load %arg7[%c0_315, %c0_316, %c0_317] : memref<9x32x1xf32, #tpu.memory_space<vmem>>, vector<1x32x1xf32>
    %358 = vector.shape_cast %357 : vector<1x32x1xf32> to vector<32x1xf32>
    %359 = vector.broadcast %358 : vector<32x1xf32> to vector<32x256xf32>
    %360 = arith.mulf %359, %356 : vector<32x256xf32>
    %cst_318 = arith.constant dense<0.000000e+00> : vector<256xf32>
    %361 = vector.multi_reduction <add>, %360, %cst_318 [0] : vector<32x256xf32> to vector<256xf32>
    %362 = vector.shape_cast %361 : vector<256xf32> to vector<1x256xf32>
    %363 = arith.addf %351, %362 : vector<1x256xf32>
    %c16_i32_319 = arith.constant 16 : i32
    %364 = tpu.dynamic_rotate %350 by %c16_i32_319 dim 1 : vector<32x256xf32>, i32 -> vector<32x256xf32>
    %c1_320 = arith.constant 1 : index
    %c0_321 = arith.constant 0 : index
    %c0_322 = arith.constant 0 : index
    %365 = vector.load %arg2[%c1_320, %c0_321, %c0_322] : memref<9x1x256xf32, #tpu.memory_space<vmem>>, vector<1x1x256xf32>
    %366 = vector.shape_cast %365 : vector<1x1x256xf32> to vector<1x256xf32>
    %367 = vector.broadcast %366 : vector<1x256xf32> to vector<32x256xf32>
    %368 = arith.mulf %364, %367 : vector<32x256xf32>
    %c1_323 = arith.constant 1 : index
    %c0_324 = arith.constant 0 : index
    %c0_325 = arith.constant 0 : index
    %369 = vector.load %arg7[%c1_323, %c0_324, %c0_325] : memref<9x32x1xf32, #tpu.memory_space<vmem>>, vector<1x32x1xf32>
    %370 = vector.shape_cast %369 : vector<1x32x1xf32> to vector<32x1xf32>
    %371 = vector.broadcast %370 : vector<32x1xf32> to vector<32x256xf32>
    %372 = arith.mulf %371, %368 : vector<32x256xf32>
    %cst_326 = arith.constant dense<0.000000e+00> : vector<256xf32>
    %373 = vector.multi_reduction <add>, %372, %cst_326 [0] : vector<32x256xf32> to vector<256xf32>
    %374 = vector.shape_cast %373 : vector<256xf32> to vector<1x256xf32>
    %375 = arith.addf %363, %374 : vector<1x256xf32>
    %c15_i32_327 = arith.constant 15 : i32
    %376 = tpu.dynamic_rotate %350 by %c15_i32_327 dim 1 : vector<32x256xf32>, i32 -> vector<32x256xf32>
    %c2_328 = arith.constant 2 : index
    %c0_329 = arith.constant 0 : index
    %c0_330 = arith.constant 0 : index
    %377 = vector.load %arg2[%c2_328, %c0_329, %c0_330] : memref<9x1x256xf32, #tpu.memory_space<vmem>>, vector<1x1x256xf32>
    %378 = vector.shape_cast %377 : vector<1x1x256xf32> to vector<1x256xf32>
    %379 = vector.broadcast %378 : vector<1x256xf32> to vector<32x256xf32>
    %380 = arith.mulf %376, %379 : vector<32x256xf32>
    %c2_331 = arith.constant 2 : index
    %c0_332 = arith.constant 0 : index
    %c0_333 = arith.constant 0 : index
    %381 = vector.load %arg7[%c2_331, %c0_332, %c0_333] : memref<9x32x1xf32, #tpu.memory_space<vmem>>, vector<1x32x1xf32>
    %382 = vector.shape_cast %381 : vector<1x32x1xf32> to vector<32x1xf32>
    %383 = vector.broadcast %382 : vector<32x1xf32> to vector<32x256xf32>
    %384 = arith.mulf %383, %380 : vector<32x256xf32>
    %cst_334 = arith.constant dense<0.000000e+00> : vector<256xf32>
    %385 = vector.multi_reduction <add>, %384, %cst_334 [0] : vector<32x256xf32> to vector<256xf32>
    %386 = vector.shape_cast %385 : vector<256xf32> to vector<1x256xf32>
    %387 = arith.addf %375, %386 : vector<1x256xf32>
    %c1_i32_335 = arith.constant 1 : i32
    %388 = tpu.dynamic_rotate %350 by %c1_i32_335 dim 1 : vector<32x256xf32>, i32 -> vector<32x256xf32>
    %c3_336 = arith.constant 3 : index
    %c0_337 = arith.constant 0 : index
    %c0_338 = arith.constant 0 : index
    %389 = vector.load %arg2[%c3_336, %c0_337, %c0_338] : memref<9x1x256xf32, #tpu.memory_space<vmem>>, vector<1x1x256xf32>
    %390 = vector.shape_cast %389 : vector<1x1x256xf32> to vector<1x256xf32>
    %391 = vector.broadcast %390 : vector<1x256xf32> to vector<32x256xf32>
    %392 = arith.mulf %388, %391 : vector<32x256xf32>
    %c3_339 = arith.constant 3 : index
    %c0_340 = arith.constant 0 : index
    %c0_341 = arith.constant 0 : index
    %393 = vector.load %arg7[%c3_339, %c0_340, %c0_341] : memref<9x32x1xf32, #tpu.memory_space<vmem>>, vector<1x32x1xf32>
    %394 = vector.shape_cast %393 : vector<1x32x1xf32> to vector<32x1xf32>
    %395 = vector.broadcast %394 : vector<32x1xf32> to vector<32x256xf32>
    %396 = arith.mulf %395, %392 : vector<32x256xf32>
    %cst_342 = arith.constant dense<0.000000e+00> : vector<256xf32>
    %397 = vector.multi_reduction <add>, %396, %cst_342 [0] : vector<32x256xf32> to vector<256xf32>
    %398 = vector.shape_cast %397 : vector<256xf32> to vector<1x256xf32>
    %399 = arith.addf %387, %398 : vector<1x256xf32>
    %c4_343 = arith.constant 4 : index
    %c0_344 = arith.constant 0 : index
    %c0_345 = arith.constant 0 : index
    %400 = vector.load %arg7[%c4_343, %c0_344, %c0_345] : memref<9x32x1xf32, #tpu.memory_space<vmem>>, vector<1x32x1xf32>
    %401 = vector.shape_cast %400 : vector<1x32x1xf32> to vector<32x1xf32>
    %402 = vector.broadcast %401 : vector<32x1xf32> to vector<32x256xf32>
    %403 = arith.mulf %402, %350 : vector<32x256xf32>
    %cst_346 = arith.constant dense<0.000000e+00> : vector<256xf32>
    %404 = vector.multi_reduction <add>, %403, %cst_346 [0] : vector<32x256xf32> to vector<256xf32>
    %405 = vector.shape_cast %404 : vector<256xf32> to vector<1x256xf32>
    %406 = arith.addf %399, %405 : vector<1x256xf32>
    %c255_i32_347 = arith.constant 255 : i32
    %407 = tpu.dynamic_rotate %350 by %c255_i32_347 dim 1 : vector<32x256xf32>, i32 -> vector<32x256xf32>
    %c5_348 = arith.constant 5 : index
    %c0_349 = arith.constant 0 : index
    %c0_350 = arith.constant 0 : index
    %408 = vector.load %arg2[%c5_348, %c0_349, %c0_350] : memref<9x1x256xf32, #tpu.memory_space<vmem>>, vector<1x1x256xf32>
    %409 = vector.shape_cast %408 : vector<1x1x256xf32> to vector<1x256xf32>
    %410 = vector.broadcast %409 : vector<1x256xf32> to vector<32x256xf32>
    %411 = arith.mulf %407, %410 : vector<32x256xf32>
    %c5_351 = arith.constant 5 : index
    %c0_352 = arith.constant 0 : index
    %c0_353 = arith.constant 0 : index
    %412 = vector.load %arg7[%c5_351, %c0_352, %c0_353] : memref<9x32x1xf32, #tpu.memory_space<vmem>>, vector<1x32x1xf32>
    %413 = vector.shape_cast %412 : vector<1x32x1xf32> to vector<32x1xf32>
    %414 = vector.broadcast %413 : vector<32x1xf32> to vector<32x256xf32>
    %415 = arith.mulf %414, %411 : vector<32x256xf32>
    %cst_354 = arith.constant dense<0.000000e+00> : vector<256xf32>
    %416 = vector.multi_reduction <add>, %415, %cst_354 [0] : vector<32x256xf32> to vector<256xf32>
    %417 = vector.shape_cast %416 : vector<256xf32> to vector<1x256xf32>
    %418 = arith.addf %406, %417 : vector<1x256xf32>
    %c241_i32_355 = arith.constant 241 : i32
    %419 = tpu.dynamic_rotate %350 by %c241_i32_355 dim 1 : vector<32x256xf32>, i32 -> vector<32x256xf32>
    %c6_356 = arith.constant 6 : index
    %c0_357 = arith.constant 0 : index
    %c0_358 = arith.constant 0 : index
    %420 = vector.load %arg2[%c6_356, %c0_357, %c0_358] : memref<9x1x256xf32, #tpu.memory_space<vmem>>, vector<1x1x256xf32>
    %421 = vector.shape_cast %420 : vector<1x1x256xf32> to vector<1x256xf32>
    %422 = vector.broadcast %421 : vector<1x256xf32> to vector<32x256xf32>
    %423 = arith.mulf %419, %422 : vector<32x256xf32>
    %c6_359 = arith.constant 6 : index
    %c0_360 = arith.constant 0 : index
    %c0_361 = arith.constant 0 : index
    %424 = vector.load %arg7[%c6_359, %c0_360, %c0_361] : memref<9x32x1xf32, #tpu.memory_space<vmem>>, vector<1x32x1xf32>
    %425 = vector.shape_cast %424 : vector<1x32x1xf32> to vector<32x1xf32>
    %426 = vector.broadcast %425 : vector<32x1xf32> to vector<32x256xf32>
    %427 = arith.mulf %426, %423 : vector<32x256xf32>
    %cst_362 = arith.constant dense<0.000000e+00> : vector<256xf32>
    %428 = vector.multi_reduction <add>, %427, %cst_362 [0] : vector<32x256xf32> to vector<256xf32>
    %429 = vector.shape_cast %428 : vector<256xf32> to vector<1x256xf32>
    %430 = arith.addf %418, %429 : vector<1x256xf32>
    %c240_i32_363 = arith.constant 240 : i32
    %431 = tpu.dynamic_rotate %350 by %c240_i32_363 dim 1 : vector<32x256xf32>, i32 -> vector<32x256xf32>
    %c7_364 = arith.constant 7 : index
    %c0_365 = arith.constant 0 : index
    %c0_366 = arith.constant 0 : index
    %432 = vector.load %arg2[%c7_364, %c0_365, %c0_366] : memref<9x1x256xf32, #tpu.memory_space<vmem>>, vector<1x1x256xf32>
    %433 = vector.shape_cast %432 : vector<1x1x256xf32> to vector<1x256xf32>
    %434 = vector.broadcast %433 : vector<1x256xf32> to vector<32x256xf32>
    %435 = arith.mulf %431, %434 : vector<32x256xf32>
    %c7_367 = arith.constant 7 : index
    %c0_368 = arith.constant 0 : index
    %c0_369 = arith.constant 0 : index
    %436 = vector.load %arg7[%c7_367, %c0_368, %c0_369] : memref<9x32x1xf32, #tpu.memory_space<vmem>>, vector<1x32x1xf32>
    %437 = vector.shape_cast %436 : vector<1x32x1xf32> to vector<32x1xf32>
    %438 = vector.broadcast %437 : vector<32x1xf32> to vector<32x256xf32>
    %439 = arith.mulf %438, %435 : vector<32x256xf32>
    %cst_370 = arith.constant dense<0.000000e+00> : vector<256xf32>
    %440 = vector.multi_reduction <add>, %439, %cst_370 [0] : vector<32x256xf32> to vector<256xf32>
    %441 = vector.shape_cast %440 : vector<256xf32> to vector<1x256xf32>
    %442 = arith.addf %430, %441 : vector<1x256xf32>
    %c239_i32_371 = arith.constant 239 : i32
    %443 = tpu.dynamic_rotate %350 by %c239_i32_371 dim 1 : vector<32x256xf32>, i32 -> vector<32x256xf32>
    %c8_372 = arith.constant 8 : index
    %c0_373 = arith.constant 0 : index
    %c0_374 = arith.constant 0 : index
    %444 = vector.load %arg2[%c8_372, %c0_373, %c0_374] : memref<9x1x256xf32, #tpu.memory_space<vmem>>, vector<1x1x256xf32>
    %445 = vector.shape_cast %444 : vector<1x1x256xf32> to vector<1x256xf32>
    %446 = vector.broadcast %445 : vector<1x256xf32> to vector<32x256xf32>
    %447 = arith.mulf %443, %446 : vector<32x256xf32>
    %c8_375 = arith.constant 8 : index
    %c0_376 = arith.constant 0 : index
    %c0_377 = arith.constant 0 : index
    %448 = vector.load %arg7[%c8_375, %c0_376, %c0_377] : memref<9x32x1xf32, #tpu.memory_space<vmem>>, vector<1x32x1xf32>
    %449 = vector.shape_cast %448 : vector<1x32x1xf32> to vector<32x1xf32>
    %450 = vector.broadcast %449 : vector<32x1xf32> to vector<32x256xf32>
    %451 = arith.mulf %450, %447 : vector<32x256xf32>
    %cst_378 = arith.constant dense<0.000000e+00> : vector<256xf32>
    %452 = vector.multi_reduction <add>, %451, %cst_378 [0] : vector<32x256xf32> to vector<256xf32>
    %453 = vector.shape_cast %452 : vector<256xf32> to vector<1x256xf32>
    %454 = arith.addf %442, %453 : vector<1x256xf32>
    %c0_379 = arith.constant 0 : index
    %c0_380 = arith.constant 0 : index
    %455 = vector.load %arg8[%c0_379, %c0_380] : memref<1x1xf32, #tpu.memory_space<vmem>>, vector<1x1xf32>
    %456 = vector.broadcast %455 : vector<1x1xf32> to vector<1x256xf32>
    %457 = arith.addf %454, %456 : vector<1x256xf32>
    %c0_381 = arith.constant 0 : index
    %c0_382 = arith.constant 0 : index
    %c0_383 = arith.constant 0 : index
    %458 = vector.load %arg9[%c0_381, %c0_382, %c0_383] : memref<1x1x256xf32, #tpu.memory_space<vmem>>, vector<1x1x256xf32>
    %459 = vector.shape_cast %458 : vector<1x1x256xf32> to vector<1x256xf32>
    %460 = vector.shape_cast %457 : vector<1x256xf32> to vector<1x1x256xf32>
    tpu.vector_store %arg9[%c0_381, %c0_382, %c0_383], %460 {strides = array<i32>} : memref<1x1x256xf32, #tpu.memory_space<vmem>>, vector<1x1x256xf32>,
    return
  }
  func.func @transform_0(%arg0: i32) -> (i32, i32, i32) {
    %c0_i32 = arith.constant 0 : i32
    %c0_i32_0 = arith.constant 0 : i32
    %c0_i32_1 = arith.constant 0 : i32
    return %arg0, %c0_i32, %c0_i32_0 : i32, i32, i32
  }
  func.func @transform_1(%arg0: i32) -> (i32, i32, i32) {
    %c0_i32 = arith.constant 0 : i32
    %c0_i32_0 = arith.constant 0 : i32
    %c0_i32_1 = arith.constant 0 : i32
    %c0_i32_2 = arith.constant 0 : i32
    return %c0_i32, %c0_i32_0, %c0_i32_1 : i32, i32, i32
  }
  func.func @transform_2(%arg0: i32) -> (i32, i32, i32) {
    %c0_i32 = arith.constant 0 : i32
    %c0_i32_0 = arith.constant 0 : i32
    %c0_i32_1 = arith.constant 0 : i32
    %c0_i32_2 = arith.constant 0 : i32
    return %c0_i32, %c0_i32_0, %c0_i32_1 : i32, i32, i32
  }
  func.func @transform_3(%arg0: i32) -> (i32, i32) {
    %c0_i32 = arith.constant 0 : i32
    %c0_i32_0 = arith.constant 0 : i32
    %c0_i32_1 = arith.constant 0 : i32
    return %c0_i32, %c0_i32_0 : i32, i32
  }
  func.func @transform_4(%arg0: i32) -> (i32, i32, i32, i32) {
    %c0_i32 = arith.constant 0 : i32
    %c0_i32_0 = arith.constant 0 : i32
    %c0_i32_1 = arith.constant 0 : i32
    %c0_i32_2 = arith.constant 0 : i32
    %c0_i32_3 = arith.constant 0 : i32
    return %c0_i32, %c0_i32_0, %c0_i32_1, %c0_i32_2 : i32, i32, i32, i32
  }
  func.func @transform_5(%arg0: i32) -> (i32, i32, i32) {
    %c0_i32 = arith.constant 0 : i32
    %c0_i32_0 = arith.constant 0 : i32
    %c0_i32_1 = arith.constant 0 : i32
    %c0_i32_2 = arith.constant 0 : i32
    return %c0_i32, %c0_i32_0, %c0_i32_1 : i32, i32, i32
  }
  func.func @transform_6(%arg0: i32) -> (i32, i32, i32) {
    %c0_i32 = arith.constant 0 : i32
    %c0_i32_0 = arith.constant 0 : i32
    %c0_i32_1 = arith.constant 0 : i32
    %c0_i32_2 = arith.constant 0 : i32
    return %c0_i32, %c0_i32_0, %c0_i32_1 : i32, i32, i32
  }
  func.func @transform_7(%arg0: i32) -> (i32, i32) {
    %c0_i32 = arith.constant 0 : i32
    %c0_i32_0 = arith.constant 0 : i32
    %c0_i32_1 = arith.constant 0 : i32
    return %c0_i32, %c0_i32_0 : i32, i32
  }
  func.func @transform_8(%arg0: i32) -> (i32, i32, i32) {
    %c0_i32 = arith.constant 0 : i32
    %c0_i32_0 = arith.constant 0 : i32
    %c0_i32_1 = arith.constant 0 : i32
    return %arg0, %c0_i32, %c0_i32_0 : i32, i32, i32
  }
}

</mosaic_0001>

<llo_original>
// kernel: tpu_custom_call.1
$region0: #{tpu_custom_call.1}
  #allocation0 [shape = 'u32[]', space=smem, size = 0x4, offset = 0x4, fixed_abs, tag = 'smem constant byte address 0x4 - core index']
  #allocation1 [shape = 'u32[144,128]{1,0:T(1,128)}', space=vmem, size = 0x12000, scoped, tag = 'internal scratch']
  #allocation2 [shape = 'f32[32,256]{1,0:T(8,128)}', space=vmem, size = 0x8000, scoped, tag = 'scratch operand']
  #allocation3 [shape = 'f32[1,1]{1,0:T(1,128)S(1)}', space=vmem, size = 0x200, scoped, tag = 'scoped memory for tpu_custom_call.1']
  %s0 = inlined_call_operand.vmem [shape: f32[2,1,256], index: 0, kind: input, shape index: {}]
  %s1 = inlined_call_operand.vmem [shape: f32[9,1,256], index: 1, kind: input, shape index: {}]
  %s2 = inlined_call_operand.vmem [shape: f32[9,32,1], index: 2, kind: input, shape index: {}]
  %s3 = inlined_call_operand.vmem [shape: f32[32,1], index: 3, kind: input, shape index: {}]
  %s4 = inlined_call_operand.hbm [shape: f32[3,9,32,32], index: 4, kind: input, shape index: {}]
  %s5 = inlined_call_operand.vmem [shape: f32[3,32,1], index: 5, kind: input, shape index: {}]
  %s6 = inlined_call_operand.vmem [shape: f32[9,32,1], index: 6, kind: input, shape index: {}]
  %s7 = inlined_call_operand.<no memory space> [shape: f32[1,1], index: 7, kind: input, shape index: {}]
  %s8 = inlined_call_operand.hbm [shape: f32[2,1,256], index: 8, kind: output, shape index: {}]
  %s9 = sld [smem:[#allocation0]]
  $region69: #{tpu_custom_call.1} parent=0
    _
  %s11 = ssub.s32 1, %s9
  %s12 = scalar_select 0, %s11, %s9
  %v13 = vstv %s7
  %14 = vst [vmem:[#allocation3] sm:$0x1] %v13
  $region1: #{tpu_custom_call.1} parent=0
    #allocation4 [shape = 'u8[442368]{0}', space=vmem, size = 0x6c000, scoped, tag = 'input window, operand 4, single buffered']
    #allocation5 [shape = 's32[2]{0}', space=sflag, size = 0x8, scoped, tag = 'scoped memory for tpu_custom_call.1']
    #allocation6 [shape = 's32[2]{0}', space=sflag, size = 0x8, scoped, tag = 'scoped memory for tpu_custom_call.1']
    #allocation7 [shape = 'u8[2048]{0}', space=vmem, size = 0x800, scoped, tag = 'output window, operand 0']
    %15 = vsyncpa [#allocation5], 0
    %16 = vsyncpa [#allocation6], 0
    %s17 = scalar_lea.sflag [#allocation6], 1
    %18 = vsyncpa %s17, 0
    loop: start=0, step=1, limit=4
    $region2: #{tpu_custom_call.1} parent=1 // loop_pre_header
      _
    $region3: #{tpu_custom_call.1} parent=1 // loop_header
      %s20 = sphi 0, %s24
      %p21 = scmp.ge.s32.totalorder %s20, 4
      %s30 = sphi 0, %s32
      %s33 = sphi 0, %s30
      %s34 = sphi 0, %s33
      %s50 = sphi 0, %s34
      %s54 = sphi 0, %s54
      %s56 = sphi 0, %s54
      %s57 = sphi 0, %s56
      %s71 = sphi 0, %s57
      %s75 = sphi 0, %s75
      %s77 = sphi 0, %s75
      %s78 = sphi 0, %s77
      %s92 = sphi 0, %s78
      %s96 = sphi 0, %s96
      %s98 = sphi 0, %s96
      %s99 = sphi 0, %s98
      %s113 = sphi 0, %s99
      %s117 = sphi 0, %s117
      %s119 = sphi 0, %s117
      %s120 = sphi 0, %s119
      %s134 = sphi 0, %s120
      %s138 = sphi 0, %s138
      %s140 = sphi 0, %s138
      %s141 = sphi 0, %s140
      %s155 = sphi 0, %s141
      %s159 = sphi 0, %s159
      %s161 = sphi 0, %s159
      %s162 = sphi 0, %s161
      %s176 = sphi 0, %s162
      %s180 = sphi 0, %s180
      %s182 = sphi 0, %s180
      %s183 = sphi 0, %s182
      %s197 = sphi 0, %s183
      %s203 = sphi 0, %s205
      %s206 = sphi 0, %s203
      %s207 = sphi 0, %s206
      %s223 = sphi 0, %s207
    $region4: #{tpu_custom_call.1} parent=1 // loop_header_branch
      %23 = sbr.rel (%p21) target = $region8
    $region5: #{tpu_custom_call.1} parent=1 // loop_body
      %s25 = ssub.s32 %s20, 1
      %s26 = ssub.s32 %s20, 2
      %s27 = sadd.s32 %s20, 1
      %s28 = ssub.s32 %s20, %s27
      %p29 = scmp.eq.s32.totalorder %s28, 0
      %s31 = sadd.s32 %s30, 1
      %s32 = scalar_select %p29, %s30, %s31
      %p35 = pneg %p29
      %p36 = scmp.eq.s32.totalorder %s20, 1
      %p37 = por %p35, %p36
      %p38 = scmp.ne.s32.totalorder %s30, %s33
      %p39 = scmp.eq.s32.totalorder %s20, 0
      %p40 = por %p38, %p39
      %p41 = scmp.ne.s32.totalorder %s30, %s33
      %p42 = scmp.eq.s32.totalorder %s25, 1
      %p43 = por %p41, %p42
      %p44 = scmp.ne.s32.totalorder %s33, %s34
      %p45 = scmp.eq.s32.totalorder %s25, 0
      %p46 = por %p44, %p45
      %p47 = scmp.ne.s32.totalorder %s33, %s34
      %p48 = scmp.eq.s32.totalorder %s26, 1
      %p49 = por %p47, %p48
      %p51 = scmp.ne.s32.totalorder %s34, %s50
      %p52 = scmp.eq.s32.totalorder %s26, 0
      %p53 = por %p51, %p52
      %s55 = sadd.s32 %s54, 1
      %p58 = scmp.eq.s32.totalorder %s20, 1
      %p59 = scmp.ne.s32.totalorder %s54, %s56
      %p60 = scmp.eq.s32.totalorder %s20, 0
      %p61 = por %p59, %p60
      %p62 = scmp.ne.s32.totalorder %s54, %s56
      %p63 = scmp.eq.s32.totalorder %s25, 1
      %p64 = por %p62, %p63
      %p65 = scmp.ne.s32.totalorder %s56, %s57
      %p66 = scmp.eq.s32.totalorder %s25, 0
      %p67 = por %p65, %p66
      %p68 = scmp.ne.s32.totalorder %s56, %s57
      %p69 = scmp.eq.s32.totalorder %s26, 1
      %p70 = por %p68, %p69
      %p72 = scmp.ne.s32.totalorder %s57, %s71
      %p73 = scmp.eq.s32.totalorder %s26, 0
      %p74 = por %p72, %p73
      %s76 = sadd.s32 %s75, 1
      %p79 = scmp.eq.s32.totalorder %s20, 1
      %p80 = scmp.ne.s32.totalorder %s75, %s77
      %p81 = scmp.eq.s32.totalorder %s20, 0
      %p82 = por %p80, %p81
      %p83 = scmp.ne.s32.totalorder %s75, %s77
      %p84 = scmp.eq.s32.totalorder %s25, 1
      %p85 = por %p83, %p84
      %p86 = scmp.ne.s32.totalorder %s77, %s78
      %p87 = scmp.eq.s32.totalorder %s25, 0
      %p88 = por %p86, %p87
      %p89 = scmp.ne.s32.totalorder %s77, %s78
      %p90 = scmp.eq.s32.totalorder %s26, 1
      %p91 = por %p89, %p90
      %p93 = scmp.ne.s32.totalorder %s78, %s92
      %p94 = scmp.eq.s32.totalorder %s26, 0
      %p95 = por %p93, %p94
      %s97 = sadd.s32 %s96, 1
      %p100 = scmp.eq.s32.totalorder %s20, 1
      %p101 = scmp.ne.s32.totalorder %s96, %s98
      %p102 = scmp.eq.s32.totalorder %s20, 0
      %p103 = por %p101, %p102
      %p104 = scmp.ne.s32.totalorder %s96, %s98
      %p105 = scmp.eq.s32.totalorder %s25, 1
      %p106 = por %p104, %p105
      %p107 = scmp.ne.s32.totalorder %s98, %s99
      %p108 = scmp.eq.s32.totalorder %s25, 0
      %p109 = por %p107, %p108
      %p110 = scmp.ne.s32.totalorder %s98, %s99
      %p111 = scmp.eq.s32.totalorder %s26, 1
      %p112 = por %p110, %p111
      %p114 = scmp.ne.s32.totalorder %s99, %s113
      %p115 = scmp.eq.s32.totalorder %s26, 0
      %p116 = por %p114, %p115
      %s118 = sadd.s32 %s117, 1
      %p121 = scmp.eq.s32.totalorder %s20, 1
      %p122 = scmp.ne.s32.totalorder %s117, %s119
      %p123 = scmp.eq.s32.totalorder %s20, 0
      %p124 = por %p122, %p123
      %p125 = scmp.ne.s32.totalorder %s117, %s119
      %p126 = scmp.eq.s32.totalorder %s25, 1
      %p127 = por %p125, %p126
      %p128 = scmp.ne.s32.totalorder %s119, %s120
      %p129 = scmp.eq.s32.totalorder %s25, 0
      %p130 = por %p128, %p129
      %p131 = scmp.ne.s32.totalorder %s119, %s120
      %p132 = scmp.eq.s32.totalorder %s26, 1
      %p133 = por %p131, %p132
      %p135 = scmp.ne.s32.totalorder %s120, %s134
      %p136 = scmp.eq.s32.totalorder %s26, 0
      %p137 = por %p135, %p136
      %s139 = sadd.s32 %s138, 1
      %p142 = scmp.eq.s32.totalorder %s20, 1
      %p143 = scmp.ne.s32.totalorder %s138, %s140
      %p144 = scmp.eq.s32.totalorder %s20, 0
      %p145 = por %p143, %p144
      %p146 = scmp.ne.s32.totalorder %s138, %s140
      %p147 = scmp.eq.s32.totalorder %s25, 1
      %p148 = por %p146, %p147
      %p149 = scmp.ne.s32.totalorder %s140, %s141
      %p150 = scmp.eq.s32.totalorder %s25, 0
      %p151 = por %p149, %p150
      %p152 = scmp.ne.s32.totalorder %s140, %s141
      %p153 = scmp.eq.s32.totalorder %s26, 1
      %p154 = por %p152, %p153
      %p156 = scmp.ne.s32.totalorder %s141, %s155
      %p157 = scmp.eq.s32.totalorder %s26, 0
      %p158 = por %p156, %p157
      %s160 = sadd.s32 %s159, 1
      %p163 = scmp.eq.s32.totalorder %s20, 1
      %p164 = scmp.ne.s32.totalorder %s159, %s161
      %p165 = scmp.eq.s32.totalorder %s20, 0
      %p166 = por %p164, %p165
      %p167 = scmp.ne.s32.totalorder %s159, %s161
      %p168 = scmp.eq.s32.totalorder %s25, 1
      %p169 = por %p167, %p168
      %p170 = scmp.ne.s32.totalorder %s161, %s162
      %p171 = scmp.eq.s32.totalorder %s25, 0
      %p172 = por %p170, %p171
      %p173 = scmp.ne.s32.totalorder %s161, %s162
      %p174 = scmp.eq.s32.totalorder %s26, 1
      %p175 = por %p173, %p174
      %p177 = scmp.ne.s32.totalorder %s162, %s176
      %p178 = scmp.eq.s32.totalorder %s26, 0
      %p179 = por %p177, %p178
      %s181 = sadd.s32 %s180, 1
      %p184 = scmp.eq.s32.totalorder %s20, 1
      %p185 = scmp.ne.s32.totalorder %s180, %s182
      %p186 = scmp.eq.s32.totalorder %s20, 0
      %p187 = por %p185, %p186
      %p188 = scmp.ne.s32.totalorder %s180, %s182
      %p189 = scmp.eq.s32.totalorder %s25, 1
      %p190 = por %p188, %p189
      %p191 = scmp.ne.s32.totalorder %s182, %s183
      %p192 = scmp.eq.s32.totalorder %s25, 0
      %p193 = por %p191, %p192
      %p194 = scmp.ne.s32.totalorder %s182, %s183
      %p195 = scmp.eq.s32.totalorder %s26, 1
      %p196 = por %p194, %p195
      %p198 = scmp.ne.s32.totalorder %s183, %s197
      %p199 = scmp.eq.s32.totalorder %s26, 0
      %p200 = por %p198, %p199
      %s201 = ssub.s32 %s20, %s27
      %p202 = scmp.eq.s32.totalorder %s201, 0
      %s204 = sadd.s32 %s203, 1
      %s205 = scalar_select %p202, %s203, %s204
      %p208 = pneg %p202
      %p209 = scmp.eq.s32.totalorder %s20, 1
      %p210 = por %p208, %p209
      %p211 = scmp.ne.s32.totalorder %s203, %s206
      %p212 = scmp.eq.s32.totalorder %s20, 0
      %p213 = por %p211, %p212
      %p214 = scmp.ne.s32.totalorder %s203, %s206
      %p215 = scmp.eq.s32.totalorder %s25, 1
      %p216 = por %p214, %p215
      %p217 = scmp.ne.s32.totalorder %s206, %s207
      %p218 = scmp.eq.s32.totalorder %s25, 0
      %p219 = por %p217, %p218
      %p220 = scmp.ne.s32.totalorder %s206, %s207
      %p221 = scmp.eq.s32.totalorder %s26, 1
      %p222 = por %p220, %p221
      %p224 = scmp.ne.s32.totalorder %s207, %s223
      %p225 = scmp.eq.s32.totalorder %s26, 0
      %p226 = por %p224, %p225
      %p227 = scmp.le.s32.totalorder 1, %s20
      %p228 = scmp.lt.s32.totalorder %s20, 3
      %p229 = pnand %p227, %p228
      %p230 = pneg %p229
      // Predicated region
      $region9: #{tpu_custom_call.1} parent=5 // pred_check
        _
      $region10: #{tpu_custom_call.1} parent=5 // pred_check_branch
        %232 = sbr.rel (%p229) target = $region12
      $region11: #{tpu_custom_call.1} parent=5 // pred_region
        %s233 = ssub.s32 %s20, 1
        // Predicated region
        $region13: #{tpu_custom_call.1} parent=11 // pred_check
          %p234 = pneg %p67
        $region14: #{tpu_custom_call.1} parent=11 // pred_check_branch
          %236 = sbr.rel (%p234) target = $region16
        $region15: #{tpu_custom_call.1} parent=11 // pred_region
          _
        $region16: #{tpu_custom_call.1} parent=11 // pred_fallthru
          _
        // Predicated region
        $region17: #{tpu_custom_call.1} parent=11 // pred_check
          %p237 = pneg %p88
        $region18: #{tpu_custom_call.1} parent=11 // pred_check_branch
          %239 = sbr.rel (%p237) target = $region20
        $region19: #{tpu_custom_call.1} parent=11 // pred_region
          _
        $region20: #{tpu_custom_call.1} parent=11 // pred_fallthru
          _
        // Predicated region
        $region21: #{tpu_custom_call.1} parent=11 // pred_check
          %p240 = pneg %p109
        $region22: #{tpu_custom_call.1} parent=11 // pred_check_branch
          %242 = sbr.rel (%p240) target = $region24
        $region23: #{tpu_custom_call.1} parent=11 // pred_region
          _
        $region24: #{tpu_custom_call.1} parent=11 // pred_fallthru
          _
        // Predicated region
        $region25: #{tpu_custom_call.1} parent=11 // pred_check
          %p243 = pneg %p130
        $region26: #{tpu_custom_call.1} parent=11 // pred_check_branch
          %245 = sbr.rel (%p243) target = $region28
        $region27: #{tpu_custom_call.1} parent=11 // pred_region
          %s247 = ssub.s32 13824, 13824
          %248 = vsyncadd [#allocation5], %s247
          %s249 = sshll.u32 [#allocation4], 4
          %s250 = int_to_ptr.vmem [resolvable:$true] %s249
          %255 = dma.hbm_to_vmem [thread:$0]  %s4, 13824, %s250, [#allocation5], 128, 128, 8
        $region28: #{tpu_custom_call.1} parent=11 // pred_fallthru
          _
        // Predicated region
        $region29: #{tpu_custom_call.1} parent=11 // pred_check
          %p256 = pneg %p151
        $region30: #{tpu_custom_call.1} parent=11 // pred_check_branch
          %258 = sbr.rel (%p256) target = $region32
        $region31: #{tpu_custom_call.1} parent=11 // pred_region
          _
        $region32: #{tpu_custom_call.1} parent=11 // pred_fallthru
          _
        // Predicated region
        $region33: #{tpu_custom_call.1} parent=11 // pred_check
          %p259 = pneg %p172
        $region34: #{tpu_custom_call.1} parent=11 // pred_check_branch
          %261 = sbr.rel (%p259) target = $region36
        $region35: #{tpu_custom_call.1} parent=11 // pred_region
          _
        $region36: #{tpu_custom_call.1} parent=11 // pred_fallthru
          _
        // Predicated region
        $region37: #{tpu_custom_call.1} parent=11 // pred_check
          %p262 = pneg %p193
        $region38: #{tpu_custom_call.1} parent=11 // pred_check_branch
          %264 = sbr.rel (%p262) target = $region40
        $region39: #{tpu_custom_call.1} parent=11 // pred_region
          _
        $region40: #{tpu_custom_call.1} parent=11 // pred_fallthru
          _
      $region12: #{tpu_custom_call.1} parent=5 // pred_fallthru
        _
      %p265 = scmp.lt.s32.totalorder %s20, 2
      // Predicated region
      $region41: #{tpu_custom_call.1} parent=5 // pred_check
        %p266 = pneg %p265
      $region42: #{tpu_custom_call.1} parent=5 // pred_check_branch
        %268 = sbr.rel (%p266) target = $region44
      $region43: #{tpu_custom_call.1} parent=5 // pred_region
        // Predicated region
        $region45: #{tpu_custom_call.1} parent=43 // pred_check
          %p269 = pneg %p40
        $region46: #{tpu_custom_call.1} parent=43 // pred_check_branch
          %271 = sbr.rel (%p269) target = $region48
        $region47: #{tpu_custom_call.1} parent=43 // pred_region
          %p272 = scmp.lt.s32.totalorder %s20, 1
          %s273 = scalar_select %p272, %s20, 1
          %s274 = smul.addr %s273, 2
          %s275 = scalar_lea.vmem %s0, %s274
        $region48: #{tpu_custom_call.1} parent=43 // pred_fallthru
          _
      $region44: #{tpu_custom_call.1} parent=5 // pred_fallthru
        _
      %p276 = scmp.le.s32.totalorder 1, %s20
      %p277 = scmp.lt.s32.totalorder %s20, 3
      %p278 = pnand %p276, %p277
      %p279 = pneg %p278
      // Predicated region
      $region49: #{tpu_custom_call.1} parent=5 // pred_check
        _
      $region50: #{tpu_custom_call.1} parent=5 // pred_check_branch
        %281 = sbr.rel (%p278) target = $region52
      $region51: #{tpu_custom_call.1} parent=5 // pred_region
        %s282 = ssub.s32 %s20, 1
        // Predicated region
        $region53: #{tpu_custom_call.1} parent=51 // pred_check
          %p283 = pneg %p130
        $region54: #{tpu_custom_call.1} parent=51 // pred_check_branch
          %285 = sbr.rel (%p283) target = $region56
        $region55: #{tpu_custom_call.1} parent=51 // pred_region
          %286 = dma.done [#allocation5], 13824
        $region56: #{tpu_custom_call.1} parent=51 // pred_fallthru
          _
        %p287 = scmp.lt.s32.totalorder %s25, 1
        %s288 = scalar_select %p287, %s25, 1
        %s289 = smul.addr %s288, 2
        %s290 = scalar_lea.vmem %s0, %s289
        %p291 = pneg %p46
        %p292 = pneg %p43
        %p293 = pneg %p67
        %p294 = pneg %p64
        %p295 = pneg %p88
        %p296 = pneg %p85
        %p297 = pneg %p109
        %p298 = pneg %p106
        %p299 = pneg %p130
        %p300 = pneg %p127
        %p301 = pneg %p151
        %p302 = pneg %p148
        %p303 = pneg %p172
        %p304 = pneg %p169
        %p305 = pneg %p193
        %p306 = pneg %p190
        %p307 = pneg %p219
        %p308 = pneg %p216
        %s309 = sand.u32 %s206, 1
        %s310 = scalar_lea.sflag [#allocation6], %s309
        %s311 = sand.u32 %s206, 1
        %s312 = smul.addr %s311, 2
        %s313 = scalar_lea.vmem [#allocation7], %s312
        %p314 = scmp.lt.s32.totalorder %s25, 1
        %s315 = scalar_select %p314, %s25, 1
        %s316 = smul.addr %s315, 2
        %s317 = scalar_lea.vmem %s0, %s316
        %v318 = vld [vmem:[%s317] sm:$0x3]
        %v319 = vld [vmem:[%s2] sm:$0xff]
        %v320 = vld [vmem:[%s2 + $0x8] sm:$0xff]
        %v321 = vld [vmem:[%s2 + $0x10] sm:$0xff]
        %v322 = vld [vmem:[%s2 + $0x18] sm:$0xff]
        %v324 = vlaneseq
        %v325 = vshrl.u32 %v324, 7
        %v326 = vsub.s32 0, %v325
        %v327 = vrot.slane %v318, %v326
        %v328 = vlaneseq
        %v329 = vshrl.u32 %v328, 7
        %v330 = vsub.s32 1, %v329
        %v331 = vrot.slane %v318, %v330
        %334 = vrot.lane.b32.xlu0 %v327, 17
        %v335 = vpop.permute.xlu0 %334
        %336 = vrot.lane.b32.xlu0 %v331, 17
        %v337 = vpop.permute.xlu0 %336
        %v338 = vlaneseq
        %v339 = vand.u32 %v338, 127
        %vm340 = vcmp.lt.s32.totalorder %v339, 17
        %v341 = vsel %vm340, %v335, %v337
        %v342 = vsel %vm340, %v337, %v335
        %v343 = vld [vmem:[%s1] sm:$0x3]
        %v345 = vlaneseq
        %v346 = vshrl.u32 %v345, 7
        %v347 = vsub.s32 0, %v346
        %v348 = vrot.slane %v343, %v347
        %v349 = vlaneseq
        %v350 = vshrl.u32 %v349, 7
        %v351 = vsub.s32 1, %v350
        %v352 = vrot.slane %v343, %v351
        %v355 = vmul.f32 %v342, %v348
        %v356 = vmul.f32 %v341, %v352
        %358 = vset.pattern.permute.xlu0 0
        %359 = vperm.xlu0 %358, %v319
        %v360 = vpop.permute.xlu0 %359
        %363 = vset.pattern.permute.xlu0 0
        %364 = vperm.xlu0 %363, %v320
        %v365 = vpop.permute.xlu0 %364
        %368 = vset.pattern.permute.xlu0 0
        %369 = vperm.xlu0 %368, %v321
        %v370 = vpop.permute.xlu0 %369
        %373 = vset.pattern.permute.xlu0 0
        %374 = vperm.xlu0 %373, %v322
        %v375 = vpop.permute.xlu0 %374
        %v377 = vlaneseq
        %v378 = vshrl.u32 %v377, 7
        %v379 = vsub.s32 0, %v378
        %v380 = vrot.slane %v355, %v379
        %v381 = vlaneseq
        %v382 = vshrl.u32 %v381, 7
        %v383 = vsub.s32 0, %v382
        %v384 = vrot.slane %v356, %v383
        %v385 = vmul.f32 %v360, %v380
        %v386 = vmul.f32 %v360, %v384
        %v387 = vmul.f32 %v365, %v380
        %v388 = vmul.f32 %v365, %v384
        %v389 = vmul.f32 %v370, %v380
        %v390 = vmul.f32 %v370, %v384
        %v391 = vmul.f32 %v375, %v380
        %v392 = vmul.f32 %v375, %v384
        %v393 = vadd.f32 %v385, 0.0
        %v394 = vadd.f32 %v386, 0.0
        %v395 = vadd.f32 %v387, 0.0
        %v396 = vadd.f32 %v388, 0.0
        %v397 = vadd.f32 %v389, 0.0
        %v398 = vadd.f32 %v390, 0.0
        %v399 = vadd.f32 %v391, 0.0
        %v400 = vadd.f32 %v392, 0.0
        %s401 = scalar_lea.vmem %s2, 32
        %v402 = vld [vmem:[%s401] sm:$0xff]
        %v403 = vld [vmem:[%s401 + $0x8] sm:$0xff]
        %v404 = vld [vmem:[%s401 + $0x10] sm:$0xff]
        %v405 = vld [vmem:[%s401 + $0x18] sm:$0xff]
        %406 = vrot.lane.b32.xlu0 %v327, 16
        %v407 = vpop.permute.xlu0 %406
        %408 = vrot.lane.b32.xlu0 %v331, 16
        %v409 = vpop.permute.xlu0 %408
        %vm410 = vcmp.lt.s32.totalorder %v339, 16
        %v411 = vsel %vm410, %v407, %v409
        %v412 = vsel %vm410, %v409, %v407
        %s413 = scalar_lea.vmem %s1, 2
        %v414 = vld [vmem:[%s413] sm:$0x3]
        %v416 = vlaneseq
        %v417 = vshrl.u32 %v416, 7
        %v418 = vsub.s32 0, %v417
        %v419 = vrot.slane %v414, %v418
        %v420 = vlaneseq
        %v421 = vshrl.u32 %v420, 7
        %v422 = vsub.s32 1, %v421
        %v423 = vrot.slane %v414, %v422
        %v426 = vmul.f32 %v412, %v419
        %v427 = vmul.f32 %v411, %v423
        %429 = vset.pattern.permute.xlu0 0
        %430 = vperm.xlu0 %429, %v402
        %v431 = vpop.permute.xlu0 %430
        %434 = vset.pattern.permute.xlu0 0
        %435 = vperm.xlu0 %434, %v403
        %v436 = vpop.permute.xlu0 %435
        %439 = vset.pattern.permute.xlu0 0
        %440 = vperm.xlu0 %439, %v404
        %v441 = vpop.permute.xlu0 %440
        %444 = vset.pattern.permute.xlu0 0
        %445 = vperm.xlu0 %444, %v405
        %v446 = vpop.permute.xlu0 %445
        %v448 = vlaneseq
        %v449 = vshrl.u32 %v448, 7
        %v450 = vsub.s32 0, %v449
        %v451 = vrot.slane %v426, %v450
        %v452 = vlaneseq
        %v453 = vshrl.u32 %v452, 7
        %v454 = vsub.s32 0, %v453
        %v455 = vrot.slane %v427, %v454
        %v456 = vmul.f32 %v431, %v451
        %v457 = vmul.f32 %v431, %v455
        %v458 = vmul.f32 %v436, %v451
        %v459 = vmul.f32 %v436, %v455
        %v460 = vmul.f32 %v441, %v451
        %v461 = vmul.f32 %v441, %v455
        %v462 = vmul.f32 %v446, %v451
        %v463 = vmul.f32 %v446, %v455
        %v464 = vadd.f32 %v393, %v456
        %v465 = vadd.f32 %v394, %v457
        %v466 = vadd.f32 %v395, %v458
        %v467 = vadd.f32 %v396, %v459
        %v468 = vadd.f32 %v397, %v460
        %v469 = vadd.f32 %v398, %v461
        %v470 = vadd.f32 %v399, %v462
        %v471 = vadd.f32 %v400, %v463
        %s472 = scalar_lea.vmem %s2, 64
        %v473 = vld [vmem:[%s472] sm:$0xff]
        %v474 = vld [vmem:[%s472 + $0x8] sm:$0xff]
        %v475 = vld [vmem:[%s472 + $0x10] sm:$0xff]
        %v476 = vld [vmem:[%s472 + $0x18] sm:$0xff]
        %477 = vrot.lane.b32.xlu0 %v327, 15
        %v478 = vpop.permute.xlu0 %477
        %479 = vrot.lane.b32.xlu0 %v331, 15
        %v480 = vpop.permute.xlu0 %479
        %vm481 = vcmp.lt.s32.totalorder %v339, 15
        %v482 = vsel %vm481, %v478, %v480
        %v483 = vsel %vm481, %v480, %v478
        %s484 = scalar_lea.vmem %s1, 4
        %v485 = vld [vmem:[%s484] sm:$0x3]
        %v487 = vlaneseq
        %v488 = vshrl.u32 %v487, 7
        %v489 = vsub.s32 0, %v488
        %v490 = vrot.slane %v485, %v489
        %v491 = vlaneseq
        %v492 = vshrl.u32 %v491, 7
        %v493 = vsub.s32 1, %v492
        %v494 = vrot.slane %v485, %v493
        %v497 = vmul.f32 %v483, %v490
        %v498 = vmul.f32 %v482, %v494
        %500 = vset.pattern.permute.xlu0 0
        %501 = vperm.xlu0 %500, %v473
        %v502 = vpop.permute.xlu0 %501
        %505 = vset.pattern.permute.xlu0 0
        %506 = vperm.xlu0 %505, %v474
        %v507 = vpop.permute.xlu0 %506
        %510 = vset.pattern.permute.xlu0 0
        %511 = vperm.xlu0 %510, %v475
        %v512 = vpop.permute.xlu0 %511
        %515 = vset.pattern.permute.xlu0 0
        %516 = vperm.xlu0 %515, %v476
        %v517 = vpop.permute.xlu0 %516
        %v519 = vlaneseq
        %v520 = vshrl.u32 %v519, 7
        %v521 = vsub.s32 0, %v520
        %v522 = vrot.slane %v497, %v521
        %v523 = vlaneseq
        %v524 = vshrl.u32 %v523, 7
        %v525 = vsub.s32 0, %v524
        %v526 = vrot.slane %v498, %v525
        %v527 = vmul.f32 %v502, %v522
        %v528 = vmul.f32 %v502, %v526
        %v529 = vmul.f32 %v507, %v522
        %v530 = vmul.f32 %v507, %v526
        %v531 = vmul.f32 %v512, %v522
        %v532 = vmul.f32 %v512, %v526
        %v533 = vmul.f32 %v517, %v522
        %v534 = vmul.f32 %v517, %v526
        %v535 = vadd.f32 %v464, %v527
        %v536 = vadd.f32 %v465, %v528
        %v537 = vadd.f32 %v466, %v529
        %v538 = vadd.f32 %v467, %v530
        %v539 = vadd.f32 %v468, %v531
        %v540 = vadd.f32 %v469, %v532
        %v541 = vadd.f32 %v470, %v533
        %v542 = vadd.f32 %v471, %v534
        %s543 = scalar_lea.vmem %s2, 96
        %v544 = vld [vmem:[%s543] sm:$0xff]
        %v545 = vld [vmem:[%s543 + $0x8] sm:$0xff]
        %v546 = vld [vmem:[%s543 + $0x10] sm:$0xff]
        %v547 = vld [vmem:[%s543 + $0x18] sm:$0xff]
        %548 = vrot.lane.b32.xlu0 %v327, 1
        %v549 = vpop.permute.xlu0 %548
        %550 = vrot.lane.b32.xlu0 %v331, 1
        %v551 = vpop.permute.xlu0 %550
        %vm552 = vcmp.lt.s32.totalorder %v339, 1
        %v553 = vsel %vm552, %v549, %v551
        %v554 = vsel %vm552, %v551, %v549
        %s555 = scalar_lea.vmem %s1, 6
        %v556 = vld [vmem:[%s555] sm:$0x3]
        %v558 = vlaneseq
        %v559 = vshrl.u32 %v558, 7
        %v560 = vsub.s32 0, %v559
        %v561 = vrot.slane %v556, %v560
        %v562 = vlaneseq
        %v563 = vshrl.u32 %v562, 7
        %v564 = vsub.s32 1, %v563
        %v565 = vrot.slane %v556, %v564
        %v568 = vmul.f32 %v554, %v561
        %v569 = vmul.f32 %v553, %v565
        %571 = vset.pattern.permute.xlu0 0
        %572 = vperm.xlu0 %571, %v544
        %v573 = vpop.permute.xlu0 %572
        %576 = vset.pattern.permute.xlu0 0
        %577 = vperm.xlu0 %576, %v545
        %v578 = vpop.permute.xlu0 %577
        %581 = vset.pattern.permute.xlu0 0
        %582 = vperm.xlu0 %581, %v546
        %v583 = vpop.permute.xlu0 %582
        %586 = vset.pattern.permute.xlu0 0
        %587 = vperm.xlu0 %586, %v547
        %v588 = vpop.permute.xlu0 %587
        %v590 = vlaneseq
        %v591 = vshrl.u32 %v590, 7
        %v592 = vsub.s32 0, %v591
        %v593 = vrot.slane %v568, %v592
        %v594 = vlaneseq
        %v595 = vshrl.u32 %v594, 7
        %v596 = vsub.s32 0, %v595
        %v597 = vrot.slane %v569, %v596
        %v598 = vmul.f32 %v573, %v593
        %v599 = vmul.f32 %v573, %v597
        %v600 = vmul.f32 %v578, %v593
        %v601 = vmul.f32 %v578, %v597
        %v602 = vmul.f32 %v583, %v593
        %v603 = vmul.f32 %v583, %v597
        %v604 = vmul.f32 %v588, %v593
        %v605 = vmul.f32 %v588, %v597
        %v606 = vadd.f32 %v535, %v598
        %v607 = vadd.f32 %v536, %v599
        %v608 = vadd.f32 %v537, %v600
        %v609 = vadd.f32 %v538, %v601
        %v610 = vadd.f32 %v539, %v602
        %v611 = vadd.f32 %v540, %v603
        %v612 = vadd.f32 %v541, %v604
        %v613 = vadd.f32 %v542, %v605
        %s614 = scalar_lea.vmem %s2, 128
        %v615 = vld [vmem:[%s614] sm:$0xff]
        %v616 = vld [vmem:[%s614 + $0x8] sm:$0xff]
        %v617 = vld [vmem:[%s614 + $0x10] sm:$0xff]
        %v618 = vld [vmem:[%s614 + $0x18] sm:$0xff]
        %620 = vset.pattern.permute.xlu0 0
        %621 = vperm.xlu0 %620, %v615
        %v622 = vpop.permute.xlu0 %621
        %625 = vset.pattern.permute.xlu0 0
        %626 = vperm.xlu0 %625, %v616
        %v627 = vpop.permute.xlu0 %626
        %630 = vset.pattern.permute.xlu0 0
        %631 = vperm.xlu0 %630, %v617
        %v632 = vpop.permute.xlu0 %631
        %635 = vset.pattern.permute.xlu0 0
        %636 = vperm.xlu0 %635, %v618
        %v637 = vpop.permute.xlu0 %636
        %v639 = vmul.f32 %v622, %v327
        %v640 = vmul.f32 %v622, %v331
        %v641 = vmul.f32 %v627, %v327
        %v642 = vmul.f32 %v627, %v331
        %v643 = vmul.f32 %v632, %v327
        %v644 = vmul.f32 %v632, %v331
        %v645 = vmul.f32 %v637, %v327
        %v646 = vmul.f32 %v637, %v331
        %v647 = vadd.f32 %v606, %v639
        %v648 = vadd.f32 %v607, %v640
        %v649 = vadd.f32 %v608, %v641
        %v650 = vadd.f32 %v609, %v642
        %v651 = vadd.f32 %v610, %v643
        %v652 = vadd.f32 %v611, %v644
        %v653 = vadd.f32 %v612, %v645
        %v654 = vadd.f32 %v613, %v646
        %s655 = scalar_lea.vmem %s2, 160
        %v656 = vld [vmem:[%s655] sm:$0xff]
        %v657 = vld [vmem:[%s655 + $0x8] sm:$0xff]
        %v658 = vld [vmem:[%s655 + $0x10] sm:$0xff]
        %v659 = vld [vmem:[%s655 + $0x18] sm:$0xff]
        %660 = vrot.lane.b32.xlu0 %v327, 127
        %v661 = vpop.permute.xlu0 %660
        %662 = vrot.lane.b32.xlu0 %v331, 127
        %v663 = vpop.permute.xlu0 %662
        %vm664 = vcmp.lt.s32.totalorder %v339, 127
        %v665 = vsel %vm664, %v661, %v663
        %v666 = vsel %vm664, %v663, %v661
        %s667 = scalar_lea.vmem %s1, 10
        %v668 = vld [vmem:[%s667] sm:$0x3]
        %v670 = vlaneseq
        %v671 = vshrl.u32 %v670, 7
        %v672 = vsub.s32 0, %v671
        %v673 = vrot.slane %v668, %v672
        %v674 = vlaneseq
        %v675 = vshrl.u32 %v674, 7
        %v676 = vsub.s32 1, %v675
        %v677 = vrot.slane %v668, %v676
        %v680 = vmul.f32 %v665, %v673
        %v681 = vmul.f32 %v666, %v677
        %683 = vset.pattern.permute.xlu0 0
        %684 = vperm.xlu0 %683, %v656
        %v685 = vpop.permute.xlu0 %684
        %688 = vset.pattern.permute.xlu0 0
        %689 = vperm.xlu0 %688, %v657
        %v690 = vpop.permute.xlu0 %689
        %693 = vset.pattern.permute.xlu0 0
        %694 = vperm.xlu0 %693, %v658
        %v695 = vpop.permute.xlu0 %694
        %698 = vset.pattern.permute.xlu0 0
        %699 = vperm.xlu0 %698, %v659
        %v700 = vpop.permute.xlu0 %699
        %v702 = vlaneseq
        %v703 = vshrl.u32 %v702, 7
        %v704 = vsub.s32 0, %v703
        %v705 = vrot.slane %v680, %v704
        %v706 = vlaneseq
        %v707 = vshrl.u32 %v706, 7
        %v708 = vsub.s32 0, %v707
        %v709 = vrot.slane %v681, %v708
        %v710 = vmul.f32 %v685, %v705
        %v711 = vmul.f32 %v685, %v709
        %v712 = vmul.f32 %v690, %v705
        %v713 = vmul.f32 %v690, %v709
        %v714 = vmul.f32 %v695, %v705
        %v715 = vmul.f32 %v695, %v709
        %v716 = vmul.f32 %v700, %v705
        %v717 = vmul.f32 %v700, %v709
        %v718 = vadd.f32 %v647, %v710
        %v719 = vadd.f32 %v648, %v711
        %v720 = vadd.f32 %v649, %v712
        %v721 = vadd.f32 %v650, %v713
        %v722 = vadd.f32 %v651, %v714
        %v723 = vadd.f32 %v652, %v715
        %v724 = vadd.f32 %v653, %v716
        %v725 = vadd.f32 %v654, %v717
        %s726 = scalar_lea.vmem %s2, 192
        %v727 = vld [vmem:[%s726] sm:$0xff]
        %v728 = vld [vmem:[%s726 + $0x8] sm:$0xff]
        %v729 = vld [vmem:[%s726 + $0x10] sm:$0xff]
        %v730 = vld [vmem:[%s726 + $0x18] sm:$0xff]
        %731 = vrot.lane.b32.xlu0 %v327, 113
        %v732 = vpop.permute.xlu0 %731
        %733 = vrot.lane.b32.xlu0 %v331, 113
        %v734 = vpop.permute.xlu0 %733
        %vm735 = vcmp.lt.s32.totalorder %v339, 113
        %v736 = vsel %vm735, %v732, %v734
        %v737 = vsel %vm735, %v734, %v732
        %s738 = scalar_lea.vmem %s1, 12
        %v739 = vld [vmem:[%s738] sm:$0x3]
        %v741 = vlaneseq
        %v742 = vshrl.u32 %v741, 7
        %v743 = vsub.s32 0, %v742
        %v744 = vrot.slane %v739, %v743
        %v745 = vlaneseq
        %v746 = vshrl.u32 %v745, 7
        %v747 = vsub.s32 1, %v746
        %v748 = vrot.slane %v739, %v747
        %v751 = vmul.f32 %v736, %v744
        %v752 = vmul.f32 %v737, %v748
        %754 = vset.pattern.permute.xlu0 0
        %755 = vperm.xlu0 %754, %v727
        %v756 = vpop.permute.xlu0 %755
        %759 = vset.pattern.permute.xlu0 0
        %760 = vperm.xlu0 %759, %v728
        %v761 = vpop.permute.xlu0 %760
        %764 = vset.pattern.permute.xlu0 0
        %765 = vperm.xlu0 %764, %v729
        %v766 = vpop.permute.xlu0 %765
        %769 = vset.pattern.permute.xlu0 0
        %770 = vperm.xlu0 %769, %v730
        %v771 = vpop.permute.xlu0 %770
        %v773 = vlaneseq
        %v774 = vshrl.u32 %v773, 7
        %v775 = vsub.s32 0, %v774
        %v776 = vrot.slane %v751, %v775
        %v777 = vlaneseq
        %v778 = vshrl.u32 %v777, 7
        %v779 = vsub.s32 0, %v778
        %v780 = vrot.slane %v752, %v779
        %v781 = vmul.f32 %v756, %v776
        %v782 = vmul.f32 %v756, %v780
        %v783 = vmul.f32 %v761, %v776
        %v784 = vmul.f32 %v761, %v780
        %v785 = vmul.f32 %v766, %v776
        %v786 = vmul.f32 %v766, %v780
        %v787 = vmul.f32 %v771, %v776
        %v788 = vmul.f32 %v771, %v780
        %v789 = vadd.f32 %v718, %v781
        %v790 = vadd.f32 %v719, %v782
        %v791 = vadd.f32 %v720, %v783
        %v792 = vadd.f32 %v721, %v784
        %v793 = vadd.f32 %v722, %v785
        %v794 = vadd.f32 %v723, %v786
        %v795 = vadd.f32 %v724, %v787
        %v796 = vadd.f32 %v725, %v788
        %s797 = scalar_lea.vmem %s2, 224
        %v798 = vld [vmem:[%s797] sm:$0xff]
        %v799 = vld [vmem:[%s797 + $0x8] sm:$0xff]
        %v800 = vld [vmem:[%s797 + $0x10] sm:$0xff]
        %v801 = vld [vmem:[%s797 + $0x18] sm:$0xff]
        %802 = vrot.lane.b32.xlu0 %v327, 112
        %v803 = vpop.permute.xlu0 %802
        %804 = vrot.lane.b32.xlu0 %v331, 112
        %v805 = vpop.permute.xlu0 %804
        %vm806 = vcmp.lt.s32.totalorder %v339, 112
        %v807 = vsel %vm806, %v803, %v805
        %v808 = vsel %vm806, %v805, %v803
        %s809 = scalar_lea.vmem %s1, 14
        %v810 = vld [vmem:[%s809] sm:$0x3]
        %v812 = vlaneseq
        %v813 = vshrl.u32 %v812, 7
        %v814 = vsub.s32 0, %v813
        %v815 = vrot.slane %v810, %v814
        %v816 = vlaneseq
        %v817 = vshrl.u32 %v816, 7
        %v818 = vsub.s32 1, %v817
        %v819 = vrot.slane %v810, %v818
        %v822 = vmul.f32 %v807, %v815
        %v823 = vmul.f32 %v808, %v819
        %825 = vset.pattern.permute.xlu0 0
        %826 = vperm.xlu0 %825, %v798
        %v827 = vpop.permute.xlu0 %826
        %830 = vset.pattern.permute.xlu0 0
        %831 = vperm.xlu0 %830, %v799
        %v832 = vpop.permute.xlu0 %831
        %835 = vset.pattern.permute.xlu0 0
        %836 = vperm.xlu0 %835, %v800
        %v837 = vpop.permute.xlu0 %836
        %840 = vset.pattern.permute.xlu0 0
        %841 = vperm.xlu0 %840, %v801
        %v842 = vpop.permute.xlu0 %841
        %v844 = vlaneseq
        %v845 = vshrl.u32 %v844, 7
        %v846 = vsub.s32 0, %v845
        %v847 = vrot.slane %v822, %v846
        %v848 = vlaneseq
        %v849 = vshrl.u32 %v848, 7
        %v850 = vsub.s32 0, %v849
        %v851 = vrot.slane %v823, %v850
        %v852 = vmul.f32 %v827, %v847
        %v853 = vmul.f32 %v827, %v851
        %v854 = vmul.f32 %v832, %v847
        %v855 = vmul.f32 %v832, %v851
        %v856 = vmul.f32 %v837, %v847
        %v857 = vmul.f32 %v837, %v851
        %v858 = vmul.f32 %v842, %v847
        %v859 = vmul.f32 %v842, %v851
        %v860 = vadd.f32 %v789, %v852
        %v861 = vadd.f32 %v790, %v853
        %v862 = vadd.f32 %v791, %v854
        %v863 = vadd.f32 %v792, %v855
        %v864 = vadd.f32 %v793, %v856
        %v865 = vadd.f32 %v794, %v857
        %v866 = vadd.f32 %v795, %v858
        %v867 = vadd.f32 %v796, %v859
        %s868 = scalar_lea.vmem %s2, 256
        %v869 = vld [vmem:[%s868] sm:$0xff]
        %v870 = vld [vmem:[%s868 + $0x8] sm:$0xff]
        %v871 = vld [vmem:[%s868 + $0x10] sm:$0xff]
        %v872 = vld [vmem:[%s868 + $0x18] sm:$0xff]
        %873 = vrot.lane.b32.xlu0 %v327, 111
        %v874 = vpop.permute.xlu0 %873
        %875 = vrot.lane.b32.xlu0 %v331, 111
        %v876 = vpop.permute.xlu0 %875
        %vm877 = vcmp.lt.s32.totalorder %v339, 111
        %v878 = vsel %vm877, %v874, %v876
        %v879 = vsel %vm877, %v876, %v874
        %s880 = scalar_lea.vmem %s1, 16
        %v881 = vld [vmem:[%s880] sm:$0x3]
        %v883 = vlaneseq
        %v884 = vshrl.u32 %v883, 7
        %v885 = vsub.s32 0, %v884
        %v886 = vrot.slane %v881, %v885
        %v887 = vlaneseq
        %v888 = vshrl.u32 %v887, 7
        %v889 = vsub.s32 1, %v888
        %v890 = vrot.slane %v881, %v889
        %v893 = vmul.f32 %v878, %v886
        %v894 = vmul.f32 %v879, %v890
        %896 = vset.pattern.permute.xlu0 0
        %897 = vperm.xlu0 %896, %v869
        %v898 = vpop.permute.xlu0 %897
        %901 = vset.pattern.permute.xlu0 0
        %902 = vperm.xlu0 %901, %v870
        %v903 = vpop.permute.xlu0 %902
        %906 = vset.pattern.permute.xlu0 0
        %907 = vperm.xlu0 %906, %v871
        %v908 = vpop.permute.xlu0 %907
        %911 = vset.pattern.permute.xlu0 0
        %912 = vperm.xlu0 %911, %v872
        %v913 = vpop.permute.xlu0 %912
        %v915 = vlaneseq
        %v916 = vshrl.u32 %v915, 7
        %v917 = vsub.s32 0, %v916
        %v918 = vrot.slane %v893, %v917
        %v919 = vlaneseq
        %v920 = vshrl.u32 %v919, 7
        %v921 = vsub.s32 0, %v920
        %v922 = vrot.slane %v894, %v921
        %v923 = vmul.f32 %v898, %v918
        %v924 = vmul.f32 %v898, %v922
        %v925 = vmul.f32 %v903, %v918
        %v926 = vmul.f32 %v903, %v922
        %v927 = vmul.f32 %v908, %v918
        %v928 = vmul.f32 %v908, %v922
        %v929 = vmul.f32 %v913, %v918
        %v930 = vmul.f32 %v913, %v922
        %v931 = vadd.f32 %v860, %v923
        %v932 = vadd.f32 %v861, %v924
        %v933 = vadd.f32 %v862, %v925
        %v934 = vadd.f32 %v863, %v926
        %v935 = vadd.f32 %v864, %v927
        %v936 = vadd.f32 %v865, %v928
        %v937 = vadd.f32 %v866, %v929
        %v938 = vadd.f32 %v867, %v930
        %v939 = vld [vmem:[%s3] sm:$0xff]
        %v940 = vld [vmem:[%s3 + $0x8] sm:$0xff]
        %v941 = vld [vmem:[%s3 + $0x10] sm:$0xff]
        %v942 = vld [vmem:[%s3 + $0x18] sm:$0xff]
        %944 = vset.pattern.permute.xlu0 0
        %945 = vperm.xlu0 %944, %v939
        %v946 = vpop.permute.xlu0 %945
        %949 = vset.pattern.permute.xlu0 0
        %950 = vperm.xlu0 %949, %v940
        %v951 = vpop.permute.xlu0 %950
        %954 = vset.pattern.permute.xlu0 0
        %955 = vperm.xlu0 %954, %v941
        %v956 = vpop.permute.xlu0 %955
        %959 = vset.pattern.permute.xlu0 0
        %960 = vperm.xlu0 %959, %v942
        %v961 = vpop.permute.xlu0 %960
        %v963 = vadd.f32 %v931, %v946
        %v964 = vadd.f32 %v932, %v946
        %v965 = vadd.f32 %v933, %v951
        %v966 = vadd.f32 %v934, %v951
        %v967 = vadd.f32 %v935, %v956
        %v968 = vadd.f32 %v936, %v956
        %v969 = vadd.f32 %v937, %v961
        %v970 = vadd.f32 %v938, %v961
        %v971 = vmax.f32 %v963, 0.0
        %v972 = vmax.f32 %v964, 0.0
        %v973 = vmax.f32 %v965, 0.0
        %v974 = vmax.f32 %v966, 0.0
        %v975 = vmax.f32 %v967, 0.0
        %v976 = vmax.f32 %v968, 0.0
        %v977 = vmax.f32 %v969, 0.0
        %v978 = vmax.f32 %v970, 0.0
        %979 = vst [vmem:[#allocation2] sm:$0xff] %v971
        %980 = vst [vmem:[#allocation2 + $0x8] sm:$0xff] %v972
        %981 = vst [vmem:[#allocation2 + $0x10] sm:$0xff] %v973
        %982 = vst [vmem:[#allocation2 + $0x18] sm:$0xff] %v974
        %983 = vst [vmem:[#allocation2 + $0x20] sm:$0xff] %v975
        %984 = vst [vmem:[#allocation2 + $0x28] sm:$0xff] %v976
        %985 = vst [vmem:[#allocation2 + $0x30] sm:$0xff] %v977
        %986 = vst [vmem:[#allocation2 + $0x38] sm:$0xff] %v978
        %v987 = vld [vmem:[#allocation2] sm:$0xff]
        %v988 = vld [vmem:[#allocation2 + $0x8] sm:$0xff]
        %v989 = vld [vmem:[#allocation2 + $0x10] sm:$0xff]
        %v990 = vld [vmem:[#allocation2 + $0x18] sm:$0xff]
        %v991 = vld [vmem:[#allocation2 + $0x20] sm:$0xff]
        %v992 = vld [vmem:[#allocation2 + $0x28] sm:$0xff]
        %v993 = vld [vmem:[#allocation2 + $0x30] sm:$0xff]
        %v994 = vld [vmem:[#allocation2 + $0x38] sm:$0xff]
        %995 = vrot.lane.b32.xlu0 %v987, 17
        %v996 = vpop.permute.xlu0 %995
        %997 = vrot.lane.b32.xlu0 %v989, 17
        %v998 = vpop.permute.xlu0 %997
        %999 = vrot.lane.b32.xlu0 %v991, 17
        %v1000 = vpop.permute.xlu0 %999
        %1001 = vrot.lane.b32.xlu0 %v993, 17
        %v1002 = vpop.permute.xlu0 %1001
        %1003 = vrot.lane.b32.xlu0 %v988, 17
        %v1004 = vpop.permute.xlu0 %1003
        %1005 = vrot.lane.b32.xlu0 %v990, 17
        %v1006 = vpop.permute.xlu0 %1005
        %1007 = vrot.lane.b32.xlu0 %v992, 17
        %v1008 = vpop.permute.xlu0 %1007
        %1009 = vrot.lane.b32.xlu0 %v994, 17
        %v1010 = vpop.permute.xlu0 %1009
        %v1011 = vsel %vm340, %v996, %v1004
        %v1012 = vsel %vm340, %v998, %v1006
        %v1013 = vsel %vm340, %v1000, %v1008
        %v1014 = vsel %vm340, %v1002, %v1010
        %v1015 = vsel %vm340, %v1004, %v996
        %v1016 = vsel %vm340, %v1006, %v998
        %v1017 = vsel %vm340, %v1008, %v1000
        %v1018 = vsel %vm340, %v1010, %v1002
        %v1019 = vld [vmem:[%s1] sm:$0x3]
        %v1021 = vlaneseq
        %v1022 = vshrl.u32 %v1021, 7
        %v1023 = vsub.s32 0, %v1022
        %v1024 = vrot.slane %v1019, %v1023
        %v1025 = vlaneseq
        %v1026 = vshrl.u32 %v1025, 7
        %v1027 = vsub.s32 1, %v1026
        %v1028 = vrot.slane %v1019, %v1027
        %v1031 = vmul.f32 %v1015, %v1024
        %v1032 = vmul.f32 %v1011, %v1028
        %v1033 = vmul.f32 %v1016, %v1024
        %v1034 = vmul.f32 %v1012, %v1028
        %v1035 = vmul.f32 %v1017, %v1024
        %v1036 = vmul.f32 %v1013, %v1028
        %v1037 = vmul.f32 %v1018, %v1024
        %v1038 = vmul.f32 %v1014, %v1028
        %v1039 = vld [vmem:[#allocation4] sm:$0xff]
        %v1040 = vld [vmem:[#allocation4 + $0x8] sm:$0xff]
        %v1041 = vld [vmem:[#allocation4 + $0x10] sm:$0xff]
        %v1042 = vld [vmem:[#allocation4 + $0x18] sm:$0xff]
        %1043 = vrot.lane.b32.xlu0 %v987, 16
        %v1044 = vpop.permute.xlu0 %1043
        %1045 = vrot.lane.b32.xlu0 %v989, 16
        %v1046 = vpop.permute.xlu0 %1045
        %1047 = vrot.lane.b32.xlu0 %v991, 16
        %v1048 = vpop.permute.xlu0 %1047
        %1049 = vrot.lane.b32.xlu0 %v993, 16
        %v1050 = vpop.permute.xlu0 %1049
        %1051 = vrot.lane.b32.xlu0 %v988, 16
        %v1052 = vpop.permute.xlu0 %1051
        %1053 = vrot.lane.b32.xlu0 %v990, 16
        %v1054 = vpop.permute.xlu0 %1053
        %1055 = vrot.lane.b32.xlu0 %v992, 16
        %v1056 = vpop.permute.xlu0 %1055
        %1057 = vrot.lane.b32.xlu0 %v994, 16
        %v1058 = vpop.permute.xlu0 %1057
        %v1059 = vsel %vm410, %v1044, %v1052
        %v1060 = vsel %vm410, %v1046, %v1054
        %v1061 = vsel %vm410, %v1048, %v1056
        %v1062 = vsel %vm410, %v1050, %v1058
        %v1063 = vsel %vm410, %v1052, %v1044
        %v1064 = vsel %vm410, %v1054, %v1046
        %v1065 = vsel %vm410, %v1056, %v1048
        %v1066 = vsel %vm410, %v1058, %v1050
        %v1067 = vld [vmem:[%s413] sm:$0x3]
        %v1069 = vlaneseq
        %v1070 = vshrl.u32 %v1069, 7
        %v1071 = vsub.s32 0, %v1070
        %v1072 = vrot.slane %v1067, %v1071
        %v1073 = vlaneseq
        %v1074 = vshrl.u32 %v1073, 7
        %v1075 = vsub.s32 1, %v1074
        %v1076 = vrot.slane %v1067, %v1075
        %v1079 = vmul.f32 %v1063, %v1072
        %v1080 = vmul.f32 %v1059, %v1076
        %v1081 = vmul.f32 %v1064, %v1072
        %v1082 = vmul.f32 %v1060, %v1076
        %v1083 = vmul.f32 %v1065, %v1072
        %v1084 = vmul.f32 %v1061, %v1076
        %v1085 = vmul.f32 %v1066, %v1072
        %v1086 = vmul.f32 %v1062, %v1076
        %s1087 = scalar_lea.vmem [#allocation4], 32
        %v1088 = vld [vmem:[%s1087] sm:$0xff]
        %v1089 = vld [vmem:[%s1087 + $0x8] sm:$0xff]
        %v1090 = vld [vmem:[%s1087 + $0x10] sm:$0xff]
        %v1091 = vld [vmem:[%s1087 + $0x18] sm:$0xff]
        %vm1092 = vcmask 261120
        %v1094 = vsel %vm1092, %v1088, 0
        %v1097 = vsel %vm1092, %v1089, 0
        %v1100 = vsel %vm1092, %v1090, 0
        %v1103 = vsel %vm1092, %v1091, 0
        %1105 = vmatprep.subr.mxu0 0.0
        %1106 = vmatpush1.msra.mxu0 0.0
        %1107 = vmatprep.subr.mxu0 0.0
        %1108 = vmatpush1.msra.mxu0 0.0
        %1109 = vmatprep.subr.mxu0 0.0
        %1110 = vmatpush1.msra.mxu0 0.0
        %1111 = vmatprep.subr.mxu0 0.0
        %1112 = vmatpush1.msra.mxu0 0.0
        %1113 = vmatprep.subr.mxu0 0.0
        %1114 = vmatpush1.msra.mxu0 0.0
        %1115 = vmatprep.subr.mxu0 0.0
        %1116 = vmatpush1.msra.mxu0 0.0
        %1117 = vmatprep.subr.mxu0 0.0
        %1118 = vmatpush1.msra.mxu0 0.0
        %1119 = vmatprep.subr.mxu0 0.0
        %1120 = vmatpush1.msra.mxu0 0.0
        %1121 = vmatprep.subr.mxu0 0.0
        %1122 = vmatpush1.msra.mxu0 0.0
        %1123 = vmatprep.subr.mxu0 0.0
        %1124 = vmatpush1.msra.mxu0 0.0
        %1125 = vmatprep.subr.mxu0 0.0
        %1126 = vmatpush1.msra.mxu0 0.0
        %1127 = vmatprep.subr.mxu0 0.0
        %1128 = vmatpush1.msra.mxu0 0.0
        %1129 = vmatprep.subr.mxu0 %v1086
        %1130 = vmatpush1.msra.mxu0 %v1085
        %1131 = vmatprep.subr.mxu0 %v1084
        %1132 = vmatpush1.msra.mxu0 %v1083
        %1133 = vmatprep.subr.mxu0 %v1082
        %1134 = vmatpush1.msra.mxu0 %v1081
        %1135 = vmatprep.subr.mxu0 %v1080
        %1136 = vmatpush1.msra.mxu0 %v1079
        %1137 = vmatprep.subr.mxu0 0.0
        %1138 = vmatpush2.msra.mxu0 0.0
        %1139 = vmatprep.subr.mxu0 0.0
        %1140 = vmatpush2.msra.mxu0 0.0
        %1141 = vmatprep.subr.mxu0 0.0
        %1142 = vmatpush2.msra.mxu0 0.0
        %1143 = vmatprep.subr.mxu0 0.0
        %1144 = vmatpush2.msra.mxu0 0.0
        %1145 = vmatprep.subr.mxu0 0.0
        %1146 = vmatpush2.msra.mxu0 0.0
        %1147 = vmatprep.subr.mxu0 0.0
        %1148 = vmatpush2.msra.mxu0 0.0
        %1149 = vmatprep.subr.mxu0 0.0
        %1150 = vmatpush2.msra.mxu0 0.0
        %1151 = vmatprep.subr.mxu0 0.0
        %1152 = vmatpush2.msra.mxu0 0.0
        %1153 = vmatprep.subr.mxu0 0.0
        %1154 = vmatpush2.msra.mxu0 0.0
        %1155 = vmatprep.subr.mxu0 0.0
        %1156 = vmatpush2.msra.mxu0 0.0
        %1157 = vmatprep.subr.mxu0 0.0
        %1158 = vmatpush2.msra.mxu0 0.0
        %1159 = vmatprep.subr.mxu0 0.0
        %1160 = vmatpush2.msra.mxu0 0.0
        %1161 = vmatprep.subr.mxu0 0.0
        %1162 = vmatpush2.msra.mxu0 0.0
        %1163 = vmatprep.subr.mxu0 0.0
        %1164 = vmatpush2.msra.mxu0 0.0
        %1165 = vmatprep.subr.mxu0 0.0
        %1166 = vmatpush2.msra.mxu0 0.0
        %1167 = vmatprep.subr.mxu0 0.0
        %1168 = vmatpush2.msra.mxu0 0.0
        %1169 = vmatprep.mubr.f32.mxu0 0.0
        %1170 = vmatmul.mubr.f32.gmra.mxu0 %v1094
        %v1171 = vpop.f32.mrf.mxu0
        %v1172 = vadd.f32 0.0, %v1171
        %v1173 = vpop.f32.mrf.mxu0
        %v1174 = vadd.f32 0.0, %v1173
        %1175 = vmatprep.mubr.f32.mxu0 0.0
        %1176 = vmatmul.mubr.f32.gmra.mxu0 %v1097
        %v1177 = vpop.f32.mrf.mxu0
        %v1178 = vadd.f32 0.0, %v1177
        %v1179 = vpop.f32.mrf.mxu0
        %v1180 = vadd.f32 0.0, %v1179
        %1181 = vmatprep.mubr.f32.mxu0 0.0
        %1182 = vmatmul.mubr.f32.gmra.mxu0 %v1100
        %v1183 = vpop.f32.mrf.mxu0
        %v1184 = vadd.f32 0.0, %v1183
        %v1185 = vpop.f32.mrf.mxu0
        %v1186 = vadd.f32 0.0, %v1185
        %1187 = vmatprep.mubr.f32.mxu0 0.0
        %1188 = vmatmul.mubr.f32.gmra.mxu0 %v1103
        %v1189 = vpop.f32.mrf.mxu0
        %v1190 = vadd.f32 0.0, %v1189
        %v1191 = vpop.f32.mrf.mxu0
        %v1192 = vadd.f32 0.0, %v1191
        %1193 = vdwg.mxu0
        %v1195 = vsel %vm1092, %v1039, 0
        %v1198 = vsel %vm1092, %v1040, 0
        %v1201 = vsel %vm1092, %v1041, 0
        %v1204 = vsel %vm1092, %v1042, 0
        %1206 = vmatprep.subr.mxu0 0.0
        %1207 = vmatpush1.msra.mxu0 0.0
        %1208 = vmatprep.subr.mxu0 0.0
        %1209 = vmatpush1.msra.mxu0 0.0
        %1210 = vmatprep.subr.mxu0 0.0
        %1211 = vmatpush1.msra.mxu0 0.0
        %1212 = vmatprep.subr.mxu0 0.0
        %1213 = vmatpush1.msra.mxu0 0.0
        %1214 = vmatprep.subr.mxu0 0.0
        %1215 = vmatpush1.msra.mxu0 0.0
        %1216 = vmatprep.subr.mxu0 0.0
        %1217 = vmatpush1.msra.mxu0 0.0
        %1218 = vmatprep.subr.mxu0 0.0
        %1219 = vmatpush1.msra.mxu0 0.0
        %1220 = vmatprep.subr.mxu0 0.0
        %1221 = vmatpush1.msra.mxu0 0.0
        %1222 = vmatprep.subr.mxu0 0.0
        %1223 = vmatpush1.msra.mxu0 0.0
        %1224 = vmatprep.subr.mxu0 0.0
        %1225 = vmatpush1.msra.mxu0 0.0
        %1226 = vmatprep.subr.mxu0 0.0
        %1227 = vmatpush1.msra.mxu0 0.0
        %1228 = vmatprep.subr.mxu0 0.0
        %1229 = vmatpush1.msra.mxu0 0.0
        %1230 = vmatprep.subr.mxu0 %v1038
        %1231 = vmatpush1.msra.mxu0 %v1037
        %1232 = vmatprep.subr.mxu0 %v1036
        %1233 = vmatpush1.msra.mxu0 %v1035
        %1234 = vmatprep.subr.mxu0 %v1034
        %1235 = vmatpush1.msra.mxu0 %v1033
        %1236 = vmatprep.subr.mxu0 %v1032
        %1237 = vmatpush1.msra.mxu0 %v1031
        %1238 = vmatprep.subr.mxu0 0.0
        %1239 = vmatpush2.msra.mxu0 0.0
        %1240 = vmatprep.subr.mxu0 0.0
        %1241 = vmatpush2.msra.mxu0 0.0
        %1242 = vmatprep.subr.mxu0 0.0
        %1243 = vmatpush2.msra.mxu0 0.0
        %1244 = vmatprep.subr.mxu0 0.0
        %1245 = vmatpush2.msra.mxu0 0.0
        %1246 = vmatprep.subr.mxu0 0.0
        %1247 = vmatpush2.msra.mxu0 0.0
        %1248 = vmatprep.subr.mxu0 0.0
        %1249 = vmatpush2.msra.mxu0 0.0
        %1250 = vmatprep.subr.mxu0 0.0
        %1251 = vmatpush2.msra.mxu0 0.0
        %1252 = vmatprep.subr.mxu0 0.0
        %1253 = vmatpush2.msra.mxu0 0.0
        %1254 = vmatprep.subr.mxu0 0.0
        %1255 = vmatpush2.msra.mxu0 0.0
        %1256 = vmatprep.subr.mxu0 0.0
        %1257 = vmatpush2.msra.mxu0 0.0
        %1258 = vmatprep.subr.mxu0 0.0
        %1259 = vmatpush2.msra.mxu0 0.0
        %1260 = vmatprep.subr.mxu0 0.0
        %1261 = vmatpush2.msra.mxu0 0.0
        %1262 = vmatprep.subr.mxu0 0.0
        %1263 = vmatpush2.msra.mxu0 0.0
        %1264 = vmatprep.subr.mxu0 0.0
        %1265 = vmatpush2.msra.mxu0 0.0
        %1266 = vmatprep.subr.mxu0 0.0
        %1267 = vmatpush2.msra.mxu0 0.0
        %1268 = vmatprep.subr.mxu0 0.0
        %1269 = vmatpush2.msra.mxu0 0.0
        %1270 = vmatprep.mubr.f32.mxu0 0.0
        %1271 = vmatmul.mubr.f32.gmra.mxu0 %v1195
        %v1272 = vpop.f32.mrf.mxu0
        %v1273 = vadd.f32 %v1172, %v1272
        %v1274 = vpop.f32.mrf.mxu0
        %v1275 = vadd.f32 %v1174, %v1274
        %1276 = vmatprep.mubr.f32.mxu0 0.0
        %1277 = vmatmul.mubr.f32.gmra.mxu0 %v1198
        %v1278 = vpop.f32.mrf.mxu0
        %v1279 = vadd.f32 %v1178, %v1278
        %v1280 = vpop.f32.mrf.mxu0
        %v1281 = vadd.f32 %v1180, %v1280
        %1282 = vmatprep.mubr.f32.mxu0 0.0
        %1283 = vmatmul.mubr.f32.gmra.mxu0 %v1201
        %v1284 = vpop.f32.mrf.mxu0
        %v1285 = vadd.f32 %v1184, %v1284
        %v1286 = vpop.f32.mrf.mxu0
        %v1287 = vadd.f32 %v1186, %v1286
        %1288 = vmatprep.mubr.f32.mxu0 0.0
        %1289 = vmatmul.mubr.f32.gmra.mxu0 %v1204
        %v1290 = vpop.f32.mrf.mxu0
        %v1291 = vadd.f32 %v1190, %v1290
        %v1292 = vpop.f32.mrf.mxu0
        %v1293 = vadd.f32 %v1192, %v1292
        %1294 = vdwg.mxu0
        %1295 = vrot.lane.b32.xlu0 %v987, 15
        %v1296 = vpop.permute.xlu0 %1295
        %1297 = vrot.lane.b32.xlu0 %v989, 15
        %v1298 = vpop.permute.xlu0 %1297
        %1299 = vrot.lane.b32.xlu0 %v991, 15
        %v1300 = vpop.permute.xlu0 %1299
        %1301 = vrot.lane.b32.xlu0 %v993, 15
        %v1302 = vpop.permute.xlu0 %1301
        %1303 = vrot.lane.b32.xlu0 %v988, 15
        %v1304 = vpop.permute.xlu0 %1303
        %1305 = vrot.lane.b32.xlu0 %v990, 15
        %v1306 = vpop.permute.xlu0 %1305
        %1307 = vrot.lane.b32.xlu0 %v992, 15
        %v1308 = vpop.permute.xlu0 %1307
        %1309 = vrot.lane.b32.xlu0 %v994, 15
        %v1310 = vpop.permute.xlu0 %1309
        %v1311 = vsel %vm481, %v1296, %v1304
        %v1312 = vsel %vm481, %v1298, %v1306
        %v1313 = vsel %vm481, %v1300, %v1308
        %v1314 = vsel %vm481, %v1302, %v1310
        %v1315 = vsel %vm481, %v1304, %v1296
        %v1316 = vsel %vm481, %v1306, %v1298
        %v1317 = vsel %vm481, %v1308, %v1300
        %v1318 = vsel %vm481, %v1310, %v1302
        %v1319 = vld [vmem:[%s484] sm:$0x3]
        %v1321 = vlaneseq
        %v1322 = vshrl.u32 %v1321, 7
        %v1323 = vsub.s32 0, %v1322
        %v1324 = vrot.slane %v1319, %v1323
        %v1325 = vlaneseq
        %v1326 = vshrl.u32 %v1325, 7
        %v1327 = vsub.s32 1, %v1326
        %v1328 = vrot.slane %v1319, %v1327
        %v1331 = vmul.f32 %v1315, %v1324
        %v1332 = vmul.f32 %v1311, %v1328
        %v1333 = vmul.f32 %v1316, %v1324
        %v1334 = vmul.f32 %v1312, %v1328
        %v1335 = vmul.f32 %v1317, %v1324
        %v1336 = vmul.f32 %v1313, %v1328
        %v1337 = vmul.f32 %v1318, %v1324
        %v1338 = vmul.f32 %v1314, %v1328
        %s1339 = scalar_lea.vmem [#allocation4], 64
        %v1340 = vld [vmem:[%s1339] sm:$0xff]
        %v1341 = vld [vmem:[%s1339 + $0x8] sm:$0xff]
        %v1342 = vld [vmem:[%s1339 + $0x10] sm:$0xff]
        %v1343 = vld [vmem:[%s1339 + $0x18] sm:$0xff]
        %v1345 = vsel %vm1092, %v1340, 0
        %v1348 = vsel %vm1092, %v1341, 0
        %v1351 = vsel %vm1092, %v1342, 0
        %v1354 = vsel %vm1092, %v1343, 0
        %1356 = vmatprep.subr.mxu0 0.0
        %1357 = vmatpush1.msra.mxu0 0.0
        %1358 = vmatprep.subr.mxu0 0.0
        %1359 = vmatpush1.msra.mxu0 0.0
        %1360 = vmatprep.subr.mxu0 0.0
        %1361 = vmatpush1.msra.mxu0 0.0
        %1362 = vmatprep.subr.mxu0 0.0
        %1363 = vmatpush1.msra.mxu0 0.0
        %1364 = vmatprep.subr.mxu0 0.0
        %1365 = vmatpush1.msra.mxu0 0.0
        %1366 = vmatprep.subr.mxu0 0.0
        %1367 = vmatpush1.msra.mxu0 0.0
        %1368 = vmatprep.subr.mxu0 0.0
        %1369 = vmatpush1.msra.mxu0 0.0
        %1370 = vmatprep.subr.mxu0 0.0
        %1371 = vmatpush1.msra.mxu0 0.0
        %1372 = vmatprep.subr.mxu0 0.0
        %1373 = vmatpush1.msra.mxu0 0.0
        %1374 = vmatprep.subr.mxu0 0.0
        %1375 = vmatpush1.msra.mxu0 0.0
        %1376 = vmatprep.subr.mxu0 0.0
        %1377 = vmatpush1.msra.mxu0 0.0
        %1378 = vmatprep.subr.mxu0 0.0
        %1379 = vmatpush1.msra.mxu0 0.0
        %1380 = vmatprep.subr.mxu0 %v1338
        %1381 = vmatpush1.msra.mxu0 %v1337
        %1382 = vmatprep.subr.mxu0 %v1336
        %1383 = vmatpush1.msra.mxu0 %v1335
        %1384 = vmatprep.subr.mxu0 %v1334
        %1385 = vmatpush1.msra.mxu0 %v1333
        %1386 = vmatprep.subr.mxu0 %v1332
        %1387 = vmatpush1.msra.mxu0 %v1331
        %1388 = vmatprep.subr.mxu0 0.0
        %1389 = vmatpush2.msra.mxu0 0.0
        %1390 = vmatprep.subr.mxu0 0.0
        %1391 = vmatpush2.msra.mxu0 0.0
        %1392 = vmatprep.subr.mxu0 0.0
        %1393 = vmatpush2.msra.mxu0 0.0
        %1394 = vmatprep.subr.mxu0 0.0
        %1395 = vmatpush2.msra.mxu0 0.0
        %1396 = vmatprep.subr.mxu0 0.0
        %1397 = vmatpush2.msra.mxu0 0.0
        %1398 = vmatprep.subr.mxu0 0.0
        %1399 = vmatpush2.msra.mxu0 0.0
        %1400 = vmatprep.subr.mxu0 0.0
        %1401 = vmatpush2.msra.mxu0 0.0
        %1402 = vmatprep.subr.mxu0 0.0
        %1403 = vmatpush2.msra.mxu0 0.0
        %1404 = vmatprep.subr.mxu0 0.0
        %1405 = vmatpush2.msra.mxu0 0.0
        %1406 = vmatprep.subr.mxu0 0.0
        %1407 = vmatpush2.msra.mxu0 0.0
        %1408 = vmatprep.subr.mxu0 0.0
        %1409 = vmatpush2.msra.mxu0 0.0
        %1410 = vmatprep.subr.mxu0 0.0
        %1411 = vmatpush2.msra.mxu0 0.0
        %1412 = vmatprep.subr.mxu0 0.0
        %1413 = vmatpush2.msra.mxu0 0.0
        %1414 = vmatprep.subr.mxu0 0.0
        %1415 = vmatpush2.msra.mxu0 0.0
        %1416 = vmatprep.subr.mxu0 0.0
        %1417 = vmatpush2.msra.mxu0 0.0
        %1418 = vmatprep.subr.mxu0 0.0
        %1419 = vmatpush2.msra.mxu0 0.0
        %1420 = vmatprep.mubr.f32.mxu0 0.0
        %1421 = vmatmul.mubr.f32.gmra.mxu0 %v1345
        %v1422 = vpop.f32.mrf.mxu0
        %v1423 = vadd.f32 0.0, %v1422
        %v1424 = vpop.f32.mrf.mxu0
        %v1425 = vadd.f32 0.0, %v1424
        %1426 = vmatprep.mubr.f32.mxu0 0.0
        %1427 = vmatmul.mubr.f32.gmra.mxu0 %v1348
        %v1428 = vpop.f32.mrf.mxu0
        %v1429 = vadd.f32 0.0, %v1428
        %v1430 = vpop.f32.mrf.mxu0
        %v1431 = vadd.f32 0.0, %v1430
        %1432 = vmatprep.mubr.f32.mxu0 0.0
        %1433 = vmatmul.mubr.f32.gmra.mxu0 %v1351
        %v1434 = vpop.f32.mrf.mxu0
        %v1435 = vadd.f32 0.0, %v1434
        %v1436 = vpop.f32.mrf.mxu0
        %v1437 = vadd.f32 0.0, %v1436
        %1438 = vmatprep.mubr.f32.mxu0 0.0
        %1439 = vmatmul.mubr.f32.gmra.mxu0 %v1354
        %v1440 = vpop.f32.mrf.mxu0
        %v1441 = vadd.f32 0.0, %v1440
        %v1442 = vpop.f32.mrf.mxu0
        %v1443 = vadd.f32 0.0, %v1442
        %1444 = vdwg.mxu0
        %v1445 = vadd.f32 %v1273, %v1423
        %v1446 = vadd.f32 %v1275, %v1425
        %v1447 = vadd.f32 %v1279, %v1429
        %v1448 = vadd.f32 %v1281, %v1431
        %v1449 = vadd.f32 %v1285, %v1435
        %v1450 = vadd.f32 %v1287, %v1437
        %v1451 = vadd.f32 %v1291, %v1441
        %v1452 = vadd.f32 %v1293, %v1443
        %1453 = vrot.lane.b32.xlu0 %v987, 1
        %v1454 = vpop.permute.xlu0 %1453
        %1455 = vrot.lane.b32.xlu0 %v989, 1
        %v1456 = vpop.permute.xlu0 %1455
        %1457 = vrot.lane.b32.xlu0 %v991, 1
        %v1458 = vpop.permute.xlu0 %1457
        %1459 = vrot.lane.b32.xlu0 %v993, 1
        %v1460 = vpop.permute.xlu0 %1459
        %1461 = vrot.lane.b32.xlu0 %v988, 1
        %v1462 = vpop.permute.xlu0 %1461
        %1463 = vrot.lane.b32.xlu0 %v990, 1
        %v1464 = vpop.permute.xlu0 %1463
        %1465 = vrot.lane.b32.xlu0 %v992, 1
        %v1466 = vpop.permute.xlu0 %1465
        %1467 = vrot.lane.b32.xlu0 %v994, 1
        %v1468 = vpop.permute.xlu0 %1467
        %v1469 = vsel %vm552, %v1454, %v1462
        %v1470 = vsel %vm552, %v1456, %v1464
        %v1471 = vsel %vm552, %v1458, %v1466
        %v1472 = vsel %vm552, %v1460, %v1468
        %v1473 = vsel %vm552, %v1462, %v1454
        %v1474 = vsel %vm552, %v1464, %v1456
        %v1475 = vsel %vm552, %v1466, %v1458
        %v1476 = vsel %vm552, %v1468, %v1460
        %v1477 = vld [vmem:[%s555] sm:$0x3]
        %v1479 = vlaneseq
        %v1480 = vshrl.u32 %v1479, 7
        %v1481 = vsub.s32 0, %v1480
        %v1482 = vrot.slane %v1477, %v1481
        %v1483 = vlaneseq
        %v1484 = vshrl.u32 %v1483, 7
        %v1485 = vsub.s32 1, %v1484
        %v1486 = vrot.slane %v1477, %v1485
        %v1489 = vmul.f32 %v1473, %v1482
        %v1490 = vmul.f32 %v1469, %v1486
        %v1491 = vmul.f32 %v1474, %v1482
        %v1492 = vmul.f32 %v1470, %v1486
        %v1493 = vmul.f32 %v1475, %v1482
        %v1494 = vmul.f32 %v1471, %v1486
        %v1495 = vmul.f32 %v1476, %v1482
        %v1496 = vmul.f32 %v1472, %v1486
        %s1497 = scalar_lea.vmem [#allocation4], 96
        %v1498 = vld [vmem:[%s1497] sm:$0xff]
        %v1499 = vld [vmem:[%s1497 + $0x8] sm:$0xff]
        %v1500 = vld [vmem:[%s1497 + $0x10] sm:$0xff]
        %v1501 = vld [vmem:[%s1497 + $0x18] sm:$0xff]
        %v1503 = vsel %vm1092, %v1498, 0
        %v1506 = vsel %vm1092, %v1499, 0
        %v1509 = vsel %vm1092, %v1500, 0
        %v1512 = vsel %vm1092, %v1501, 0
        %1514 = vmatprep.subr.mxu0 0.0
        %1515 = vmatpush1.msra.mxu0 0.0
        %1516 = vmatprep.subr.mxu0 0.0
        %1517 = vmatpush1.msra.mxu0 0.0
        %1518 = vmatprep.subr.mxu0 0.0
        %1519 = vmatpush1.msra.mxu0 0.0
        %1520 = vmatprep.subr.mxu0 0.0
        %1521 = vmatpush1.msra.mxu0 0.0
        %1522 = vmatprep.subr.mxu0 0.0
        %1523 = vmatpush1.msra.mxu0 0.0
        %1524 = vmatprep.subr.mxu0 0.0
        %1525 = vmatpush1.msra.mxu0 0.0
        %1526 = vmatprep.subr.mxu0 0.0
        %1527 = vmatpush1.msra.mxu0 0.0
        %1528 = vmatprep.subr.mxu0 0.0
        %1529 = vmatpush1.msra.mxu0 0.0
        %1530 = vmatprep.subr.mxu0 0.0
        %1531 = vmatpush1.msra.mxu0 0.0
        %1532 = vmatprep.subr.mxu0 0.0
        %1533 = vmatpush1.msra.mxu0 0.0
        %1534 = vmatprep.subr.mxu0 0.0
        %1535 = vmatpush1.msra.mxu0 0.0
        %1536 = vmatprep.subr.mxu0 0.0
        %1537 = vmatpush1.msra.mxu0 0.0
        %1538 = vmatprep.subr.mxu0 %v1496
        %1539 = vmatpush1.msra.mxu0 %v1495
        %1540 = vmatprep.subr.mxu0 %v1494
        %1541 = vmatpush1.msra.mxu0 %v1493
        %1542 = vmatprep.subr.mxu0 %v1492
        %1543 = vmatpush1.msra.mxu0 %v1491
        %1544 = vmatprep.subr.mxu0 %v1490
        %1545 = vmatpush1.msra.mxu0 %v1489
        %1546 = vmatprep.subr.mxu0 0.0
        %1547 = vmatpush2.msra.mxu0 0.0
        %1548 = vmatprep.subr.mxu0 0.0
        %1549 = vmatpush2.msra.mxu0 0.0
        %1550 = vmatprep.subr.mxu0 0.0
        %1551 = vmatpush2.msra.mxu0 0.0
        %1552 = vmatprep.subr.mxu0 0.0
        %1553 = vmatpush2.msra.mxu0 0.0
        %1554 = vmatprep.subr.mxu0 0.0
        %1555 = vmatpush2.msra.mxu0 0.0
        %1556 = vmatprep.subr.mxu0 0.0
        %1557 = vmatpush2.msra.mxu0 0.0
        %1558 = vmatprep.subr.mxu0 0.0
        %1559 = vmatpush2.msra.mxu0 0.0
        %1560 = vmatprep.subr.mxu0 0.0
        %1561 = vmatpush2.msra.mxu0 0.0
        %1562 = vmatprep.subr.mxu0 0.0
        %1563 = vmatpush2.msra.mxu0 0.0
        %1564 = vmatprep.subr.mxu0 0.0
        %1565 = vmatpush2.msra.mxu0 0.0
        %1566 = vmatprep.subr.mxu0 0.0
        %1567 = vmatpush2.msra.mxu0 0.0
        %1568 = vmatprep.subr.mxu0 0.0
        %1569 = vmatpush2.msra.mxu0 0.0
        %1570 = vmatprep.subr.mxu0 0.0
        %1571 = vmatpush2.msra.mxu0 0.0
        %1572 = vmatprep.subr.mxu0 0.0
        %1573 = vmatpush2.msra.mxu0 0.0
        %1574 = vmatprep.subr.mxu0 0.0
        %1575 = vmatpush2.msra.mxu0 0.0
        %1576 = vmatprep.subr.mxu0 0.0
        %1577 = vmatpush2.msra.mxu0 0.0
        %1578 = vmatprep.mubr.f32.mxu0 0.0
        %1579 = vmatmul.mubr.f32.gmra.mxu0 %v1503
        %v1580 = vpop.f32.mrf.mxu0
        %v1581 = vadd.f32 0.0, %v1580
        %v1582 = vpop.f32.mrf.mxu0
        %v1583 = vadd.f32 0.0, %v1582
        %1584 = vmatprep.mubr.f32.mxu0 0.0
        %1585 = vmatmul.mubr.f32.gmra.mxu0 %v1506
        %v1586 = vpop.f32.mrf.mxu0
        %v1587 = vadd.f32 0.0, %v1586
        %v1588 = vpop.f32.mrf.mxu0
        %v1589 = vadd.f32 0.0, %v1588
        %1590 = vmatprep.mubr.f32.mxu0 0.0
        %1591 = vmatmul.mubr.f32.gmra.mxu0 %v1509
        %v1592 = vpop.f32.mrf.mxu0
        %v1593 = vadd.f32 0.0, %v1592
        %v1594 = vpop.f32.mrf.mxu0
        %v1595 = vadd.f32 0.0, %v1594
        %1596 = vmatprep.mubr.f32.mxu0 0.0
        %1597 = vmatmul.mubr.f32.gmra.mxu0 %v1512
        %v1598 = vpop.f32.mrf.mxu0
        %v1599 = vadd.f32 0.0, %v1598
        %v1600 = vpop.f32.mrf.mxu0
        %v1601 = vadd.f32 0.0, %v1600
        %1602 = vdwg.mxu0
        %v1603 = vadd.f32 %v1445, %v1581
        %v1604 = vadd.f32 %v1446, %v1583
        %v1605 = vadd.f32 %v1447, %v1587
        %v1606 = vadd.f32 %v1448, %v1589
        %v1607 = vadd.f32 %v1449, %v1593
        %v1608 = vadd.f32 %v1450, %v1595
        %v1609 = vadd.f32 %v1451, %v1599
        %v1610 = vadd.f32 %v1452, %v1601
        %s1611 = scalar_lea.vmem [#allocation4], 128
        %v1612 = vld [vmem:[%s1611] sm:$0xff]
        %v1613 = vld [vmem:[%s1611 + $0x8] sm:$0xff]
        %v1614 = vld [vmem:[%s1611 + $0x10] sm:$0xff]
        %v1615 = vld [vmem:[%s1611 + $0x18] sm:$0xff]
        %v1617 = vsel %vm1092, %v1612, 0
        %v1620 = vsel %vm1092, %v1613, 0
        %v1623 = vsel %vm1092, %v1614, 0
        %v1626 = vsel %vm1092, %v1615, 0
        %1628 = vmatprep.subr.mxu0 0.0
        %1629 = vmatpush1.msra.mxu0 0.0
        %1630 = vmatprep.subr.mxu0 0.0
        %1631 = vmatpush1.msra.mxu0 0.0
        %1632 = vmatprep.subr.mxu0 0.0
        %1633 = vmatpush1.msra.mxu0 0.0
        %1634 = vmatprep.subr.mxu0 0.0
        %1635 = vmatpush1.msra.mxu0 0.0
        %1636 = vmatprep.subr.mxu0 0.0
        %1637 = vmatpush1.msra.mxu0 0.0
        %1638 = vmatprep.subr.mxu0 0.0
        %1639 = vmatpush1.msra.mxu0 0.0
        %1640 = vmatprep.subr.mxu0 0.0
        %1641 = vmatpush1.msra.mxu0 0.0
        %1642 = vmatprep.subr.mxu0 0.0
        %1643 = vmatpush1.msra.mxu0 0.0
        %1644 = vmatprep.subr.mxu0 0.0
        %1645 = vmatpush1.msra.mxu0 0.0
        %1646 = vmatprep.subr.mxu0 0.0
        %1647 = vmatpush1.msra.mxu0 0.0
        %1648 = vmatprep.subr.mxu0 0.0
        %1649 = vmatpush1.msra.mxu0 0.0
        %1650 = vmatprep.subr.mxu0 0.0
        %1651 = vmatpush1.msra.mxu0 0.0
        %1652 = vmatprep.subr.mxu0 %v994
        %1653 = vmatpush1.msra.mxu0 %v993
        %1654 = vmatprep.subr.mxu0 %v992
        %1655 = vmatpush1.msra.mxu0 %v991
        %1656 = vmatprep.subr.mxu0 %v990
        %1657 = vmatpush1.msra.mxu0 %v989
        %1658 = vmatprep.subr.mxu0 %v988
        %1659 = vmatpush1.msra.mxu0 %v987
        %1660 = vmatprep.subr.mxu0 0.0
        %1661 = vmatpush2.msra.mxu0 0.0
        %1662 = vmatprep.subr.mxu0 0.0
        %1663 = vmatpush2.msra.mxu0 0.0
        %1664 = vmatprep.subr.mxu0 0.0
        %1665 = vmatpush2.msra.mxu0 0.0
        %1666 = vmatprep.subr.mxu0 0.0
        %1667 = vmatpush2.msra.mxu0 0.0
        %1668 = vmatprep.subr.mxu0 0.0
        %1669 = vmatpush2.msra.mxu0 0.0
        %1670 = vmatprep.subr.mxu0 0.0
        %1671 = vmatpush2.msra.mxu0 0.0
        %1672 = vmatprep.subr.mxu0 0.0
        %1673 = vmatpush2.msra.mxu0 0.0
        %1674 = vmatprep.subr.mxu0 0.0
        %1675 = vmatpush2.msra.mxu0 0.0
        %1676 = vmatprep.subr.mxu0 0.0
        %1677 = vmatpush2.msra.mxu0 0.0
        %1678 = vmatprep.subr.mxu0 0.0
        %1679 = vmatpush2.msra.mxu0 0.0
        %1680 = vmatprep.subr.mxu0 0.0
        %1681 = vmatpush2.msra.mxu0 0.0
        %1682 = vmatprep.subr.mxu0 0.0
        %1683 = vmatpush2.msra.mxu0 0.0
        %1684 = vmatprep.subr.mxu0 0.0
        %1685 = vmatpush2.msra.mxu0 0.0
        %1686 = vmatprep.subr.mxu0 0.0
        %1687 = vmatpush2.msra.mxu0 0.0
        %1688 = vmatprep.subr.mxu0 0.0
        %1689 = vmatpush2.msra.mxu0 0.0
        %1690 = vmatprep.subr.mxu0 0.0
        %1691 = vmatpush2.msra.mxu0 0.0
        %1692 = vmatprep.mubr.f32.mxu0 0.0
        %1693 = vmatmul.mubr.f32.gmra.mxu0 %v1617
        %v1694 = vpop.f32.mrf.mxu0
        %v1695 = vadd.f32 0.0, %v1694
        %v1696 = vpop.f32.mrf.mxu0
        %v1697 = vadd.f32 0.0, %v1696
        %1698 = vmatprep.mubr.f32.mxu0 0.0
        %1699 = vmatmul.mubr.f32.gmra.mxu0 %v1620
        %v1700 = vpop.f32.mrf.mxu0
        %v1701 = vadd.f32 0.0, %v1700
        %v1702 = vpop.f32.mrf.mxu0
        %v1703 = vadd.f32 0.0, %v1702
        %1704 = vmatprep.mubr.f32.mxu0 0.0
        %1705 = vmatmul.mubr.f32.gmra.mxu0 %v1623
        %v1706 = vpop.f32.mrf.mxu0
        %v1707 = vadd.f32 0.0, %v1706
        %v1708 = vpop.f32.mrf.mxu0
        %v1709 = vadd.f32 0.0, %v1708
        %1710 = vmatprep.mubr.f32.mxu0 0.0
        %1711 = vmatmul.mubr.f32.gmra.mxu0 %v1626
        %v1712 = vpop.f32.mrf.mxu0
        %v1713 = vadd.f32 0.0, %v1712
        %v1714 = vpop.f32.mrf.mxu0
        %v1715 = vadd.f32 0.0, %v1714
        %1716 = vdwg.mxu0
        %v1717 = vadd.f32 %v1603, %v1695
        %v1718 = vadd.f32 %v1604, %v1697
        %v1719 = vadd.f32 %v1605, %v1701
        %v1720 = vadd.f32 %v1606, %v1703
        %v1721 = vadd.f32 %v1607, %v1707
        %v1722 = vadd.f32 %v1608, %v1709
        %v1723 = vadd.f32 %v1609, %v1713
        %v1724 = vadd.f32 %v1610, %v1715
        %1725 = vrot.lane.b32.xlu0 %v987, 127
        %v1726 = vpop.permute.xlu0 %1725
        %1727 = vrot.lane.b32.xlu0 %v989, 127
        %v1728 = vpop.permute.xlu0 %1727
        %1729 = vrot.lane.b32.xlu0 %v991, 127
        %v1730 = vpop.permute.xlu0 %1729
        %1731 = vrot.lane.b32.xlu0 %v993, 127
        %v1732 = vpop.permute.xlu0 %1731
        %1733 = vrot.lane.b32.xlu0 %v988, 127
        %v1734 = vpop.permute.xlu0 %1733
        %1735 = vrot.lane.b32.xlu0 %v990, 127
        %v1736 = vpop.permute.xlu0 %1735
        %1737 = vrot.lane.b32.xlu0 %v992, 127
        %v1738 = vpop.permute.xlu0 %1737
        %1739 = vrot.lane.b32.xlu0 %v994, 127
        %v1740 = vpop.permute.xlu0 %1739
        %v1741 = vsel %vm664, %v1726, %v1734
        %v1742 = vsel %vm664, %v1728, %v1736
        %v1743 = vsel %vm664, %v1730, %v1738
        %v1744 = vsel %vm664, %v1732, %v1740
        %v1745 = vsel %vm664, %v1734, %v1726
        %v1746 = vsel %vm664, %v1736, %v1728
        %v1747 = vsel %vm664, %v1738, %v1730
        %v1748 = vsel %vm664, %v1740, %v1732
        %v1749 = vld [vmem:[%s667] sm:$0x3]
        %v1751 = vlaneseq
        %v1752 = vshrl.u32 %v1751, 7
        %v1753 = vsub.s32 0, %v1752
        %v1754 = vrot.slane %v1749, %v1753
        %v1755 = vlaneseq
        %v1756 = vshrl.u32 %v1755, 7
        %v1757 = vsub.s32 1, %v1756
        %v1758 = vrot.slane %v1749, %v1757
        %v1761 = vmul.f32 %v1741, %v1754
        %v1762 = vmul.f32 %v1745, %v1758
        %v1763 = vmul.f32 %v1742, %v1754
        %v1764 = vmul.f32 %v1746, %v1758
        %v1765 = vmul.f32 %v1743, %v1754
        %v1766 = vmul.f32 %v1747, %v1758
        %v1767 = vmul.f32 %v1744, %v1754
        %v1768 = vmul.f32 %v1748, %v1758
        %s1769 = scalar_lea.vmem [#allocation4], 160
        %v1770 = vld [vmem:[%s1769] sm:$0xff]
        %v1771 = vld [vmem:[%s1769 + $0x8] sm:$0xff]
        %v1772 = vld [vmem:[%s1769 + $0x10] sm:$0xff]
        %v1773 = vld [vmem:[%s1769 + $0x18] sm:$0xff]
        %v1775 = vsel %vm1092, %v1770, 0
        %v1778 = vsel %vm1092, %v1771, 0
        %v1781 = vsel %vm1092, %v1772, 0
        %v1784 = vsel %vm1092, %v1773, 0
        %1786 = vmatprep.subr.mxu0 0.0
        %1787 = vmatpush1.msra.mxu0 0.0
        %1788 = vmatprep.subr.mxu0 0.0
        %1789 = vmatpush1.msra.mxu0 0.0
        %1790 = vmatprep.subr.mxu0 0.0
        %1791 = vmatpush1.msra.mxu0 0.0
        %1792 = vmatprep.subr.mxu0 0.0
        %1793 = vmatpush1.msra.mxu0 0.0
        %1794 = vmatprep.subr.mxu0 0.0
        %1795 = vmatpush1.msra.mxu0 0.0
        %1796 = vmatprep.subr.mxu0 0.0
        %1797 = vmatpush1.msra.mxu0 0.0
        %1798 = vmatprep.subr.mxu0 0.0
        %1799 = vmatpush1.msra.mxu0 0.0
        %1800 = vmatprep.subr.mxu0 0.0
        %1801 = vmatpush1.msra.mxu0 0.0
        %1802 = vmatprep.subr.mxu0 0.0
        %1803 = vmatpush1.msra.mxu0 0.0
        %1804 = vmatprep.subr.mxu0 0.0
        %1805 = vmatpush1.msra.mxu0 0.0
        %1806 = vmatprep.subr.mxu0 0.0
        %1807 = vmatpush1.msra.mxu0 0.0
        %1808 = vmatprep.subr.mxu0 0.0
        %1809 = vmatpush1.msra.mxu0 0.0
        %1810 = vmatprep.subr.mxu0 %v1768
        %1811 = vmatpush1.msra.mxu0 %v1767
        %1812 = vmatprep.subr.mxu0 %v1766
        %1813 = vmatpush1.msra.mxu0 %v1765
        %1814 = vmatprep.subr.mxu0 %v1764
        %1815 = vmatpush1.msra.mxu0 %v1763
        %1816 = vmatprep.subr.mxu0 %v1762
        %1817 = vmatpush1.msra.mxu0 %v1761
        %1818 = vmatprep.subr.mxu0 0.0
        %1819 = vmatpush2.msra.mxu0 0.0
        %1820 = vmatprep.subr.mxu0 0.0
        %1821 = vmatpush2.msra.mxu0 0.0
        %1822 = vmatprep.subr.mxu0 0.0
        %1823 = vmatpush2.msra.mxu0 0.0
        %1824 = vmatprep.subr.mxu0 0.0
        %1825 = vmatpush2.msra.mxu0 0.0
        %1826 = vmatprep.subr.mxu0 0.0
        %1827 = vmatpush2.msra.mxu0 0.0
        %1828 = vmatprep.subr.mxu0 0.0
        %1829 = vmatpush2.msra.mxu0 0.0
        %1830 = vmatprep.subr.mxu0 0.0
        %1831 = vmatpush2.msra.mxu0 0.0
        %1832 = vmatprep.subr.mxu0 0.0
        %1833 = vmatpush2.msra.mxu0 0.0
        %1834 = vmatprep.subr.mxu0 0.0
        %1835 = vmatpush2.msra.mxu0 0.0
        %1836 = vmatprep.subr.mxu0 0.0
        %1837 = vmatpush2.msra.mxu0 0.0
        %1838 = vmatprep.subr.mxu0 0.0
        %1839 = vmatpush2.msra.mxu0 0.0
        %1840 = vmatprep.subr.mxu0 0.0
        %1841 = vmatpush2.msra.mxu0 0.0
        %1842 = vmatprep.subr.mxu0 0.0
        %1843 = vmatpush2.msra.mxu0 0.0
        %1844 = vmatprep.subr.mxu0 0.0
        %1845 = vmatpush2.msra.mxu0 0.0
        %1846 = vmatprep.subr.mxu0 0.0
        %1847 = vmatpush2.msra.mxu0 0.0
        %1848 = vmatprep.subr.mxu0 0.0
        %1849 = vmatpush2.msra.mxu0 0.0
        %1850 = vmatprep.mubr.f32.mxu0 0.0
        %1851 = vmatmul.mubr.f32.gmra.mxu0 %v1775
        %v1852 = vpop.f32.mrf.mxu0
        %v1853 = vadd.f32 0.0, %v1852
        %v1854 = vpop.f32.mrf.mxu0
        %v1855 = vadd.f32 0.0, %v1854
        %1856 = vmatprep.mubr.f32.mxu0 0.0
        %1857 = vmatmul.mubr.f32.gmra.mxu0 %v1778
        %v1858 = vpop.f32.mrf.mxu0
        %v1859 = vadd.f32 0.0, %v1858
        %v1860 = vpop.f32.mrf.mxu0
        %v1861 = vadd.f32 0.0, %v1860
        %1862 = vmatprep.mubr.f32.mxu0 0.0
        %1863 = vmatmul.mubr.f32.gmra.mxu0 %v1781
        %v1864 = vpop.f32.mrf.mxu0
        %v1865 = vadd.f32 0.0, %v1864
        %v1866 = vpop.f32.mrf.mxu0
        %v1867 = vadd.f32 0.0, %v1866
        %1868 = vmatprep.mubr.f32.mxu0 0.0
        %1869 = vmatmul.mubr.f32.gmra.mxu0 %v1784
        %v1870 = vpop.f32.mrf.mxu0
        %v1871 = vadd.f32 0.0, %v1870
        %v1872 = vpop.f32.mrf.mxu0
        %v1873 = vadd.f32 0.0, %v1872
        %1874 = vdwg.mxu0
        %v1875 = vadd.f32 %v1717, %v1853
        %v1876 = vadd.f32 %v1718, %v1855
        %v1877 = vadd.f32 %v1719, %v1859
        %v1878 = vadd.f32 %v1720, %v1861
        %v1879 = vadd.f32 %v1721, %v1865
        %v1880 = vadd.f32 %v1722, %v1867
        %v1881 = vadd.f32 %v1723, %v1871
        %v1882 = vadd.f32 %v1724, %v1873
        %1883 = vrot.lane.b32.xlu0 %v987, 113
        %v1884 = vpop.permute.xlu0 %1883
        %1885 = vrot.lane.b32.xlu0 %v989, 113
        %v1886 = vpop.permute.xlu0 %1885
        %1887 = vrot.lane.b32.xlu0 %v991, 113
        %v1888 = vpop.permute.xlu0 %1887
        %1889 = vrot.lane.b32.xlu0 %v993, 113
        %v1890 = vpop.permute.xlu0 %1889
        %1891 = vrot.lane.b32.xlu0 %v988, 113
        %v1892 = vpop.permute.xlu0 %1891
        %1893 = vrot.lane.b32.xlu0 %v990, 113
        %v1894 = vpop.permute.xlu0 %1893
        %1895 = vrot.lane.b32.xlu0 %v992, 113
        %v1896 = vpop.permute.xlu0 %1895
        %1897 = vrot.lane.b32.xlu0 %v994, 113
        %v1898 = vpop.permute.xlu0 %1897
        %v1899 = vsel %vm735, %v1884, %v1892
        %v1900 = vsel %vm735, %v1886, %v1894
        %v1901 = vsel %vm735, %v1888, %v1896
        %v1902 = vsel %vm735, %v1890, %v1898
        %v1903 = vsel %vm735, %v1892, %v1884
        %v1904 = vsel %vm735, %v1894, %v1886
        %v1905 = vsel %vm735, %v1896, %v1888
        %v1906 = vsel %vm735, %v1898, %v1890
        %v1907 = vld [vmem:[%s738] sm:$0x3]
        %v1909 = vlaneseq
        %v1910 = vshrl.u32 %v1909, 7
        %v1911 = vsub.s32 0, %v1910
        %v1912 = vrot.slane %v1907, %v1911
        %v1913 = vlaneseq
        %v1914 = vshrl.u32 %v1913, 7
        %v1915 = vsub.s32 1, %v1914
        %v1916 = vrot.slane %v1907, %v1915
        %v1919 = vmul.f32 %v1899, %v1912
        %v1920 = vmul.f32 %v1903, %v1916
        %v1921 = vmul.f32 %v1900, %v1912
        %v1922 = vmul.f32 %v1904, %v1916
        %v1923 = vmul.f32 %v1901, %v1912
        %v1924 = vmul.f32 %v1905, %v1916
        %v1925 = vmul.f32 %v1902, %v1912
        %v1926 = vmul.f32 %v1906, %v1916
        %s1927 = scalar_lea.vmem [#allocation4], 192
        %v1928 = vld [vmem:[%s1927] sm:$0xff]
        %v1929 = vld [vmem:[%s1927 + $0x8] sm:$0xff]
        %v1930 = vld [vmem:[%s1927 + $0x10] sm:$0xff]
        %v1931 = vld [vmem:[%s1927 + $0x18] sm:$0xff]
        %v1933 = vsel %vm1092, %v1928, 0
        %v1936 = vsel %vm1092, %v1929, 0
        %v1939 = vsel %vm1092, %v1930, 0
        %v1942 = vsel %vm1092, %v1931, 0
        %1944 = vmatprep.subr.mxu0 0.0
        %1945 = vmatpush1.msra.mxu0 0.0
        %1946 = vmatprep.subr.mxu0 0.0
        %1947 = vmatpush1.msra.mxu0 0.0
        %1948 = vmatprep.subr.mxu0 0.0
        %1949 = vmatpush1.msra.mxu0 0.0
        %1950 = vmatprep.subr.mxu0 0.0
        %1951 = vmatpush1.msra.mxu0 0.0
        %1952 = vmatprep.subr.mxu0 0.0
        %1953 = vmatpush1.msra.mxu0 0.0
        %1954 = vmatprep.subr.mxu0 0.0
        %1955 = vmatpush1.msra.mxu0 0.0
        %1956 = vmatprep.subr.mxu0 0.0
        %1957 = vmatpush1.msra.mxu0 0.0
        %1958 = vmatprep.subr.mxu0 0.0
        %1959 = vmatpush1.msra.mxu0 0.0
        %1960 = vmatprep.subr.mxu0 0.0
        %1961 = vmatpush1.msra.mxu0 0.0
        %1962 = vmatprep.subr.mxu0 0.0
        %1963 = vmatpush1.msra.mxu0 0.0
        %1964 = vmatprep.subr.mxu0 0.0
        %1965 = vmatpush1.msra.mxu0 0.0
        %1966 = vmatprep.subr.mxu0 0.0
        %1967 = vmatpush1.msra.mxu0 0.0
        %1968 = vmatprep.subr.mxu0 %v1926
        %1969 = vmatpush1.msra.mxu0 %v1925
        %1970 = vmatprep.subr.mxu0 %v1924
        %1971 = vmatpush1.msra.mxu0 %v1923
        %1972 = vmatprep.subr.mxu0 %v1922
        %1973 = vmatpush1.msra.mxu0 %v1921
        %1974 = vmatprep.subr.mxu0 %v1920
        %1975 = vmatpush1.msra.mxu0 %v1919
        %1976 = vmatprep.subr.mxu0 0.0
        %1977 = vmatpush2.msra.mxu0 0.0
        %1978 = vmatprep.subr.mxu0 0.0
        %1979 = vmatpush2.msra.mxu0 0.0
        %1980 = vmatprep.subr.mxu0 0.0
        %1981 = vmatpush2.msra.mxu0 0.0
        %1982 = vmatprep.subr.mxu0 0.0
        %1983 = vmatpush2.msra.mxu0 0.0
        %1984 = vmatprep.subr.mxu0 0.0
        %1985 = vmatpush2.msra.mxu0 0.0
        %1986 = vmatprep.subr.mxu0 0.0
        %1987 = vmatpush2.msra.mxu0 0.0
        %1988 = vmatprep.subr.mxu0 0.0
        %1989 = vmatpush2.msra.mxu0 0.0
        %1990 = vmatprep.subr.mxu0 0.0
        %1991 = vmatpush2.msra.mxu0 0.0
        %1992 = vmatprep.subr.mxu0 0.0
        %1993 = vmatpush2.msra.mxu0 0.0
        %1994 = vmatprep.subr.mxu0 0.0
        %1995 = vmatpush2.msra.mxu0 0.0
        %1996 = vmatprep.subr.mxu0 0.0
        %1997 = vmatpush2.msra.mxu0 0.0
        %1998 = vmatprep.subr.mxu0 0.0
        %1999 = vmatpush2.msra.mxu0 0.0
        %2000 = vmatprep.subr.mxu0 0.0
        %2001 = vmatpush2.msra.mxu0 0.0
        %2002 = vmatprep.subr.mxu0 0.0
        %2003 = vmatpush2.msra.mxu0 0.0
        %2004 = vmatprep.subr.mxu0 0.0
        %2005 = vmatpush2.msra.mxu0 0.0
        %2006 = vmatprep.subr.mxu0 0.0
        %2007 = vmatpush2.msra.mxu0 0.0
        %2008 = vmatprep.mubr.f32.mxu0 0.0
        %2009 = vmatmul.mubr.f32.gmra.mxu0 %v1933
        %v2010 = vpop.f32.mrf.mxu0
        %v2011 = vadd.f32 0.0, %v2010
        %v2012 = vpop.f32.mrf.mxu0
        %v2013 = vadd.f32 0.0, %v2012
        %2014 = vmatprep.mubr.f32.mxu0 0.0
        %2015 = vmatmul.mubr.f32.gmra.mxu0 %v1936
        %v2016 = vpop.f32.mrf.mxu0
        %v2017 = vadd.f32 0.0, %v2016
        %v2018 = vpop.f32.mrf.mxu0
        %v2019 = vadd.f32 0.0, %v2018
        %2020 = vmatprep.mubr.f32.mxu0 0.0
        %2021 = vmatmul.mubr.f32.gmra.mxu0 %v1939
        %v2022 = vpop.f32.mrf.mxu0
        %v2023 = vadd.f32 0.0, %v2022
        %v2024 = vpop.f32.mrf.mxu0
        %v2025 = vadd.f32 0.0, %v2024
        %2026 = vmatprep.mubr.f32.mxu0 0.0
        %2027 = vmatmul.mubr.f32.gmra.mxu0 %v1942
        %v2028 = vpop.f32.mrf.mxu0
        %v2029 = vadd.f32 0.0, %v2028
        %v2030 = vpop.f32.mrf.mxu0
        %v2031 = vadd.f32 0.0, %v2030
        %2032 = vdwg.mxu0
        %v2033 = vadd.f32 %v1875, %v2011
        %v2034 = vadd.f32 %v1876, %v2013
        %v2035 = vadd.f32 %v1877, %v2017
        %v2036 = vadd.f32 %v1878, %v2019
        %v2037 = vadd.f32 %v1879, %v2023
        %v2038 = vadd.f32 %v1880, %v2025
        %v2039 = vadd.f32 %v1881, %v2029
        %v2040 = vadd.f32 %v1882, %v2031
        %2041 = vrot.lane.b32.xlu0 %v987, 112
        %v2042 = vpop.permute.xlu0 %2041
        %2043 = vrot.lane.b32.xlu0 %v989, 112
        %v2044 = vpop.permute.xlu0 %2043
        %2045 = vrot.lane.b32.xlu0 %v991, 112
        %v2046 = vpop.permute.xlu0 %2045
        %2047 = vrot.lane.b32.xlu0 %v993, 112
        %v2048 = vpop.permute.xlu0 %2047
        %2049 = vrot.lane.b32.xlu0 %v988, 112
        %v2050 = vpop.permute.xlu0 %2049
        %2051 = vrot.lane.b32.xlu0 %v990, 112
        %v2052 = vpop.permute.xlu0 %2051
        %2053 = vrot.lane.b32.xlu0 %v992, 112
        %v2054 = vpop.permute.xlu0 %2053
        %2055 = vrot.lane.b32.xlu0 %v994, 112
        %v2056 = vpop.permute.xlu0 %2055
        %v2057 = vsel %vm806, %v2042, %v2050
        %v2058 = vsel %vm806, %v2044, %v2052
        %v2059 = vsel %vm806, %v2046, %v2054
        %v2060 = vsel %vm806, %v2048, %v2056
        %v2061 = vsel %vm806, %v2050, %v2042
        %v2062 = vsel %vm806, %v2052, %v2044
        %v2063 = vsel %vm806, %v2054, %v2046
        %v2064 = vsel %vm806, %v2056, %v2048
        %v2065 = vld [vmem:[%s809] sm:$0x3]
        %v2067 = vlaneseq
        %v2068 = vshrl.u32 %v2067, 7
        %v2069 = vsub.s32 0, %v2068
        %v2070 = vrot.slane %v2065, %v2069
        %v2071 = vlaneseq
        %v2072 = vshrl.u32 %v2071, 7
        %v2073 = vsub.s32 1, %v2072
        %v2074 = vrot.slane %v2065, %v2073
        %v2077 = vmul.f32 %v2057, %v2070
        %v2078 = vmul.f32 %v2061, %v2074
        %v2079 = vmul.f32 %v2058, %v2070
        %v2080 = vmul.f32 %v2062, %v2074
        %v2081 = vmul.f32 %v2059, %v2070
        %v2082 = vmul.f32 %v2063, %v2074
        %v2083 = vmul.f32 %v2060, %v2070
        %v2084 = vmul.f32 %v2064, %v2074
        %s2085 = scalar_lea.vmem [#allocation4], 224
        %v2086 = vld [vmem:[%s2085] sm:$0xff]
        %v2087 = vld [vmem:[%s2085 + $0x8] sm:$0xff]
        %v2088 = vld [vmem:[%s2085 + $0x10] sm:$0xff]
        %v2089 = vld [vmem:[%s2085 + $0x18] sm:$0xff]
        %v2091 = vsel %vm1092, %v2086, 0
        %v2094 = vsel %vm1092, %v2087, 0
        %v2097 = vsel %vm1092, %v2088, 0
        %v2100 = vsel %vm1092, %v2089, 0
        %2102 = vmatprep.subr.mxu0 0.0
        %2103 = vmatpush1.msra.mxu0 0.0
        %2104 = vmatprep.subr.mxu0 0.0
        %2105 = vmatpush1.msra.mxu0 0.0
        %2106 = vmatprep.subr.mxu0 0.0
        %2107 = vmatpush1.msra.mxu0 0.0
        %2108 = vmatprep.subr.mxu0 0.0
        %2109 = vmatpush1.msra.mxu0 0.0
        %2110 = vmatprep.subr.mxu0 0.0
        %2111 = vmatpush1.msra.mxu0 0.0
        %2112 = vmatprep.subr.mxu0 0.0
        %2113 = vmatpush1.msra.mxu0 0.0
        %2114 = vmatprep.subr.mxu0 0.0
        %2115 = vmatpush1.msra.mxu0 0.0
        %2116 = vmatprep.subr.mxu0 0.0
        %2117 = vmatpush1.msra.mxu0 0.0
        %2118 = vmatprep.subr.mxu0 0.0
        %2119 = vmatpush1.msra.mxu0 0.0
        %2120 = vmatprep.subr.mxu0 0.0
        %2121 = vmatpush1.msra.mxu0 0.0
        %2122 = vmatprep.subr.mxu0 0.0
        %2123 = vmatpush1.msra.mxu0 0.0
        %2124 = vmatprep.subr.mxu0 0.0
        %2125 = vmatpush1.msra.mxu0 0.0
        %2126 = vmatprep.subr.mxu0 %v2084
        %2127 = vmatpush1.msra.mxu0 %v2083
        %2128 = vmatprep.subr.mxu0 %v2082
        %2129 = vmatpush1.msra.mxu0 %v2081
        %2130 = vmatprep.subr.mxu0 %v2080
        %2131 = vmatpush1.msra.mxu0 %v2079
        %2132 = vmatprep.subr.mxu0 %v2078
        %2133 = vmatpush1.msra.mxu0 %v2077
        %2134 = vmatprep.subr.mxu0 0.0
        %2135 = vmatpush2.msra.mxu0 0.0
        %2136 = vmatprep.subr.mxu0 0.0
        %2137 = vmatpush2.msra.mxu0 0.0
        %2138 = vmatprep.subr.mxu0 0.0
        %2139 = vmatpush2.msra.mxu0 0.0
        %2140 = vmatprep.subr.mxu0 0.0
        %2141 = vmatpush2.msra.mxu0 0.0
        %2142 = vmatprep.subr.mxu0 0.0
        %2143 = vmatpush2.msra.mxu0 0.0
        %2144 = vmatprep.subr.mxu0 0.0
        %2145 = vmatpush2.msra.mxu0 0.0
        %2146 = vmatprep.subr.mxu0 0.0
        %2147 = vmatpush2.msra.mxu0 0.0
        %2148 = vmatprep.subr.mxu0 0.0
        %2149 = vmatpush2.msra.mxu0 0.0
        %2150 = vmatprep.subr.mxu0 0.0
        %2151 = vmatpush2.msra.mxu0 0.0
        %2152 = vmatprep.subr.mxu0 0.0
        %2153 = vmatpush2.msra.mxu0 0.0
        %2154 = vmatprep.subr.mxu0 0.0
        %2155 = vmatpush2.msra.mxu0 0.0
        %2156 = vmatprep.subr.mxu0 0.0
        %2157 = vmatpush2.msra.mxu0 0.0
        %2158 = vmatprep.subr.mxu0 0.0
        %2159 = vmatpush2.msra.mxu0 0.0
        %2160 = vmatprep.subr.mxu0 0.0
        %2161 = vmatpush2.msra.mxu0 0.0
        %2162 = vmatprep.subr.mxu0 0.0
        %2163 = vmatpush2.msra.mxu0 0.0
        %2164 = vmatprep.subr.mxu0 0.0
        %2165 = vmatpush2.msra.mxu0 0.0
        %2166 = vmatprep.mubr.f32.mxu0 0.0
        %2167 = vmatmul.mubr.f32.gmra.mxu0 %v2091
        %v2168 = vpop.f32.mrf.mxu0
        %v2169 = vadd.f32 0.0, %v2168
        %v2170 = vpop.f32.mrf.mxu0
        %v2171 = vadd.f32 0.0, %v2170
        %2172 = vmatprep.mubr.f32.mxu0 0.0
        %2173 = vmatmul.mubr.f32.gmra.mxu0 %v2094
        %v2174 = vpop.f32.mrf.mxu0
        %v2175 = vadd.f32 0.0, %v2174
        %v2176 = vpop.f32.mrf.mxu0
        %v2177 = vadd.f32 0.0, %v2176
        %2178 = vmatprep.mubr.f32.mxu0 0.0
        %2179 = vmatmul.mubr.f32.gmra.mxu0 %v2097
        %v2180 = vpop.f32.mrf.mxu0
        %v2181 = vadd.f32 0.0, %v2180
        %v2182 = vpop.f32.mrf.mxu0
        %v2183 = vadd.f32 0.0, %v2182
        %2184 = vmatprep.mubr.f32.mxu0 0.0
        %2185 = vmatmul.mubr.f32.gmra.mxu0 %v2100
        %v2186 = vpop.f32.mrf.mxu0
        %v2187 = vadd.f32 0.0, %v2186
        %v2188 = vpop.f32.mrf.mxu0
        %v2189 = vadd.f32 0.0, %v2188
        %2190 = vdwg.mxu0
        %v2191 = vadd.f32 %v2033, %v2169
        %v2192 = vadd.f32 %v2034, %v2171
        %v2193 = vadd.f32 %v2035, %v2175
        %v2194 = vadd.f32 %v2036, %v2177
        %v2195 = vadd.f32 %v2037, %v2181
        %v2196 = vadd.f32 %v2038, %v2183
        %v2197 = vadd.f32 %v2039, %v2187
        %v2198 = vadd.f32 %v2040, %v2189
        %2199 = vrot.lane.b32.xlu0 %v987, 111
        %v2200 = vpop.permute.xlu0 %2199
        %2201 = vrot.lane.b32.xlu0 %v989, 111
        %v2202 = vpop.permute.xlu0 %2201
        %2203 = vrot.lane.b32.xlu0 %v991, 111
        %v2204 = vpop.permute.xlu0 %2203
        %2205 = vrot.lane.b32.xlu0 %v993, 111
        %v2206 = vpop.permute.xlu0 %2205
        %2207 = vrot.lane.b32.xlu0 %v988, 111
        %v2208 = vpop.permute.xlu0 %2207
        %2209 = vrot.lane.b32.xlu0 %v990, 111
        %v2210 = vpop.permute.xlu0 %2209
        %2211 = vrot.lane.b32.xlu0 %v992, 111
        %v2212 = vpop.permute.xlu0 %2211
        %2213 = vrot.lane.b32.xlu0 %v994, 111
        %v2214 = vpop.permute.xlu0 %2213
        %v2215 = vsel %vm877, %v2200, %v2208
        %v2216 = vsel %vm877, %v2202, %v2210
        %v2217 = vsel %vm877, %v2204, %v2212
        %v2218 = vsel %vm877, %v2206, %v2214
        %v2219 = vsel %vm877, %v2208, %v2200
        %v2220 = vsel %vm877, %v2210, %v2202
        %v2221 = vsel %vm877, %v2212, %v2204
        %v2222 = vsel %vm877, %v2214, %v2206
        %v2223 = vld [vmem:[%s880] sm:$0x3]
        %v2225 = vlaneseq
        %v2226 = vshrl.u32 %v2225, 7
        %v2227 = vsub.s32 0, %v2226
        %v2228 = vrot.slane %v2223, %v2227
        %v2229 = vlaneseq
        %v2230 = vshrl.u32 %v2229, 7
        %v2231 = vsub.s32 1, %v2230
        %v2232 = vrot.slane %v2223, %v2231
        %v2235 = vmul.f32 %v2215, %v2228
        %v2236 = vmul.f32 %v2219, %v2232
        %v2237 = vmul.f32 %v2216, %v2228
        %v2238 = vmul.f32 %v2220, %v2232
        %v2239 = vmul.f32 %v2217, %v2228
        %v2240 = vmul.f32 %v2221, %v2232
        %v2241 = vmul.f32 %v2218, %v2228
        %v2242 = vmul.f32 %v2222, %v2232
        %s2243 = scalar_lea.vmem [#allocation4], 256
        %v2244 = vld [vmem:[%s2243] sm:$0xff]
        %v2245 = vld [vmem:[%s2243 + $0x8] sm:$0xff]
        %v2246 = vld [vmem:[%s2243 + $0x10] sm:$0xff]
        %v2247 = vld [vmem:[%s2243 + $0x18] sm:$0xff]
        %v2249 = vsel %vm1092, %v2244, 0
        %v2252 = vsel %vm1092, %v2245, 0
        %v2255 = vsel %vm1092, %v2246, 0
        %v2258 = vsel %vm1092, %v2247, 0
        %2260 = vmatprep.subr.mxu0 0.0
        %2261 = vmatpush1.msra.mxu0 0.0
        %2262 = vmatprep.subr.mxu0 0.0
        %2263 = vmatpush1.msra.mxu0 0.0
        %2264 = vmatprep.subr.mxu0 0.0
        %2265 = vmatpush1.msra.mxu0 0.0
        %2266 = vmatprep.subr.mxu0 0.0
        %2267 = vmatpush1.msra.mxu0 0.0
        %2268 = vmatprep.subr.mxu0 0.0
        %2269 = vmatpush1.msra.mxu0 0.0
        %2270 = vmatprep.subr.mxu0 0.0
        %2271 = vmatpush1.msra.mxu0 0.0
        %2272 = vmatprep.subr.mxu0 0.0
        %2273 = vmatpush1.msra.mxu0 0.0
        %2274 = vmatprep.subr.mxu0 0.0
        %2275 = vmatpush1.msra.mxu0 0.0
        %2276 = vmatprep.subr.mxu0 0.0
        %2277 = vmatpush1.msra.mxu0 0.0
        %2278 = vmatprep.subr.mxu0 0.0
        %2279 = vmatpush1.msra.mxu0 0.0
        %2280 = vmatprep.subr.mxu0 0.0
        %2281 = vmatpush1.msra.mxu0 0.0
        %2282 = vmatprep.subr.mxu0 0.0
        %2283 = vmatpush1.msra.mxu0 0.0
        %2284 = vmatprep.subr.mxu0 %v2242
        %2285 = vmatpush1.msra.mxu0 %v2241
        %2286 = vmatprep.subr.mxu0 %v2240
        %2287 = vmatpush1.msra.mxu0 %v2239
        %2288 = vmatprep.subr.mxu0 %v2238
        %2289 = vmatpush1.msra.mxu0 %v2237
        %2290 = vmatprep.subr.mxu0 %v2236
        %2291 = vmatpush1.msra.mxu0 %v2235
        %2292 = vmatprep.subr.mxu0 0.0
        %2293 = vmatpush2.msra.mxu0 0.0
        %2294 = vmatprep.subr.mxu0 0.0
        %2295 = vmatpush2.msra.mxu0 0.0
        %2296 = vmatprep.subr.mxu0 0.0
        %2297 = vmatpush2.msra.mxu0 0.0
        %2298 = vmatprep.subr.mxu0 0.0
        %2299 = vmatpush2.msra.mxu0 0.0
        %2300 = vmatprep.subr.mxu0 0.0
        %2301 = vmatpush2.msra.mxu0 0.0
        %2302 = vmatprep.subr.mxu0 0.0
        %2303 = vmatpush2.msra.mxu0 0.0
        %2304 = vmatprep.subr.mxu0 0.0
        %2305 = vmatpush2.msra.mxu0 0.0
        %2306 = vmatprep.subr.mxu0 0.0
        %2307 = vmatpush2.msra.mxu0 0.0
        %2308 = vmatprep.subr.mxu0 0.0
        %2309 = vmatpush2.msra.mxu0 0.0
        %2310 = vmatprep.subr.mxu0 0.0
        %2311 = vmatpush2.msra.mxu0 0.0
        %2312 = vmatprep.subr.mxu0 0.0
        %2313 = vmatpush2.msra.mxu0 0.0
        %2314 = vmatprep.subr.mxu0 0.0
        %2315 = vmatpush2.msra.mxu0 0.0
        %2316 = vmatprep.subr.mxu0 0.0
        %2317 = vmatpush2.msra.mxu0 0.0
        %2318 = vmatprep.subr.mxu0 0.0
        %2319 = vmatpush2.msra.mxu0 0.0
        %2320 = vmatprep.subr.mxu0 0.0
        %2321 = vmatpush2.msra.mxu0 0.0
        %2322 = vmatprep.subr.mxu0 0.0
        %2323 = vmatpush2.msra.mxu0 0.0
        %2324 = vmatprep.mubr.f32.mxu0 0.0
        %2325 = vmatmul.mubr.f32.gmra.mxu0 %v2249
        %v2326 = vpop.f32.mrf.mxu0
        %v2327 = vadd.f32 0.0, %v2326
        %v2328 = vpop.f32.mrf.mxu0
        %v2329 = vadd.f32 0.0, %v2328
        %2330 = vmatprep.mubr.f32.mxu0 0.0
        %2331 = vmatmul.mubr.f32.gmra.mxu0 %v2252
        %v2332 = vpop.f32.mrf.mxu0
        %v2333 = vadd.f32 0.0, %v2332
        %v2334 = vpop.f32.mrf.mxu0
        %v2335 = vadd.f32 0.0, %v2334
        %2336 = vmatprep.mubr.f32.mxu0 0.0
        %2337 = vmatmul.mubr.f32.gmra.mxu0 %v2255
        %v2338 = vpop.f32.mrf.mxu0
        %v2339 = vadd.f32 0.0, %v2338
        %v2340 = vpop.f32.mrf.mxu0
        %v2341 = vadd.f32 0.0, %v2340
        %2342 = vmatprep.mubr.f32.mxu0 0.0
        %2343 = vmatmul.mubr.f32.gmra.mxu0 %v2258
        %v2344 = vpop.f32.mrf.mxu0
        %v2345 = vadd.f32 0.0, %v2344
        %v2346 = vpop.f32.mrf.mxu0
        %v2347 = vadd.f32 0.0, %v2346
        %2348 = vdwg.mxu0
        %v2349 = vadd.f32 %v2191, %v2327
        %v2350 = vadd.f32 %v2192, %v2329
        %v2351 = vadd.f32 %v2193, %v2333
        %v2352 = vadd.f32 %v2194, %v2335
        %v2353 = vadd.f32 %v2195, %v2339
        %v2354 = vadd.f32 %v2196, %v2341
        %v2355 = vadd.f32 %v2197, %v2345
        %v2356 = vadd.f32 %v2198, %v2347
        %v2357 = vld [vmem:[%s5] sm:$0xff]
        %v2358 = vld [vmem:[%s5 + $0x8] sm:$0xff]
        %v2359 = vld [vmem:[%s5 + $0x10] sm:$0xff]
        %v2360 = vld [vmem:[%s5 + $0x18] sm:$0xff]
        %2362 = vset.pattern.permute.xlu0 0
        %2363 = vperm.xlu0 %2362, %v2357
        %v2364 = vpop.permute.xlu0 %2363
        %2367 = vset.pattern.permute.xlu0 0
        %2368 = vperm.xlu0 %2367, %v2358
        %v2369 = vpop.permute.xlu0 %2368
        %2372 = vset.pattern.permute.xlu0 0
        %2373 = vperm.xlu0 %2372, %v2359
        %v2374 = vpop.permute.xlu0 %2373
        %2377 = vset.pattern.permute.xlu0 0
        %2378 = vperm.xlu0 %2377, %v2360
        %v2379 = vpop.permute.xlu0 %2378
        %v2381 = vadd.f32 %v2349, %v2364
        %v2382 = vadd.f32 %v2350, %v2364
        %v2383 = vadd.f32 %v2351, %v2369
        %v2384 = vadd.f32 %v2352, %v2369
        %v2385 = vadd.f32 %v2353, %v2374
        %v2386 = vadd.f32 %v2354, %v2374
        %v2387 = vadd.f32 %v2355, %v2379
        %v2388 = vadd.f32 %v2356, %v2379
        %v2389 = vmax.f32 %v2381, 0.0
        %v2390 = vmax.f32 %v2382, 0.0
        %v2391 = vmax.f32 %v2383, 0.0
        %v2392 = vmax.f32 %v2384, 0.0
        %v2393 = vmax.f32 %v2385, 0.0
        %v2394 = vmax.f32 %v2386, 0.0
        %v2395 = vmax.f32 %v2387, 0.0
        %v2396 = vmax.f32 %v2388, 0.0
        %2397 = vst [vmem:[#allocation2] sm:$0xff] %v2389
        %2398 = vst [vmem:[#allocation2 + $0x8] sm:$0xff] %v2390
        %2399 = vst [vmem:[#allocation2 + $0x10] sm:$0xff] %v2391
        %2400 = vst [vmem:[#allocation2 + $0x18] sm:$0xff] %v2392
        %2401 = vst [vmem:[#allocation2 + $0x20] sm:$0xff] %v2393
        %2402 = vst [vmem:[#allocation2 + $0x28] sm:$0xff] %v2394
        %2403 = vst [vmem:[#allocation2 + $0x30] sm:$0xff] %v2395
        %2404 = vst [vmem:[#allocation2 + $0x38] sm:$0xff] %v2396
        %v2405 = vld [vmem:[#allocation2] sm:$0xff]
        %v2406 = vld [vmem:[#allocation2 + $0x8] sm:$0xff]
        %v2407 = vld [vmem:[#allocation2 + $0x10] sm:$0xff]
        %v2408 = vld [vmem:[#allocation2 + $0x18] sm:$0xff]
        %v2409 = vld [vmem:[#allocation2 + $0x20] sm:$0xff]
        %v2410 = vld [vmem:[#allocation2 + $0x28] sm:$0xff]
        %v2411 = vld [vmem:[#allocation2 + $0x30] sm:$0xff]
        %v2412 = vld [vmem:[#allocation2 + $0x38] sm:$0xff]
        %2413 = vrot.lane.b32.xlu0 %v2405, 17
        %v2414 = vpop.permute.xlu0 %2413
        %2415 = vrot.lane.b32.xlu0 %v2407, 17
        %v2416 = vpop.permute.xlu0 %2415
        %2417 = vrot.lane.b32.xlu0 %v2409, 17
        %v2418 = vpop.permute.xlu0 %2417
        %2419 = vrot.lane.b32.xlu0 %v2411, 17
        %v2420 = vpop.permute.xlu0 %2419
        %2421 = vrot.lane.b32.xlu0 %v2406, 17
        %v2422 = vpop.permute.xlu0 %2421
        %2423 = vrot.lane.b32.xlu0 %v2408, 17
        %v2424 = vpop.permute.xlu0 %2423
        %2425 = vrot.lane.b32.xlu0 %v2410, 17
        %v2426 = vpop.permute.xlu0 %2425
        %2427 = vrot.lane.b32.xlu0 %v2412, 17
        %v2428 = vpop.permute.xlu0 %2427
        %v2429 = vsel %vm340, %v2414, %v2422
        %v2430 = vsel %vm340, %v2416, %v2424
        %v2431 = vsel %vm340, %v2418, %v2426
        %v2432 = vsel %vm340, %v2420, %v2428
        %v2433 = vsel %vm340, %v2422, %v2414
        %v2434 = vsel %vm340, %v2424, %v2416
        %v2435 = vsel %vm340, %v2426, %v2418
        %v2436 = vsel %vm340, %v2428, %v2420
        %v2437 = vld [vmem:[%s1] sm:$0x3]
        %v2439 = vlaneseq
        %v2440 = vshrl.u32 %v2439, 7
        %v2441 = vsub.s32 0, %v2440
        %v2442 = vrot.slane %v2437, %v2441
        %v2443 = vlaneseq
        %v2444 = vshrl.u32 %v2443, 7
        %v2445 = vsub.s32 1, %v2444
        %v2446 = vrot.slane %v2437, %v2445
        %v2449 = vmul.f32 %v2433, %v2442
        %v2450 = vmul.f32 %v2429, %v2446
        %v2451 = vmul.f32 %v2434, %v2442
        %v2452 = vmul.f32 %v2430, %v2446
        %v2453 = vmul.f32 %v2435, %v2442
        %v2454 = vmul.f32 %v2431, %v2446
        %v2455 = vmul.f32 %v2436, %v2442
        %v2456 = vmul.f32 %v2432, %v2446
        %s2457 = scalar_lea.vmem [#allocation4], 288
        %v2458 = vld [vmem:[%s2457] sm:$0xff]
        %v2459 = vld [vmem:[%s2457 + $0x8] sm:$0xff]
        %v2460 = vld [vmem:[%s2457 + $0x10] sm:$0xff]
        %v2461 = vld [vmem:[%s2457 + $0x18] sm:$0xff]
        %2462 = vrot.lane.b32.xlu0 %v2405, 16
        %v2463 = vpop.permute.xlu0 %2462
        %2464 = vrot.lane.b32.xlu0 %v2407, 16
        %v2465 = vpop.permute.xlu0 %2464
        %2466 = vrot.lane.b32.xlu0 %v2409, 16
        %v2467 = vpop.permute.xlu0 %2466
        %2468 = vrot.lane.b32.xlu0 %v2411, 16
        %v2469 = vpop.permute.xlu0 %2468
        %2470 = vrot.lane.b32.xlu0 %v2406, 16
        %v2471 = vpop.permute.xlu0 %2470
        %2472 = vrot.lane.b32.xlu0 %v2408, 16
        %v2473 = vpop.permute.xlu0 %2472
        %2474 = vrot.lane.b32.xlu0 %v2410, 16
        %v2475 = vpop.permute.xlu0 %2474
        %2476 = vrot.lane.b32.xlu0 %v2412, 16
        %v2477 = vpop.permute.xlu0 %2476
        %v2478 = vsel %vm410, %v2463, %v2471
        %v2479 = vsel %vm410, %v2465, %v2473
        %v2480 = vsel %vm410, %v2467, %v2475
        %v2481 = vsel %vm410, %v2469, %v2477
        %v2482 = vsel %vm410, %v2471, %v2463
        %v2483 = vsel %vm410, %v2473, %v2465
        %v2484 = vsel %vm410, %v2475, %v2467
        %v2485 = vsel %vm410, %v2477, %v2469
        %v2486 = vld [vmem:[%s413] sm:$0x3]
        %v2488 = vlaneseq
        %v2489 = vshrl.u32 %v2488, 7
        %v2490 = vsub.s32 0, %v2489
        %v2491 = vrot.slane %v2486, %v2490
        %v2492 = vlaneseq
        %v2493 = vshrl.u32 %v2492, 7
        %v2494 = vsub.s32 1, %v2493
        %v2495 = vrot.slane %v2486, %v2494
        %v2498 = vmul.f32 %v2482, %v2491
        %v2499 = vmul.f32 %v2478, %v2495
        %v2500 = vmul.f32 %v2483, %v2491
        %v2501 = vmul.f32 %v2479, %v2495
        %v2502 = vmul.f32 %v2484, %v2491
        %v2503 = vmul.f32 %v2480, %v2495
        %v2504 = vmul.f32 %v2485, %v2491
        %v2505 = vmul.f32 %v2481, %v2495
        %s2506 = scalar_lea.vmem [#allocation4], 320
        %v2507 = vld [vmem:[%s2506] sm:$0xff]
        %v2508 = vld [vmem:[%s2506 + $0x8] sm:$0xff]
        %v2509 = vld [vmem:[%s2506 + $0x10] sm:$0xff]
        %v2510 = vld [vmem:[%s2506 + $0x18] sm:$0xff]
        %v2512 = vsel %vm1092, %v2507, 0
        %v2515 = vsel %vm1092, %v2508, 0
        %v2518 = vsel %vm1092, %v2509, 0
        %v2521 = vsel %vm1092, %v2510, 0
        %2523 = vmatprep.subr.mxu0 0.0
        %2524 = vmatpush1.msra.mxu0 0.0
        %2525 = vmatprep.subr.mxu0 0.0
        %2526 = vmatpush1.msra.mxu0 0.0
        %2527 = vmatprep.subr.mxu0 0.0
        %2528 = vmatpush1.msra.mxu0 0.0
        %2529 = vmatprep.subr.mxu0 0.0
        %2530 = vmatpush1.msra.mxu0 0.0
        %2531 = vmatprep.subr.mxu0 0.0
        %2532 = vmatpush1.msra.mxu0 0.0
        %2533 = vmatprep.subr.mxu0 0.0
        %2534 = vmatpush1.msra.mxu0 0.0
        %2535 = vmatprep.subr.mxu0 0.0
        %2536 = vmatpush1.msra.mxu0 0.0
        %2537 = vmatprep.subr.mxu0 0.0
        %2538 = vmatpush1.msra.mxu0 0.0
        %2539 = vmatprep.subr.mxu0 0.0
        %2540 = vmatpush1.msra.mxu0 0.0
        %2541 = vmatprep.subr.mxu0 0.0
        %2542 = vmatpush1.msra.mxu0 0.0
        %2543 = vmatprep.subr.mxu0 0.0
        %2544 = vmatpush1.msra.mxu0 0.0
        %2545 = vmatprep.subr.mxu0 0.0
        %2546 = vmatpush1.msra.mxu0 0.0
        %2547 = vmatprep.subr.mxu0 %v2505
        %2548 = vmatpush1.msra.mxu0 %v2504
        %2549 = vmatprep.subr.mxu0 %v2503
        %2550 = vmatpush1.msra.mxu0 %v2502
        %2551 = vmatprep.subr.mxu0 %v2501
        %2552 = vmatpush1.msra.mxu0 %v2500
        %2553 = vmatprep.subr.mxu0 %v2499
        %2554 = vmatpush1.msra.mxu0 %v2498
        %2555 = vmatprep.subr.mxu0 0.0
        %2556 = vmatpush2.msra.mxu0 0.0
        %2557 = vmatprep.subr.mxu0 0.0
        %2558 = vmatpush2.msra.mxu0 0.0
        %2559 = vmatprep.subr.mxu0 0.0
        %2560 = vmatpush2.msra.mxu0 0.0
        %2561 = vmatprep.subr.mxu0 0.0
        %2562 = vmatpush2.msra.mxu0 0.0
        %2563 = vmatprep.subr.mxu0 0.0
        %2564 = vmatpush2.msra.mxu0 0.0
        %2565 = vmatprep.subr.mxu0 0.0
        %2566 = vmatpush2.msra.mxu0 0.0
        %2567 = vmatprep.subr.mxu0 0.0
        %2568 = vmatpush2.msra.mxu0 0.0
        %2569 = vmatprep.subr.mxu0 0.0
        %2570 = vmatpush2.msra.mxu0 0.0
        %2571 = vmatprep.subr.mxu0 0.0
        %2572 = vmatpush2.msra.mxu0 0.0
        %2573 = vmatprep.subr.mxu0 0.0
        %2574 = vmatpush2.msra.mxu0 0.0
        %2575 = vmatprep.subr.mxu0 0.0
        %2576 = vmatpush2.msra.mxu0 0.0
        %2577 = vmatprep.subr.mxu0 0.0
        %2578 = vmatpush2.msra.mxu0 0.0
        %2579 = vmatprep.subr.mxu0 0.0
        %2580 = vmatpush2.msra.mxu0 0.0
        %2581 = vmatprep.subr.mxu0 0.0
        %2582 = vmatpush2.msra.mxu0 0.0
        %2583 = vmatprep.subr.mxu0 0.0
        %2584 = vmatpush2.msra.mxu0 0.0
        %2585 = vmatprep.subr.mxu0 0.0
        %2586 = vmatpush2.msra.mxu0 0.0
        %2587 = vmatprep.mubr.f32.mxu0 0.0
        %2588 = vmatmul.mubr.f32.gmra.mxu0 %v2512
        %v2589 = vpop.f32.mrf.mxu0
        %v2590 = vadd.f32 0.0, %v2589
        %v2591 = vpop.f32.mrf.mxu0
        %v2592 = vadd.f32 0.0, %v2591
        %2593 = vmatprep.mubr.f32.mxu0 0.0
        %2594 = vmatmul.mubr.f32.gmra.mxu0 %v2515
        %v2595 = vpop.f32.mrf.mxu0
        %v2596 = vadd.f32 0.0, %v2595
        %v2597 = vpop.f32.mrf.mxu0
        %v2598 = vadd.f32 0.0, %v2597
        %2599 = vmatprep.mubr.f32.mxu0 0.0
        %2600 = vmatmul.mubr.f32.gmra.mxu0 %v2518
        %v2601 = vpop.f32.mrf.mxu0
        %v2602 = vadd.f32 0.0, %v2601
        %v2603 = vpop.f32.mrf.mxu0
        %v2604 = vadd.f32 0.0, %v2603
        %2605 = vmatprep.mubr.f32.mxu0 0.0
        %2606 = vmatmul.mubr.f32.gmra.mxu0 %v2521
        %v2607 = vpop.f32.mrf.mxu0
        %v2608 = vadd.f32 0.0, %v2607
        %v2609 = vpop.f32.mrf.mxu0
        %v2610 = vadd.f32 0.0, %v2609
        %2611 = vdwg.mxu0
        %v2613 = vsel %vm1092, %v2458, 0
        %v2616 = vsel %vm1092, %v2459, 0
        %v2619 = vsel %vm1092, %v2460, 0
        %v2622 = vsel %vm1092, %v2461, 0
        %2624 = vmatprep.subr.mxu0 0.0
        %2625 = vmatpush1.msra.mxu0 0.0
        %2626 = vmatprep.subr.mxu0 0.0
        %2627 = vmatpush1.msra.mxu0 0.0
        %2628 = vmatprep.subr.mxu0 0.0
        %2629 = vmatpush1.msra.mxu0 0.0
        %2630 = vmatprep.subr.mxu0 0.0
        %2631 = vmatpush1.msra.mxu0 0.0
        %2632 = vmatprep.subr.mxu0 0.0
        %2633 = vmatpush1.msra.mxu0 0.0
        %2634 = vmatprep.subr.mxu0 0.0
        %2635 = vmatpush1.msra.mxu0 0.0
        %2636 = vmatprep.subr.mxu0 0.0
        %2637 = vmatpush1.msra.mxu0 0.0
        %2638 = vmatprep.subr.mxu0 0.0
        %2639 = vmatpush1.msra.mxu0 0.0
        %2640 = vmatprep.subr.mxu0 0.0
        %2641 = vmatpush1.msra.mxu0 0.0
        %2642 = vmatprep.subr.mxu0 0.0
        %2643 = vmatpush1.msra.mxu0 0.0
        %2644 = vmatprep.subr.mxu0 0.0
        %2645 = vmatpush1.msra.mxu0 0.0
        %2646 = vmatprep.subr.mxu0 0.0
        %2647 = vmatpush1.msra.mxu0 0.0
        %2648 = vmatprep.subr.mxu0 %v2456
        %2649 = vmatpush1.msra.mxu0 %v2455
        %2650 = vmatprep.subr.mxu0 %v2454
        %2651 = vmatpush1.msra.mxu0 %v2453
        %2652 = vmatprep.subr.mxu0 %v2452
        %2653 = vmatpush1.msra.mxu0 %v2451
        %2654 = vmatprep.subr.mxu0 %v2450
        %2655 = vmatpush1.msra.mxu0 %v2449
        %2656 = vmatprep.subr.mxu0 0.0
        %2657 = vmatpush2.msra.mxu0 0.0
        %2658 = vmatprep.subr.mxu0 0.0
        %2659 = vmatpush2.msra.mxu0 0.0
        %2660 = vmatprep.subr.mxu0 0.0
        %2661 = vmatpush2.msra.mxu0 0.0
        %2662 = vmatprep.subr.mxu0 0.0
        %2663 = vmatpush2.msra.mxu0 0.0
        %2664 = vmatprep.subr.mxu0 0.0
        %2665 = vmatpush2.msra.mxu0 0.0
        %2666 = vmatprep.subr.mxu0 0.0
        %2667 = vmatpush2.msra.mxu0 0.0
        %2668 = vmatprep.subr.mxu0 0.0
        %2669 = vmatpush2.msra.mxu0 0.0
        %2670 = vmatprep.subr.mxu0 0.0
        %2671 = vmatpush2.msra.mxu0 0.0
        %2672 = vmatprep.subr.mxu0 0.0
        %2673 = vmatpush2.msra.mxu0 0.0
        %2674 = vmatprep.subr.mxu0 0.0
        %2675 = vmatpush2.msra.mxu0 0.0
        %2676 = vmatprep.subr.mxu0 0.0
        %2677 = vmatpush2.msra.mxu0 0.0
        %2678 = vmatprep.subr.mxu0 0.0
        %2679 = vmatpush2.msra.mxu0 0.0
        %2680 = vmatprep.subr.mxu0 0.0
        %2681 = vmatpush2.msra.mxu0 0.0
        %2682 = vmatprep.subr.mxu0 0.0
        %2683 = vmatpush2.msra.mxu0 0.0
        %2684 = vmatprep.subr.mxu0 0.0
        %2685 = vmatpush2.msra.mxu0 0.0
        %2686 = vmatprep.subr.mxu0 0.0
        %2687 = vmatpush2.msra.mxu0 0.0
        %2688 = vmatprep.mubr.f32.mxu0 0.0
        %2689 = vmatmul.mubr.f32.gmra.mxu0 %v2613
        %v2690 = vpop.f32.mrf.mxu0
        %v2691 = vadd.f32 %v2590, %v2690
        %v2692 = vpop.f32.mrf.mxu0
        %v2693 = vadd.f32 %v2592, %v2692
        %2694 = vmatprep.mubr.f32.mxu0 0.0
        %2695 = vmatmul.mubr.f32.gmra.mxu0 %v2616
        %v2696 = vpop.f32.mrf.mxu0
        %v2697 = vadd.f32 %v2596, %v2696
        %v2698 = vpop.f32.mrf.mxu0
        %v2699 = vadd.f32 %v2598, %v2698
        %2700 = vmatprep.mubr.f32.mxu0 0.0
        %2701 = vmatmul.mubr.f32.gmra.mxu0 %v2619
        %v2702 = vpop.f32.mrf.mxu0
        %v2703 = vadd.f32 %v2602, %v2702
        %v2704 = vpop.f32.mrf.mxu0
        %v2705 = vadd.f32 %v2604, %v2704
        %2706 = vmatprep.mubr.f32.mxu0 0.0
        %2707 = vmatmul.mubr.f32.gmra.mxu0 %v2622
        %v2708 = vpop.f32.mrf.mxu0
        %v2709 = vadd.f32 %v2608, %v2708
        %v2710 = vpop.f32.mrf.mxu0
        %v2711 = vadd.f32 %v2610, %v2710
        %2712 = vdwg.mxu0
        %2713 = vrot.lane.b32.xlu0 %v2405, 15
        %v2714 = vpop.permute.xlu0 %2713
        %2715 = vrot.lane.b32.xlu0 %v2407, 15
        %v2716 = vpop.permute.xlu0 %2715
        %2717 = vrot.lane.b32.xlu0 %v2409, 15
        %v2718 = vpop.permute.xlu0 %2717
        %2719 = vrot.lane.b32.xlu0 %v2411, 15
        %v2720 = vpop.permute.xlu0 %2719
        %2721 = vrot.lane.b32.xlu0 %v2406, 15
        %v2722 = vpop.permute.xlu0 %2721
        %2723 = vrot.lane.b32.xlu0 %v2408, 15
        %v2724 = vpop.permute.xlu0 %2723
        %2725 = vrot.lane.b32.xlu0 %v2410, 15
        %v2726 = vpop.permute.xlu0 %2725
        %2727 = vrot.lane.b32.xlu0 %v2412, 15
        %v2728 = vpop.permute.xlu0 %2727
        %v2729 = vsel %vm481, %v2714, %v2722
        %v2730 = vsel %vm481, %v2716, %v2724
        %v2731 = vsel %vm481, %v2718, %v2726
        %v2732 = vsel %vm481, %v2720, %v2728
        %v2733 = vsel %vm481, %v2722, %v2714
        %v2734 = vsel %vm481, %v2724, %v2716
        %v2735 = vsel %vm481, %v2726, %v2718
        %v2736 = vsel %vm481, %v2728, %v2720
        %v2737 = vld [vmem:[%s484] sm:$0x3]
        %v2739 = vlaneseq
        %v2740 = vshrl.u32 %v2739, 7
        %v2741 = vsub.s32 0, %v2740
        %v2742 = vrot.slane %v2737, %v2741
        %v2743 = vlaneseq
        %v2744 = vshrl.u32 %v2743, 7
        %v2745 = vsub.s32 1, %v2744
        %v2746 = vrot.slane %v2737, %v2745
        %v2749 = vmul.f32 %v2733, %v2742
        %v2750 = vmul.f32 %v2729, %v2746
        %v2751 = vmul.f32 %v2734, %v2742
        %v2752 = vmul.f32 %v2730, %v2746
        %v2753 = vmul.f32 %v2735, %v2742
        %v2754 = vmul.f32 %v2731, %v2746
        %v2755 = vmul.f32 %v2736, %v2742
        %v2756 = vmul.f32 %v2732, %v2746
        %s2757 = scalar_lea.vmem [#allocation4], 352
        %v2758 = vld [vmem:[%s2757] sm:$0xff]
        %v2759 = vld [vmem:[%s2757 + $0x8] sm:$0xff]
        %v2760 = vld [vmem:[%s2757 + $0x10] sm:$0xff]
        %v2761 = vld [vmem:[%s2757 + $0x18] sm:$0xff]
        %v2763 = vsel %vm1092, %v2758, 0
        %v2766 = vsel %vm1092, %v2759, 0
        %v2769 = vsel %vm1092, %v2760, 0
        %v2772 = vsel %vm1092, %v2761, 0
        %2774 = vmatprep.subr.mxu0 0.0
        %2775 = vmatpush1.msra.mxu0 0.0
        %2776 = vmatprep.subr.mxu0 0.0
        %2777 = vmatpush1.msra.mxu0 0.0
        %2778 = vmatprep.subr.mxu0 0.0
        %2779 = vmatpush1.msra.mxu0 0.0
        %2780 = vmatprep.subr.mxu0 0.0
        %2781 = vmatpush1.msra.mxu0 0.0
        %2782 = vmatprep.subr.mxu0 0.0
        %2783 = vmatpush1.msra.mxu0 0.0
        %2784 = vmatprep.subr.mxu0 0.0
        %2785 = vmatpush1.msra.mxu0 0.0
        %2786 = vmatprep.subr.mxu0 0.0
        %2787 = vmatpush1.msra.mxu0 0.0
        %2788 = vmatprep.subr.mxu0 0.0
        %2789 = vmatpush1.msra.mxu0 0.0
        %2790 = vmatprep.subr.mxu0 0.0
        %2791 = vmatpush1.msra.mxu0 0.0
        %2792 = vmatprep.subr.mxu0 0.0
        %2793 = vmatpush1.msra.mxu0 0.0
        %2794 = vmatprep.subr.mxu0 0.0
        %2795 = vmatpush1.msra.mxu0 0.0
        %2796 = vmatprep.subr.mxu0 0.0
        %2797 = vmatpush1.msra.mxu0 0.0
        %2798 = vmatprep.subr.mxu0 %v2756
        %2799 = vmatpush1.msra.mxu0 %v2755
        %2800 = vmatprep.subr.mxu0 %v2754
        %2801 = vmatpush1.msra.mxu0 %v2753
        %2802 = vmatprep.subr.mxu0 %v2752
        %2803 = vmatpush1.msra.mxu0 %v2751
        %2804 = vmatprep.subr.mxu0 %v2750
        %2805 = vmatpush1.msra.mxu0 %v2749
        %2806 = vmatprep.subr.mxu0 0.0
        %2807 = vmatpush2.msra.mxu0 0.0
        %2808 = vmatprep.subr.mxu0 0.0
        %2809 = vmatpush2.msra.mxu0 0.0
        %2810 = vmatprep.subr.mxu0 0.0
        %2811 = vmatpush2.msra.mxu0 0.0
        %2812 = vmatprep.subr.mxu0 0.0
        %2813 = vmatpush2.msra.mxu0 0.0
        %2814 = vmatprep.subr.mxu0 0.0
        %2815 = vmatpush2.msra.mxu0 0.0
        %2816 = vmatprep.subr.mxu0 0.0
        %2817 = vmatpush2.msra.mxu0 0.0
        %2818 = vmatprep.subr.mxu0 0.0
        %2819 = vmatpush2.msra.mxu0 0.0
        %2820 = vmatprep.subr.mxu0 0.0
        %2821 = vmatpush2.msra.mxu0 0.0
        %2822 = vmatprep.subr.mxu0 0.0
        %2823 = vmatpush2.msra.mxu0 0.0
        %2824 = vmatprep.subr.mxu0 0.0
        %2825 = vmatpush2.msra.mxu0 0.0
        %2826 = vmatprep.subr.mxu0 0.0
        %2827 = vmatpush2.msra.mxu0 0.0
        %2828 = vmatprep.subr.mxu0 0.0
        %2829 = vmatpush2.msra.mxu0 0.0
        %2830 = vmatprep.subr.mxu0 0.0
        %2831 = vmatpush2.msra.mxu0 0.0
        %2832 = vmatprep.subr.mxu0 0.0
        %2833 = vmatpush2.msra.mxu0 0.0
        %2834 = vmatprep.subr.mxu0 0.0
        %2835 = vmatpush2.msra.mxu0 0.0
        %2836 = vmatprep.subr.mxu0 0.0
        %2837 = vmatpush2.msra.mxu0 0.0
        %2838 = vmatprep.mubr.f32.mxu0 0.0
        %2839 = vmatmul.mubr.f32.gmra.mxu0 %v2763
        %v2840 = vpop.f32.mrf.mxu0
        %v2841 = vadd.f32 0.0, %v2840
        %v2842 = vpop.f32.mrf.mxu0
        %v2843 = vadd.f32 0.0, %v2842
        %2844 = vmatprep.mubr.f32.mxu0 0.0
        %2845 = vmatmul.mubr.f32.gmra.mxu0 %v2766
        %v2846 = vpop.f32.mrf.mxu0
        %v2847 = vadd.f32 0.0, %v2846
        %v2848 = vpop.f32.mrf.mxu0
        %v2849 = vadd.f32 0.0, %v2848
        %2850 = vmatprep.mubr.f32.mxu0 0.0
        %2851 = vmatmul.mubr.f32.gmra.mxu0 %v2769
        %v2852 = vpop.f32.mrf.mxu0
        %v2853 = vadd.f32 0.0, %v2852
        %v2854 = vpop.f32.mrf.mxu0
        %v2855 = vadd.f32 0.0, %v2854
        %2856 = vmatprep.mubr.f32.mxu0 0.0
        %2857 = vmatmul.mubr.f32.gmra.mxu0 %v2772
        %v2858 = vpop.f32.mrf.mxu0
        %v2859 = vadd.f32 0.0, %v2858
        %v2860 = vpop.f32.mrf.mxu0
        %v2861 = vadd.f32 0.0, %v2860
        %2862 = vdwg.mxu0
        %v2863 = vadd.f32 %v2691, %v2841
        %v2864 = vadd.f32 %v2693, %v2843
        %v2865 = vadd.f32 %v2697, %v2847
        %v2866 = vadd.f32 %v2699, %v2849
        %v2867 = vadd.f32 %v2703, %v2853
        %v2868 = vadd.f32 %v2705, %v2855
        %v2869 = vadd.f32 %v2709, %v2859
        %v2870 = vadd.f32 %v2711, %v2861
        %2871 = vrot.lane.b32.xlu0 %v2405, 1
        %v2872 = vpop.permute.xlu0 %2871
        %2873 = vrot.lane.b32.xlu0 %v2407, 1
        %v2874 = vpop.permute.xlu0 %2873
        %2875 = vrot.lane.b32.xlu0 %v2409, 1
        %v2876 = vpop.permute.xlu0 %2875
        %2877 = vrot.lane.b32.xlu0 %v2411, 1
        %v2878 = vpop.permute.xlu0 %2877
        %2879 = vrot.lane.b32.xlu0 %v2406, 1
        %v2880 = vpop.permute.xlu0 %2879
        %2881 = vrot.lane.b32.xlu0 %v2408, 1
        %v2882 = vpop.permute.xlu0 %2881
        %2883 = vrot.lane.b32.xlu0 %v2410, 1
        %v2884 = vpop.permute.xlu0 %2883
        %2885 = vrot.lane.b32.xlu0 %v2412, 1
        %v2886 = vpop.permute.xlu0 %2885
        %v2887 = vsel %vm552, %v2872, %v2880
        %v2888 = vsel %vm552, %v2874, %v2882
        %v2889 = vsel %vm552, %v2876, %v2884
        %v2890 = vsel %vm552, %v2878, %v2886
        %v2891 = vsel %vm552, %v2880, %v2872
        %v2892 = vsel %vm552, %v2882, %v2874
        %v2893 = vsel %vm552, %v2884, %v2876
        %v2894 = vsel %vm552, %v2886, %v2878
        %v2895 = vld [vmem:[%s555] sm:$0x3]
        %v2897 = vlaneseq
        %v2898 = vshrl.u32 %v2897, 7
        %v2899 = vsub.s32 0, %v2898
        %v2900 = vrot.slane %v2895, %v2899
        %v2901 = vlaneseq
        %v2902 = vshrl.u32 %v2901, 7
        %v2903 = vsub.s32 1, %v2902
        %v2904 = vrot.slane %v2895, %v2903
        %v2907 = vmul.f32 %v2891, %v2900
        %v2908 = vmul.f32 %v2887, %v2904
        %v2909 = vmul.f32 %v2892, %v2900
        %v2910 = vmul.f32 %v2888, %v2904
        %v2911 = vmul.f32 %v2893, %v2900
        %v2912 = vmul.f32 %v2889, %v2904
        %v2913 = vmul.f32 %v2894, %v2900
        %v2914 = vmul.f32 %v2890, %v2904
        %s2915 = scalar_lea.vmem [#allocation4], 384
        %v2916 = vld [vmem:[%s2915] sm:$0xff]
        %v2917 = vld [vmem:[%s2915 + $0x8] sm:$0xff]
        %v2918 = vld [vmem:[%s2915 + $0x10] sm:$0xff]
        %v2919 = vld [vmem:[%s2915 + $0x18] sm:$0xff]
        %v2921 = vsel %vm1092, %v2916, 0
        %v2924 = vsel %vm1092, %v2917, 0
        %v2927 = vsel %vm1092, %v2918, 0
        %v2930 = vsel %vm1092, %v2919, 0
        %2932 = vmatprep.subr.mxu0 0.0
        %2933 = vmatpush1.msra.mxu0 0.0
        %2934 = vmatprep.subr.mxu0 0.0
        %2935 = vmatpush1.msra.mxu0 0.0
        %2936 = vmatprep.subr.mxu0 0.0
        %2937 = vmatpush1.msra.mxu0 0.0
        %2938 = vmatprep.subr.mxu0 0.0
        %2939 = vmatpush1.msra.mxu0 0.0
        %2940 = vmatprep.subr.mxu0 0.0
        %2941 = vmatpush1.msra.mxu0 0.0
        %2942 = vmatprep.subr.mxu0 0.0
        %2943 = vmatpush1.msra.mxu0 0.0
        %2944 = vmatprep.subr.mxu0 0.0
        %2945 = vmatpush1.msra.mxu0 0.0
        %2946 = vmatprep.subr.mxu0 0.0
        %2947 = vmatpush1.msra.mxu0 0.0
        %2948 = vmatprep.subr.mxu0 0.0
        %2949 = vmatpush1.msra.mxu0 0.0
        %2950 = vmatprep.subr.mxu0 0.0
        %2951 = vmatpush1.msra.mxu0 0.0
        %2952 = vmatprep.subr.mxu0 0.0
        %2953 = vmatpush1.msra.mxu0 0.0
        %2954 = vmatprep.subr.mxu0 0.0
        %2955 = vmatpush1.msra.mxu0 0.0
        %2956 = vmatprep.subr.mxu0 %v2914
        %2957 = vmatpush1.msra.mxu0 %v2913
        %2958 = vmatprep.subr.mxu0 %v2912
        %2959 = vmatpush1.msra.mxu0 %v2911
        %2960 = vmatprep.subr.mxu0 %v2910
        %2961 = vmatpush1.msra.mxu0 %v2909
        %2962 = vmatprep.subr.mxu0 %v2908
        %2963 = vmatpush1.msra.mxu0 %v2907
        %2964 = vmatprep.subr.mxu0 0.0
        %2965 = vmatpush2.msra.mxu0 0.0
        %2966 = vmatprep.subr.mxu0 0.0
        %2967 = vmatpush2.msra.mxu0 0.0
        %2968 = vmatprep.subr.mxu0 0.0
        %2969 = vmatpush2.msra.mxu0 0.0
        %2970 = vmatprep.subr.mxu0 0.0
        %2971 = vmatpush2.msra.mxu0 0.0
        %2972 = vmatprep.subr.mxu0 0.0
        %2973 = vmatpush2.msra.mxu0 0.0
        %2974 = vmatprep.subr.mxu0 0.0
        %2975 = vmatpush2.msra.mxu0 0.0
        %2976 = vmatprep.subr.mxu0 0.0
        %2977 = vmatpush2.msra.mxu0 0.0
        %2978 = vmatprep.subr.mxu0 0.0
        %2979 = vmatpush2.msra.mxu0 0.0
        %2980 = vmatprep.subr.mxu0 0.0
        %2981 = vmatpush2.msra.mxu0 0.0
        %2982 = vmatprep.subr.mxu0 0.0
        %2983 = vmatpush2.msra.mxu0 0.0
        %2984 = vmatprep.subr.mxu0 0.0
        %2985 = vmatpush2.msra.mxu0 0.0
        %2986 = vmatprep.subr.mxu0 0.0
        %2987 = vmatpush2.msra.mxu0 0.0
        %2988 = vmatprep.subr.mxu0 0.0
        %2989 = vmatpush2.msra.mxu0 0.0
        %2990 = vmatprep.subr.mxu0 0.0
        %2991 = vmatpush2.msra.mxu0 0.0
        %2992 = vmatprep.subr.mxu0 0.0
        %2993 = vmatpush2.msra.mxu0 0.0
        %2994 = vmatprep.subr.mxu0 0.0
        %2995 = vmatpush2.msra.mxu0 0.0
        %2996 = vmatprep.mubr.f32.mxu0 0.0
        %2997 = vmatmul.mubr.f32.gmra.mxu0 %v2921
        %v2998 = vpop.f32.mrf.mxu0
        %v2999 = vadd.f32 0.0, %v2998
        %v3000 = vpop.f32.mrf.mxu0
        %v3001 = vadd.f32 0.0, %v3000
        %3002 = vmatprep.mubr.f32.mxu0 0.0
        %3003 = vmatmul.mubr.f32.gmra.mxu0 %v2924
        %v3004 = vpop.f32.mrf.mxu0
        %v3005 = vadd.f32 0.0, %v3004
        %v3006 = vpop.f32.mrf.mxu0
        %v3007 = vadd.f32 0.0, %v3006
        %3008 = vmatprep.mubr.f32.mxu0 0.0
        %3009 = vmatmul.mubr.f32.gmra.mxu0 %v2927
        %v3010 = vpop.f32.mrf.mxu0
        %v3011 = vadd.f32 0.0, %v3010
        %v3012 = vpop.f32.mrf.mxu0
        %v3013 = vadd.f32 0.0, %v3012
        %3014 = vmatprep.mubr.f32.mxu0 0.0
        %3015 = vmatmul.mubr.f32.gmra.mxu0 %v2930
        %v3016 = vpop.f32.mrf.mxu0
        %v3017 = vadd.f32 0.0, %v3016
        %v3018 = vpop.f32.mrf.mxu0
        %v3019 = vadd.f32 0.0, %v3018
        %3020 = vdwg.mxu0
        %v3021 = vadd.f32 %v2863, %v2999
        %v3022 = vadd.f32 %v2864, %v3001
        %v3023 = vadd.f32 %v2865, %v3005
        %v3024 = vadd.f32 %v2866, %v3007
        %v3025 = vadd.f32 %v2867, %v3011
        %v3026 = vadd.f32 %v2868, %v3013
        %v3027 = vadd.f32 %v2869, %v3017
        %v3028 = vadd.f32 %v2870, %v3019
        %s3029 = scalar_lea.vmem [#allocation4], 416
        %v3030 = vld [vmem:[%s3029] sm:$0xff]
        %v3031 = vld [vmem:[%s3029 + $0x8] sm:$0xff]
        %v3032 = vld [vmem:[%s3029 + $0x10] sm:$0xff]
        %v3033 = vld [vmem:[%s3029 + $0x18] sm:$0xff]
        %v3035 = vsel %vm1092, %v3030, 0
        %v3038 = vsel %vm1092, %v3031, 0
        %v3041 = vsel %vm1092, %v3032, 0
        %v3044 = vsel %vm1092, %v3033, 0
        %3046 = vmatprep.subr.mxu0 0.0
        %3047 = vmatpush1.msra.mxu0 0.0
        %3048 = vmatprep.subr.mxu0 0.0
        %3049 = vmatpush1.msra.mxu0 0.0
        %3050 = vmatprep.subr.mxu0 0.0
        %3051 = vmatpush1.msra.mxu0 0.0
        %3052 = vmatprep.subr.mxu0 0.0
        %3053 = vmatpush1.msra.mxu0 0.0
        %3054 = vmatprep.subr.mxu0 0.0
        %3055 = vmatpush1.msra.mxu0 0.0
        %3056 = vmatprep.subr.mxu0 0.0
        %3057 = vmatpush1.msra.mxu0 0.0
        %3058 = vmatprep.subr.mxu0 0.0
        %3059 = vmatpush1.msra.mxu0 0.0
        %3060 = vmatprep.subr.mxu0 0.0
        %3061 = vmatpush1.msra.mxu0 0.0
        %3062 = vmatprep.subr.mxu0 0.0
        %3063 = vmatpush1.msra.mxu0 0.0
        %3064 = vmatprep.subr.mxu0 0.0
        %3065 = vmatpush1.msra.mxu0 0.0
        %3066 = vmatprep.subr.mxu0 0.0
        %3067 = vmatpush1.msra.mxu0 0.0
        %3068 = vmatprep.subr.mxu0 0.0
        %3069 = vmatpush1.msra.mxu0 0.0
        %3070 = vmatprep.subr.mxu0 %v2412
        %3071 = vmatpush1.msra.mxu0 %v2411
        %3072 = vmatprep.subr.mxu0 %v2410
        %3073 = vmatpush1.msra.mxu0 %v2409
        %3074 = vmatprep.subr.mxu0 %v2408
        %3075 = vmatpush1.msra.mxu0 %v2407
        %3076 = vmatprep.subr.mxu0 %v2406
        %3077 = vmatpush1.msra.mxu0 %v2405
        %3078 = vmatprep.subr.mxu0 0.0
        %3079 = vmatpush2.msra.mxu0 0.0
        %3080 = vmatprep.subr.mxu0 0.0
        %3081 = vmatpush2.msra.mxu0 0.0
        %3082 = vmatprep.subr.mxu0 0.0
        %3083 = vmatpush2.msra.mxu0 0.0
        %3084 = vmatprep.subr.mxu0 0.0
        %3085 = vmatpush2.msra.mxu0 0.0
        %3086 = vmatprep.subr.mxu0 0.0
        %3087 = vmatpush2.msra.mxu0 0.0
        %3088 = vmatprep.subr.mxu0 0.0
        %3089 = vmatpush2.msra.mxu0 0.0
        %3090 = vmatprep.subr.mxu0 0.0
        %3091 = vmatpush2.msra.mxu0 0.0
        %3092 = vmatprep.subr.mxu0 0.0
        %3093 = vmatpush2.msra.mxu0 0.0
        %3094 = vmatprep.subr.mxu0 0.0
        %3095 = vmatpush2.msra.mxu0 0.0
        %3096 = vmatprep.subr.mxu0 0.0
        %3097 = vmatpush2.msra.mxu0 0.0
        %3098 = vmatprep.subr.mxu0 0.0
        %3099 = vmatpush2.msra.mxu0 0.0
        %3100 = vmatprep.subr.mxu0 0.0
        %3101 = vmatpush2.msra.mxu0 0.0
        %3102 = vmatprep.subr.mxu0 0.0
        %3103 = vmatpush2.msra.mxu0 0.0
        %3104 = vmatprep.subr.mxu0 0.0
        %3105 = vmatpush2.msra.mxu0 0.0
        %3106 = vmatprep.subr.mxu0 0.0
        %3107 = vmatpush2.msra.mxu0 0.0
        %3108 = vmatprep.subr.mxu0 0.0
        %3109 = vmatpush2.msra.mxu0 0.0
        %3110 = vmatprep.mubr.f32.mxu0 0.0
        %3111 = vmatmul.mubr.f32.gmra.mxu0 %v3035
        %v3112 = vpop.f32.mrf.mxu0
        %v3113 = vadd.f32 0.0, %v3112
        %v3114 = vpop.f32.mrf.mxu0
        %v3115 = vadd.f32 0.0, %v3114
        %3116 = vmatprep.mubr.f32.mxu0 0.0
        %3117 = vmatmul.mubr.f32.gmra.mxu0 %v3038
        %v3118 = vpop.f32.mrf.mxu0
        %v3119 = vadd.f32 0.0, %v3118
        %v3120 = vpop.f32.mrf.mxu0
        %v3121 = vadd.f32 0.0, %v3120
        %3122 = vmatprep.mubr.f32.mxu0 0.0
        %3123 = vmatmul.mubr.f32.gmra.mxu0 %v3041
        %v3124 = vpop.f32.mrf.mxu0
        %v3125 = vadd.f32 0.0, %v3124
        %v3126 = vpop.f32.mrf.mxu0
        %v3127 = vadd.f32 0.0, %v3126
        %3128 = vmatprep.mubr.f32.mxu0 0.0
        %3129 = vmatmul.mubr.f32.gmra.mxu0 %v3044
        %v3130 = vpop.f32.mrf.mxu0
        %v3131 = vadd.f32 0.0, %v3130
        %v3132 = vpop.f32.mrf.mxu0
        %v3133 = vadd.f32 0.0, %v3132
        %3134 = vdwg.mxu0
        %v3135 = vadd.f32 %v3021, %v3113
        %v3136 = vadd.f32 %v3022, %v3115
        %v3137 = vadd.f32 %v3023, %v3119
        %v3138 = vadd.f32 %v3024, %v3121
        %v3139 = vadd.f32 %v3025, %v3125
        %v3140 = vadd.f32 %v3026, %v3127
        %v3141 = vadd.f32 %v3027, %v3131
        %v3142 = vadd.f32 %v3028, %v3133
        %3143 = vrot.lane.b32.xlu0 %v2405, 127
        %v3144 = vpop.permute.xlu0 %3143
        %3145 = vrot.lane.b32.xlu0 %v2407, 127
        %v3146 = vpop.permute.xlu0 %3145
        %3147 = vrot.lane.b32.xlu0 %v2409, 127
        %v3148 = vpop.permute.xlu0 %3147
        %3149 = vrot.lane.b32.xlu0 %v2411, 127
        %v3150 = vpop.permute.xlu0 %3149
        %3151 = vrot.lane.b32.xlu0 %v2406, 127
        %v3152 = vpop.permute.xlu0 %3151
        %3153 = vrot.lane.b32.xlu0 %v2408, 127
        %v3154 = vpop.permute.xlu0 %3153
        %3155 = vrot.lane.b32.xlu0 %v2410, 127
        %v3156 = vpop.permute.xlu0 %3155
        %3157 = vrot.lane.b32.xlu0 %v2412, 127
        %v3158 = vpop.permute.xlu0 %3157
        %v3159 = vsel %vm664, %v3144, %v3152
        %v3160 = vsel %vm664, %v3146, %v3154
        %v3161 = vsel %vm664, %v3148, %v3156
        %v3162 = vsel %vm664, %v3150, %v3158
        %v3163 = vsel %vm664, %v3152, %v3144
        %v3164 = vsel %vm664, %v3154, %v3146
        %v3165 = vsel %vm664, %v3156, %v3148
        %v3166 = vsel %vm664, %v3158, %v3150
        %v3167 = vld [vmem:[%s667] sm:$0x3]
        %v3169 = vlaneseq
        %v3170 = vshrl.u32 %v3169, 7
        %v3171 = vsub.s32 0, %v3170
        %v3172 = vrot.slane %v3167, %v3171
        %v3173 = vlaneseq
        %v3174 = vshrl.u32 %v3173, 7
        %v3175 = vsub.s32 1, %v3174
        %v3176 = vrot.slane %v3167, %v3175
        %v3179 = vmul.f32 %v3159, %v3172
        %v3180 = vmul.f32 %v3163, %v3176
        %v3181 = vmul.f32 %v3160, %v3172
        %v3182 = vmul.f32 %v3164, %v3176
        %v3183 = vmul.f32 %v3161, %v3172
        %v3184 = vmul.f32 %v3165, %v3176
        %v3185 = vmul.f32 %v3162, %v3172
        %v3186 = vmul.f32 %v3166, %v3176
        %s3187 = scalar_lea.vmem [#allocation4], 448
        %v3188 = vld [vmem:[%s3187] sm:$0xff]
        %v3189 = vld [vmem:[%s3187 + $0x8] sm:$0xff]
        %v3190 = vld [vmem:[%s3187 + $0x10] sm:$0xff]
        %v3191 = vld [vmem:[%s3187 + $0x18] sm:$0xff]
        %v3193 = vsel %vm1092, %v3188, 0
        %v3196 = vsel %vm1092, %v3189, 0
        %v3199 = vsel %vm1092, %v3190, 0
        %v3202 = vsel %vm1092, %v3191, 0
        %3204 = vmatprep.subr.mxu0 0.0
        %3205 = vmatpush1.msra.mxu0 0.0
        %3206 = vmatprep.subr.mxu0 0.0
        %3207 = vmatpush1.msra.mxu0 0.0
        %3208 = vmatprep.subr.mxu0 0.0
        %3209 = vmatpush1.msra.mxu0 0.0
        %3210 = vmatprep.subr.mxu0 0.0
        %3211 = vmatpush1.msra.mxu0 0.0
        %3212 = vmatprep.subr.mxu0 0.0
        %3213 = vmatpush1.msra.mxu0 0.0
        %3214 = vmatprep.subr.mxu0 0.0
        %3215 = vmatpush1.msra.mxu0 0.0
        %3216 = vmatprep.subr.mxu0 0.0
        %3217 = vmatpush1.msra.mxu0 0.0
        %3218 = vmatprep.subr.mxu0 0.0
        %3219 = vmatpush1.msra.mxu0 0.0
        %3220 = vmatprep.subr.mxu0 0.0
        %3221 = vmatpush1.msra.mxu0 0.0
        %3222 = vmatprep.subr.mxu0 0.0
        %3223 = vmatpush1.msra.mxu0 0.0
        %3224 = vmatprep.subr.mxu0 0.0
        %3225 = vmatpush1.msra.mxu0 0.0
        %3226 = vmatprep.subr.mxu0 0.0
        %3227 = vmatpush1.msra.mxu0 0.0
        %3228 = vmatprep.subr.mxu0 %v3186
        %3229 = vmatpush1.msra.mxu0 %v3185
        %3230 = vmatprep.subr.mxu0 %v3184
        %3231 = vmatpush1.msra.mxu0 %v3183
        %3232 = vmatprep.subr.mxu0 %v3182
        %3233 = vmatpush1.msra.mxu0 %v3181
        %3234 = vmatprep.subr.mxu0 %v3180
        %3235 = vmatpush1.msra.mxu0 %v3179
        %3236 = vmatprep.subr.mxu0 0.0
        %3237 = vmatpush2.msra.mxu0 0.0
        %3238 = vmatprep.subr.mxu0 0.0
        %3239 = vmatpush2.msra.mxu0 0.0
        %3240 = vmatprep.subr.mxu0 0.0
        %3241 = vmatpush2.msra.mxu0 0.0
        %3242 = vmatprep.subr.mxu0 0.0
        %3243 = vmatpush2.msra.mxu0 0.0
        %3244 = vmatprep.subr.mxu0 0.0
        %3245 = vmatpush2.msra.mxu0 0.0
        %3246 = vmatprep.subr.mxu0 0.0
        %3247 = vmatpush2.msra.mxu0 0.0
        %3248 = vmatprep.subr.mxu0 0.0
        %3249 = vmatpush2.msra.mxu0 0.0
        %3250 = vmatprep.subr.mxu0 0.0
        %3251 = vmatpush2.msra.mxu0 0.0
        %3252 = vmatprep.subr.mxu0 0.0
        %3253 = vmatpush2.msra.mxu0 0.0
        %3254 = vmatprep.subr.mxu0 0.0
        %3255 = vmatpush2.msra.mxu0 0.0
        %3256 = vmatprep.subr.mxu0 0.0
        %3257 = vmatpush2.msra.mxu0 0.0
        %3258 = vmatprep.subr.mxu0 0.0
        %3259 = vmatpush2.msra.mxu0 0.0
        %3260 = vmatprep.subr.mxu0 0.0
        %3261 = vmatpush2.msra.mxu0 0.0
        %3262 = vmatprep.subr.mxu0 0.0
        %3263 = vmatpush2.msra.mxu0 0.0
        %3264 = vmatprep.subr.mxu0 0.0
        %3265 = vmatpush2.msra.mxu0 0.0
        %3266 = vmatprep.subr.mxu0 0.0
        %3267 = vmatpush2.msra.mxu0 0.0
        %3268 = vmatprep.mubr.f32.mxu0 0.0
        %3269 = vmatmul.mubr.f32.gmra.mxu0 %v3193
        %v3270 = vpop.f32.mrf.mxu0
        %v3271 = vadd.f32 0.0, %v3270
        %v3272 = vpop.f32.mrf.mxu0
        %v3273 = vadd.f32 0.0, %v3272
        %3274 = vmatprep.mubr.f32.mxu0 0.0
        %3275 = vmatmul.mubr.f32.gmra.mxu0 %v3196
        %v3276 = vpop.f32.mrf.mxu0
        %v3277 = vadd.f32 0.0, %v3276
        %v3278 = vpop.f32.mrf.mxu0
        %v3279 = vadd.f32 0.0, %v3278
        %3280 = vmatprep.mubr.f32.mxu0 0.0
        %3281 = vmatmul.mubr.f32.gmra.mxu0 %v3199
        %v3282 = vpop.f32.mrf.mxu0
        %v3283 = vadd.f32 0.0, %v3282
        %v3284 = vpop.f32.mrf.mxu0
        %v3285 = vadd.f32 0.0, %v3284
        %3286 = vmatprep.mubr.f32.mxu0 0.0
        %3287 = vmatmul.mubr.f32.gmra.mxu0 %v3202
        %v3288 = vpop.f32.mrf.mxu0
        %v3289 = vadd.f32 0.0, %v3288
        %v3290 = vpop.f32.mrf.mxu0
        %v3291 = vadd.f32 0.0, %v3290
        %3292 = vdwg.mxu0
        %v3293 = vadd.f32 %v3135, %v3271
        %v3294 = vadd.f32 %v3136, %v3273
        %v3295 = vadd.f32 %v3137, %v3277
        %v3296 = vadd.f32 %v3138, %v3279
        %v3297 = vadd.f32 %v3139, %v3283
        %v3298 = vadd.f32 %v3140, %v3285
        %v3299 = vadd.f32 %v3141, %v3289
        %v3300 = vadd.f32 %v3142, %v3291
        %3301 = vrot.lane.b32.xlu0 %v2405, 113
        %v3302 = vpop.permute.xlu0 %3301
        %3303 = vrot.lane.b32.xlu0 %v2407, 113
        %v3304 = vpop.permute.xlu0 %3303
        %3305 = vrot.lane.b32.xlu0 %v2409, 113
        %v3306 = vpop.permute.xlu0 %3305
        %3307 = vrot.lane.b32.xlu0 %v2411, 113
        %v3308 = vpop.permute.xlu0 %3307
        %3309 = vrot.lane.b32.xlu0 %v2406, 113
        %v3310 = vpop.permute.xlu0 %3309
        %3311 = vrot.lane.b32.xlu0 %v2408, 113
        %v3312 = vpop.permute.xlu0 %3311
        %3313 = vrot.lane.b32.xlu0 %v2410, 113
        %v3314 = vpop.permute.xlu0 %3313
        %3315 = vrot.lane.b32.xlu0 %v2412, 113
        %v3316 = vpop.permute.xlu0 %3315
        %v3317 = vsel %vm735, %v3302, %v3310
        %v3318 = vsel %vm735, %v3304, %v3312
        %v3319 = vsel %vm735, %v3306, %v3314
        %v3320 = vsel %vm735, %v3308, %v3316
        %v3321 = vsel %vm735, %v3310, %v3302
        %v3322 = vsel %vm735, %v3312, %v3304
        %v3323 = vsel %vm735, %v3314, %v3306
        %v3324 = vsel %vm735, %v3316, %v3308
        %v3325 = vld [vmem:[%s738] sm:$0x3]
        %v3327 = vlaneseq
        %v3328 = vshrl.u32 %v3327, 7
        %v3329 = vsub.s32 0, %v3328
        %v3330 = vrot.slane %v3325, %v3329
        %v3331 = vlaneseq
        %v3332 = vshrl.u32 %v3331, 7
        %v3333 = vsub.s32 1, %v3332
        %v3334 = vrot.slane %v3325, %v3333
        %v3337 = vmul.f32 %v3317, %v3330
        %v3338 = vmul.f32 %v3321, %v3334
        %v3339 = vmul.f32 %v3318, %v3330
        %v3340 = vmul.f32 %v3322, %v3334
        %v3341 = vmul.f32 %v3319, %v3330
        %v3342 = vmul.f32 %v3323, %v3334
        %v3343 = vmul.f32 %v3320, %v3330
        %v3344 = vmul.f32 %v3324, %v3334
        %s3345 = scalar_lea.vmem [#allocation4], 480
        %v3346 = vld [vmem:[%s3345] sm:$0xff]
        %v3347 = vld [vmem:[%s3345 + $0x8] sm:$0xff]
        %v3348 = vld [vmem:[%s3345 + $0x10] sm:$0xff]
        %v3349 = vld [vmem:[%s3345 + $0x18] sm:$0xff]
        %v3351 = vsel %vm1092, %v3346, 0
        %v3354 = vsel %vm1092, %v3347, 0
        %v3357 = vsel %vm1092, %v3348, 0
        %v3360 = vsel %vm1092, %v3349, 0
        %3362 = vmatprep.subr.mxu0 0.0
        %3363 = vmatpush1.msra.mxu0 0.0
        %3364 = vmatprep.subr.mxu0 0.0
        %3365 = vmatpush1.msra.mxu0 0.0
        %3366 = vmatprep.subr.mxu0 0.0
        %3367 = vmatpush1.msra.mxu0 0.0
        %3368 = vmatprep.subr.mxu0 0.0
        %3369 = vmatpush1.msra.mxu0 0.0
        %3370 = vmatprep.subr.mxu0 0.0
        %3371 = vmatpush1.msra.mxu0 0.0
        %3372 = vmatprep.subr.mxu0 0.0
        %3373 = vmatpush1.msra.mxu0 0.0
        %3374 = vmatprep.subr.mxu0 0.0
        %3375 = vmatpush1.msra.mxu0 0.0
        %3376 = vmatprep.subr.mxu0 0.0
        %3377 = vmatpush1.msra.mxu0 0.0
        %3378 = vmatprep.subr.mxu0 0.0
        %3379 = vmatpush1.msra.mxu0 0.0
        %3380 = vmatprep.subr.mxu0 0.0
        %3381 = vmatpush1.msra.mxu0 0.0
        %3382 = vmatprep.subr.mxu0 0.0
        %3383 = vmatpush1.msra.mxu0 0.0
        %3384 = vmatprep.subr.mxu0 0.0
        %3385 = vmatpush1.msra.mxu0 0.0
        %3386 = vmatprep.subr.mxu0 %v3344
        %3387 = vmatpush1.msra.mxu0 %v3343
        %3388 = vmatprep.subr.mxu0 %v3342
        %3389 = vmatpush1.msra.mxu0 %v3341
        %3390 = vmatprep.subr.mxu0 %v3340
        %3391 = vmatpush1.msra.mxu0 %v3339
        %3392 = vmatprep.subr.mxu0 %v3338
        %3393 = vmatpush1.msra.mxu0 %v3337
        %3394 = vmatprep.subr.mxu0 0.0
        %3395 = vmatpush2.msra.mxu0 0.0
        %3396 = vmatprep.subr.mxu0 0.0
        %3397 = vmatpush2.msra.mxu0 0.0
        %3398 = vmatprep.subr.mxu0 0.0
        %3399 = vmatpush2.msra.mxu0 0.0
        %3400 = vmatprep.subr.mxu0 0.0
        %3401 = vmatpush2.msra.mxu0 0.0
        %3402 = vmatprep.subr.mxu0 0.0
        %3403 = vmatpush2.msra.mxu0 0.0
        %3404 = vmatprep.subr.mxu0 0.0
        %3405 = vmatpush2.msra.mxu0 0.0
        %3406 = vmatprep.subr.mxu0 0.0
        %3407 = vmatpush2.msra.mxu0 0.0
        %3408 = vmatprep.subr.mxu0 0.0
        %3409 = vmatpush2.msra.mxu0 0.0
        %3410 = vmatprep.subr.mxu0 0.0
        %3411 = vmatpush2.msra.mxu0 0.0
        %3412 = vmatprep.subr.mxu0 0.0
        %3413 = vmatpush2.msra.mxu0 0.0
        %3414 = vmatprep.subr.mxu0 0.0
        %3415 = vmatpush2.msra.mxu0 0.0
        %3416 = vmatprep.subr.mxu0 0.0
        %3417 = vmatpush2.msra.mxu0 0.0
        %3418 = vmatprep.subr.mxu0 0.0
        %3419 = vmatpush2.msra.mxu0 0.0
        %3420 = vmatprep.subr.mxu0 0.0
        %3421 = vmatpush2.msra.mxu0 0.0
        %3422 = vmatprep.subr.mxu0 0.0
        %3423 = vmatpush2.msra.mxu0 0.0
        %3424 = vmatprep.subr.mxu0 0.0
        %3425 = vmatpush2.msra.mxu0 0.0
        %3426 = vmatprep.mubr.f32.mxu0 0.0
        %3427 = vmatmul.mubr.f32.gmra.mxu0 %v3351
        %v3428 = vpop.f32.mrf.mxu0
        %v3429 = vadd.f32 0.0, %v3428
        %v3430 = vpop.f32.mrf.mxu0
        %v3431 = vadd.f32 0.0, %v3430
        %3432 = vmatprep.mubr.f32.mxu0 0.0
        %3433 = vmatmul.mubr.f32.gmra.mxu0 %v3354
        %v3434 = vpop.f32.mrf.mxu0
        %v3435 = vadd.f32 0.0, %v3434
        %v3436 = vpop.f32.mrf.mxu0
        %v3437 = vadd.f32 0.0, %v3436
        %3438 = vmatprep.mubr.f32.mxu0 0.0
        %3439 = vmatmul.mubr.f32.gmra.mxu0 %v3357
        %v3440 = vpop.f32.mrf.mxu0
        %v3441 = vadd.f32 0.0, %v3440
        %v3442 = vpop.f32.mrf.mxu0
        %v3443 = vadd.f32 0.0, %v3442
        %3444 = vmatprep.mubr.f32.mxu0 0.0
        %3445 = vmatmul.mubr.f32.gmra.mxu0 %v3360
        %v3446 = vpop.f32.mrf.mxu0
        %v3447 = vadd.f32 0.0, %v3446
        %v3448 = vpop.f32.mrf.mxu0
        %v3449 = vadd.f32 0.0, %v3448
        %3450 = vdwg.mxu0
        %v3451 = vadd.f32 %v3293, %v3429
        %v3452 = vadd.f32 %v3294, %v3431
        %v3453 = vadd.f32 %v3295, %v3435
        %v3454 = vadd.f32 %v3296, %v3437
        %v3455 = vadd.f32 %v3297, %v3441
        %v3456 = vadd.f32 %v3298, %v3443
        %v3457 = vadd.f32 %v3299, %v3447
        %v3458 = vadd.f32 %v3300, %v3449
        %3459 = vrot.lane.b32.xlu0 %v2405, 112
        %v3460 = vpop.permute.xlu0 %3459
        %3461 = vrot.lane.b32.xlu0 %v2407, 112
        %v3462 = vpop.permute.xlu0 %3461
        %3463 = vrot.lane.b32.xlu0 %v2409, 112
        %v3464 = vpop.permute.xlu0 %3463
        %3465 = vrot.lane.b32.xlu0 %v2411, 112
        %v3466 = vpop.permute.xlu0 %3465
        %3467 = vrot.lane.b32.xlu0 %v2406, 112
        %v3468 = vpop.permute.xlu0 %3467
        %3469 = vrot.lane.b32.xlu0 %v2408, 112
        %v3470 = vpop.permute.xlu0 %3469
        %3471 = vrot.lane.b32.xlu0 %v2410, 112
        %v3472 = vpop.permute.xlu0 %3471
        %3473 = vrot.lane.b32.xlu0 %v2412, 112
        %v3474 = vpop.permute.xlu0 %3473
        %v3475 = vsel %vm806, %v3460, %v3468
        %v3476 = vsel %vm806, %v3462, %v3470
        %v3477 = vsel %vm806, %v3464, %v3472
        %v3478 = vsel %vm806, %v3466, %v3474
        %v3479 = vsel %vm806, %v3468, %v3460
        %v3480 = vsel %vm806, %v3470, %v3462
        %v3481 = vsel %vm806, %v3472, %v3464
        %v3482 = vsel %vm806, %v3474, %v3466
        %v3483 = vld [vmem:[%s809] sm:$0x3]
        %v3485 = vlaneseq
        %v3486 = vshrl.u32 %v3485, 7
        %v3487 = vsub.s32 0, %v3486
        %v3488 = vrot.slane %v3483, %v3487
        %v3489 = vlaneseq
        %v3490 = vshrl.u32 %v3489, 7
        %v3491 = vsub.s32 1, %v3490
        %v3492 = vrot.slane %v3483, %v3491
        %v3495 = vmul.f32 %v3475, %v3488
        %v3496 = vmul.f32 %v3479, %v3492
        %v3497 = vmul.f32 %v3476, %v3488
        %v3498 = vmul.f32 %v3480, %v3492
        %v3499 = vmul.f32 %v3477, %v3488
        %v3500 = vmul.f32 %v3481, %v3492
        %v3501 = vmul.f32 %v3478, %v3488
        %v3502 = vmul.f32 %v3482, %v3492
        %s3503 = scalar_lea.vmem [#allocation4], 512
        %v3504 = vld [vmem:[%s3503] sm:$0xff]
        %v3505 = vld [vmem:[%s3503 + $0x8] sm:$0xff]
        %v3506 = vld [vmem:[%s3503 + $0x10] sm:$0xff]
        %v3507 = vld [vmem:[%s3503 + $0x18] sm:$0xff]
        %v3509 = vsel %vm1092, %v3504, 0
        %v3512 = vsel %vm1092, %v3505, 0
        %v3515 = vsel %vm1092, %v3506, 0
        %v3518 = vsel %vm1092, %v3507, 0
        %3520 = vmatprep.subr.mxu0 0.0
        %3521 = vmatpush1.msra.mxu0 0.0
        %3522 = vmatprep.subr.mxu0 0.0
        %3523 = vmatpush1.msra.mxu0 0.0
        %3524 = vmatprep.subr.mxu0 0.0
        %3525 = vmatpush1.msra.mxu0 0.0
        %3526 = vmatprep.subr.mxu0 0.0
        %3527 = vmatpush1.msra.mxu0 0.0
        %3528 = vmatprep.subr.mxu0 0.0
        %3529 = vmatpush1.msra.mxu0 0.0
        %3530 = vmatprep.subr.mxu0 0.0
        %3531 = vmatpush1.msra.mxu0 0.0
        %3532 = vmatprep.subr.mxu0 0.0
        %3533 = vmatpush1.msra.mxu0 0.0
        %3534 = vmatprep.subr.mxu0 0.0
        %3535 = vmatpush1.msra.mxu0 0.0
        %3536 = vmatprep.subr.mxu0 0.0
        %3537 = vmatpush1.msra.mxu0 0.0
        %3538 = vmatprep.subr.mxu0 0.0
        %3539 = vmatpush1.msra.mxu0 0.0
        %3540 = vmatprep.subr.mxu0 0.0
        %3541 = vmatpush1.msra.mxu0 0.0
        %3542 = vmatprep.subr.mxu0 0.0
        %3543 = vmatpush1.msra.mxu0 0.0
        %3544 = vmatprep.subr.mxu0 %v3502
        %3545 = vmatpush1.msra.mxu0 %v3501
        %3546 = vmatprep.subr.mxu0 %v3500
        %3547 = vmatpush1.msra.mxu0 %v3499
        %3548 = vmatprep.subr.mxu0 %v3498
        %3549 = vmatpush1.msra.mxu0 %v3497
        %3550 = vmatprep.subr.mxu0 %v3496
        %3551 = vmatpush1.msra.mxu0 %v3495
        %3552 = vmatprep.subr.mxu0 0.0
        %3553 = vmatpush2.msra.mxu0 0.0
        %3554 = vmatprep.subr.mxu0 0.0
        %3555 = vmatpush2.msra.mxu0 0.0
        %3556 = vmatprep.subr.mxu0 0.0
        %3557 = vmatpush2.msra.mxu0 0.0
        %3558 = vmatprep.subr.mxu0 0.0
        %3559 = vmatpush2.msra.mxu0 0.0
        %3560 = vmatprep.subr.mxu0 0.0
        %3561 = vmatpush2.msra.mxu0 0.0
        %3562 = vmatprep.subr.mxu0 0.0
        %3563 = vmatpush2.msra.mxu0 0.0
        %3564 = vmatprep.subr.mxu0 0.0
        %3565 = vmatpush2.msra.mxu0 0.0
        %3566 = vmatprep.subr.mxu0 0.0
        %3567 = vmatpush2.msra.mxu0 0.0
        %3568 = vmatprep.subr.mxu0 0.0
        %3569 = vmatpush2.msra.mxu0 0.0
        %3570 = vmatprep.subr.mxu0 0.0
        %3571 = vmatpush2.msra.mxu0 0.0
        %3572 = vmatprep.subr.mxu0 0.0
        %3573 = vmatpush2.msra.mxu0 0.0
        %3574 = vmatprep.subr.mxu0 0.0
        %3575 = vmatpush2.msra.mxu0 0.0
        %3576 = vmatprep.subr.mxu0 0.0
        %3577 = vmatpush2.msra.mxu0 0.0
        %3578 = vmatprep.subr.mxu0 0.0
        %3579 = vmatpush2.msra.mxu0 0.0
        %3580 = vmatprep.subr.mxu0 0.0
        %3581 = vmatpush2.msra.mxu0 0.0
        %3582 = vmatprep.subr.mxu0 0.0
        %3583 = vmatpush2.msra.mxu0 0.0
        %3584 = vmatprep.mubr.f32.mxu0 0.0
        %3585 = vmatmul.mubr.f32.gmra.mxu0 %v3509
        %v3586 = vpop.f32.mrf.mxu0
        %v3587 = vadd.f32 0.0, %v3586
        %v3588 = vpop.f32.mrf.mxu0
        %v3589 = vadd.f32 0.0, %v3588
        %3590 = vmatprep.mubr.f32.mxu0 0.0
        %3591 = vmatmul.mubr.f32.gmra.mxu0 %v3512
        %v3592 = vpop.f32.mrf.mxu0
        %v3593 = vadd.f32 0.0, %v3592
        %v3594 = vpop.f32.mrf.mxu0
        %v3595 = vadd.f32 0.0, %v3594
        %3596 = vmatprep.mubr.f32.mxu0 0.0
        %3597 = vmatmul.mubr.f32.gmra.mxu0 %v3515
        %v3598 = vpop.f32.mrf.mxu0
        %v3599 = vadd.f32 0.0, %v3598
        %v3600 = vpop.f32.mrf.mxu0
        %v3601 = vadd.f32 0.0, %v3600
        %3602 = vmatprep.mubr.f32.mxu0 0.0
        %3603 = vmatmul.mubr.f32.gmra.mxu0 %v3518
        %v3604 = vpop.f32.mrf.mxu0
        %v3605 = vadd.f32 0.0, %v3604
        %v3606 = vpop.f32.mrf.mxu0
        %v3607 = vadd.f32 0.0, %v3606
        %3608 = vdwg.mxu0
        %v3609 = vadd.f32 %v3451, %v3587
        %v3610 = vadd.f32 %v3452, %v3589
        %v3611 = vadd.f32 %v3453, %v3593
        %v3612 = vadd.f32 %v3454, %v3595
        %v3613 = vadd.f32 %v3455, %v3599
        %v3614 = vadd.f32 %v3456, %v3601
        %v3615 = vadd.f32 %v3457, %v3605
        %v3616 = vadd.f32 %v3458, %v3607
        %3617 = vrot.lane.b32.xlu0 %v2405, 111
        %v3618 = vpop.permute.xlu0 %3617
        %3619 = vrot.lane.b32.xlu0 %v2407, 111
        %v3620 = vpop.permute.xlu0 %3619
        %3621 = vrot.lane.b32.xlu0 %v2409, 111
        %v3622 = vpop.permute.xlu0 %3621
        %3623 = vrot.lane.b32.xlu0 %v2411, 111
        %v3624 = vpop.permute.xlu0 %3623
        %3625 = vrot.lane.b32.xlu0 %v2406, 111
        %v3626 = vpop.permute.xlu0 %3625
        %3627 = vrot.lane.b32.xlu0 %v2408, 111
        %v3628 = vpop.permute.xlu0 %3627
        %3629 = vrot.lane.b32.xlu0 %v2410, 111
        %v3630 = vpop.permute.xlu0 %3629
        %3631 = vrot.lane.b32.xlu0 %v2412, 111
        %v3632 = vpop.permute.xlu0 %3631
        %v3633 = vsel %vm877, %v3618, %v3626
        %v3634 = vsel %vm877, %v3620, %v3628
        %v3635 = vsel %vm877, %v3622, %v3630
        %v3636 = vsel %vm877, %v3624, %v3632
        %v3637 = vsel %vm877, %v3626, %v3618
        %v3638 = vsel %vm877, %v3628, %v3620
        %v3639 = vsel %vm877, %v3630, %v3622
        %v3640 = vsel %vm877, %v3632, %v3624
        %v3641 = vld [vmem:[%s880] sm:$0x3]
        %v3643 = vlaneseq
        %v3644 = vshrl.u32 %v3643, 7
        %v3645 = vsub.s32 0, %v3644
        %v3646 = vrot.slane %v3641, %v3645
        %v3647 = vlaneseq
        %v3648 = vshrl.u32 %v3647, 7
        %v3649 = vsub.s32 1, %v3648
        %v3650 = vrot.slane %v3641, %v3649
        %v3653 = vmul.f32 %v3633, %v3646
        %v3654 = vmul.f32 %v3637, %v3650
        %v3655 = vmul.f32 %v3634, %v3646
        %v3656 = vmul.f32 %v3638, %v3650
        %v3657 = vmul.f32 %v3635, %v3646
        %v3658 = vmul.f32 %v3639, %v3650
        %v3659 = vmul.f32 %v3636, %v3646
        %v3660 = vmul.f32 %v3640, %v3650
        %s3661 = scalar_lea.vmem [#allocation4], 544
        %v3662 = vld [vmem:[%s3661] sm:$0xff]
        %v3663 = vld [vmem:[%s3661 + $0x8] sm:$0xff]
        %v3664 = vld [vmem:[%s3661 + $0x10] sm:$0xff]
        %v3665 = vld [vmem:[%s3661 + $0x18] sm:$0xff]
        %v3667 = vsel %vm1092, %v3662, 0
        %v3670 = vsel %vm1092, %v3663, 0
        %v3673 = vsel %vm1092, %v3664, 0
        %v3676 = vsel %vm1092, %v3665, 0
        %3678 = vmatprep.subr.mxu0 0.0
        %3679 = vmatpush1.msra.mxu0 0.0
        %3680 = vmatprep.subr.mxu0 0.0
        %3681 = vmatpush1.msra.mxu0 0.0
        %3682 = vmatprep.subr.mxu0 0.0
        %3683 = vmatpush1.msra.mxu0 0.0
        %3684 = vmatprep.subr.mxu0 0.0
        %3685 = vmatpush1.msra.mxu0 0.0
        %3686 = vmatprep.subr.mxu0 0.0
        %3687 = vmatpush1.msra.mxu0 0.0
        %3688 = vmatprep.subr.mxu0 0.0
        %3689 = vmatpush1.msra.mxu0 0.0
        %3690 = vmatprep.subr.mxu0 0.0
        %3691 = vmatpush1.msra.mxu0 0.0
        %3692 = vmatprep.subr.mxu0 0.0
        %3693 = vmatpush1.msra.mxu0 0.0
        %3694 = vmatprep.subr.mxu0 0.0
        %3695 = vmatpush1.msra.mxu0 0.0
        %3696 = vmatprep.subr.mxu0 0.0
        %3697 = vmatpush1.msra.mxu0 0.0
        %3698 = vmatprep.subr.mxu0 0.0
        %3699 = vmatpush1.msra.mxu0 0.0
        %3700 = vmatprep.subr.mxu0 0.0
        %3701 = vmatpush1.msra.mxu0 0.0
        %3702 = vmatprep.subr.mxu0 %v3660
        %3703 = vmatpush1.msra.mxu0 %v3659
        %3704 = vmatprep.subr.mxu0 %v3658
        %3705 = vmatpush1.msra.mxu0 %v3657
        %3706 = vmatprep.subr.mxu0 %v3656
        %3707 = vmatpush1.msra.mxu0 %v3655
        %3708 = vmatprep.subr.mxu0 %v3654
        %3709 = vmatpush1.msra.mxu0 %v3653
        %3710 = vmatprep.subr.mxu0 0.0
        %3711 = vmatpush2.msra.mxu0 0.0
        %3712 = vmatprep.subr.mxu0 0.0
        %3713 = vmatpush2.msra.mxu0 0.0
        %3714 = vmatprep.subr.mxu0 0.0
        %3715 = vmatpush2.msra.mxu0 0.0
        %3716 = vmatprep.subr.mxu0 0.0
        %3717 = vmatpush2.msra.mxu0 0.0
        %3718 = vmatprep.subr.mxu0 0.0
        %3719 = vmatpush2.msra.mxu0 0.0
        %3720 = vmatprep.subr.mxu0 0.0
        %3721 = vmatpush2.msra.mxu0 0.0
        %3722 = vmatprep.subr.mxu0 0.0
        %3723 = vmatpush2.msra.mxu0 0.0
        %3724 = vmatprep.subr.mxu0 0.0
        %3725 = vmatpush2.msra.mxu0 0.0
        %3726 = vmatprep.subr.mxu0 0.0
        %3727 = vmatpush2.msra.mxu0 0.0
        %3728 = vmatprep.subr.mxu0 0.0
        %3729 = vmatpush2.msra.mxu0 0.0
        %3730 = vmatprep.subr.mxu0 0.0
        %3731 = vmatpush2.msra.mxu0 0.0
        %3732 = vmatprep.subr.mxu0 0.0
        %3733 = vmatpush2.msra.mxu0 0.0
        %3734 = vmatprep.subr.mxu0 0.0
        %3735 = vmatpush2.msra.mxu0 0.0
        %3736 = vmatprep.subr.mxu0 0.0
        %3737 = vmatpush2.msra.mxu0 0.0
        %3738 = vmatprep.subr.mxu0 0.0
        %3739 = vmatpush2.msra.mxu0 0.0
        %3740 = vmatprep.subr.mxu0 0.0
        %3741 = vmatpush2.msra.mxu0 0.0
        %3742 = vmatprep.mubr.f32.mxu0 0.0
        %3743 = vmatmul.mubr.f32.gmra.mxu0 %v3667
        %v3744 = vpop.f32.mrf.mxu0
        %v3745 = vadd.f32 0.0, %v3744
        %v3746 = vpop.f32.mrf.mxu0
        %v3747 = vadd.f32 0.0, %v3746
        %3748 = vmatprep.mubr.f32.mxu0 0.0
        %3749 = vmatmul.mubr.f32.gmra.mxu0 %v3670
        %v3750 = vpop.f32.mrf.mxu0
        %v3751 = vadd.f32 0.0, %v3750
        %v3752 = vpop.f32.mrf.mxu0
        %v3753 = vadd.f32 0.0, %v3752
        %3754 = vmatprep.mubr.f32.mxu0 0.0
        %3755 = vmatmul.mubr.f32.gmra.mxu0 %v3673
        %v3756 = vpop.f32.mrf.mxu0
        %v3757 = vadd.f32 0.0, %v3756
        %v3758 = vpop.f32.mrf.mxu0
        %v3759 = vadd.f32 0.0, %v3758
        %3760 = vmatprep.mubr.f32.mxu0 0.0
        %3761 = vmatmul.mubr.f32.gmra.mxu0 %v3676
        %v3762 = vpop.f32.mrf.mxu0
        %v3763 = vadd.f32 0.0, %v3762
        %v3764 = vpop.f32.mrf.mxu0
        %v3765 = vadd.f32 0.0, %v3764
        %3766 = vdwg.mxu0
        %v3767 = vadd.f32 %v3609, %v3745
        %v3768 = vadd.f32 %v3610, %v3747
        %v3769 = vadd.f32 %v3611, %v3751
        %v3770 = vadd.f32 %v3612, %v3753
        %v3771 = vadd.f32 %v3613, %v3757
        %v3772 = vadd.f32 %v3614, %v3759
        %v3773 = vadd.f32 %v3615, %v3763
        %v3774 = vadd.f32 %v3616, %v3765
        %s3775 = scalar_lea.vmem %s5, 32
        %v3776 = vld [vmem:[%s3775] sm:$0xff]
        %v3777 = vld [vmem:[%s3775 + $0x8] sm:$0xff]
        %v3778 = vld [vmem:[%s3775 + $0x10] sm:$0xff]
        %v3779 = vld [vmem:[%s3775 + $0x18] sm:$0xff]
        %3781 = vset.pattern.permute.xlu0 0
        %3782 = vperm.xlu0 %3781, %v3776
        %v3783 = vpop.permute.xlu0 %3782
        %3786 = vset.pattern.permute.xlu0 0
        %3787 = vperm.xlu0 %3786, %v3777
        %v3788 = vpop.permute.xlu0 %3787
        %3791 = vset.pattern.permute.xlu0 0
        %3792 = vperm.xlu0 %3791, %v3778
        %v3793 = vpop.permute.xlu0 %3792
        %3796 = vset.pattern.permute.xlu0 0
        %3797 = vperm.xlu0 %3796, %v3779
        %v3798 = vpop.permute.xlu0 %3797
        %v3800 = vadd.f32 %v3767, %v3783
        %v3801 = vadd.f32 %v3768, %v3783
        %v3802 = vadd.f32 %v3769, %v3788
        %v3803 = vadd.f32 %v3770, %v3788
        %v3804 = vadd.f32 %v3771, %v3793
        %v3805 = vadd.f32 %v3772, %v3793
        %v3806 = vadd.f32 %v3773, %v3798
        %v3807 = vadd.f32 %v3774, %v3798
        %v3808 = vmax.f32 %v3800, 0.0
        %v3809 = vmax.f32 %v3801, 0.0
        %v3810 = vmax.f32 %v3802, 0.0
        %v3811 = vmax.f32 %v3803, 0.0
        %v3812 = vmax.f32 %v3804, 0.0
        %v3813 = vmax.f32 %v3805, 0.0
        %v3814 = vmax.f32 %v3806, 0.0
        %v3815 = vmax.f32 %v3807, 0.0
        %3816 = vst [vmem:[#allocation2] sm:$0xff] %v3808
        %3817 = vst [vmem:[#allocation2 + $0x8] sm:$0xff] %v3809
        %3818 = vst [vmem:[#allocation2 + $0x10] sm:$0xff] %v3810
        %3819 = vst [vmem:[#allocation2 + $0x18] sm:$0xff] %v3811
        %3820 = vst [vmem:[#allocation2 + $0x20] sm:$0xff] %v3812
        %3821 = vst [vmem:[#allocation2 + $0x28] sm:$0xff] %v3813
        %3822 = vst [vmem:[#allocation2 + $0x30] sm:$0xff] %v3814
        %3823 = vst [vmem:[#allocation2 + $0x38] sm:$0xff] %v3815
        %v3824 = vld [vmem:[#allocation2] sm:$0xff]
        %v3825 = vld [vmem:[#allocation2 + $0x8] sm:$0xff]
        %v3826 = vld [vmem:[#allocation2 + $0x10] sm:$0xff]
        %v3827 = vld [vmem:[#allocation2 + $0x18] sm:$0xff]
        %v3828 = vld [vmem:[#allocation2 + $0x20] sm:$0xff]
        %v3829 = vld [vmem:[#allocation2 + $0x28] sm:$0xff]
        %v3830 = vld [vmem:[#allocation2 + $0x30] sm:$0xff]
        %v3831 = vld [vmem:[#allocation2 + $0x38] sm:$0xff]
        %3832 = vrot.lane.b32.xlu0 %v3824, 17
        %v3833 = vpop.permute.xlu0 %3832
        %3834 = vrot.lane.b32.xlu0 %v3826, 17
        %v3835 = vpop.permute.xlu0 %3834
        %3836 = vrot.lane.b32.xlu0 %v3828, 17
        %v3837 = vpop.permute.xlu0 %3836
        %3838 = vrot.lane.b32.xlu0 %v3830, 17
        %v3839 = vpop.permute.xlu0 %3838
        %3840 = vrot.lane.b32.xlu0 %v3825, 17
        %v3841 = vpop.permute.xlu0 %3840
        %3842 = vrot.lane.b32.xlu0 %v3827, 17
        %v3843 = vpop.permute.xlu0 %3842
        %3844 = vrot.lane.b32.xlu0 %v3829, 17
        %v3845 = vpop.permute.xlu0 %3844
        %3846 = vrot.lane.b32.xlu0 %v3831, 17
        %v3847 = vpop.permute.xlu0 %3846
        %v3848 = vsel %vm340, %v3833, %v3841
        %v3849 = vsel %vm340, %v3835, %v3843
        %v3850 = vsel %vm340, %v3837, %v3845
        %v3851 = vsel %vm340, %v3839, %v3847
        %v3852 = vsel %vm340, %v3841, %v3833
        %v3853 = vsel %vm340, %v3843, %v3835
        %v3854 = vsel %vm340, %v3845, %v3837
        %v3855 = vsel %vm340, %v3847, %v3839
        %v3856 = vld [vmem:[%s1] sm:$0x3]
        %v3858 = vlaneseq
        %v3859 = vshrl.u32 %v3858, 7
        %v3860 = vsub.s32 0, %v3859
        %v3861 = vrot.slane %v3856, %v3860
        %v3862 = vlaneseq
        %v3863 = vshrl.u32 %v3862, 7
        %v3864 = vsub.s32 1, %v3863
        %v3865 = vrot.slane %v3856, %v3864
        %v3868 = vmul.f32 %v3852, %v3861
        %v3869 = vmul.f32 %v3848, %v3865
        %v3870 = vmul.f32 %v3853, %v3861
        %v3871 = vmul.f32 %v3849, %v3865
        %v3872 = vmul.f32 %v3854, %v3861
        %v3873 = vmul.f32 %v3850, %v3865
        %v3874 = vmul.f32 %v3855, %v3861
        %v3875 = vmul.f32 %v3851, %v3865
        %s3876 = scalar_lea.vmem [#allocation4], 576
        %v3877 = vld [vmem:[%s3876] sm:$0xff]
        %v3878 = vld [vmem:[%s3876 + $0x8] sm:$0xff]
        %v3879 = vld [vmem:[%s3876 + $0x10] sm:$0xff]
        %v3880 = vld [vmem:[%s3876 + $0x18] sm:$0xff]
        %3881 = vrot.lane.b32.xlu0 %v3824, 16
        %v3882 = vpop.permute.xlu0 %3881
        %3883 = vrot.lane.b32.xlu0 %v3826, 16
        %v3884 = vpop.permute.xlu0 %3883
        %3885 = vrot.lane.b32.xlu0 %v3828, 16
        %v3886 = vpop.permute.xlu0 %3885
        %3887 = vrot.lane.b32.xlu0 %v3830, 16
        %v3888 = vpop.permute.xlu0 %3887
        %3889 = vrot.lane.b32.xlu0 %v3825, 16
        %v3890 = vpop.permute.xlu0 %3889
        %3891 = vrot.lane.b32.xlu0 %v3827, 16
        %v3892 = vpop.permute.xlu0 %3891
        %3893 = vrot.lane.b32.xlu0 %v3829, 16
        %v3894 = vpop.permute.xlu0 %3893
        %3895 = vrot.lane.b32.xlu0 %v3831, 16
        %v3896 = vpop.permute.xlu0 %3895
        %v3897 = vsel %vm410, %v3882, %v3890
        %v3898 = vsel %vm410, %v3884, %v3892
        %v3899 = vsel %vm410, %v3886, %v3894
        %v3900 = vsel %vm410, %v3888, %v3896
        %v3901 = vsel %vm410, %v3890, %v3882
        %v3902 = vsel %vm410, %v3892, %v3884
        %v3903 = vsel %vm410, %v3894, %v3886
        %v3904 = vsel %vm410, %v3896, %v3888
        %v3905 = vld [vmem:[%s413] sm:$0x3]
        %v3907 = vlaneseq
        %v3908 = vshrl.u32 %v3907, 7
        %v3909 = vsub.s32 0, %v3908
        %v3910 = vrot.slane %v3905, %v3909
        %v3911 = vlaneseq
        %v3912 = vshrl.u32 %v3911, 7
        %v3913 = vsub.s32 1, %v3912
        %v3914 = vrot.slane %v3905, %v3913
        %v3917 = vmul.f32 %v3901, %v3910
        %v3918 = vmul.f32 %v3897, %v3914
        %v3919 = vmul.f32 %v3902, %v3910
        %v3920 = vmul.f32 %v3898, %v3914
        %v3921 = vmul.f32 %v3903, %v3910
        %v3922 = vmul.f32 %v3899, %v3914
        %v3923 = vmul.f32 %v3904, %v3910
        %v3924 = vmul.f32 %v3900, %v3914
        %s3925 = scalar_lea.vmem [#allocation4], 608
        %v3926 = vld [vmem:[%s3925] sm:$0xff]
        %v3927 = vld [vmem:[%s3925 + $0x8] sm:$0xff]
        %v3928 = vld [vmem:[%s3925 + $0x10] sm:$0xff]
        %v3929 = vld [vmem:[%s3925 + $0x18] sm:$0xff]
        %v3931 = vsel %vm1092, %v3926, 0
        %v3934 = vsel %vm1092, %v3927, 0
        %v3937 = vsel %vm1092, %v3928, 0
        %v3940 = vsel %vm1092, %v3929, 0
        %3942 = vmatprep.subr.mxu0 0.0
        %3943 = vmatpush1.msra.mxu0 0.0
        %3944 = vmatprep.subr.mxu0 0.0
        %3945 = vmatpush1.msra.mxu0 0.0
        %3946 = vmatprep.subr.mxu0 0.0
        %3947 = vmatpush1.msra.mxu0 0.0
        %3948 = vmatprep.subr.mxu0 0.0
        %3949 = vmatpush1.msra.mxu0 0.0
        %3950 = vmatprep.subr.mxu0 0.0
        %3951 = vmatpush1.msra.mxu0 0.0
        %3952 = vmatprep.subr.mxu0 0.0
        %3953 = vmatpush1.msra.mxu0 0.0
        %3954 = vmatprep.subr.mxu0 0.0
        %3955 = vmatpush1.msra.mxu0 0.0
        %3956 = vmatprep.subr.mxu0 0.0
        %3957 = vmatpush1.msra.mxu0 0.0
        %3958 = vmatprep.subr.mxu0 0.0
        %3959 = vmatpush1.msra.mxu0 0.0
        %3960 = vmatprep.subr.mxu0 0.0
        %3961 = vmatpush1.msra.mxu0 0.0
        %3962 = vmatprep.subr.mxu0 0.0
        %3963 = vmatpush1.msra.mxu0 0.0
        %3964 = vmatprep.subr.mxu0 0.0
        %3965 = vmatpush1.msra.mxu0 0.0
        %3966 = vmatprep.subr.mxu0 %v3924
        %3967 = vmatpush1.msra.mxu0 %v3923
        %3968 = vmatprep.subr.mxu0 %v3922
        %3969 = vmatpush1.msra.mxu0 %v3921
        %3970 = vmatprep.subr.mxu0 %v3920
        %3971 = vmatpush1.msra.mxu0 %v3919
        %3972 = vmatprep.subr.mxu0 %v3918
        %3973 = vmatpush1.msra.mxu0 %v3917
        %3974 = vmatprep.subr.mxu0 0.0
        %3975 = vmatpush2.msra.mxu0 0.0
        %3976 = vmatprep.subr.mxu0 0.0
        %3977 = vmatpush2.msra.mxu0 0.0
        %3978 = vmatprep.subr.mxu0 0.0
        %3979 = vmatpush2.msra.mxu0 0.0
        %3980 = vmatprep.subr.mxu0 0.0
        %3981 = vmatpush2.msra.mxu0 0.0
        %3982 = vmatprep.subr.mxu0 0.0
        %3983 = vmatpush2.msra.mxu0 0.0
        %3984 = vmatprep.subr.mxu0 0.0
        %3985 = vmatpush2.msra.mxu0 0.0
        %3986 = vmatprep.subr.mxu0 0.0
        %3987 = vmatpush2.msra.mxu0 0.0
        %3988 = vmatprep.subr.mxu0 0.0
        %3989 = vmatpush2.msra.mxu0 0.0
        %3990 = vmatprep.subr.mxu0 0.0
        %3991 = vmatpush2.msra.mxu0 0.0
        %3992 = vmatprep.subr.mxu0 0.0
        %3993 = vmatpush2.msra.mxu0 0.0
        %3994 = vmatprep.subr.mxu0 0.0
        %3995 = vmatpush2.msra.mxu0 0.0
        %3996 = vmatprep.subr.mxu0 0.0
        %3997 = vmatpush2.msra.mxu0 0.0
        %3998 = vmatprep.subr.mxu0 0.0
        %3999 = vmatpush2.msra.mxu0 0.0
        %4000 = vmatprep.subr.mxu0 0.0
        %4001 = vmatpush2.msra.mxu0 0.0
        %4002 = vmatprep.subr.mxu0 0.0
        %4003 = vmatpush2.msra.mxu0 0.0
        %4004 = vmatprep.subr.mxu0 0.0
        %4005 = vmatpush2.msra.mxu0 0.0
        %4006 = vmatprep.mubr.f32.mxu0 0.0
        %4007 = vmatmul.mubr.f32.gmra.mxu0 %v3931
        %v4008 = vpop.f32.mrf.mxu0
        %v4009 = vadd.f32 0.0, %v4008
        %v4010 = vpop.f32.mrf.mxu0
        %v4011 = vadd.f32 0.0, %v4010
        %4012 = vmatprep.mubr.f32.mxu0 0.0
        %4013 = vmatmul.mubr.f32.gmra.mxu0 %v3934
        %v4014 = vpop.f32.mrf.mxu0
        %v4015 = vadd.f32 0.0, %v4014
        %v4016 = vpop.f32.mrf.mxu0
        %v4017 = vadd.f32 0.0, %v4016
        %4018 = vmatprep.mubr.f32.mxu0 0.0
        %4019 = vmatmul.mubr.f32.gmra.mxu0 %v3937
        %v4020 = vpop.f32.mrf.mxu0
        %v4021 = vadd.f32 0.0, %v4020
        %v4022 = vpop.f32.mrf.mxu0
        %v4023 = vadd.f32 0.0, %v4022
        %4024 = vmatprep.mubr.f32.mxu0 0.0
        %4025 = vmatmul.mubr.f32.gmra.mxu0 %v3940
        %v4026 = vpop.f32.mrf.mxu0
        %v4027 = vadd.f32 0.0, %v4026
        %v4028 = vpop.f32.mrf.mxu0
        %v4029 = vadd.f32 0.0, %v4028
        %4030 = vdwg.mxu0
        %v4032 = vsel %vm1092, %v3877, 0
        %v4035 = vsel %vm1092, %v3878, 0
        %v4038 = vsel %vm1092, %v3879, 0
        %v4041 = vsel %vm1092, %v3880, 0
        %4043 = vmatprep.subr.mxu0 0.0
        %4044 = vmatpush1.msra.mxu0 0.0
        %4045 = vmatprep.subr.mxu0 0.0
        %4046 = vmatpush1.msra.mxu0 0.0
        %4047 = vmatprep.subr.mxu0 0.0
        %4048 = vmatpush1.msra.mxu0 0.0
        %4049 = vmatprep.subr.mxu0 0.0
        %4050 = vmatpush1.msra.mxu0 0.0
        %4051 = vmatprep.subr.mxu0 0.0
        %4052 = vmatpush1.msra.mxu0 0.0
        %4053 = vmatprep.subr.mxu0 0.0
        %4054 = vmatpush1.msra.mxu0 0.0
        %4055 = vmatprep.subr.mxu0 0.0
        %4056 = vmatpush1.msra.mxu0 0.0
        %4057 = vmatprep.subr.mxu0 0.0
        %4058 = vmatpush1.msra.mxu0 0.0
        %4059 = vmatprep.subr.mxu0 0.0
        %4060 = vmatpush1.msra.mxu0 0.0
        %4061 = vmatprep.subr.mxu0 0.0
        %4062 = vmatpush1.msra.mxu0 0.0
        %4063 = vmatprep.subr.mxu0 0.0
        %4064 = vmatpush1.msra.mxu0 0.0
        %4065 = vmatprep.subr.mxu0 0.0
        %4066 = vmatpush1.msra.mxu0 0.0
        %4067 = vmatprep.subr.mxu0 %v3875
        %4068 = vmatpush1.msra.mxu0 %v3874
        %4069 = vmatprep.subr.mxu0 %v3873
        %4070 = vmatpush1.msra.mxu0 %v3872
        %4071 = vmatprep.subr.mxu0 %v3871
        %4072 = vmatpush1.msra.mxu0 %v3870
        %4073 = vmatprep.subr.mxu0 %v3869
        %4074 = vmatpush1.msra.mxu0 %v3868
        %4075 = vmatprep.subr.mxu0 0.0
        %4076 = vmatpush2.msra.mxu0 0.0
        %4077 = vmatprep.subr.mxu0 0.0
        %4078 = vmatpush2.msra.mxu0 0.0
        %4079 = vmatprep.subr.mxu0 0.0
        %4080 = vmatpush2.msra.mxu0 0.0
        %4081 = vmatprep.subr.mxu0 0.0
        %4082 = vmatpush2.msra.mxu0 0.0
        %4083 = vmatprep.subr.mxu0 0.0
        %4084 = vmatpush2.msra.mxu0 0.0
        %4085 = vmatprep.subr.mxu0 0.0
        %4086 = vmatpush2.msra.mxu0 0.0
        %4087 = vmatprep.subr.mxu0 0.0
        %4088 = vmatpush2.msra.mxu0 0.0
        %4089 = vmatprep.subr.mxu0 0.0
        %4090 = vmatpush2.msra.mxu0 0.0
        %4091 = vmatprep.subr.mxu0 0.0
        %4092 = vmatpush2.msra.mxu0 0.0
        %4093 = vmatprep.subr.mxu0 0.0
        %4094 = vmatpush2.msra.mxu0 0.0
        %4095 = vmatprep.subr.mxu0 0.0
        %4096 = vmatpush2.msra.mxu0 0.0
        %4097 = vmatprep.subr.mxu0 0.0
        %4098 = vmatpush2.msra.mxu0 0.0
        %4099 = vmatprep.subr.mxu0 0.0
        %4100 = vmatpush2.msra.mxu0 0.0
        %4101 = vmatprep.subr.mxu0 0.0
        %4102 = vmatpush2.msra.mxu0 0.0
        %4103 = vmatprep.subr.mxu0 0.0
        %4104 = vmatpush2.msra.mxu0 0.0
        %4105 = vmatprep.subr.mxu0 0.0
        %4106 = vmatpush2.msra.mxu0 0.0
        %4107 = vmatprep.mubr.f32.mxu0 0.0
        %4108 = vmatmul.mubr.f32.gmra.mxu0 %v4032
        %v4109 = vpop.f32.mrf.mxu0
        %v4110 = vadd.f32 %v4009, %v4109
        %v4111 = vpop.f32.mrf.mxu0
        %v4112 = vadd.f32 %v4011, %v4111
        %4113 = vmatprep.mubr.f32.mxu0 0.0
        %4114 = vmatmul.mubr.f32.gmra.mxu0 %v4035
        %v4115 = vpop.f32.mrf.mxu0
        %v4116 = vadd.f32 %v4015, %v4115
        %v4117 = vpop.f32.mrf.mxu0
        %v4118 = vadd.f32 %v4017, %v4117
        %4119 = vmatprep.mubr.f32.mxu0 0.0
        %4120 = vmatmul.mubr.f32.gmra.mxu0 %v4038
        %v4121 = vpop.f32.mrf.mxu0
        %v4122 = vadd.f32 %v4021, %v4121
        %v4123 = vpop.f32.mrf.mxu0
        %v4124 = vadd.f32 %v4023, %v4123
        %4125 = vmatprep.mubr.f32.mxu0 0.0
        %4126 = vmatmul.mubr.f32.gmra.mxu0 %v4041
        %v4127 = vpop.f32.mrf.mxu0
        %v4128 = vadd.f32 %v4027, %v4127
        %v4129 = vpop.f32.mrf.mxu0
        %v4130 = vadd.f32 %v4029, %v4129
        %4131 = vdwg.mxu0
        %4132 = vrot.lane.b32.xlu0 %v3824, 15
        %v4133 = vpop.permute.xlu0 %4132
        %4134 = vrot.lane.b32.xlu0 %v3826, 15
        %v4135 = vpop.permute.xlu0 %4134
        %4136 = vrot.lane.b32.xlu0 %v3828, 15
        %v4137 = vpop.permute.xlu0 %4136
        %4138 = vrot.lane.b32.xlu0 %v3830, 15
        %v4139 = vpop.permute.xlu0 %4138
        %4140 = vrot.lane.b32.xlu0 %v3825, 15
        %v4141 = vpop.permute.xlu0 %4140
        %4142 = vrot.lane.b32.xlu0 %v3827, 15
        %v4143 = vpop.permute.xlu0 %4142
        %4144 = vrot.lane.b32.xlu0 %v3829, 15
        %v4145 = vpop.permute.xlu0 %4144
        %4146 = vrot.lane.b32.xlu0 %v3831, 15
        %v4147 = vpop.permute.xlu0 %4146
        %v4148 = vsel %vm481, %v4133, %v4141
        %v4149 = vsel %vm481, %v4135, %v4143
        %v4150 = vsel %vm481, %v4137, %v4145
        %v4151 = vsel %vm481, %v4139, %v4147
        %v4152 = vsel %vm481, %v4141, %v4133
        %v4153 = vsel %vm481, %v4143, %v4135
        %v4154 = vsel %vm481, %v4145, %v4137
        %v4155 = vsel %vm481, %v4147, %v4139
        %v4156 = vld [vmem:[%s484] sm:$0x3]
        %v4158 = vlaneseq
        %v4159 = vshrl.u32 %v4158, 7
        %v4160 = vsub.s32 0, %v4159
        %v4161 = vrot.slane %v4156, %v4160
        %v4162 = vlaneseq
        %v4163 = vshrl.u32 %v4162, 7
        %v4164 = vsub.s32 1, %v4163
        %v4165 = vrot.slane %v4156, %v4164
        %v4168 = vmul.f32 %v4152, %v4161
        %v4169 = vmul.f32 %v4148, %v4165
        %v4170 = vmul.f32 %v4153, %v4161
        %v4171 = vmul.f32 %v4149, %v4165
        %v4172 = vmul.f32 %v4154, %v4161
        %v4173 = vmul.f32 %v4150, %v4165
        %v4174 = vmul.f32 %v4155, %v4161
        %v4175 = vmul.f32 %v4151, %v4165
        %s4176 = scalar_lea.vmem [#allocation4], 640
        %v4177 = vld [vmem:[%s4176] sm:$0xff]
        %v4178 = vld [vmem:[%s4176 + $0x8] sm:$0xff]
        %v4179 = vld [vmem:[%s4176 + $0x10] sm:$0xff]
        %v4180 = vld [vmem:[%s4176 + $0x18] sm:$0xff]
        %v4182 = vsel %vm1092, %v4177, 0
        %v4185 = vsel %vm1092, %v4178, 0
        %v4188 = vsel %vm1092, %v4179, 0
        %v4191 = vsel %vm1092, %v4180, 0
        %4193 = vmatprep.subr.mxu0 0.0
        %4194 = vmatpush1.msra.mxu0 0.0
        %4195 = vmatprep.subr.mxu0 0.0
        %4196 = vmatpush1.msra.mxu0 0.0
        %4197 = vmatprep.subr.mxu0 0.0
        %4198 = vmatpush1.msra.mxu0 0.0
        %4199 = vmatprep.subr.mxu0 0.0
        %4200 = vmatpush1.msra.mxu0 0.0
        %4201 = vmatprep.subr.mxu0 0.0
        %4202 = vmatpush1.msra.mxu0 0.0
        %4203 = vmatprep.subr.mxu0 0.0
        %4204 = vmatpush1.msra.mxu0 0.0
        %4205 = vmatprep.subr.mxu0 0.0
        %4206 = vmatpush1.msra.mxu0 0.0
        %4207 = vmatprep.subr.mxu0 0.0
        %4208 = vmatpush1.msra.mxu0 0.0
        %4209 = vmatprep.subr.mxu0 0.0
        %4210 = vmatpush1.msra.mxu0 0.0
        %4211 = vmatprep.subr.mxu0 0.0
        %4212 = vmatpush1.msra.mxu0 0.0
        %4213 = vmatprep.subr.mxu0 0.0
        %4214 = vmatpush1.msra.mxu0 0.0
        %4215 = vmatprep.subr.mxu0 0.0
        %4216 = vmatpush1.msra.mxu0 0.0
        %4217 = vmatprep.subr.mxu0 %v4175
        %4218 = vmatpush1.msra.mxu0 %v4174
        %4219 = vmatprep.subr.mxu0 %v4173
        %4220 = vmatpush1.msra.mxu0 %v4172
        %4221 = vmatprep.subr.mxu0 %v4171
        %4222 = vmatpush1.msra.mxu0 %v4170
        %4223 = vmatprep.subr.mxu0 %v4169
        %4224 = vmatpush1.msra.mxu0 %v4168
        %4225 = vmatprep.subr.mxu0 0.0
        %4226 = vmatpush2.msra.mxu0 0.0
        %4227 = vmatprep.subr.mxu0 0.0
        %4228 = vmatpush2.msra.mxu0 0.0
        %4229 = vmatprep.subr.mxu0 0.0
        %4230 = vmatpush2.msra.mxu0 0.0
        %4231 = vmatprep.subr.mxu0 0.0
        %4232 = vmatpush2.msra.mxu0 0.0
        %4233 = vmatprep.subr.mxu0 0.0
        %4234 = vmatpush2.msra.mxu0 0.0
        %4235 = vmatprep.subr.mxu0 0.0
        %4236 = vmatpush2.msra.mxu0 0.0
        %4237 = vmatprep.subr.mxu0 0.0
        %4238 = vmatpush2.msra.mxu0 0.0
        %4239 = vmatprep.subr.mxu0 0.0
        %4240 = vmatpush2.msra.mxu0 0.0
        %4241 = vmatprep.subr.mxu0 0.0
        %4242 = vmatpush2.msra.mxu0 0.0
        %4243 = vmatprep.subr.mxu0 0.0
        %4244 = vmatpush2.msra.mxu0 0.0
        %4245 = vmatprep.subr.mxu0 0.0
        %4246 = vmatpush2.msra.mxu0 0.0
        %4247 = vmatprep.subr.mxu0 0.0
        %4248 = vmatpush2.msra.mxu0 0.0
        %4249 = vmatprep.subr.mxu0 0.0
        %4250 = vmatpush2.msra.mxu0 0.0
        %4251 = vmatprep.subr.mxu0 0.0
        %4252 = vmatpush2.msra.mxu0 0.0
        %4253 = vmatprep.subr.mxu0 0.0
        %4254 = vmatpush2.msra.mxu0 0.0
        %4255 = vmatprep.subr.mxu0 0.0
        %4256 = vmatpush2.msra.mxu0 0.0
        %4257 = vmatprep.mubr.f32.mxu0 0.0
        %4258 = vmatmul.mubr.f32.gmra.mxu0 %v4182
        %v4259 = vpop.f32.mrf.mxu0
        %v4260 = vadd.f32 0.0, %v4259
        %v4261 = vpop.f32.mrf.mxu0
        %v4262 = vadd.f32 0.0, %v4261
        %4263 = vmatprep.mubr.f32.mxu0 0.0
        %4264 = vmatmul.mubr.f32.gmra.mxu0 %v4185
        %v4265 = vpop.f32.mrf.mxu0
        %v4266 = vadd.f32 0.0, %v4265
        %v4267 = vpop.f32.mrf.mxu0
        %v4268 = vadd.f32 0.0, %v4267
        %4269 = vmatprep.mubr.f32.mxu0 0.0
        %4270 = vmatmul.mubr.f32.gmra.mxu0 %v4188
        %v4271 = vpop.f32.mrf.mxu0
        %v4272 = vadd.f32 0.0, %v4271
        %v4273 = vpop.f32.mrf.mxu0
        %v4274 = vadd.f32 0.0, %v4273
        %4275 = vmatprep.mubr.f32.mxu0 0.0
        %4276 = vmatmul.mubr.f32.gmra.mxu0 %v4191
        %v4277 = vpop.f32.mrf.mxu0
        %v4278 = vadd.f32 0.0, %v4277
        %v4279 = vpop.f32.mrf.mxu0
        %v4280 = vadd.f32 0.0, %v4279
        %4281 = vdwg.mxu0
        %v4282 = vadd.f32 %v4110, %v4260
        %v4283 = vadd.f32 %v4112, %v4262
        %v4284 = vadd.f32 %v4116, %v4266
        %v4285 = vadd.f32 %v4118, %v4268
        %v4286 = vadd.f32 %v4122, %v4272
        %v4287 = vadd.f32 %v4124, %v4274
        %v4288 = vadd.f32 %v4128, %v4278
        %v4289 = vadd.f32 %v4130, %v4280
        %4290 = vrot.lane.b32.xlu0 %v3824, 1
        %v4291 = vpop.permute.xlu0 %4290
        %4292 = vrot.lane.b32.xlu0 %v3826, 1
        %v4293 = vpop.permute.xlu0 %4292
        %4294 = vrot.lane.b32.xlu0 %v3828, 1
        %v4295 = vpop.permute.xlu0 %4294
        %4296 = vrot.lane.b32.xlu0 %v3830, 1
        %v4297 = vpop.permute.xlu0 %4296
        %4298 = vrot.lane.b32.xlu0 %v3825, 1
        %v4299 = vpop.permute.xlu0 %4298
        %4300 = vrot.lane.b32.xlu0 %v3827, 1
        %v4301 = vpop.permute.xlu0 %4300
        %4302 = vrot.lane.b32.xlu0 %v3829, 1
        %v4303 = vpop.permute.xlu0 %4302
        %4304 = vrot.lane.b32.xlu0 %v3831, 1
        %v4305 = vpop.permute.xlu0 %4304
        %v4306 = vsel %vm552, %v4291, %v4299
        %v4307 = vsel %vm552, %v4293, %v4301
        %v4308 = vsel %vm552, %v4295, %v4303
        %v4309 = vsel %vm552, %v4297, %v4305
        %v4310 = vsel %vm552, %v4299, %v4291
        %v4311 = vsel %vm552, %v4301, %v4293
        %v4312 = vsel %vm552, %v4303, %v4295
        %v4313 = vsel %vm552, %v4305, %v4297
        %v4314 = vld [vmem:[%s555] sm:$0x3]
        %v4316 = vlaneseq
        %v4317 = vshrl.u32 %v4316, 7
        %v4318 = vsub.s32 0, %v4317
        %v4319 = vrot.slane %v4314, %v4318
        %v4320 = vlaneseq
        %v4321 = vshrl.u32 %v4320, 7
        %v4322 = vsub.s32 1, %v4321
        %v4323 = vrot.slane %v4314, %v4322
        %v4326 = vmul.f32 %v4310, %v4319
        %v4327 = vmul.f32 %v4306, %v4323
        %v4328 = vmul.f32 %v4311, %v4319
        %v4329 = vmul.f32 %v4307, %v4323
        %v4330 = vmul.f32 %v4312, %v4319
        %v4331 = vmul.f32 %v4308, %v4323
        %v4332 = vmul.f32 %v4313, %v4319
        %v4333 = vmul.f32 %v4309, %v4323
        %s4334 = scalar_lea.vmem [#allocation4], 672
        %v4335 = vld [vmem:[%s4334] sm:$0xff]
        %v4336 = vld [vmem:[%s4334 + $0x8] sm:$0xff]
        %v4337 = vld [vmem:[%s4334 + $0x10] sm:$0xff]
        %v4338 = vld [vmem:[%s4334 + $0x18] sm:$0xff]
        %v4340 = vsel %vm1092, %v4335, 0
        %v4343 = vsel %vm1092, %v4336, 0
        %v4346 = vsel %vm1092, %v4337, 0
        %v4349 = vsel %vm1092, %v4338, 0
        %4351 = vmatprep.subr.mxu0 0.0
        %4352 = vmatpush1.msra.mxu0 0.0
        %4353 = vmatprep.subr.mxu0 0.0
        %4354 = vmatpush1.msra.mxu0 0.0
        %4355 = vmatprep.subr.mxu0 0.0
        %4356 = vmatpush1.msra.mxu0 0.0
        %4357 = vmatprep.subr.mxu0 0.0
        %4358 = vmatpush1.msra.mxu0 0.0
        %4359 = vmatprep.subr.mxu0 0.0
        %4360 = vmatpush1.msra.mxu0 0.0
        %4361 = vmatprep.subr.mxu0 0.0
        %4362 = vmatpush1.msra.mxu0 0.0
        %4363 = vmatprep.subr.mxu0 0.0
        %4364 = vmatpush1.msra.mxu0 0.0
        %4365 = vmatprep.subr.mxu0 0.0
        %4366 = vmatpush1.msra.mxu0 0.0
        %4367 = vmatprep.subr.mxu0 0.0
        %4368 = vmatpush1.msra.mxu0 0.0
        %4369 = vmatprep.subr.mxu0 0.0
        %4370 = vmatpush1.msra.mxu0 0.0
        %4371 = vmatprep.subr.mxu0 0.0
        %4372 = vmatpush1.msra.mxu0 0.0
        %4373 = vmatprep.subr.mxu0 0.0
        %4374 = vmatpush1.msra.mxu0 0.0
        %4375 = vmatprep.subr.mxu0 %v4333
        %4376 = vmatpush1.msra.mxu0 %v4332
        %4377 = vmatprep.subr.mxu0 %v4331
        %4378 = vmatpush1.msra.mxu0 %v4330
        %4379 = vmatprep.subr.mxu0 %v4329
        %4380 = vmatpush1.msra.mxu0 %v4328
        %4381 = vmatprep.subr.mxu0 %v4327
        %4382 = vmatpush1.msra.mxu0 %v4326
        %4383 = vmatprep.subr.mxu0 0.0
        %4384 = vmatpush2.msra.mxu0 0.0
        %4385 = vmatprep.subr.mxu0 0.0
        %4386 = vmatpush2.msra.mxu0 0.0
        %4387 = vmatprep.subr.mxu0 0.0
        %4388 = vmatpush2.msra.mxu0 0.0
        %4389 = vmatprep.subr.mxu0 0.0
        %4390 = vmatpush2.msra.mxu0 0.0
        %4391 = vmatprep.subr.mxu0 0.0
        %4392 = vmatpush2.msra.mxu0 0.0
        %4393 = vmatprep.subr.mxu0 0.0
        %4394 = vmatpush2.msra.mxu0 0.0
        %4395 = vmatprep.subr.mxu0 0.0
        %4396 = vmatpush2.msra.mxu0 0.0
        %4397 = vmatprep.subr.mxu0 0.0
        %4398 = vmatpush2.msra.mxu0 0.0
        %4399 = vmatprep.subr.mxu0 0.0
        %4400 = vmatpush2.msra.mxu0 0.0
        %4401 = vmatprep.subr.mxu0 0.0
        %4402 = vmatpush2.msra.mxu0 0.0
        %4403 = vmatprep.subr.mxu0 0.0
        %4404 = vmatpush2.msra.mxu0 0.0
        %4405 = vmatprep.subr.mxu0 0.0
        %4406 = vmatpush2.msra.mxu0 0.0
        %4407 = vmatprep.subr.mxu0 0.0
        %4408 = vmatpush2.msra.mxu0 0.0
        %4409 = vmatprep.subr.mxu0 0.0
        %4410 = vmatpush2.msra.mxu0 0.0
        %4411 = vmatprep.subr.mxu0 0.0
        %4412 = vmatpush2.msra.mxu0 0.0
        %4413 = vmatprep.subr.mxu0 0.0
        %4414 = vmatpush2.msra.mxu0 0.0
        %4415 = vmatprep.mubr.f32.mxu0 0.0
        %4416 = vmatmul.mubr.f32.gmra.mxu0 %v4340
        %v4417 = vpop.f32.mrf.mxu0
        %v4418 = vadd.f32 0.0, %v4417
        %v4419 = vpop.f32.mrf.mxu0
        %v4420 = vadd.f32 0.0, %v4419
        %4421 = vmatprep.mubr.f32.mxu0 0.0
        %4422 = vmatmul.mubr.f32.gmra.mxu0 %v4343
        %v4423 = vpop.f32.mrf.mxu0
        %v4424 = vadd.f32 0.0, %v4423
        %v4425 = vpop.f32.mrf.mxu0
        %v4426 = vadd.f32 0.0, %v4425
        %4427 = vmatprep.mubr.f32.mxu0 0.0
        %4428 = vmatmul.mubr.f32.gmra.mxu0 %v4346
        %v4429 = vpop.f32.mrf.mxu0
        %v4430 = vadd.f32 0.0, %v4429
        %v4431 = vpop.f32.mrf.mxu0
        %v4432 = vadd.f32 0.0, %v4431
        %4433 = vmatprep.mubr.f32.mxu0 0.0
        %4434 = vmatmul.mubr.f32.gmra.mxu0 %v4349
        %v4435 = vpop.f32.mrf.mxu0
        %v4436 = vadd.f32 0.0, %v4435
        %v4437 = vpop.f32.mrf.mxu0
        %v4438 = vadd.f32 0.0, %v4437
        %4439 = vdwg.mxu0
        %v4440 = vadd.f32 %v4282, %v4418
        %v4441 = vadd.f32 %v4283, %v4420
        %v4442 = vadd.f32 %v4284, %v4424
        %v4443 = vadd.f32 %v4285, %v4426
        %v4444 = vadd.f32 %v4286, %v4430
        %v4445 = vadd.f32 %v4287, %v4432
        %v4446 = vadd.f32 %v4288, %v4436
        %v4447 = vadd.f32 %v4289, %v4438
        %s4448 = scalar_lea.vmem [#allocation4], 704
        %v4449 = vld [vmem:[%s4448] sm:$0xff]
        %v4450 = vld [vmem:[%s4448 + $0x8] sm:$0xff]
        %v4451 = vld [vmem:[%s4448 + $0x10] sm:$0xff]
        %v4452 = vld [vmem:[%s4448 + $0x18] sm:$0xff]
        %v4454 = vsel %vm1092, %v4449, 0
        %v4457 = vsel %vm1092, %v4450, 0
        %v4460 = vsel %vm1092, %v4451, 0
        %v4463 = vsel %vm1092, %v4452, 0
        %4465 = vmatprep.subr.mxu0 0.0
        %4466 = vmatpush1.msra.mxu0 0.0
        %4467 = vmatprep.subr.mxu0 0.0
        %4468 = vmatpush1.msra.mxu0 0.0
        %4469 = vmatprep.subr.mxu0 0.0
        %4470 = vmatpush1.msra.mxu0 0.0
        %4471 = vmatprep.subr.mxu0 0.0
        %4472 = vmatpush1.msra.mxu0 0.0
        %4473 = vmatprep.subr.mxu0 0.0
        %4474 = vmatpush1.msra.mxu0 0.0
        %4475 = vmatprep.subr.mxu0 0.0
        %4476 = vmatpush1.msra.mxu0 0.0
        %4477 = vmatprep.subr.mxu0 0.0
        %4478 = vmatpush1.msra.mxu0 0.0
        %4479 = vmatprep.subr.mxu0 0.0
        %4480 = vmatpush1.msra.mxu0 0.0
        %4481 = vmatprep.subr.mxu0 0.0
        %4482 = vmatpush1.msra.mxu0 0.0
        %4483 = vmatprep.subr.mxu0 0.0
        %4484 = vmatpush1.msra.mxu0 0.0
        %4485 = vmatprep.subr.mxu0 0.0
        %4486 = vmatpush1.msra.mxu0 0.0
        %4487 = vmatprep.subr.mxu0 0.0
        %4488 = vmatpush1.msra.mxu0 0.0
        %4489 = vmatprep.subr.mxu0 %v3831
        %4490 = vmatpush1.msra.mxu0 %v3830
        %4491 = vmatprep.subr.mxu0 %v3829
        %4492 = vmatpush1.msra.mxu0 %v3828
        %4493 = vmatprep.subr.mxu0 %v3827
        %4494 = vmatpush1.msra.mxu0 %v3826
        %4495 = vmatprep.subr.mxu0 %v3825
        %4496 = vmatpush1.msra.mxu0 %v3824
        %4497 = vmatprep.subr.mxu0 0.0
        %4498 = vmatpush2.msra.mxu0 0.0
        %4499 = vmatprep.subr.mxu0 0.0
        %4500 = vmatpush2.msra.mxu0 0.0
        %4501 = vmatprep.subr.mxu0 0.0
        %4502 = vmatpush2.msra.mxu0 0.0
        %4503 = vmatprep.subr.mxu0 0.0
        %4504 = vmatpush2.msra.mxu0 0.0
        %4505 = vmatprep.subr.mxu0 0.0
        %4506 = vmatpush2.msra.mxu0 0.0
        %4507 = vmatprep.subr.mxu0 0.0
        %4508 = vmatpush2.msra.mxu0 0.0
        %4509 = vmatprep.subr.mxu0 0.0
        %4510 = vmatpush2.msra.mxu0 0.0
        %4511 = vmatprep.subr.mxu0 0.0
        %4512 = vmatpush2.msra.mxu0 0.0
        %4513 = vmatprep.subr.mxu0 0.0
        %4514 = vmatpush2.msra.mxu0 0.0
        %4515 = vmatprep.subr.mxu0 0.0
        %4516 = vmatpush2.msra.mxu0 0.0
        %4517 = vmatprep.subr.mxu0 0.0
        %4518 = vmatpush2.msra.mxu0 0.0
        %4519 = vmatprep.subr.mxu0 0.0
        %4520 = vmatpush2.msra.mxu0 0.0
        %4521 = vmatprep.subr.mxu0 0.0
        %4522 = vmatpush2.msra.mxu0 0.0
        %4523 = vmatprep.subr.mxu0 0.0
        %4524 = vmatpush2.msra.mxu0 0.0
        %4525 = vmatprep.subr.mxu0 0.0
        %4526 = vmatpush2.msra.mxu0 0.0
        %4527 = vmatprep.subr.mxu0 0.0
        %4528 = vmatpush2.msra.mxu0 0.0
        %4529 = vmatprep.mubr.f32.mxu0 0.0
        %4530 = vmatmul.mubr.f32.gmra.mxu0 %v4454
        %v4531 = vpop.f32.mrf.mxu0
        %v4532 = vadd.f32 0.0, %v4531
        %v4533 = vpop.f32.mrf.mxu0
        %v4534 = vadd.f32 0.0, %v4533
        %4535 = vmatprep.mubr.f32.mxu0 0.0
        %4536 = vmatmul.mubr.f32.gmra.mxu0 %v4457
        %v4537 = vpop.f32.mrf.mxu0
        %v4538 = vadd.f32 0.0, %v4537
        %v4539 = vpop.f32.mrf.mxu0
        %v4540 = vadd.f32 0.0, %v4539
        %4541 = vmatprep.mubr.f32.mxu0 0.0
        %4542 = vmatmul.mubr.f32.gmra.mxu0 %v4460
        %v4543 = vpop.f32.mrf.mxu0
        %v4544 = vadd.f32 0.0, %v4543
        %v4545 = vpop.f32.mrf.mxu0
        %v4546 = vadd.f32 0.0, %v4545
        %4547 = vmatprep.mubr.f32.mxu0 0.0
        %4548 = vmatmul.mubr.f32.gmra.mxu0 %v4463
        %v4549 = vpop.f32.mrf.mxu0
        %v4550 = vadd.f32 0.0, %v4549
        %v4551 = vpop.f32.mrf.mxu0
        %v4552 = vadd.f32 0.0, %v4551
        %4553 = vdwg.mxu0
        %v4554 = vadd.f32 %v4440, %v4532
        %v4555 = vadd.f32 %v4441, %v4534
        %v4556 = vadd.f32 %v4442, %v4538
        %v4557 = vadd.f32 %v4443, %v4540
        %v4558 = vadd.f32 %v4444, %v4544
        %v4559 = vadd.f32 %v4445, %v4546
        %v4560 = vadd.f32 %v4446, %v4550
        %v4561 = vadd.f32 %v4447, %v4552
        %4562 = vrot.lane.b32.xlu0 %v3824, 127
        %v4563 = vpop.permute.xlu0 %4562
        %4564 = vrot.lane.b32.xlu0 %v3826, 127
        %v4565 = vpop.permute.xlu0 %4564
        %4566 = vrot.lane.b32.xlu0 %v3828, 127
        %v4567 = vpop.permute.xlu0 %4566
        %4568 = vrot.lane.b32.xlu0 %v3830, 127
        %v4569 = vpop.permute.xlu0 %4568
        %4570 = vrot.lane.b32.xlu0 %v3825, 127
        %v4571 = vpop.permute.xlu0 %4570
        %4572 = vrot.lane.b32.xlu0 %v3827, 127
        %v4573 = vpop.permute.xlu0 %4572
        %4574 = vrot.lane.b32.xlu0 %v3829, 127
        %v4575 = vpop.permute.xlu0 %4574
        %4576 = vrot.lane.b32.xlu0 %v3831, 127
        %v4577 = vpop.permute.xlu0 %4576
        %v4578 = vsel %vm664, %v4563, %v4571
        %v4579 = vsel %vm664, %v4565, %v4573
        %v4580 = vsel %vm664, %v4567, %v4575
        %v4581 = vsel %vm664, %v4569, %v4577
        %v4582 = vsel %vm664, %v4571, %v4563
        %v4583 = vsel %vm664, %v4573, %v4565
        %v4584 = vsel %vm664, %v4575, %v4567
        %v4585 = vsel %vm664, %v4577, %v4569
        %v4586 = vld [vmem:[%s667] sm:$0x3]
        %v4588 = vlaneseq
        %v4589 = vshrl.u32 %v4588, 7
        %v4590 = vsub.s32 0, %v4589
        %v4591 = vrot.slane %v4586, %v4590
        %v4592 = vlaneseq
        %v4593 = vshrl.u32 %v4592, 7
        %v4594 = vsub.s32 1, %v4593
        %v4595 = vrot.slane %v4586, %v4594
        %v4598 = vmul.f32 %v4578, %v4591
        %v4599 = vmul.f32 %v4582, %v4595
        %v4600 = vmul.f32 %v4579, %v4591
        %v4601 = vmul.f32 %v4583, %v4595
        %v4602 = vmul.f32 %v4580, %v4591
        %v4603 = vmul.f32 %v4584, %v4595
        %v4604 = vmul.f32 %v4581, %v4591
        %v4605 = vmul.f32 %v4585, %v4595
        %s4606 = scalar_lea.vmem [#allocation4], 736
        %v4607 = vld [vmem:[%s4606] sm:$0xff]
        %v4608 = vld [vmem:[%s4606 + $0x8] sm:$0xff]
        %v4609 = vld [vmem:[%s4606 + $0x10] sm:$0xff]
        %v4610 = vld [vmem:[%s4606 + $0x18] sm:$0xff]
        %v4612 = vsel %vm1092, %v4607, 0
        %v4615 = vsel %vm1092, %v4608, 0
        %v4618 = vsel %vm1092, %v4609, 0
        %v4621 = vsel %vm1092, %v4610, 0
        %4623 = vmatprep.subr.mxu0 0.0
        %4624 = vmatpush1.msra.mxu0 0.0
        %4625 = vmatprep.subr.mxu0 0.0
        %4626 = vmatpush1.msra.mxu0 0.0
        %4627 = vmatprep.subr.mxu0 0.0
        %4628 = vmatpush1.msra.mxu0 0.0
        %4629 = vmatprep.subr.mxu0 0.0
        %4630 = vmatpush1.msra.mxu0 0.0
        %4631 = vmatprep.subr.mxu0 0.0
        %4632 = vmatpush1.msra.mxu0 0.0
        %4633 = vmatprep.subr.mxu0 0.0
        %4634 = vmatpush1.msra.mxu0 0.0
        %4635 = vmatprep.subr.mxu0 0.0
        %4636 = vmatpush1.msra.mxu0 0.0
        %4637 = vmatprep.subr.mxu0 0.0
        %4638 = vmatpush1.msra.mxu0 0.0
        %4639 = vmatprep.subr.mxu0 0.0
        %4640 = vmatpush1.msra.mxu0 0.0
        %4641 = vmatprep.subr.mxu0 0.0
        %4642 = vmatpush1.msra.mxu0 0.0
        %4643 = vmatprep.subr.mxu0 0.0
        %4644 = vmatpush1.msra.mxu0 0.0
        %4645 = vmatprep.subr.mxu0 0.0
        %4646 = vmatpush1.msra.mxu0 0.0
        %4647 = vmatprep.subr.mxu0 %v4605
        %4648 = vmatpush1.msra.mxu0 %v4604
        %4649 = vmatprep.subr.mxu0 %v4603
        %4650 = vmatpush1.msra.mxu0 %v4602
        %4651 = vmatprep.subr.mxu0 %v4601
        %4652 = vmatpush1.msra.mxu0 %v4600
        %4653 = vmatprep.subr.mxu0 %v4599
        %4654 = vmatpush1.msra.mxu0 %v4598
        %4655 = vmatprep.subr.mxu0 0.0
        %4656 = vmatpush2.msra.mxu0 0.0
        %4657 = vmatprep.subr.mxu0 0.0
        %4658 = vmatpush2.msra.mxu0 0.0
        %4659 = vmatprep.subr.mxu0 0.0
        %4660 = vmatpush2.msra.mxu0 0.0
        %4661 = vmatprep.subr.mxu0 0.0
        %4662 = vmatpush2.msra.mxu0 0.0
        %4663 = vmatprep.subr.mxu0 0.0
        %4664 = vmatpush2.msra.mxu0 0.0
        %4665 = vmatprep.subr.mxu0 0.0
        %4666 = vmatpush2.msra.mxu0 0.0
        %4667 = vmatprep.subr.mxu0 0.0
        %4668 = vmatpush2.msra.mxu0 0.0
        %4669 = vmatprep.subr.mxu0 0.0
        %4670 = vmatpush2.msra.mxu0 0.0
        %4671 = vmatprep.subr.mxu0 0.0
        %4672 = vmatpush2.msra.mxu0 0.0
        %4673 = vmatprep.subr.mxu0 0.0
        %4674 = vmatpush2.msra.mxu0 0.0
        %4675 = vmatprep.subr.mxu0 0.0
        %4676 = vmatpush2.msra.mxu0 0.0
        %4677 = vmatprep.subr.mxu0 0.0
        %4678 = vmatpush2.msra.mxu0 0.0
        %4679 = vmatprep.subr.mxu0 0.0
        %4680 = vmatpush2.msra.mxu0 0.0
        %4681 = vmatprep.subr.mxu0 0.0
        %4682 = vmatpush2.msra.mxu0 0.0
        %4683 = vmatprep.subr.mxu0 0.0
        %4684 = vmatpush2.msra.mxu0 0.0
        %4685 = vmatprep.subr.mxu0 0.0
        %4686 = vmatpush2.msra.mxu0 0.0
        %4687 = vmatprep.mubr.f32.mxu0 0.0
        %4688 = vmatmul.mubr.f32.gmra.mxu0 %v4612
        %v4689 = vpop.f32.mrf.mxu0
        %v4690 = vadd.f32 0.0, %v4689
        %v4691 = vpop.f32.mrf.mxu0
        %v4692 = vadd.f32 0.0, %v4691
        %4693 = vmatprep.mubr.f32.mxu0 0.0
        %4694 = vmatmul.mubr.f32.gmra.mxu0 %v4615
        %v4695 = vpop.f32.mrf.mxu0
        %v4696 = vadd.f32 0.0, %v4695
        %v4697 = vpop.f32.mrf.mxu0
        %v4698 = vadd.f32 0.0, %v4697
        %4699 = vmatprep.mubr.f32.mxu0 0.0
        %4700 = vmatmul.mubr.f32.gmra.mxu0 %v4618
        %v4701 = vpop.f32.mrf.mxu0
        %v4702 = vadd.f32 0.0, %v4701
        %v4703 = vpop.f32.mrf.mxu0
        %v4704 = vadd.f32 0.0, %v4703
        %4705 = vmatprep.mubr.f32.mxu0 0.0
        %4706 = vmatmul.mubr.f32.gmra.mxu0 %v4621
        %v4707 = vpop.f32.mrf.mxu0
        %v4708 = vadd.f32 0.0, %v4707
        %v4709 = vpop.f32.mrf.mxu0
        %v4710 = vadd.f32 0.0, %v4709
        %4711 = vdwg.mxu0
        %v4712 = vadd.f32 %v4554, %v4690
        %v4713 = vadd.f32 %v4555, %v4692
        %v4714 = vadd.f32 %v4556, %v4696
        %v4715 = vadd.f32 %v4557, %v4698
        %v4716 = vadd.f32 %v4558, %v4702
        %v4717 = vadd.f32 %v4559, %v4704
        %v4718 = vadd.f32 %v4560, %v4708
        %v4719 = vadd.f32 %v4561, %v4710
        %4720 = vrot.lane.b32.xlu0 %v3824, 113
        %v4721 = vpop.permute.xlu0 %4720
        %4722 = vrot.lane.b32.xlu0 %v3826, 113
        %v4723 = vpop.permute.xlu0 %4722
        %4724 = vrot.lane.b32.xlu0 %v3828, 113
        %v4725 = vpop.permute.xlu0 %4724
        %4726 = vrot.lane.b32.xlu0 %v3830, 113
        %v4727 = vpop.permute.xlu0 %4726
        %4728 = vrot.lane.b32.xlu0 %v3825, 113
        %v4729 = vpop.permute.xlu0 %4728
        %4730 = vrot.lane.b32.xlu0 %v3827, 113
        %v4731 = vpop.permute.xlu0 %4730
        %4732 = vrot.lane.b32.xlu0 %v3829, 113
        %v4733 = vpop.permute.xlu0 %4732
        %4734 = vrot.lane.b32.xlu0 %v3831, 113
        %v4735 = vpop.permute.xlu0 %4734
        %v4736 = vsel %vm735, %v4721, %v4729
        %v4737 = vsel %vm735, %v4723, %v4731
        %v4738 = vsel %vm735, %v4725, %v4733
        %v4739 = vsel %vm735, %v4727, %v4735
        %v4740 = vsel %vm735, %v4729, %v4721
        %v4741 = vsel %vm735, %v4731, %v4723
        %v4742 = vsel %vm735, %v4733, %v4725
        %v4743 = vsel %vm735, %v4735, %v4727
        %v4744 = vld [vmem:[%s738] sm:$0x3]
        %v4746 = vlaneseq
        %v4747 = vshrl.u32 %v4746, 7
        %v4748 = vsub.s32 0, %v4747
        %v4749 = vrot.slane %v4744, %v4748
        %v4750 = vlaneseq
        %v4751 = vshrl.u32 %v4750, 7
        %v4752 = vsub.s32 1, %v4751
        %v4753 = vrot.slane %v4744, %v4752
        %v4756 = vmul.f32 %v4736, %v4749
        %v4757 = vmul.f32 %v4740, %v4753
        %v4758 = vmul.f32 %v4737, %v4749
        %v4759 = vmul.f32 %v4741, %v4753
        %v4760 = vmul.f32 %v4738, %v4749
        %v4761 = vmul.f32 %v4742, %v4753
        %v4762 = vmul.f32 %v4739, %v4749
        %v4763 = vmul.f32 %v4743, %v4753
        %s4764 = scalar_lea.vmem [#allocation4], 768
        %v4765 = vld [vmem:[%s4764] sm:$0xff]
        %v4766 = vld [vmem:[%s4764 + $0x8] sm:$0xff]
        %v4767 = vld [vmem:[%s4764 + $0x10] sm:$0xff]
        %v4768 = vld [vmem:[%s4764 + $0x18] sm:$0xff]
        %v4770 = vsel %vm1092, %v4765, 0
        %v4773 = vsel %vm1092, %v4766, 0
        %v4776 = vsel %vm1092, %v4767, 0
        %v4779 = vsel %vm1092, %v4768, 0
        %4781 = vmatprep.subr.mxu0 0.0
        %4782 = vmatpush1.msra.mxu0 0.0
        %4783 = vmatprep.subr.mxu0 0.0
        %4784 = vmatpush1.msra.mxu0 0.0
        %4785 = vmatprep.subr.mxu0 0.0
        %4786 = vmatpush1.msra.mxu0 0.0
        %4787 = vmatprep.subr.mxu0 0.0
        %4788 = vmatpush1.msra.mxu0 0.0
        %4789 = vmatprep.subr.mxu0 0.0
        %4790 = vmatpush1.msra.mxu0 0.0
        %4791 = vmatprep.subr.mxu0 0.0
        %4792 = vmatpush1.msra.mxu0 0.0
        %4793 = vmatprep.subr.mxu0 0.0
        %4794 = vmatpush1.msra.mxu0 0.0
        %4795 = vmatprep.subr.mxu0 0.0
        %4796 = vmatpush1.msra.mxu0 0.0
        %4797 = vmatprep.subr.mxu0 0.0
        %4798 = vmatpush1.msra.mxu0 0.0
        %4799 = vmatprep.subr.mxu0 0.0
        %4800 = vmatpush1.msra.mxu0 0.0
        %4801 = vmatprep.subr.mxu0 0.0
        %4802 = vmatpush1.msra.mxu0 0.0
        %4803 = vmatprep.subr.mxu0 0.0
        %4804 = vmatpush1.msra.mxu0 0.0
        %4805 = vmatprep.subr.mxu0 %v4763
        %4806 = vmatpush1.msra.mxu0 %v4762
        %4807 = vmatprep.subr.mxu0 %v4761
        %4808 = vmatpush1.msra.mxu0 %v4760
        %4809 = vmatprep.subr.mxu0 %v4759
        %4810 = vmatpush1.msra.mxu0 %v4758
        %4811 = vmatprep.subr.mxu0 %v4757
        %4812 = vmatpush1.msra.mxu0 %v4756
        %4813 = vmatprep.subr.mxu0 0.0
        %4814 = vmatpush2.msra.mxu0 0.0
        %4815 = vmatprep.subr.mxu0 0.0
        %4816 = vmatpush2.msra.mxu0 0.0
        %4817 = vmatprep.subr.mxu0 0.0
        %4818 = vmatpush2.msra.mxu0 0.0
        %4819 = vmatprep.subr.mxu0 0.0
        %4820 = vmatpush2.msra.mxu0 0.0
        %4821 = vmatprep.subr.mxu0 0.0
        %4822 = vmatpush2.msra.mxu0 0.0
        %4823 = vmatprep.subr.mxu0 0.0
        %4824 = vmatpush2.msra.mxu0 0.0
        %4825 = vmatprep.subr.mxu0 0.0
        %4826 = vmatpush2.msra.mxu0 0.0
        %4827 = vmatprep.subr.mxu0 0.0
        %4828 = vmatpush2.msra.mxu0 0.0
        %4829 = vmatprep.subr.mxu0 0.0
        %4830 = vmatpush2.msra.mxu0 0.0
        %4831 = vmatprep.subr.mxu0 0.0
        %4832 = vmatpush2.msra.mxu0 0.0
        %4833 = vmatprep.subr.mxu0 0.0
        %4834 = vmatpush2.msra.mxu0 0.0
        %4835 = vmatprep.subr.mxu0 0.0
        %4836 = vmatpush2.msra.mxu0 0.0
        %4837 = vmatprep.subr.mxu0 0.0
        %4838 = vmatpush2.msra.mxu0 0.0
        %4839 = vmatprep.subr.mxu0 0.0
        %4840 = vmatpush2.msra.mxu0 0.0
        %4841 = vmatprep.subr.mxu0 0.0
        %4842 = vmatpush2.msra.mxu0 0.0
        %4843 = vmatprep.subr.mxu0 0.0
        %4844 = vmatpush2.msra.mxu0 0.0
        %4845 = vmatprep.mubr.f32.mxu0 0.0
        %4846 = vmatmul.mubr.f32.gmra.mxu0 %v4770
        %v4847 = vpop.f32.mrf.mxu0
        %v4848 = vadd.f32 0.0, %v4847
        %v4849 = vpop.f32.mrf.mxu0
        %v4850 = vadd.f32 0.0, %v4849
        %4851 = vmatprep.mubr.f32.mxu0 0.0
        %4852 = vmatmul.mubr.f32.gmra.mxu0 %v4773
        %v4853 = vpop.f32.mrf.mxu0
        %v4854 = vadd.f32 0.0, %v4853
        %v4855 = vpop.f32.mrf.mxu0
        %v4856 = vadd.f32 0.0, %v4855
        %4857 = vmatprep.mubr.f32.mxu0 0.0
        %4858 = vmatmul.mubr.f32.gmra.mxu0 %v4776
        %v4859 = vpop.f32.mrf.mxu0
        %v4860 = vadd.f32 0.0, %v4859
        %v4861 = vpop.f32.mrf.mxu0
        %v4862 = vadd.f32 0.0, %v4861
        %4863 = vmatprep.mubr.f32.mxu0 0.0
        %4864 = vmatmul.mubr.f32.gmra.mxu0 %v4779
        %v4865 = vpop.f32.mrf.mxu0
        %v4866 = vadd.f32 0.0, %v4865
        %v4867 = vpop.f32.mrf.mxu0
        %v4868 = vadd.f32 0.0, %v4867
        %4869 = vdwg.mxu0
        %v4870 = vadd.f32 %v4712, %v4848
        %v4871 = vadd.f32 %v4713, %v4850
        %v4872 = vadd.f32 %v4714, %v4854
        %v4873 = vadd.f32 %v4715, %v4856
        %v4874 = vadd.f32 %v4716, %v4860
        %v4875 = vadd.f32 %v4717, %v4862
        %v4876 = vadd.f32 %v4718, %v4866
        %v4877 = vadd.f32 %v4719, %v4868
        %4878 = vrot.lane.b32.xlu0 %v3824, 112
        %v4879 = vpop.permute.xlu0 %4878
        %4880 = vrot.lane.b32.xlu0 %v3826, 112
        %v4881 = vpop.permute.xlu0 %4880
        %4882 = vrot.lane.b32.xlu0 %v3828, 112
        %v4883 = vpop.permute.xlu0 %4882
        %4884 = vrot.lane.b32.xlu0 %v3830, 112
        %v4885 = vpop.permute.xlu0 %4884
        %4886 = vrot.lane.b32.xlu0 %v3825, 112
        %v4887 = vpop.permute.xlu0 %4886
        %4888 = vrot.lane.b32.xlu0 %v3827, 112
        %v4889 = vpop.permute.xlu0 %4888
        %4890 = vrot.lane.b32.xlu0 %v3829, 112
        %v4891 = vpop.permute.xlu0 %4890
        %4892 = vrot.lane.b32.xlu0 %v3831, 112
        %v4893 = vpop.permute.xlu0 %4892
        %v4894 = vsel %vm806, %v4879, %v4887
        %v4895 = vsel %vm806, %v4881, %v4889
        %v4896 = vsel %vm806, %v4883, %v4891
        %v4897 = vsel %vm806, %v4885, %v4893
        %v4898 = vsel %vm806, %v4887, %v4879
        %v4899 = vsel %vm806, %v4889, %v4881
        %v4900 = vsel %vm806, %v4891, %v4883
        %v4901 = vsel %vm806, %v4893, %v4885
        %v4902 = vld [vmem:[%s809] sm:$0x3]
        %v4904 = vlaneseq
        %v4905 = vshrl.u32 %v4904, 7
        %v4906 = vsub.s32 0, %v4905
        %v4907 = vrot.slane %v4902, %v4906
        %v4908 = vlaneseq
        %v4909 = vshrl.u32 %v4908, 7
        %v4910 = vsub.s32 1, %v4909
        %v4911 = vrot.slane %v4902, %v4910
        %v4914 = vmul.f32 %v4894, %v4907
        %v4915 = vmul.f32 %v4898, %v4911
        %v4916 = vmul.f32 %v4895, %v4907
        %v4917 = vmul.f32 %v4899, %v4911
        %v4918 = vmul.f32 %v4896, %v4907
        %v4919 = vmul.f32 %v4900, %v4911
        %v4920 = vmul.f32 %v4897, %v4907
        %v4921 = vmul.f32 %v4901, %v4911
        %s4922 = scalar_lea.vmem [#allocation4], 800
        %v4923 = vld [vmem:[%s4922] sm:$0xff]
        %v4924 = vld [vmem:[%s4922 + $0x8] sm:$0xff]
        %v4925 = vld [vmem:[%s4922 + $0x10] sm:$0xff]
        %v4926 = vld [vmem:[%s4922 + $0x18] sm:$0xff]
        %v4928 = vsel %vm1092, %v4923, 0
        %v4931 = vsel %vm1092, %v4924, 0
        %v4934 = vsel %vm1092, %v4925, 0
        %v4937 = vsel %vm1092, %v4926, 0
        %4939 = vmatprep.subr.mxu0 0.0
        %4940 = vmatpush1.msra.mxu0 0.0
        %4941 = vmatprep.subr.mxu0 0.0
        %4942 = vmatpush1.msra.mxu0 0.0
        %4943 = vmatprep.subr.mxu0 0.0
        %4944 = vmatpush1.msra.mxu0 0.0
        %4945 = vmatprep.subr.mxu0 0.0
        %4946 = vmatpush1.msra.mxu0 0.0
        %4947 = vmatprep.subr.mxu0 0.0
        %4948 = vmatpush1.msra.mxu0 0.0
        %4949 = vmatprep.subr.mxu0 0.0
        %4950 = vmatpush1.msra.mxu0 0.0
        %4951 = vmatprep.subr.mxu0 0.0
        %4952 = vmatpush1.msra.mxu0 0.0
        %4953 = vmatprep.subr.mxu0 0.0
        %4954 = vmatpush1.msra.mxu0 0.0
        %4955 = vmatprep.subr.mxu0 0.0
        %4956 = vmatpush1.msra.mxu0 0.0
        %4957 = vmatprep.subr.mxu0 0.0
        %4958 = vmatpush1.msra.mxu0 0.0
        %4959 = vmatprep.subr.mxu0 0.0
        %4960 = vmatpush1.msra.mxu0 0.0
        %4961 = vmatprep.subr.mxu0 0.0
        %4962 = vmatpush1.msra.mxu0 0.0
        %4963 = vmatprep.subr.mxu0 %v4921
        %4964 = vmatpush1.msra.mxu0 %v4920
        %4965 = vmatprep.subr.mxu0 %v4919
        %4966 = vmatpush1.msra.mxu0 %v4918
        %4967 = vmatprep.subr.mxu0 %v4917
        %4968 = vmatpush1.msra.mxu0 %v4916
        %4969 = vmatprep.subr.mxu0 %v4915
        %4970 = vmatpush1.msra.mxu0 %v4914
        %4971 = vmatprep.subr.mxu0 0.0
        %4972 = vmatpush2.msra.mxu0 0.0
        %4973 = vmatprep.subr.mxu0 0.0
        %4974 = vmatpush2.msra.mxu0 0.0
        %4975 = vmatprep.subr.mxu0 0.0
        %4976 = vmatpush2.msra.mxu0 0.0
        %4977 = vmatprep.subr.mxu0 0.0
        %4978 = vmatpush2.msra.mxu0 0.0
        %4979 = vmatprep.subr.mxu0 0.0
        %4980 = vmatpush2.msra.mxu0 0.0
        %4981 = vmatprep.subr.mxu0 0.0
        %4982 = vmatpush2.msra.mxu0 0.0
        %4983 = vmatprep.subr.mxu0 0.0
        %4984 = vmatpush2.msra.mxu0 0.0
        %4985 = vmatprep.subr.mxu0 0.0
        %4986 = vmatpush2.msra.mxu0 0.0
        %4987 = vmatprep.subr.mxu0 0.0
        %4988 = vmatpush2.msra.mxu0 0.0
        %4989 = vmatprep.subr.mxu0 0.0
        %4990 = vmatpush2.msra.mxu0 0.0
        %4991 = vmatprep.subr.mxu0 0.0
        %4992 = vmatpush2.msra.mxu0 0.0
        %4993 = vmatprep.subr.mxu0 0.0
        %4994 = vmatpush2.msra.mxu0 0.0
        %4995 = vmatprep.subr.mxu0 0.0
        %4996 = vmatpush2.msra.mxu0 0.0
        %4997 = vmatprep.subr.mxu0 0.0
        %4998 = vmatpush2.msra.mxu0 0.0
        %4999 = vmatprep.subr.mxu0 0.0
        %5000 = vmatpush2.msra.mxu0 0.0
        %5001 = vmatprep.subr.mxu0 0.0
        %5002 = vmatpush2.msra.mxu0 0.0
        %5003 = vmatprep.mubr.f32.mxu0 0.0
        %5004 = vmatmul.mubr.f32.gmra.mxu0 %v4928
        %v5005 = vpop.f32.mrf.mxu0
        %v5006 = vadd.f32 0.0, %v5005
        %v5007 = vpop.f32.mrf.mxu0
        %v5008 = vadd.f32 0.0, %v5007
        %5009 = vmatprep.mubr.f32.mxu0 0.0
        %5010 = vmatmul.mubr.f32.gmra.mxu0 %v4931
        %v5011 = vpop.f32.mrf.mxu0
        %v5012 = vadd.f32 0.0, %v5011
        %v5013 = vpop.f32.mrf.mxu0
        %v5014 = vadd.f32 0.0, %v5013
        %5015 = vmatprep.mubr.f32.mxu0 0.0
        %5016 = vmatmul.mubr.f32.gmra.mxu0 %v4934
        %v5017 = vpop.f32.mrf.mxu0
        %v5018 = vadd.f32 0.0, %v5017
        %v5019 = vpop.f32.mrf.mxu0
        %v5020 = vadd.f32 0.0, %v5019
        %5021 = vmatprep.mubr.f32.mxu0 0.0
        %5022 = vmatmul.mubr.f32.gmra.mxu0 %v4937
        %v5023 = vpop.f32.mrf.mxu0
        %v5024 = vadd.f32 0.0, %v5023
        %v5025 = vpop.f32.mrf.mxu0
        %v5026 = vadd.f32 0.0, %v5025
        %5027 = vdwg.mxu0
        %v5028 = vadd.f32 %v4870, %v5006
        %v5029 = vadd.f32 %v4871, %v5008
        %v5030 = vadd.f32 %v4872, %v5012
        %v5031 = vadd.f32 %v4873, %v5014
        %v5032 = vadd.f32 %v4874, %v5018
        %v5033 = vadd.f32 %v4875, %v5020
        %v5034 = vadd.f32 %v4876, %v5024
        %v5035 = vadd.f32 %v4877, %v5026
        %5036 = vrot.lane.b32.xlu0 %v3824, 111
        %v5037 = vpop.permute.xlu0 %5036
        %5038 = vrot.lane.b32.xlu0 %v3826, 111
        %v5039 = vpop.permute.xlu0 %5038
        %5040 = vrot.lane.b32.xlu0 %v3828, 111
        %v5041 = vpop.permute.xlu0 %5040
        %5042 = vrot.lane.b32.xlu0 %v3830, 111
        %v5043 = vpop.permute.xlu0 %5042
        %5044 = vrot.lane.b32.xlu0 %v3825, 111
        %v5045 = vpop.permute.xlu0 %5044
        %5046 = vrot.lane.b32.xlu0 %v3827, 111
        %v5047 = vpop.permute.xlu0 %5046
        %5048 = vrot.lane.b32.xlu0 %v3829, 111
        %v5049 = vpop.permute.xlu0 %5048
        %5050 = vrot.lane.b32.xlu0 %v3831, 111
        %v5051 = vpop.permute.xlu0 %5050
        %v5052 = vsel %vm877, %v5037, %v5045
        %v5053 = vsel %vm877, %v5039, %v5047
        %v5054 = vsel %vm877, %v5041, %v5049
        %v5055 = vsel %vm877, %v5043, %v5051
        %v5056 = vsel %vm877, %v5045, %v5037
        %v5057 = vsel %vm877, %v5047, %v5039
        %v5058 = vsel %vm877, %v5049, %v5041
        %v5059 = vsel %vm877, %v5051, %v5043
        %v5060 = vld [vmem:[%s880] sm:$0x3]
        %v5062 = vlaneseq
        %v5063 = vshrl.u32 %v5062, 7
        %v5064 = vsub.s32 0, %v5063
        %v5065 = vrot.slane %v5060, %v5064
        %v5066 = vlaneseq
        %v5067 = vshrl.u32 %v5066, 7
        %v5068 = vsub.s32 1, %v5067
        %v5069 = vrot.slane %v5060, %v5068
        %v5072 = vmul.f32 %v5052, %v5065
        %v5073 = vmul.f32 %v5056, %v5069
        %v5074 = vmul.f32 %v5053, %v5065
        %v5075 = vmul.f32 %v5057, %v5069
        %v5076 = vmul.f32 %v5054, %v5065
        %v5077 = vmul.f32 %v5058, %v5069
        %v5078 = vmul.f32 %v5055, %v5065
        %v5079 = vmul.f32 %v5059, %v5069
        %s5080 = scalar_lea.vmem [#allocation4], 832
        %v5081 = vld [vmem:[%s5080] sm:$0xff]
        %v5082 = vld [vmem:[%s5080 + $0x8] sm:$0xff]
        %v5083 = vld [vmem:[%s5080 + $0x10] sm:$0xff]
        %v5084 = vld [vmem:[%s5080 + $0x18] sm:$0xff]
        %v5086 = vsel %vm1092, %v5081, 0
        %v5089 = vsel %vm1092, %v5082, 0
        %v5092 = vsel %vm1092, %v5083, 0
        %v5095 = vsel %vm1092, %v5084, 0
        %5097 = vmatprep.subr.mxu0 0.0
        %5098 = vmatpush1.msra.mxu0 0.0
        %5099 = vmatprep.subr.mxu0 0.0
        %5100 = vmatpush1.msra.mxu0 0.0
        %5101 = vmatprep.subr.mxu0 0.0
        %5102 = vmatpush1.msra.mxu0 0.0
        %5103 = vmatprep.subr.mxu0 0.0
        %5104 = vmatpush1.msra.mxu0 0.0
        %5105 = vmatprep.subr.mxu0 0.0
        %5106 = vmatpush1.msra.mxu0 0.0
        %5107 = vmatprep.subr.mxu0 0.0
        %5108 = vmatpush1.msra.mxu0 0.0
        %5109 = vmatprep.subr.mxu0 0.0
        %5110 = vmatpush1.msra.mxu0 0.0
        %5111 = vmatprep.subr.mxu0 0.0
        %5112 = vmatpush1.msra.mxu0 0.0
        %5113 = vmatprep.subr.mxu0 0.0
        %5114 = vmatpush1.msra.mxu0 0.0
        %5115 = vmatprep.subr.mxu0 0.0
        %5116 = vmatpush1.msra.mxu0 0.0
        %5117 = vmatprep.subr.mxu0 0.0
        %5118 = vmatpush1.msra.mxu0 0.0
        %5119 = vmatprep.subr.mxu0 0.0
        %5120 = vmatpush1.msra.mxu0 0.0
        %5121 = vmatprep.subr.mxu0 %v5079
        %5122 = vmatpush1.msra.mxu0 %v5078
        %5123 = vmatprep.subr.mxu0 %v5077
        %5124 = vmatpush1.msra.mxu0 %v5076
        %5125 = vmatprep.subr.mxu0 %v5075
        %5126 = vmatpush1.msra.mxu0 %v5074
        %5127 = vmatprep.subr.mxu0 %v5073
        %5128 = vmatpush1.msra.mxu0 %v5072
        %5129 = vmatprep.subr.mxu0 0.0
        %5130 = vmatpush2.msra.mxu0 0.0
        %5131 = vmatprep.subr.mxu0 0.0
        %5132 = vmatpush2.msra.mxu0 0.0
        %5133 = vmatprep.subr.mxu0 0.0
        %5134 = vmatpush2.msra.mxu0 0.0
        %5135 = vmatprep.subr.mxu0 0.0
        %5136 = vmatpush2.msra.mxu0 0.0
        %5137 = vmatprep.subr.mxu0 0.0
        %5138 = vmatpush2.msra.mxu0 0.0
        %5139 = vmatprep.subr.mxu0 0.0
        %5140 = vmatpush2.msra.mxu0 0.0
        %5141 = vmatprep.subr.mxu0 0.0
        %5142 = vmatpush2.msra.mxu0 0.0
        %5143 = vmatprep.subr.mxu0 0.0
        %5144 = vmatpush2.msra.mxu0 0.0
        %5145 = vmatprep.subr.mxu0 0.0
        %5146 = vmatpush2.msra.mxu0 0.0
        %5147 = vmatprep.subr.mxu0 0.0
        %5148 = vmatpush2.msra.mxu0 0.0
        %5149 = vmatprep.subr.mxu0 0.0
        %5150 = vmatpush2.msra.mxu0 0.0
        %5151 = vmatprep.subr.mxu0 0.0
        %5152 = vmatpush2.msra.mxu0 0.0
        %5153 = vmatprep.subr.mxu0 0.0
        %5154 = vmatpush2.msra.mxu0 0.0
        %5155 = vmatprep.subr.mxu0 0.0
        %5156 = vmatpush2.msra.mxu0 0.0
        %5157 = vmatprep.subr.mxu0 0.0
        %5158 = vmatpush2.msra.mxu0 0.0
        %5159 = vmatprep.subr.mxu0 0.0
        %5160 = vmatpush2.msra.mxu0 0.0
        %5161 = vmatprep.mubr.f32.mxu0 0.0
        %5162 = vmatmul.mubr.f32.gmra.mxu0 %v5086
        %v5163 = vpop.f32.mrf.mxu0
        %v5164 = vadd.f32 0.0, %v5163
        %v5165 = vpop.f32.mrf.mxu0
        %v5166 = vadd.f32 0.0, %v5165
        %5167 = vmatprep.mubr.f32.mxu0 0.0
        %5168 = vmatmul.mubr.f32.gmra.mxu0 %v5089
        %v5169 = vpop.f32.mrf.mxu0
        %v5170 = vadd.f32 0.0, %v5169
        %v5171 = vpop.f32.mrf.mxu0
        %v5172 = vadd.f32 0.0, %v5171
        %5173 = vmatprep.mubr.f32.mxu0 0.0
        %5174 = vmatmul.mubr.f32.gmra.mxu0 %v5092
        %v5175 = vpop.f32.mrf.mxu0
        %v5176 = vadd.f32 0.0, %v5175
        %v5177 = vpop.f32.mrf.mxu0
        %v5178 = vadd.f32 0.0, %v5177
        %5179 = vmatprep.mubr.f32.mxu0 0.0
        %5180 = vmatmul.mubr.f32.gmra.mxu0 %v5095
        %v5181 = vpop.f32.mrf.mxu0
        %v5182 = vadd.f32 0.0, %v5181
        %v5183 = vpop.f32.mrf.mxu0
        %v5184 = vadd.f32 0.0, %v5183
        %5185 = vdwg.mxu0
        %v5186 = vadd.f32 %v5028, %v5164
        %v5187 = vadd.f32 %v5029, %v5166
        %v5188 = vadd.f32 %v5030, %v5170
        %v5189 = vadd.f32 %v5031, %v5172
        %v5190 = vadd.f32 %v5032, %v5176
        %v5191 = vadd.f32 %v5033, %v5178
        %v5192 = vadd.f32 %v5034, %v5182
        %v5193 = vadd.f32 %v5035, %v5184
        %s5194 = scalar_lea.vmem %s5, 64
        %v5195 = vld [vmem:[%s5194] sm:$0xff]
        %v5196 = vld [vmem:[%s5194 + $0x8] sm:$0xff]
        %v5197 = vld [vmem:[%s5194 + $0x10] sm:$0xff]
        %v5198 = vld [vmem:[%s5194 + $0x18] sm:$0xff]
        %5200 = vset.pattern.permute.xlu0 0
        %5201 = vperm.xlu0 %5200, %v5195
        %v5202 = vpop.permute.xlu0 %5201
        %5205 = vset.pattern.permute.xlu0 0
        %5206 = vperm.xlu0 %5205, %v5196
        %v5207 = vpop.permute.xlu0 %5206
        %5210 = vset.pattern.permute.xlu0 0
        %5211 = vperm.xlu0 %5210, %v5197
        %v5212 = vpop.permute.xlu0 %5211
        %5215 = vset.pattern.permute.xlu0 0
        %5216 = vperm.xlu0 %5215, %v5198
        %v5217 = vpop.permute.xlu0 %5216
        %v5219 = vadd.f32 %v5186, %v5202
        %v5220 = vadd.f32 %v5187, %v5202
        %v5221 = vadd.f32 %v5188, %v5207
        %v5222 = vadd.f32 %v5189, %v5207
        %v5223 = vadd.f32 %v5190, %v5212
        %v5224 = vadd.f32 %v5191, %v5212
        %v5225 = vadd.f32 %v5192, %v5217
        %v5226 = vadd.f32 %v5193, %v5217
        %v5227 = vmax.f32 %v5219, 0.0
        %v5228 = vmax.f32 %v5220, 0.0
        %v5229 = vmax.f32 %v5221, 0.0
        %v5230 = vmax.f32 %v5222, 0.0
        %v5231 = vmax.f32 %v5223, 0.0
        %v5232 = vmax.f32 %v5224, 0.0
        %v5233 = vmax.f32 %v5225, 0.0
        %v5234 = vmax.f32 %v5226, 0.0
        %5235 = vst [vmem:[#allocation2] sm:$0xff] %v5227
        %5236 = vst [vmem:[#allocation2 + $0x8] sm:$0xff] %v5228
        %5237 = vst [vmem:[#allocation2 + $0x10] sm:$0xff] %v5229
        %5238 = vst [vmem:[#allocation2 + $0x18] sm:$0xff] %v5230
        %5239 = vst [vmem:[#allocation2 + $0x20] sm:$0xff] %v5231
        %5240 = vst [vmem:[#allocation2 + $0x28] sm:$0xff] %v5232
        %5241 = vst [vmem:[#allocation2 + $0x30] sm:$0xff] %v5233
        %5242 = vst [vmem:[#allocation2 + $0x38] sm:$0xff] %v5234
        %v5243 = vld [vmem:[#allocation2] sm:$0xff]
        %v5244 = vld [vmem:[#allocation2 + $0x8] sm:$0xff]
        %v5245 = vld [vmem:[#allocation2 + $0x10] sm:$0xff]
        %v5246 = vld [vmem:[#allocation2 + $0x18] sm:$0xff]
        %v5247 = vld [vmem:[#allocation2 + $0x20] sm:$0xff]
        %v5248 = vld [vmem:[#allocation2 + $0x28] sm:$0xff]
        %v5249 = vld [vmem:[#allocation2 + $0x30] sm:$0xff]
        %v5250 = vld [vmem:[#allocation2 + $0x38] sm:$0xff]
        %5251 = vrot.lane.b32.xlu0 %v5243, 17
        %v5252 = vpop.permute.xlu0 %5251
        %5253 = vrot.lane.b32.xlu0 %v5245, 17
        %v5254 = vpop.permute.xlu0 %5253
        %5255 = vrot.lane.b32.xlu0 %v5247, 17
        %v5256 = vpop.permute.xlu0 %5255
        %5257 = vrot.lane.b32.xlu0 %v5249, 17
        %v5258 = vpop.permute.xlu0 %5257
        %5259 = vrot.lane.b32.xlu0 %v5244, 17
        %v5260 = vpop.permute.xlu0 %5259
        %5261 = vrot.lane.b32.xlu0 %v5246, 17
        %v5262 = vpop.permute.xlu0 %5261
        %5263 = vrot.lane.b32.xlu0 %v5248, 17
        %v5264 = vpop.permute.xlu0 %5263
        %5265 = vrot.lane.b32.xlu0 %v5250, 17
        %v5266 = vpop.permute.xlu0 %5265
        %v5267 = vsel %vm340, %v5252, %v5260
        %v5268 = vsel %vm340, %v5254, %v5262
        %v5269 = vsel %vm340, %v5256, %v5264
        %v5270 = vsel %vm340, %v5258, %v5266
        %v5271 = vsel %vm340, %v5260, %v5252
        %v5272 = vsel %vm340, %v5262, %v5254
        %v5273 = vsel %vm340, %v5264, %v5256
        %v5274 = vsel %vm340, %v5266, %v5258
        %v5275 = vld [vmem:[%s1] sm:$0x3]
        %v5277 = vlaneseq
        %v5278 = vshrl.u32 %v5277, 7
        %v5279 = vsub.s32 0, %v5278
        %v5280 = vrot.slane %v5275, %v5279
        %v5281 = vlaneseq
        %v5282 = vshrl.u32 %v5281, 7
        %v5283 = vsub.s32 1, %v5282
        %v5284 = vrot.slane %v5275, %v5283
        %v5287 = vmul.f32 %v5271, %v5280
        %v5288 = vmul.f32 %v5267, %v5284
        %v5289 = vmul.f32 %v5272, %v5280
        %v5290 = vmul.f32 %v5268, %v5284
        %v5291 = vmul.f32 %v5273, %v5280
        %v5292 = vmul.f32 %v5269, %v5284
        %v5293 = vmul.f32 %v5274, %v5280
        %v5294 = vmul.f32 %v5270, %v5284
        %v5295 = vld [vmem:[%s6] sm:$0xff]
        %v5296 = vld [vmem:[%s6 + $0x8] sm:$0xff]
        %v5297 = vld [vmem:[%s6 + $0x10] sm:$0xff]
        %v5298 = vld [vmem:[%s6 + $0x18] sm:$0xff]
        %5300 = vset.pattern.permute.xlu0 0
        %5301 = vperm.xlu0 %5300, %v5295
        %v5302 = vpop.permute.xlu0 %5301
        %5305 = vset.pattern.permute.xlu0 0
        %5306 = vperm.xlu0 %5305, %v5296
        %v5307 = vpop.permute.xlu0 %5306
        %5310 = vset.pattern.permute.xlu0 0
        %5311 = vperm.xlu0 %5310, %v5297
        %v5312 = vpop.permute.xlu0 %5311
        %5315 = vset.pattern.permute.xlu0 0
        %5316 = vperm.xlu0 %5315, %v5298
        %v5317 = vpop.permute.xlu0 %5316
        %v5319 = vmul.f32 %v5302, %v5287
        %v5320 = vmul.f32 %v5302, %v5288
        %v5321 = vmul.f32 %v5307, %v5289
        %v5322 = vmul.f32 %v5307, %v5290
        %v5323 = vmul.f32 %v5312, %v5291
        %v5324 = vmul.f32 %v5312, %v5292
        %v5325 = vmul.f32 %v5317, %v5293
        %v5326 = vmul.f32 %v5317, %v5294
        %v5327 = vadd.f32 %v5319, %v5321
        %v5328 = vadd.f32 %v5327, %v5323
        %v5329 = vadd.f32 %v5328, %v5325
        %v5330 = vrot.slane %v5329, 4
        %v5331 = vadd.f32 %v5329, %v5330
        %v5332 = vrot.slane %v5331, 2
        %v5333 = vadd.f32 %v5331, %v5332
        %v5334 = vrot.slane %v5333, 1
        %v5335 = vadd.f32 %v5333, %v5334
        %v5336 = vadd.f32 %v5320, %v5322
        %v5337 = vadd.f32 %v5336, %v5324
        %v5338 = vadd.f32 %v5337, %v5326
        %v5339 = vrot.slane %v5338, 4
        %v5340 = vadd.f32 %v5338, %v5339
        %v5341 = vrot.slane %v5340, 2
        %v5342 = vadd.f32 %v5340, %v5341
        %v5343 = vrot.slane %v5342, 1
        %v5344 = vadd.f32 %v5342, %v5343
        %v5345 = vadd.f32 %v5335, 0.0
        %v5346 = vadd.f32 %v5344, 0.0
        %5347 = vrot.lane.b32.xlu0 %v5243, 16
        %v5348 = vpop.permute.xlu0 %5347
        %5349 = vrot.lane.b32.xlu0 %v5245, 16
        %v5350 = vpop.permute.xlu0 %5349
        %5351 = vrot.lane.b32.xlu0 %v5247, 16
        %v5352 = vpop.permute.xlu0 %5351
        %5353 = vrot.lane.b32.xlu0 %v5249, 16
        %v5354 = vpop.permute.xlu0 %5353
        %5355 = vrot.lane.b32.xlu0 %v5244, 16
        %v5356 = vpop.permute.xlu0 %5355
        %5357 = vrot.lane.b32.xlu0 %v5246, 16
        %v5358 = vpop.permute.xlu0 %5357
        %5359 = vrot.lane.b32.xlu0 %v5248, 16
        %v5360 = vpop.permute.xlu0 %5359
        %5361 = vrot.lane.b32.xlu0 %v5250, 16
        %v5362 = vpop.permute.xlu0 %5361
        %v5363 = vsel %vm410, %v5348, %v5356
        %v5364 = vsel %vm410, %v5350, %v5358
        %v5365 = vsel %vm410, %v5352, %v5360
        %v5366 = vsel %vm410, %v5354, %v5362
        %v5367 = vsel %vm410, %v5356, %v5348
        %v5368 = vsel %vm410, %v5358, %v5350
        %v5369 = vsel %vm410, %v5360, %v5352
        %v5370 = vsel %vm410, %v5362, %v5354
        %v5371 = vld [vmem:[%s413] sm:$0x3]
        %v5373 = vlaneseq
        %v5374 = vshrl.u32 %v5373, 7
        %v5375 = vsub.s32 0, %v5374
        %v5376 = vrot.slane %v5371, %v5375
        %v5377 = vlaneseq
        %v5378 = vshrl.u32 %v5377, 7
        %v5379 = vsub.s32 1, %v5378
        %v5380 = vrot.slane %v5371, %v5379
        %v5383 = vmul.f32 %v5367, %v5376
        %v5384 = vmul.f32 %v5363, %v5380
        %v5385 = vmul.f32 %v5368, %v5376
        %v5386 = vmul.f32 %v5364, %v5380
        %v5387 = vmul.f32 %v5369, %v5376
        %v5388 = vmul.f32 %v5365, %v5380
        %v5389 = vmul.f32 %v5370, %v5376
        %v5390 = vmul.f32 %v5366, %v5380
        %s5391 = scalar_lea.vmem %s6, 32
        %v5392 = vld [vmem:[%s5391] sm:$0xff]
        %v5393 = vld [vmem:[%s5391 + $0x8] sm:$0xff]
        %v5394 = vld [vmem:[%s5391 + $0x10] sm:$0xff]
        %v5395 = vld [vmem:[%s5391 + $0x18] sm:$0xff]
        %5397 = vset.pattern.permute.xlu0 0
        %5398 = vperm.xlu0 %5397, %v5392
        %v5399 = vpop.permute.xlu0 %5398
        %5402 = vset.pattern.permute.xlu0 0
        %5403 = vperm.xlu0 %5402, %v5393
        %v5404 = vpop.permute.xlu0 %5403
        %5407 = vset.pattern.permute.xlu0 0
        %5408 = vperm.xlu0 %5407, %v5394
        %v5409 = vpop.permute.xlu0 %5408
        %5412 = vset.pattern.permute.xlu0 0
        %5413 = vperm.xlu0 %5412, %v5395
        %v5414 = vpop.permute.xlu0 %5413
        %v5416 = vmul.f32 %v5399, %v5383
        %v5417 = vmul.f32 %v5399, %v5384
        %v5418 = vmul.f32 %v5404, %v5385
        %v5419 = vmul.f32 %v5404, %v5386
        %v5420 = vmul.f32 %v5409, %v5387
        %v5421 = vmul.f32 %v5409, %v5388
        %v5422 = vmul.f32 %v5414, %v5389
        %v5423 = vmul.f32 %v5414, %v5390
        %v5424 = vadd.f32 %v5416, %v5418
        %v5425 = vadd.f32 %v5424, %v5420
        %v5426 = vadd.f32 %v5425, %v5422
        %v5427 = vrot.slane %v5426, 4
        %v5428 = vadd.f32 %v5426, %v5427
        %v5429 = vrot.slane %v5428, 2
        %v5430 = vadd.f32 %v5428, %v5429
        %v5431 = vrot.slane %v5430, 1
        %v5432 = vadd.f32 %v5430, %v5431
        %v5433 = vadd.f32 %v5417, %v5419
        %v5434 = vadd.f32 %v5433, %v5421
        %v5435 = vadd.f32 %v5434, %v5423
        %v5436 = vrot.slane %v5435, 4
        %v5437 = vadd.f32 %v5435, %v5436
        %v5438 = vrot.slane %v5437, 2
        %v5439 = vadd.f32 %v5437, %v5438
        %v5440 = vrot.slane %v5439, 1
        %v5441 = vadd.f32 %v5439, %v5440
        %v5442 = vadd.f32 %v5345, %v5432
        %v5443 = vadd.f32 %v5346, %v5441
        %5444 = vrot.lane.b32.xlu0 %v5243, 15
        %v5445 = vpop.permute.xlu0 %5444
        %5446 = vrot.lane.b32.xlu0 %v5245, 15
        %v5447 = vpop.permute.xlu0 %5446
        %5448 = vrot.lane.b32.xlu0 %v5247, 15
        %v5449 = vpop.permute.xlu0 %5448
        %5450 = vrot.lane.b32.xlu0 %v5249, 15
        %v5451 = vpop.permute.xlu0 %5450
        %5452 = vrot.lane.b32.xlu0 %v5244, 15
        %v5453 = vpop.permute.xlu0 %5452
        %5454 = vrot.lane.b32.xlu0 %v5246, 15
        %v5455 = vpop.permute.xlu0 %5454
        %5456 = vrot.lane.b32.xlu0 %v5248, 15
        %v5457 = vpop.permute.xlu0 %5456
        %5458 = vrot.lane.b32.xlu0 %v5250, 15
        %v5459 = vpop.permute.xlu0 %5458
        %v5460 = vsel %vm481, %v5445, %v5453
        %v5461 = vsel %vm481, %v5447, %v5455
        %v5462 = vsel %vm481, %v5449, %v5457
        %v5463 = vsel %vm481, %v5451, %v5459
        %v5464 = vsel %vm481, %v5453, %v5445
        %v5465 = vsel %vm481, %v5455, %v5447
        %v5466 = vsel %vm481, %v5457, %v5449
        %v5467 = vsel %vm481, %v5459, %v5451
        %v5468 = vld [vmem:[%s484] sm:$0x3]
        %v5470 = vlaneseq
        %v5471 = vshrl.u32 %v5470, 7
        %v5472 = vsub.s32 0, %v5471
        %v5473 = vrot.slane %v5468, %v5472
        %v5474 = vlaneseq
        %v5475 = vshrl.u32 %v5474, 7
        %v5476 = vsub.s32 1, %v5475
        %v5477 = vrot.slane %v5468, %v5476
        %v5480 = vmul.f32 %v5464, %v5473
        %v5481 = vmul.f32 %v5460, %v5477
        %v5482 = vmul.f32 %v5465, %v5473
        %v5483 = vmul.f32 %v5461, %v5477
        %v5484 = vmul.f32 %v5466, %v5473
        %v5485 = vmul.f32 %v5462, %v5477
        %v5486 = vmul.f32 %v5467, %v5473
        %v5487 = vmul.f32 %v5463, %v5477
        %s5488 = scalar_lea.vmem %s6, 64
        %v5489 = vld [vmem:[%s5488] sm:$0xff]
        %v5490 = vld [vmem:[%s5488 + $0x8] sm:$0xff]
        %v5491 = vld [vmem:[%s5488 + $0x10] sm:$0xff]
        %v5492 = vld [vmem:[%s5488 + $0x18] sm:$0xff]
        %5494 = vset.pattern.permute.xlu0 0
        %5495 = vperm.xlu0 %5494, %v5489
        %v5496 = vpop.permute.xlu0 %5495
        %5499 = vset.pattern.permute.xlu0 0
        %5500 = vperm.xlu0 %5499, %v5490
        %v5501 = vpop.permute.xlu0 %5500
        %5504 = vset.pattern.permute.xlu0 0
        %5505 = vperm.xlu0 %5504, %v5491
        %v5506 = vpop.permute.xlu0 %5505
        %5509 = vset.pattern.permute.xlu0 0
        %5510 = vperm.xlu0 %5509, %v5492
        %v5511 = vpop.permute.xlu0 %5510
        %v5513 = vmul.f32 %v5496, %v5480
        %v5514 = vmul.f32 %v5496, %v5481
        %v5515 = vmul.f32 %v5501, %v5482
        %v5516 = vmul.f32 %v5501, %v5483
        %v5517 = vmul.f32 %v5506, %v5484
        %v5518 = vmul.f32 %v5506, %v5485
        %v5519 = vmul.f32 %v5511, %v5486
        %v5520 = vmul.f32 %v5511, %v5487
        %v5521 = vadd.f32 %v5513, %v5515
        %v5522 = vadd.f32 %v5521, %v5517
        %v5523 = vadd.f32 %v5522, %v5519
        %v5524 = vrot.slane %v5523, 4
        %v5525 = vadd.f32 %v5523, %v5524
        %v5526 = vrot.slane %v5525, 2
        %v5527 = vadd.f32 %v5525, %v5526
        %v5528 = vrot.slane %v5527, 1
        %v5529 = vadd.f32 %v5527, %v5528
        %v5530 = vadd.f32 %v5514, %v5516
        %v5531 = vadd.f32 %v5530, %v5518
        %v5532 = vadd.f32 %v5531, %v5520
        %v5533 = vrot.slane %v5532, 4
        %v5534 = vadd.f32 %v5532, %v5533
        %v5535 = vrot.slane %v5534, 2
        %v5536 = vadd.f32 %v5534, %v5535
        %v5537 = vrot.slane %v5536, 1
        %v5538 = vadd.f32 %v5536, %v5537
        %v5539 = vadd.f32 %v5442, %v5529
        %v5540 = vadd.f32 %v5443, %v5538
        %5541 = vrot.lane.b32.xlu0 %v5243, 1
        %v5542 = vpop.permute.xlu0 %5541
        %5543 = vrot.lane.b32.xlu0 %v5245, 1
        %v5544 = vpop.permute.xlu0 %5543
        %5545 = vrot.lane.b32.xlu0 %v5247, 1
        %v5546 = vpop.permute.xlu0 %5545
        %5547 = vrot.lane.b32.xlu0 %v5249, 1
        %v5548 = vpop.permute.xlu0 %5547
        %5549 = vrot.lane.b32.xlu0 %v5244, 1
        %v5550 = vpop.permute.xlu0 %5549
        %5551 = vrot.lane.b32.xlu0 %v5246, 1
        %v5552 = vpop.permute.xlu0 %5551
        %5553 = vrot.lane.b32.xlu0 %v5248, 1
        %v5554 = vpop.permute.xlu0 %5553
        %5555 = vrot.lane.b32.xlu0 %v5250, 1
        %v5556 = vpop.permute.xlu0 %5555
        %v5557 = vsel %vm552, %v5542, %v5550
        %v5558 = vsel %vm552, %v5544, %v5552
        %v5559 = vsel %vm552, %v5546, %v5554
        %v5560 = vsel %vm552, %v5548, %v5556
        %v5561 = vsel %vm552, %v5550, %v5542
        %v5562 = vsel %vm552, %v5552, %v5544
        %v5563 = vsel %vm552, %v5554, %v5546
        %v5564 = vsel %vm552, %v5556, %v5548
        %v5565 = vld [vmem:[%s555] sm:$0x3]
        %v5567 = vlaneseq
        %v5568 = vshrl.u32 %v5567, 7
        %v5569 = vsub.s32 0, %v5568
        %v5570 = vrot.slane %v5565, %v5569
        %v5571 = vlaneseq
        %v5572 = vshrl.u32 %v5571, 7
        %v5573 = vsub.s32 1, %v5572
        %v5574 = vrot.slane %v5565, %v5573
        %v5577 = vmul.f32 %v5561, %v5570
        %v5578 = vmul.f32 %v5557, %v5574
        %v5579 = vmul.f32 %v5562, %v5570
        %v5580 = vmul.f32 %v5558, %v5574
        %v5581 = vmul.f32 %v5563, %v5570
        %v5582 = vmul.f32 %v5559, %v5574
        %v5583 = vmul.f32 %v5564, %v5570
        %v5584 = vmul.f32 %v5560, %v5574
        %s5585 = scalar_lea.vmem %s6, 96
        %v5586 = vld [vmem:[%s5585] sm:$0xff]
        %v5587 = vld [vmem:[%s5585 + $0x8] sm:$0xff]
        %v5588 = vld [vmem:[%s5585 + $0x10] sm:$0xff]
        %v5589 = vld [vmem:[%s5585 + $0x18] sm:$0xff]
        %5591 = vset.pattern.permute.xlu0 0
        %5592 = vperm.xlu0 %5591, %v5586
        %v5593 = vpop.permute.xlu0 %5592
        %5596 = vset.pattern.permute.xlu0 0
        %5597 = vperm.xlu0 %5596, %v5587
        %v5598 = vpop.permute.xlu0 %5597
        %5601 = vset.pattern.permute.xlu0 0
        %5602 = vperm.xlu0 %5601, %v5588
        %v5603 = vpop.permute.xlu0 %5602
        %5606 = vset.pattern.permute.xlu0 0
        %5607 = vperm.xlu0 %5606, %v5589
        %v5608 = vpop.permute.xlu0 %5607
        %v5610 = vmul.f32 %v5593, %v5577
        %v5611 = vmul.f32 %v5593, %v5578
        %v5612 = vmul.f32 %v5598, %v5579
        %v5613 = vmul.f32 %v5598, %v5580
        %v5614 = vmul.f32 %v5603, %v5581
        %v5615 = vmul.f32 %v5603, %v5582
        %v5616 = vmul.f32 %v5608, %v5583
        %v5617 = vmul.f32 %v5608, %v5584
        %v5618 = vadd.f32 %v5610, %v5612
        %v5619 = vadd.f32 %v5618, %v5614
        %v5620 = vadd.f32 %v5619, %v5616
        %v5621 = vrot.slane %v5620, 4
        %v5622 = vadd.f32 %v5620, %v5621
        %v5623 = vrot.slane %v5622, 2
        %v5624 = vadd.f32 %v5622, %v5623
        %v5625 = vrot.slane %v5624, 1
        %v5626 = vadd.f32 %v5624, %v5625
        %v5627 = vadd.f32 %v5611, %v5613
        %v5628 = vadd.f32 %v5627, %v5615
        %v5629 = vadd.f32 %v5628, %v5617
        %v5630 = vrot.slane %v5629, 4
        %v5631 = vadd.f32 %v5629, %v5630
        %v5632 = vrot.slane %v5631, 2
        %v5633 = vadd.f32 %v5631, %v5632
        %v5634 = vrot.slane %v5633, 1
        %v5635 = vadd.f32 %v5633, %v5634
        %v5636 = vadd.f32 %v5539, %v5626
        %v5637 = vadd.f32 %v5540, %v5635
        %s5638 = scalar_lea.vmem %s6, 128
        %v5639 = vld [vmem:[%s5638] sm:$0xff]
        %v5640 = vld [vmem:[%s5638 + $0x8] sm:$0xff]
        %v5641 = vld [vmem:[%s5638 + $0x10] sm:$0xff]
        %v5642 = vld [vmem:[%s5638 + $0x18] sm:$0xff]
        %5644 = vset.pattern.permute.xlu0 0
        %5645 = vperm.xlu0 %5644, %v5639
        %v5646 = vpop.permute.xlu0 %5645
        %5649 = vset.pattern.permute.xlu0 0
        %5650 = vperm.xlu0 %5649, %v5640
        %v5651 = vpop.permute.xlu0 %5650
        %5654 = vset.pattern.permute.xlu0 0
        %5655 = vperm.xlu0 %5654, %v5641
        %v5656 = vpop.permute.xlu0 %5655
        %5659 = vset.pattern.permute.xlu0 0
        %5660 = vperm.xlu0 %5659, %v5642
        %v5661 = vpop.permute.xlu0 %5660
        %v5663 = vmul.f32 %v5646, %v5243
        %v5664 = vmul.f32 %v5646, %v5244
        %v5665 = vmul.f32 %v5651, %v5245
        %v5666 = vmul.f32 %v5651, %v5246
        %v5667 = vmul.f32 %v5656, %v5247
        %v5668 = vmul.f32 %v5656, %v5248
        %v5669 = vmul.f32 %v5661, %v5249
        %v5670 = vmul.f32 %v5661, %v5250
        %v5671 = vadd.f32 %v5663, %v5665
        %v5672 = vadd.f32 %v5671, %v5667
        %v5673 = vadd.f32 %v5672, %v5669
        %v5674 = vrot.slane %v5673, 4
        %v5675 = vadd.f32 %v5673, %v5674
        %v5676 = vrot.slane %v5675, 2
        %v5677 = vadd.f32 %v5675, %v5676
        %v5678 = vrot.slane %v5677, 1
        %v5679 = vadd.f32 %v5677, %v5678
        %v5680 = vadd.f32 %v5664, %v5666
        %v5681 = vadd.f32 %v5680, %v5668
        %v5682 = vadd.f32 %v5681, %v5670
        %v5683 = vrot.slane %v5682, 4
        %v5684 = vadd.f32 %v5682, %v5683
        %v5685 = vrot.slane %v5684, 2
        %v5686 = vadd.f32 %v5684, %v5685
        %v5687 = vrot.slane %v5686, 1
        %v5688 = vadd.f32 %v5686, %v5687
        %v5689 = vadd.f32 %v5636, %v5679
        %v5690 = vadd.f32 %v5637, %v5688
        %5691 = vrot.lane.b32.xlu0 %v5243, 127
        %v5692 = vpop.permute.xlu0 %5691
        %5693 = vrot.lane.b32.xlu0 %v5245, 127
        %v5694 = vpop.permute.xlu0 %5693
        %5695 = vrot.lane.b32.xlu0 %v5247, 127
        %v5696 = vpop.permute.xlu0 %5695
        %5697 = vrot.lane.b32.xlu0 %v5249, 127
        %v5698 = vpop.permute.xlu0 %5697
        %5699 = vrot.lane.b32.xlu0 %v5244, 127
        %v5700 = vpop.permute.xlu0 %5699
        %5701 = vrot.lane.b32.xlu0 %v5246, 127
        %v5702 = vpop.permute.xlu0 %5701
        %5703 = vrot.lane.b32.xlu0 %v5248, 127
        %v5704 = vpop.permute.xlu0 %5703
        %5705 = vrot.lane.b32.xlu0 %v5250, 127
        %v5706 = vpop.permute.xlu0 %5705
        %v5707 = vsel %vm664, %v5692, %v5700
        %v5708 = vsel %vm664, %v5694, %v5702
        %v5709 = vsel %vm664, %v5696, %v5704
        %v5710 = vsel %vm664, %v5698, %v5706
        %v5711 = vsel %vm664, %v5700, %v5692
        %v5712 = vsel %vm664, %v5702, %v5694
        %v5713 = vsel %vm664, %v5704, %v5696
        %v5714 = vsel %vm664, %v5706, %v5698
        %v5715 = vld [vmem:[%s667] sm:$0x3]
        %v5717 = vlaneseq
        %v5718 = vshrl.u32 %v5717, 7
        %v5719 = vsub.s32 0, %v5718
        %v5720 = vrot.slane %v5715, %v5719
        %v5721 = vlaneseq
        %v5722 = vshrl.u32 %v5721, 7
        %v5723 = vsub.s32 1, %v5722
        %v5724 = vrot.slane %v5715, %v5723
        %v5727 = vmul.f32 %v5707, %v5720
        %v5728 = vmul.f32 %v5711, %v5724
        %v5729 = vmul.f32 %v5708, %v5720
        %v5730 = vmul.f32 %v5712, %v5724
        %v5731 = vmul.f32 %v5709, %v5720
        %v5732 = vmul.f32 %v5713, %v5724
        %v5733 = vmul.f32 %v5710, %v5720
        %v5734 = vmul.f32 %v5714, %v5724
        %s5735 = scalar_lea.vmem %s6, 160
        %v5736 = vld [vmem:[%s5735] sm:$0xff]
        %v5737 = vld [vmem:[%s5735 + $0x8] sm:$0xff]
        %v5738 = vld [vmem:[%s5735 + $0x10] sm:$0xff]
        %v5739 = vld [vmem:[%s5735 + $0x18] sm:$0xff]
        %5741 = vset.pattern.permute.xlu0 0
        %5742 = vperm.xlu0 %5741, %v5736
        %v5743 = vpop.permute.xlu0 %5742
        %5746 = vset.pattern.permute.xlu0 0
        %5747 = vperm.xlu0 %5746, %v5737
        %v5748 = vpop.permute.xlu0 %5747
        %5751 = vset.pattern.permute.xlu0 0
        %5752 = vperm.xlu0 %5751, %v5738
        %v5753 = vpop.permute.xlu0 %5752
        %5756 = vset.pattern.permute.xlu0 0
        %5757 = vperm.xlu0 %5756, %v5739
        %v5758 = vpop.permute.xlu0 %5757
        %v5760 = vmul.f32 %v5743, %v5727
        %v5761 = vmul.f32 %v5743, %v5728
        %v5762 = vmul.f32 %v5748, %v5729
        %v5763 = vmul.f32 %v5748, %v5730
        %v5764 = vmul.f32 %v5753, %v5731
        %v5765 = vmul.f32 %v5753, %v5732
        %v5766 = vmul.f32 %v5758, %v5733
        %v5767 = vmul.f32 %v5758, %v5734
        %v5768 = vadd.f32 %v5760, %v5762
        %v5769 = vadd.f32 %v5768, %v5764
        %v5770 = vadd.f32 %v5769, %v5766
        %v5771 = vrot.slane %v5770, 4
        %v5772 = vadd.f32 %v5770, %v5771
        %v5773 = vrot.slane %v5772, 2
        %v5774 = vadd.f32 %v5772, %v5773
        %v5775 = vrot.slane %v5774, 1
        %v5776 = vadd.f32 %v5774, %v5775
        %v5777 = vadd.f32 %v5761, %v5763
        %v5778 = vadd.f32 %v5777, %v5765
        %v5779 = vadd.f32 %v5778, %v5767
        %v5780 = vrot.slane %v5779, 4
        %v5781 = vadd.f32 %v5779, %v5780
        %v5782 = vrot.slane %v5781, 2
        %v5783 = vadd.f32 %v5781, %v5782
        %v5784 = vrot.slane %v5783, 1
        %v5785 = vadd.f32 %v5783, %v5784
        %v5786 = vadd.f32 %v5689, %v5776
        %v5787 = vadd.f32 %v5690, %v5785
        %5788 = vrot.lane.b32.xlu0 %v5243, 113
        %v5789 = vpop.permute.xlu0 %5788
        %5790 = vrot.lane.b32.xlu0 %v5245, 113
        %v5791 = vpop.permute.xlu0 %5790
        %5792 = vrot.lane.b32.xlu0 %v5247, 113
        %v5793 = vpop.permute.xlu0 %5792
        %5794 = vrot.lane.b32.xlu0 %v5249, 113
        %v5795 = vpop.permute.xlu0 %5794
        %5796 = vrot.lane.b32.xlu0 %v5244, 113
        %v5797 = vpop.permute.xlu0 %5796
        %5798 = vrot.lane.b32.xlu0 %v5246, 113
        %v5799 = vpop.permute.xlu0 %5798
        %5800 = vrot.lane.b32.xlu0 %v5248, 113
        %v5801 = vpop.permute.xlu0 %5800
        %5802 = vrot.lane.b32.xlu0 %v5250, 113
        %v5803 = vpop.permute.xlu0 %5802
        %v5804 = vsel %vm735, %v5789, %v5797
        %v5805 = vsel %vm735, %v5791, %v5799
        %v5806 = vsel %vm735, %v5793, %v5801
        %v5807 = vsel %vm735, %v5795, %v5803
        %v5808 = vsel %vm735, %v5797, %v5789
        %v5809 = vsel %vm735, %v5799, %v5791
        %v5810 = vsel %vm735, %v5801, %v5793
        %v5811 = vsel %vm735, %v5803, %v5795
        %v5812 = vld [vmem:[%s738] sm:$0x3]
        %v5814 = vlaneseq
        %v5815 = vshrl.u32 %v5814, 7
        %v5816 = vsub.s32 0, %v5815
        %v5817 = vrot.slane %v5812, %v5816
        %v5818 = vlaneseq
        %v5819 = vshrl.u32 %v5818, 7
        %v5820 = vsub.s32 1, %v5819
        %v5821 = vrot.slane %v5812, %v5820
        %v5824 = vmul.f32 %v5804, %v5817
        %v5825 = vmul.f32 %v5808, %v5821
        %v5826 = vmul.f32 %v5805, %v5817
        %v5827 = vmul.f32 %v5809, %v5821
        %v5828 = vmul.f32 %v5806, %v5817
        %v5829 = vmul.f32 %v5810, %v5821
        %v5830 = vmul.f32 %v5807, %v5817
        %v5831 = vmul.f32 %v5811, %v5821
        %s5832 = scalar_lea.vmem %s6, 192
        %v5833 = vld [vmem:[%s5832] sm:$0xff]
        %v5834 = vld [vmem:[%s5832 + $0x8] sm:$0xff]
        %v5835 = vld [vmem:[%s5832 + $0x10] sm:$0xff]
        %v5836 = vld [vmem:[%s5832 + $0x18] sm:$0xff]
        %5838 = vset.pattern.permute.xlu0 0
        %5839 = vperm.xlu0 %5838, %v5833
        %v5840 = vpop.permute.xlu0 %5839
        %5843 = vset.pattern.permute.xlu0 0
        %5844 = vperm.xlu0 %5843, %v5834
        %v5845 = vpop.permute.xlu0 %5844
        %5848 = vset.pattern.permute.xlu0 0
        %5849 = vperm.xlu0 %5848, %v5835
        %v5850 = vpop.permute.xlu0 %5849
        %5853 = vset.pattern.permute.xlu0 0
        %5854 = vperm.xlu0 %5853, %v5836
        %v5855 = vpop.permute.xlu0 %5854
        %v5857 = vmul.f32 %v5840, %v5824
        %v5858 = vmul.f32 %v5840, %v5825
        %v5859 = vmul.f32 %v5845, %v5826
        %v5860 = vmul.f32 %v5845, %v5827
        %v5861 = vmul.f32 %v5850, %v5828
        %v5862 = vmul.f32 %v5850, %v5829
        %v5863 = vmul.f32 %v5855, %v5830
        %v5864 = vmul.f32 %v5855, %v5831
        %v5865 = vadd.f32 %v5857, %v5859
        %v5866 = vadd.f32 %v5865, %v5861
        %v5867 = vadd.f32 %v5866, %v5863
        %v5868 = vrot.slane %v5867, 4
        %v5869 = vadd.f32 %v5867, %v5868
        %v5870 = vrot.slane %v5869, 2
        %v5871 = vadd.f32 %v5869, %v5870
        %v5872 = vrot.slane %v5871, 1
        %v5873 = vadd.f32 %v5871, %v5872
        %v5874 = vadd.f32 %v5858, %v5860
        %v5875 = vadd.f32 %v5874, %v5862
        %v5876 = vadd.f32 %v5875, %v5864
        %v5877 = vrot.slane %v5876, 4
        %v5878 = vadd.f32 %v5876, %v5877
        %v5879 = vrot.slane %v5878, 2
        %v5880 = vadd.f32 %v5878, %v5879
        %v5881 = vrot.slane %v5880, 1
        %v5882 = vadd.f32 %v5880, %v5881
        %v5883 = vadd.f32 %v5786, %v5873
        %v5884 = vadd.f32 %v5787, %v5882
        %5885 = vrot.lane.b32.xlu0 %v5243, 112
        %v5886 = vpop.permute.xlu0 %5885
        %5887 = vrot.lane.b32.xlu0 %v5245, 112
        %v5888 = vpop.permute.xlu0 %5887
        %5889 = vrot.lane.b32.xlu0 %v5247, 112
        %v5890 = vpop.permute.xlu0 %5889
        %5891 = vrot.lane.b32.xlu0 %v5249, 112
        %v5892 = vpop.permute.xlu0 %5891
        %5893 = vrot.lane.b32.xlu0 %v5244, 112
        %v5894 = vpop.permute.xlu0 %5893
        %5895 = vrot.lane.b32.xlu0 %v5246, 112
        %v5896 = vpop.permute.xlu0 %5895
        %5897 = vrot.lane.b32.xlu0 %v5248, 112
        %v5898 = vpop.permute.xlu0 %5897
        %5899 = vrot.lane.b32.xlu0 %v5250, 112
        %v5900 = vpop.permute.xlu0 %5899
        %v5901 = vsel %vm806, %v5886, %v5894
        %v5902 = vsel %vm806, %v5888, %v5896
        %v5903 = vsel %vm806, %v5890, %v5898
        %v5904 = vsel %vm806, %v5892, %v5900
        %v5905 = vsel %vm806, %v5894, %v5886
        %v5906 = vsel %vm806, %v5896, %v5888
        %v5907 = vsel %vm806, %v5898, %v5890
        %v5908 = vsel %vm806, %v5900, %v5892
        %v5909 = vld [vmem:[%s809] sm:$0x3]
        %v5911 = vlaneseq
        %v5912 = vshrl.u32 %v5911, 7
        %v5913 = vsub.s32 0, %v5912
        %v5914 = vrot.slane %v5909, %v5913
        %v5915 = vlaneseq
        %v5916 = vshrl.u32 %v5915, 7
        %v5917 = vsub.s32 1, %v5916
        %v5918 = vrot.slane %v5909, %v5917
        %v5921 = vmul.f32 %v5901, %v5914
        %v5922 = vmul.f32 %v5905, %v5918
        %v5923 = vmul.f32 %v5902, %v5914
        %v5924 = vmul.f32 %v5906, %v5918
        %v5925 = vmul.f32 %v5903, %v5914
        %v5926 = vmul.f32 %v5907, %v5918
        %v5927 = vmul.f32 %v5904, %v5914
        %v5928 = vmul.f32 %v5908, %v5918
        %s5929 = scalar_lea.vmem %s6, 224
        %v5930 = vld [vmem:[%s5929] sm:$0xff]
        %v5931 = vld [vmem:[%s5929 + $0x8] sm:$0xff]
        %v5932 = vld [vmem:[%s5929 + $0x10] sm:$0xff]
        %v5933 = vld [vmem:[%s5929 + $0x18] sm:$0xff]
        %5935 = vset.pattern.permute.xlu0 0
        %5936 = vperm.xlu0 %5935, %v5930
        %v5937 = vpop.permute.xlu0 %5936
        %5940 = vset.pattern.permute.xlu0 0
        %5941 = vperm.xlu0 %5940, %v5931
        %v5942 = vpop.permute.xlu0 %5941
        %5945 = vset.pattern.permute.xlu0 0
        %5946 = vperm.xlu0 %5945, %v5932
        %v5947 = vpop.permute.xlu0 %5946
        %5950 = vset.pattern.permute.xlu0 0
        %5951 = vperm.xlu0 %5950, %v5933
        %v5952 = vpop.permute.xlu0 %5951
        %v5954 = vmul.f32 %v5937, %v5921
        %v5955 = vmul.f32 %v5937, %v5922
        %v5956 = vmul.f32 %v5942, %v5923
        %v5957 = vmul.f32 %v5942, %v5924
        %v5958 = vmul.f32 %v5947, %v5925
        %v5959 = vmul.f32 %v5947, %v5926
        %v5960 = vmul.f32 %v5952, %v5927
        %v5961 = vmul.f32 %v5952, %v5928
        %v5962 = vadd.f32 %v5954, %v5956
        %v5963 = vadd.f32 %v5962, %v5958
        %v5964 = vadd.f32 %v5963, %v5960
        %v5965 = vrot.slane %v5964, 4
        %v5966 = vadd.f32 %v5964, %v5965
        %v5967 = vrot.slane %v5966, 2
        %v5968 = vadd.f32 %v5966, %v5967
        %v5969 = vrot.slane %v5968, 1
        %v5970 = vadd.f32 %v5968, %v5969
        %v5971 = vadd.f32 %v5955, %v5957
        %v5972 = vadd.f32 %v5971, %v5959
        %v5973 = vadd.f32 %v5972, %v5961
        %v5974 = vrot.slane %v5973, 4
        %v5975 = vadd.f32 %v5973, %v5974
        %v5976 = vrot.slane %v5975, 2
        %v5977 = vadd.f32 %v5975, %v5976
        %v5978 = vrot.slane %v5977, 1
        %v5979 = vadd.f32 %v5977, %v5978
        %v5980 = vadd.f32 %v5883, %v5970
        %v5981 = vadd.f32 %v5884, %v5979
        %5982 = vrot.lane.b32.xlu0 %v5243, 111
        %v5983 = vpop.permute.xlu0 %5982
        %5984 = vrot.lane.b32.xlu0 %v5245, 111
        %v5985 = vpop.permute.xlu0 %5984
        %5986 = vrot.lane.b32.xlu0 %v5247, 111
        %v5987 = vpop.permute.xlu0 %5986
        %5988 = vrot.lane.b32.xlu0 %v5249, 111
        %v5989 = vpop.permute.xlu0 %5988
        %5990 = vrot.lane.b32.xlu0 %v5244, 111
        %v5991 = vpop.permute.xlu0 %5990
        %5992 = vrot.lane.b32.xlu0 %v5246, 111
        %v5993 = vpop.permute.xlu0 %5992
        %5994 = vrot.lane.b32.xlu0 %v5248, 111
        %v5995 = vpop.permute.xlu0 %5994
        %5996 = vrot.lane.b32.xlu0 %v5250, 111
        %v5997 = vpop.permute.xlu0 %5996
        %v5998 = vsel %vm877, %v5983, %v5991
        %v5999 = vsel %vm877, %v5985, %v5993
        %v6000 = vsel %vm877, %v5987, %v5995
        %v6001 = vsel %vm877, %v5989, %v5997
        %v6002 = vsel %vm877, %v5991, %v5983
        %v6003 = vsel %vm877, %v5993, %v5985
        %v6004 = vsel %vm877, %v5995, %v5987
        %v6005 = vsel %vm877, %v5997, %v5989
        %v6006 = vld [vmem:[%s880] sm:$0x3]
        %v6008 = vlaneseq
        %v6009 = vshrl.u32 %v6008, 7
        %v6010 = vsub.s32 0, %v6009
        %v6011 = vrot.slane %v6006, %v6010
        %v6012 = vlaneseq
        %v6013 = vshrl.u32 %v6012, 7
        %v6014 = vsub.s32 1, %v6013
        %v6015 = vrot.slane %v6006, %v6014
        %v6018 = vmul.f32 %v5998, %v6011
        %v6019 = vmul.f32 %v6002, %v6015
        %v6020 = vmul.f32 %v5999, %v6011
        %v6021 = vmul.f32 %v6003, %v6015
        %v6022 = vmul.f32 %v6000, %v6011
        %v6023 = vmul.f32 %v6004, %v6015
        %v6024 = vmul.f32 %v6001, %v6011
        %v6025 = vmul.f32 %v6005, %v6015
        %s6026 = scalar_lea.vmem %s6, 256
        %v6027 = vld [vmem:[%s6026] sm:$0xff]
        %v6028 = vld [vmem:[%s6026 + $0x8] sm:$0xff]
        %v6029 = vld [vmem:[%s6026 + $0x10] sm:$0xff]
        %v6030 = vld [vmem:[%s6026 + $0x18] sm:$0xff]
        %6032 = vset.pattern.permute.xlu0 0
        %6033 = vperm.xlu0 %6032, %v6027
        %v6034 = vpop.permute.xlu0 %6033
        %6037 = vset.pattern.permute.xlu0 0
        %6038 = vperm.xlu0 %6037, %v6028
        %v6039 = vpop.permute.xlu0 %6038
        %6042 = vset.pattern.permute.xlu0 0
        %6043 = vperm.xlu0 %6042, %v6029
        %v6044 = vpop.permute.xlu0 %6043
        %6047 = vset.pattern.permute.xlu0 0
        %6048 = vperm.xlu0 %6047, %v6030
        %v6049 = vpop.permute.xlu0 %6048
        %v6051 = vmul.f32 %v6034, %v6018
        %v6052 = vmul.f32 %v6034, %v6019
        %v6053 = vmul.f32 %v6039, %v6020
        %v6054 = vmul.f32 %v6039, %v6021
        %v6055 = vmul.f32 %v6044, %v6022
        %v6056 = vmul.f32 %v6044, %v6023
        %v6057 = vmul.f32 %v6049, %v6024
        %v6058 = vmul.f32 %v6049, %v6025
        %v6059 = vadd.f32 %v6051, %v6053
        %v6060 = vadd.f32 %v6059, %v6055
        %v6061 = vadd.f32 %v6060, %v6057
        %v6062 = vrot.slane %v6061, 4
        %v6063 = vadd.f32 %v6061, %v6062
        %v6064 = vrot.slane %v6063, 2
        %v6065 = vadd.f32 %v6063, %v6064
        %v6066 = vrot.slane %v6065, 1
        %v6067 = vadd.f32 %v6065, %v6066
        %v6068 = vadd.f32 %v6052, %v6054
        %v6069 = vadd.f32 %v6068, %v6056
        %v6070 = vadd.f32 %v6069, %v6058
        %v6071 = vrot.slane %v6070, 4
        %v6072 = vadd.f32 %v6070, %v6071
        %v6073 = vrot.slane %v6072, 2
        %v6074 = vadd.f32 %v6072, %v6073
        %v6075 = vrot.slane %v6074, 1
        %v6076 = vadd.f32 %v6074, %v6075
        %v6077 = vadd.f32 %v5980, %v6067
        %v6078 = vadd.f32 %v5981, %v6076
        %v6079 = vld [vmem:[#allocation3] sm:$0x1]
        %6081 = vset.pattern.permute.xlu0 0
        %6082 = vperm.xlu0 %6081, %v6079
        %v6083 = vpop.permute.xlu0 %6082
        %v6085 = vlaneseq
        %v6086 = vshrl.u32 %v6085, 7
        %v6087 = vsub.s32 0, %v6086
        %v6088 = vrot.slane %v6083, %v6087
        %v6089 = vadd.f32 %v6077, %v6088
        %v6090 = vadd.f32 %v6078, %v6088
        %v6093 = vcombine.low %v6089, %v6090
        %v6095 = vunpack.c.l.s4 1966171168
        %v6096 = vunpack.c.0.s8 %v6095
        %v6097 = vlaneseq
        %v6098 = vshrl.u32 %v6097, 7
        %v6099 = vsub.s32 %v6096, %v6098
        %v6100 = vrot.slane %v6093, %v6099
        %v6102 = vunpack.c.l.s4 1966171168
        %v6103 = vunpack.c.0.s8 %v6102
        %v6104 = vlaneseq
        %v6105 = vshrl.u32 %v6104, 7
        %v6106 = vsub.s32 %v6103, %v6105
        %v6107 = vrot.slane %v6100, %v6106
        %v6109 = vlaneseq
        %vm6110 = vcmp.ge.s32.totalorder %v6109, 0
        %vm6111 = vcmp.lt.s32.totalorder %v6109, 256
        %vm6112 = vmand %vm6110, %vm6111
        %6113 = vst.msk [vmem:[%s313] sm:$0x3] %vm6112, %v6107
        %s6114 = sand.u32 %s206, 1
        %s6115 = scalar_lea.sflag [#allocation6], %s6114
        %s6116 = sand.u32 %s206, 1
        %s6117 = smul.addr %s6116, 2
        %s6118 = scalar_lea.vmem [#allocation7], %s6117
        // Predicated region
        $region57: #{tpu_custom_call.1} parent=51 // pred_check
          %p6119 = pneg %p216
        $region58: #{tpu_custom_call.1} parent=51 // pred_check_branch
          %6121 = sbr.rel (%p6119) target = $region60
        $region59: #{tpu_custom_call.1} parent=51 // pred_region
          %s6123 = ssub.s32 32, 32
          %6124 = vsyncadd %s6115, %s6123
          %s6125 = smul.addr %s25, 2
          %s6126 = smul.addr %s6125, 16
          %s6127 = scalar_lea.hbm %s8, %s6126
          %s6129 = sshll.u32 %s6118, 4
          %s6130 = int_to_ptr.vmem [resolvable:$true] %s6129
          %6132 = dma.vmem_to_hbm [thread:$0]  %s6130, 32, %s6127, %s6115
        $region60: #{tpu_custom_call.1} parent=51 // pred_fallthru
          _
      $region52: #{tpu_custom_call.1} parent=5 // pred_fallthru
        _
      %p6133 = scmp.le.s32.totalorder 2, %s20
      // Predicated region
      $region61: #{tpu_custom_call.1} parent=5 // pred_check
        %p6134 = pneg %p6133
      $region62: #{tpu_custom_call.1} parent=5 // pred_check_branch
        %6136 = sbr.rel (%p6134) target = $region64
      $region63: #{tpu_custom_call.1} parent=5 // pred_region
        %s6137 = ssub.s32 %s20, 2
        // Predicated region
        $region65: #{tpu_custom_call.1} parent=63 // pred_check
          %p6138 = pneg %p222
        $region66: #{tpu_custom_call.1} parent=63 // pred_check_branch
          %6140 = sbr.rel (%p6138) target = $region68
        $region67: #{tpu_custom_call.1} parent=63 // pred_region
          %s6141 = sand.u32 %s207, 1
          %s6142 = scalar_lea.sflag [#allocation6], %s6141
          %s6143 = sand.u32 %s207, 1
          %s6144 = smul.addr %s6143, 2
          %s6145 = scalar_lea.vmem [#allocation7], %s6144
          %6146 = dma.done %s6142, 32
        $region68: #{tpu_custom_call.1} parent=63 // pred_fallthru
          _
      $region64: #{tpu_custom_call.1} parent=5 // pred_fallthru
        _
    $region6: #{tpu_custom_call.1} parent=1 // loop_footer
      %s24 = sadd.s32 1, %s20
    $region7: #{tpu_custom_call.1} parent=1 // loop_footer_branch
      %19 = sbr.rel target = $region3
    $region8: #{tpu_custom_call.1} parent=1 // loop_exit
      _
    %6147 = vsyncpa [#allocation5], 1
    %s6148 = scalar_lea.sflag [#allocation5], 1
    %6149 = vsyncpa %s6148, 1
    %6150 = vsyncpa [#allocation6], 1
    %s6151 = scalar_lea.sflag [#allocation6], 1
    %6152 = vsyncpa %s6151, 1

</llo_original>
